<compile_context>
chip_gen: v6e
topology: v6e:2x2x1
jax: 0.10.0
libtpu: 0.0.40
codegen_flags: <defaults>
</compile_context>

<pallas_src>
import jax
import jax.numpy as jnp
from jax import lax
from jax.experimental import pallas as pl
from jax.experimental.pallas import tpu as pltpu


# ---------------------------------------------------------------------------
# Static plan: flat-spatial bookkeeping for the conv stack
# ---------------------------------------------------------------------------
def build_plan(obs_space, input_channels, channel_size, action_space, d_hidden):
    H, W, C = obs_space
    assert C == input_channels
    # torch does transpose(x, -1, 0): conv spatial dims are (W, H), channels C.
    s1, s2 = W, H
    oc0, k0, st0 = channel_size[0]
    assert s1 % st0 == 0 and s2 % st0 == 0, "first-conv stride must divide spatial dims"
    p1, p2 = s1 // st0, s2 // st0                # phase-plane spatial dims
    plan = {
        "stride1": st0,
        "n_phase": st0 * st0,
        "plane_shape": (p1, p2),
        "plane_flat": p1 * p2,
        "C": C,
        "C_pad": ((C + 7) // 8) * 8,
    }
    conv_layers = []
    rs, cs = p2, 1                               # flat-index strides of current map
    oh = (s1 - k0) // st0 + 1
    ow = (s2 - k0) // st0 + 1
    taps = []
    for kh in range(k0):
        for kw in range(k0):
            taps.append(((kh % st0) * st0 + (kw % st0),
                         (kh // st0) * rs + (kw // st0) * cs))
    n_rows = (oh - 1) * rs + (ow - 1) * cs + 1
    conv_layers.append(dict(taps=taps, n_rows=n_rows, oh=oh, ow=ow,
                            rs=rs, cs=cs, oc=oc0))
    for (oc, k, st) in channel_size[1:]:
        taps = [(None, kh * rs + kw * cs) for kh in range(k) for kw in range(k)]
        rs2, cs2 = rs * st, cs * st
        oh = (oh - k) // st + 1
        ow = (ow - k) // st + 1
        n_rows = (oh - 1) * rs2 + (ow - 1) * cs2 + 1
        conv_layers.append(dict(taps=taps, n_rows=n_rows, oh=oh, ow=ow,
                                rs=rs2, cs=cs2, oc=oc))
        rs, cs = rs2, cs2
    plan["conv_layers"] = conv_layers
    last = conv_layers[-1]
    plan["fc1_rows"] = [r * last["rs"] + c * last["cs"]
                        for r in range(last["oh"]) for c in range(last["ow"])]
    plan["flat_features"] = last["oc"] * last["oh"] * last["ow"]
    plan["fc_dims"] = list(d_hidden) + [action_space[0]]
    return plan


# ---------------------------------------------------------------------------
# Fused kernel (one grid step == one observation)
# ---------------------------------------------------------------------------
def make_kernel(plan):
    convs = plan["conv_layers"]
    n_conv = len(convs)
    fc1_rows = plan["fc1_rows"]
    n_fc = len(plan["fc_dims"])

    def kernel(*refs):
        scratch = refs[len(refs) - n_conv:]          # per-conv feature maps (VMEM)
        out_ref = refs[len(refs) - n_conv - 1]
        ins = refs[:len(refs) - n_conv - 1]

        x_ref = ins[0]                               # [n_phase, plane_flat, C_pad]
        idx = 1
        # --- conv stack: each conv = sum over K*K shifted matmuls -----------
        for li, cl in enumerate(convs):
            wblk_ref, b_ref = ins[idx], ins[idx + 1]
            idx += 2
            n_rows = cl["n_rows"]
            acc = None
            for t, (phase, d) in enumerate(cl["taps"]):
                if li == 0:
                    piece = x_ref[phase, pl.ds(d, n_rows), :]
                else:
                    piece = scratch[li - 1][pl.ds(d, n_rows), :]
                contrib = jnp.dot(piece, wblk_ref[t],
                                  preferred_element_type=jnp.float32)
                acc = contrib if acc is None else acc + contrib
            scratch[li][...] = acc + b_ref[...]

        # --- FC1: gather the valid spatial rows, one tiny matmul each -------
        wfc1_ref, bfc1_ref = ins[idx], ins[idx + 1]
        idx += 2
        feat = scratch[n_conv - 1]
        h = None
        for p, q in enumerate(fc1_rows):
            contrib = jnp.dot(feat[pl.ds(q, 1), :], wfc1_ref[p],
                              preferred_element_type=jnp.float32)
            h = contrib if h is None else h + contrib
        h = h + bfc1_ref[...]

        # --- remaining FC layers (no activation in between, as in the spec) -
        for _ in range(n_fc - 1):
            w_ref, b_ref = ins[idx], ins[idx + 1]
            idx += 2
            h = jnp.dot(h, w_ref[...], preferred_element_type=jnp.float32) + b_ref[...]

        # --- sigmoid + x[0] = 2*x[0] - 1 via precomputed scale/offset rows --
        scale_ref, offset_ref = ins[idx], ins[idx + 1]
        out_ref[...] = (jax.nn.sigmoid(h) * scale_ref[...]
                        + offset_ref[...]).astype(out_ref.dtype)

    return kernel


def make_forward(plan):
    kernel = make_kernel(plan)
    convs = plan["conv_layers"]
    st = plan["stride1"]
    p1, p2 = plan["plane_shape"]
    n_phase = plan["n_phase"]
    plane_flat = plan["plane_flat"]
    C, C_pad = plan["C"], plan["C_pad"]
    A = plan["fc_dims"][-1]

    def forward(ops, xb):
        B = xb.shape[0]
        # obs [B,H,W,C] -> conv layout [B, W, H, C] (torch transpose(-1,0), with
        # channels kept on the lane dim), then phase split for the strided conv.
        ximg = jnp.swapaxes(xb, 1, 2).astype(jnp.float32)       # [B, s1, s2, C]
        xph = ximg.reshape(B, p1, st, p2, st, C)
        xph = xph.transpose(0, 2, 4, 1, 3, 5).reshape(B, n_phase, plane_flat, C)
        if C_pad != C:
            xph = jnp.pad(xph, ((0, 0), (0, 0), (0, 0), (0, C_pad - C)))

        in_specs = [pl.BlockSpec((None, n_phase, plane_flat, C_pad),
                                 lambda b: (b, 0, 0, 0))]
        for arr in ops:  # weights/biases: whole array, resident across the grid
            in_specs.append(
                pl.BlockSpec(arr.shape, lambda b, _n=arr.ndim: (0,) * _n))
        out_specs = pl.BlockSpec((None, 1, A), lambda b: (b, 0, 0))
        scratch_shapes = [pltpu.VMEM((cl["n_rows"], cl["oc"]), jnp.float32)
                          for cl in convs]

        y = pl.pallas_call(
            kernel,
            out_shape=jax.ShapeDtypeStruct((B, 1, A), jnp.float32),
            grid_spec=pltpu.PrefetchScalarGridSpec(
                num_scalar_prefetch=0,
                grid=(B,),
                in_specs=in_specs,
                out_specs=out_specs,
                scratch_shapes=scratch_shapes),
            compiler_params=pltpu.CompilerParams(
                dimension_semantics=("parallel",)),
        )(xph, *ops)
        return y.reshape(B, A)

    return jax.jit(forward)


# ---------------------------------------------------------------------------
# Parameters: raw torch-layout init + one-time kernel-layout preparation
# ---------------------------------------------------------------------------
def init_params(key, input_channels, channel_size, obs_space, action_space,
                d_hidden=(32, 32)):
    """Raw parameters in torch layouts (Conv2d OIHW, Linear [out, in]).

    The torch module uses nn.init.normal_ (std=1); we scale the synthetic init
    down so the final sigmoid is not saturated and the numeric check against
    the pure-JAX reference is meaningful.  Forward math is identical.
    """
    H, W, C = obs_space
    assert C == input_channels
    raw = {"conv": [], "fc": []}
    in_c = C
    h, w = W, H
    for (oc, k, s) in channel_size:
        key, k_w, k_b = jax.random.split(key, 3)
        wt = jax.random.normal(k_w, (oc, in_c, k, k), jnp.float32) * 0.1
        bs = jax.random.normal(k_b, (oc,), jnp.float32) * 0.1
        raw["conv"].append((wt, bs, k, s))
        h = (h - k) // s + 1
        w = (w - k) // s + 1
        in_c = oc
    in_size = in_c * h * w
    for out_size in list(d_hidden) + [action_space[0]]:
        key, k_w, k_b = jax.random.split(key, 3)
        wt = jax.random.normal(k_w, (out_size, in_size), jnp.float32) * (in_size ** -0.5)
        bs = jax.random.normal(k_b, (out_size,), jnp.float32) * 0.1
        raw["fc"].append((wt, bs))
        in_size = out_size
    return raw


def prepare_params(raw, plan):
    """One-time re-layout of torch parameters into kernel operand order."""
    ops = []
    convs = plan["conv_layers"]
    C_pad = plan["C_pad"]
    for li, ((wt, bs, k, s), cl) in enumerate(zip(raw["conv"], convs)):
        oc, ic = wt.shape[0], wt.shape[1]
        blocks = []
        for kh in range(k):
            for kw in range(k):
                w2 = wt[:, :, kh, kw].T                          # [ic, oc]
                if li == 0 and ic != C_pad:
                    w2 = jnp.pad(w2, ((0, C_pad - ic), (0, 0)))  # zero-pad contraction
                blocks.append(w2)
        ops.append(jnp.stack(blocks, axis=0))                    # [K*K, ic(_pad), oc]
        ops.append(bs.reshape(1, oc))
    last = convs[-1]
    oc_l, oh_l, ow_l = last["oc"], last["oh"], last["ow"]
    w1, b1 = raw["fc"][0]
    d0 = w1.shape[0]
    assert w1.shape[1] == oc_l * oh_l * ow_l == plan["flat_features"]
    # torch.flatten order is (oc, oh, ow); regroup as one [oc, d0] block per
    # spatial position p = oh*OW + ow so FC1 is a few tiny VMEM matmuls in-kernel.
    wblk = w1.T.reshape(oc_l, oh_l * ow_l, d0).transpose(1, 0, 2)
    ops.append(wblk)                                             # [P, oc_last, d0]
    ops.append(b1.reshape(1, d0))
    for (wt, bs) in raw["fc"][1:]:
        ops.append(wt.T)                                         # [in, out]
        ops.append(bs.reshape(1, -1))
    A = plan["fc_dims"][-1]
    scale = jnp.ones((1, A), jnp.float32).at[0, 0].set(2.0)
    offset = jnp.zeros((1, A), jnp.float32).at[0, 0].set(-1.0)
    ops.append(scale)
    ops.append(offset)
    return ops


# ---------------------------------------------------------------------------
# Pure-JAX reference (mirrors the PyTorch forward) for validation
# ---------------------------------------------------------------------------
def reference_forward(raw, x):
    hp = lax.Precision.HIGHEST
    x = jnp.swapaxes(x, -1, 0)[None]                             # [1, C, W, H]
    for (wt, bs, k, s) in raw["conv"]:
        x = lax.conv_general_dilated(
            x, wt, window_strides=(s, s), padding="VALID",
            dimension_numbers=("NCHW", "OIHW", "NCHW"),
            precision=hp) + bs.reshape(1, -1, 1, 1)
    v = x.reshape(-1)
    for (wt, bs) in raw["fc"]:
        v = jnp.dot(wt, v, precision=hp) + bs
    v = jax.nn.sigmoid(v)
    v = v.at[0].set(v[0] * 2.0 - 1.0)
    return v


if __name__ == "__main__":
    obs_space = [16, 16, 4]                    # [H, W, C]
    input_channels = 4
    channel_size = [[8, 4, 2], [16, 3, 1]]     # (out_channels, kernel, stride)
    action_space = [4]
    d_hidden = [32, 32]
    batch = 2                                  # ES population slice per call

    key = jax.random.PRNGKey(0)
    kp, kx = jax.random.split(key)
    raw = init_params(kp, input_channels, channel_size, obs_space, action_space,
                      d_hidden)
    plan = build_plan(obs_space, input_channels, channel_size, action_space,
                      d_hidden)
    ops = prepare_params(raw, plan)
    forward = make_forward(plan)

    xb = jax.random.normal(kx, (batch, *obs_space), jnp.float32)
    y = jax.block_until_ready(forward(ops, xb))
    y_ref = jax.block_until_ready(
        jnp.stack([reference_forward(raw, xb[i]) for i in range(batch)]))

    assert y.shape == (batch, action_space[0])
    assert jnp.allclose(y, y_ref, atol=1e-3, rtol=1e-3), (y, y_ref)
    print("KERNEL_OK")
</pallas_src>

<mosaic_0001>
module attributes {stable_mosaic.version = 11 : i64} {
  func.func @kernel(%arg0: i32, %arg1: memref<1x4x64x8xf32, #tpu.memory_space<vmem>>, %arg2: memref<16x8x8xf32, #tpu.memory_space<vmem>>, %arg3: memref<1x8xf32, #tpu.memory_space<vmem>>, %arg4: memref<9x8x16xf32, #tpu.memory_space<vmem>>, %arg5: memref<1x16xf32, #tpu.memory_space<vmem>>, %arg6: memref<25x16x32xf32, #tpu.memory_space<vmem>>, %arg7: memref<1x32xf32, #tpu.memory_space<vmem>>, %arg8: memref<32x32xf32, #tpu.memory_space<vmem>>, %arg9: memref<1x32xf32, #tpu.memory_space<vmem>>, %arg10: memref<32x4xf32, #tpu.memory_space<vmem>>, %arg11: memref<1x4xf32, #tpu.memory_space<vmem>>, %arg12: memref<1x4xf32, #tpu.memory_space<vmem>>, %arg13: memref<1x4xf32, #tpu.memory_space<vmem>>, %arg14: memref<1x1x4xf32, #tpu.memory_space<vmem>>, %arg15: memref<55x8xf32, #tpu.memory_space<vmem>>, %arg16: memref<37x16xf32, #tpu.memory_space<vmem>>) attributes {dimension_semantics = [#tpu.dimension_semantics<parallel>], iteration_bounds = array<i64: 2>, scalar_prefetch = 0 : i64, scratch_operands = 2 : i64, tpu.core_type = #tpu.core_type<tc>, window_params = [{transform_indices = @transform_0, window_bounds = array<i64: 1, 4, 64, 8>}, {pipeline_mode = #tpu.pipeline_mode<synchronous>, transform_indices = @transform_1, window_bounds = array<i64: 16, 8, 8>}, {pipeline_mode = #tpu.pipeline_mode<synchronous>, transform_indices = @transform_2, window_bounds = array<i64: 1, 8>}, {pipeline_mode = #tpu.pipeline_mode<synchronous>, transform_indices = @transform_3, window_bounds = array<i64: 9, 8, 16>}, {pipeline_mode = #tpu.pipeline_mode<synchronous>, transform_indices = @transform_4, window_bounds = array<i64: 1, 16>}, {pipeline_mode = #tpu.pipeline_mode<synchronous>, transform_indices = @transform_5, window_bounds = array<i64: 25, 16, 32>}, {pipeline_mode = #tpu.pipeline_mode<synchronous>, transform_indices = @transform_6, window_bounds = array<i64: 1, 32>}, {pipeline_mode = #tpu.pipeline_mode<synchronous>, transform_indices = @transform_7, window_bounds = array<i64: 32, 32>}, {pipeline_mode = #tpu.pipeline_mode<synchronous>, transform_indices = @transform_8, window_bounds = array<i64: 1, 32>}, {pipeline_mode = #tpu.pipeline_mode<synchronous>, transform_indices = @transform_9, window_bounds = array<i64: 32, 4>}, {pipeline_mode = #tpu.pipeline_mode<synchronous>, transform_indices = @transform_10, window_bounds = array<i64: 1, 4>}, {pipeline_mode = #tpu.pipeline_mode<synchronous>, transform_indices = @transform_11, window_bounds = array<i64: 1, 4>}, {pipeline_mode = #tpu.pipeline_mode<synchronous>, transform_indices = @transform_12, window_bounds = array<i64: 1, 4>}, {transform_indices = @transform_13, window_bounds = array<i64: 1, 1, 4>}]} {
    %c0 = arith.constant 0 : index
    %c0_0 = arith.constant 0 : index
    %c0_1 = arith.constant 0 : index
    %c0_2 = arith.constant 0 : index
    %0 = vector.load %arg1[%c0, %c0_0, %c0_1, %c0_2] : memref<1x4x64x8xf32, #tpu.memory_space<vmem>>, vector<1x1x55x8xf32>
    %1 = vector.shape_cast %0 : vector<1x1x55x8xf32> to vector<55x8xf32>
    %c0_3 = arith.constant 0 : index
    %c0_4 = arith.constant 0 : index
    %c0_5 = arith.constant 0 : index
    %2 = vector.load %arg2[%c0_3, %c0_4, %c0_5] : memref<16x8x8xf32, #tpu.memory_space<vmem>>, vector<1x8x8xf32>
    %3 = vector.shape_cast %2 : vector<1x8x8xf32> to vector<8x8xf32>
    %cst = arith.constant dense<0.000000e+00> : vector<55x8xf32>
    %4 = tpu.matmul %1, %3, %cst {dimension_numbers = #tpu.dot_dimension_numbers<[1], [0], [0], [1], [0, 0, 1, 1], [], []>} : vector<55x8xf32>, vector<8x8xf32>, vector<55x8xf32> -> vector<55x8xf32>
    %c0_6 = arith.constant 0 : index
    %c1 = arith.constant 1 : index
    %c0_7 = arith.constant 0 : index
    %c0_8 = arith.constant 0 : index
    %5 = vector.load %arg1[%c0_6, %c1, %c0_7, %c0_8] : memref<1x4x64x8xf32, #tpu.memory_space<vmem>>, vector<1x1x55x8xf32>
    %6 = vector.shape_cast %5 : vector<1x1x55x8xf32> to vector<55x8xf32>
    %c1_9 = arith.constant 1 : index
    %c0_10 = arith.constant 0 : index
    %c0_11 = arith.constant 0 : index
    %7 = vector.load %arg2[%c1_9, %c0_10, %c0_11] : memref<16x8x8xf32, #tpu.memory_space<vmem>>, vector<1x8x8xf32>
    %8 = vector.shape_cast %7 : vector<1x8x8xf32> to vector<8x8xf32>
    %cst_12 = arith.constant dense<0.000000e+00> : vector<55x8xf32>
    %9 = tpu.matmul %6, %8, %cst_12 {dimension_numbers = #tpu.dot_dimension_numbers<[1], [0], [0], [1], [0, 0, 1, 1], [], []>} : vector<55x8xf32>, vector<8x8xf32>, vector<55x8xf32> -> vector<55x8xf32>
    %10 = arith.addf %4, %9 : vector<55x8xf32>
    %c0_13 = arith.constant 0 : index
    %c0_14 = arith.constant 0 : index
    %c1_15 = arith.constant 1 : index
    %c0_16 = arith.constant 0 : index
    %11 = vector.load %arg1[%c0_13, %c0_14, %c1_15, %c0_16] : memref<1x4x64x8xf32, #tpu.memory_space<vmem>>, vector<1x1x55x8xf32>
    %12 = vector.shape_cast %11 : vector<1x1x55x8xf32> to vector<55x8xf32>
    %c2 = arith.constant 2 : index
    %c0_17 = arith.constant 0 : index
    %c0_18 = arith.constant 0 : index
    %13 = vector.load %arg2[%c2, %c0_17, %c0_18] : memref<16x8x8xf32, #tpu.memory_space<vmem>>, vector<1x8x8xf32>
    %14 = vector.shape_cast %13 : vector<1x8x8xf32> to vector<8x8xf32>
    %cst_19 = arith.constant dense<0.000000e+00> : vector<55x8xf32>
    %15 = tpu.matmul %12, %14, %cst_19 {dimension_numbers = #tpu.dot_dimension_numbers<[1], [0], [0], [1], [0, 0, 1, 1], [], []>} : vector<55x8xf32>, vector<8x8xf32>, vector<55x8xf32> -> vector<55x8xf32>
    %16 = arith.addf %10, %15 : vector<55x8xf32>
    %c0_20 = arith.constant 0 : index
    %c1_21 = arith.constant 1 : index
    %c1_22 = arith.constant 1 : index
    %c0_23 = arith.constant 0 : index
    %17 = vector.load %arg1[%c0_20, %c1_21, %c1_22, %c0_23] : memref<1x4x64x8xf32, #tpu.memory_space<vmem>>, vector<1x1x55x8xf32>
    %18 = vector.shape_cast %17 : vector<1x1x55x8xf32> to vector<55x8xf32>
    %c3 = arith.constant 3 : index
    %c0_24 = arith.constant 0 : index
    %c0_25 = arith.constant 0 : index
    %19 = vector.load %arg2[%c3, %c0_24, %c0_25] : memref<16x8x8xf32, #tpu.memory_space<vmem>>, vector<1x8x8xf32>
    %20 = vector.shape_cast %19 : vector<1x8x8xf32> to vector<8x8xf32>
    %cst_26 = arith.constant dense<0.000000e+00> : vector<55x8xf32>
    %21 = tpu.matmul %18, %20, %cst_26 {dimension_numbers = #tpu.dot_dimension_numbers<[1], [0], [0], [1], [0, 0, 1, 1], [], []>} : vector<55x8xf32>, vector<8x8xf32>, vector<55x8xf32> -> vector<55x8xf32>
    %22 = arith.addf %16, %21 : vector<55x8xf32>
    %c0_27 = arith.constant 0 : index
    %c2_28 = arith.constant 2 : index
    %c0_29 = arith.constant 0 : index
    %c0_30 = arith.constant 0 : index
    %23 = vector.load %arg1[%c0_27, %c2_28, %c0_29, %c0_30] : memref<1x4x64x8xf32, #tpu.memory_space<vmem>>, vector<1x1x55x8xf32>
    %24 = vector.shape_cast %23 : vector<1x1x55x8xf32> to vector<55x8xf32>
    %c4 = arith.constant 4 : index
    %c0_31 = arith.constant 0 : index
    %c0_32 = arith.constant 0 : index
    %25 = vector.load %arg2[%c4, %c0_31, %c0_32] : memref<16x8x8xf32, #tpu.memory_space<vmem>>, vector<1x8x8xf32>
    %26 = vector.shape_cast %25 : vector<1x8x8xf32> to vector<8x8xf32>
    %cst_33 = arith.constant dense<0.000000e+00> : vector<55x8xf32>
    %27 = tpu.matmul %24, %26, %cst_33 {dimension_numbers = #tpu.dot_dimension_numbers<[1], [0], [0], [1], [0, 0, 1, 1], [], []>} : vector<55x8xf32>, vector<8x8xf32>, vector<55x8xf32> -> vector<55x8xf32>
    %28 = arith.addf %22, %27 : vector<55x8xf32>
    %c0_34 = arith.constant 0 : index
    %c3_35 = arith.constant 3 : index
    %c0_36 = arith.constant 0 : index
    %c0_37 = arith.constant 0 : index
    %29 = vector.load %arg1[%c0_34, %c3_35, %c0_36, %c0_37] : memref<1x4x64x8xf32, #tpu.memory_space<vmem>>, vector<1x1x55x8xf32>
    %30 = vector.shape_cast %29 : vector<1x1x55x8xf32> to vector<55x8xf32>
    %c5 = arith.constant 5 : index
    %c0_38 = arith.constant 0 : index
    %c0_39 = arith.constant 0 : index
    %31 = vector.load %arg2[%c5, %c0_38, %c0_39] : memref<16x8x8xf32, #tpu.memory_space<vmem>>, vector<1x8x8xf32>
    %32 = vector.shape_cast %31 : vector<1x8x8xf32> to vector<8x8xf32>
    %cst_40 = arith.constant dense<0.000000e+00> : vector<55x8xf32>
    %33 = tpu.matmul %30, %32, %cst_40 {dimension_numbers = #tpu.dot_dimension_numbers<[1], [0], [0], [1], [0, 0, 1, 1], [], []>} : vector<55x8xf32>, vector<8x8xf32>, vector<55x8xf32> -> vector<55x8xf32>
    %34 = arith.addf %28, %33 : vector<55x8xf32>
    %c0_41 = arith.constant 0 : index
    %c2_42 = arith.constant 2 : index
    %c1_43 = arith.constant 1 : index
    %c0_44 = arith.constant 0 : index
    %35 = vector.load %arg1[%c0_41, %c2_42, %c1_43, %c0_44] : memref<1x4x64x8xf32, #tpu.memory_space<vmem>>, vector<1x1x55x8xf32>
    %36 = vector.shape_cast %35 : vector<1x1x55x8xf32> to vector<55x8xf32>
    %c6 = arith.constant 6 : index
    %c0_45 = arith.constant 0 : index
    %c0_46 = arith.constant 0 : index
    %37 = vector.load %arg2[%c6, %c0_45, %c0_46] : memref<16x8x8xf32, #tpu.memory_space<vmem>>, vector<1x8x8xf32>
    %38 = vector.shape_cast %37 : vector<1x8x8xf32> to vector<8x8xf32>
    %cst_47 = arith.constant dense<0.000000e+00> : vector<55x8xf32>
    %39 = tpu.matmul %36, %38, %cst_47 {dimension_numbers = #tpu.dot_dimension_numbers<[1], [0], [0], [1], [0, 0, 1, 1], [], []>} : vector<55x8xf32>, vector<8x8xf32>, vector<55x8xf32> -> vector<55x8xf32>
    %40 = arith.addf %34, %39 : vector<55x8xf32>
    %c0_48 = arith.constant 0 : index
    %c3_49 = arith.constant 3 : index
    %c1_50 = arith.constant 1 : index
    %c0_51 = arith.constant 0 : index
    %41 = vector.load %arg1[%c0_48, %c3_49, %c1_50, %c0_51] : memref<1x4x64x8xf32, #tpu.memory_space<vmem>>, vector<1x1x55x8xf32>
    %42 = vector.shape_cast %41 : vector<1x1x55x8xf32> to vector<55x8xf32>
    %c7 = arith.constant 7 : index
    %c0_52 = arith.constant 0 : index
    %c0_53 = arith.constant 0 : index
    %43 = vector.load %arg2[%c7, %c0_52, %c0_53] : memref<16x8x8xf32, #tpu.memory_space<vmem>>, vector<1x8x8xf32>
    %44 = vector.shape_cast %43 : vector<1x8x8xf32> to vector<8x8xf32>
    %cst_54 = arith.constant dense<0.000000e+00> : vector<55x8xf32>
    %45 = tpu.matmul %42, %44, %cst_54 {dimension_numbers = #tpu.dot_dimension_numbers<[1], [0], [0], [1], [0, 0, 1, 1], [], []>} : vector<55x8xf32>, vector<8x8xf32>, vector<55x8xf32> -> vector<55x8xf32>
    %46 = arith.addf %40, %45 : vector<55x8xf32>
    %c0_55 = arith.constant 0 : index
    %c0_56 = arith.constant 0 : index
    %c8 = arith.constant 8 : index
    %c0_57 = arith.constant 0 : index
    %47 = vector.load %arg1[%c0_55, %c0_56, %c8, %c0_57] : memref<1x4x64x8xf32, #tpu.memory_space<vmem>>, vector<1x1x55x8xf32>
    %48 = vector.shape_cast %47 : vector<1x1x55x8xf32> to vector<55x8xf32>
    %c8_58 = arith.constant 8 : index
    %c0_59 = arith.constant 0 : index
    %c0_60 = arith.constant 0 : index
    %49 = vector.load %arg2[%c8_58, %c0_59, %c0_60] : memref<16x8x8xf32, #tpu.memory_space<vmem>>, vector<1x8x8xf32>
    %50 = vector.shape_cast %49 : vector<1x8x8xf32> to vector<8x8xf32>
    %cst_61 = arith.constant dense<0.000000e+00> : vector<55x8xf32>
    %51 = tpu.matmul %48, %50, %cst_61 {dimension_numbers = #tpu.dot_dimension_numbers<[1], [0], [0], [1], [0, 0, 1, 1], [], []>} : vector<55x8xf32>, vector<8x8xf32>, vector<55x8xf32> -> vector<55x8xf32>
    %52 = arith.addf %46, %51 : vector<55x8xf32>
    %c0_62 = arith.constant 0 : index
    %c1_63 = arith.constant 1 : index
    %c8_64 = arith.constant 8 : index
    %c0_65 = arith.constant 0 : index
    %53 = vector.load %arg1[%c0_62, %c1_63, %c8_64, %c0_65] : memref<1x4x64x8xf32, #tpu.memory_space<vmem>>, vector<1x1x55x8xf32>
    %54 = vector.shape_cast %53 : vector<1x1x55x8xf32> to vector<55x8xf32>
    %c9 = arith.constant 9 : index
    %c0_66 = arith.constant 0 : index
    %c0_67 = arith.constant 0 : index
    %55 = vector.load %arg2[%c9, %c0_66, %c0_67] : memref<16x8x8xf32, #tpu.memory_space<vmem>>, vector<1x8x8xf32>
    %56 = vector.shape_cast %55 : vector<1x8x8xf32> to vector<8x8xf32>
    %cst_68 = arith.constant dense<0.000000e+00> : vector<55x8xf32>
    %57 = tpu.matmul %54, %56, %cst_68 {dimension_numbers = #tpu.dot_dimension_numbers<[1], [0], [0], [1], [0, 0, 1, 1], [], []>} : vector<55x8xf32>, vector<8x8xf32>, vector<55x8xf32> -> vector<55x8xf32>
    %58 = arith.addf %52, %57 : vector<55x8xf32>
    %c0_69 = arith.constant 0 : index
    %c0_70 = arith.constant 0 : index
    %c9_71 = arith.constant 9 : index
    %c0_72 = arith.constant 0 : index
    %59 = vector.load %arg1[%c0_69, %c0_70, %c9_71, %c0_72] : memref<1x4x64x8xf32, #tpu.memory_space<vmem>>, vector<1x1x55x8xf32>
    %60 = vector.shape_cast %59 : vector<1x1x55x8xf32> to vector<55x8xf32>
    %c10 = arith.constant 10 : index
    %c0_73 = arith.constant 0 : index
    %c0_74 = arith.constant 0 : index
    %61 = vector.load %arg2[%c10, %c0_73, %c0_74] : memref<16x8x8xf32, #tpu.memory_space<vmem>>, vector<1x8x8xf32>
    %62 = vector.shape_cast %61 : vector<1x8x8xf32> to vector<8x8xf32>
    %cst_75 = arith.constant dense<0.000000e+00> : vector<55x8xf32>
    %63 = tpu.matmul %60, %62, %cst_75 {dimension_numbers = #tpu.dot_dimension_numbers<[1], [0], [0], [1], [0, 0, 1, 1], [], []>} : vector<55x8xf32>, vector<8x8xf32>, vector<55x8xf32> -> vector<55x8xf32>
    %64 = arith.addf %58, %63 : vector<55x8xf32>
    %c0_76 = arith.constant 0 : index
    %c1_77 = arith.constant 1 : index
    %c9_78 = arith.constant 9 : index
    %c0_79 = arith.constant 0 : index
    %65 = vector.load %arg1[%c0_76, %c1_77, %c9_78, %c0_79] : memref<1x4x64x8xf32, #tpu.memory_space<vmem>>, vector<1x1x55x8xf32>
    %66 = vector.shape_cast %65 : vector<1x1x55x8xf32> to vector<55x8xf32>
    %c11 = arith.constant 11 : index
    %c0_80 = arith.constant 0 : index
    %c0_81 = arith.constant 0 : index
    %67 = vector.load %arg2[%c11, %c0_80, %c0_81] : memref<16x8x8xf32, #tpu.memory_space<vmem>>, vector<1x8x8xf32>
    %68 = vector.shape_cast %67 : vector<1x8x8xf32> to vector<8x8xf32>
    %cst_82 = arith.constant dense<0.000000e+00> : vector<55x8xf32>
    %69 = tpu.matmul %66, %68, %cst_82 {dimension_numbers = #tpu.dot_dimension_numbers<[1], [0], [0], [1], [0, 0, 1, 1], [], []>} : vector<55x8xf32>, vector<8x8xf32>, vector<55x8xf32> -> vector<55x8xf32>
    %70 = arith.addf %64, %69 : vector<55x8xf32>
    %c0_83 = arith.constant 0 : index
    %c2_84 = arith.constant 2 : index
    %c8_85 = arith.constant 8 : index
    %c0_86 = arith.constant 0 : index
    %71 = vector.load %arg1[%c0_83, %c2_84, %c8_85, %c0_86] : memref<1x4x64x8xf32, #tpu.memory_space<vmem>>, vector<1x1x55x8xf32>
    %72 = vector.shape_cast %71 : vector<1x1x55x8xf32> to vector<55x8xf32>
    %c12 = arith.constant 12 : index
    %c0_87 = arith.constant 0 : index
    %c0_88 = arith.constant 0 : index
    %73 = vector.load %arg2[%c12, %c0_87, %c0_88] : memref<16x8x8xf32, #tpu.memory_space<vmem>>, vector<1x8x8xf32>
    %74 = vector.shape_cast %73 : vector<1x8x8xf32> to vector<8x8xf32>
    %cst_89 = arith.constant dense<0.000000e+00> : vector<55x8xf32>
    %75 = tpu.matmul %72, %74, %cst_89 {dimension_numbers = #tpu.dot_dimension_numbers<[1], [0], [0], [1], [0, 0, 1, 1], [], []>} : vector<55x8xf32>, vector<8x8xf32>, vector<55x8xf32> -> vector<55x8xf32>
    %76 = arith.addf %70, %75 : vector<55x8xf32>
    %c0_90 = arith.constant 0 : index
    %c3_91 = arith.constant 3 : index
    %c8_92 = arith.constant 8 : index
    %c0_93 = arith.constant 0 : index
    %77 = vector.load %arg1[%c0_90, %c3_91, %c8_92, %c0_93] : memref<1x4x64x8xf32, #tpu.memory_space<vmem>>, vector<1x1x55x8xf32>
    %78 = vector.shape_cast %77 : vector<1x1x55x8xf32> to vector<55x8xf32>
    %c13 = arith.constant 13 : index
    %c0_94 = arith.constant 0 : index
    %c0_95 = arith.constant 0 : index
    %79 = vector.load %arg2[%c13, %c0_94, %c0_95] : memref<16x8x8xf32, #tpu.memory_space<vmem>>, vector<1x8x8xf32>
    %80 = vector.shape_cast %79 : vector<1x8x8xf32> to vector<8x8xf32>
    %cst_96 = arith.constant dense<0.000000e+00> : vector<55x8xf32>
    %81 = tpu.matmul %78, %80, %cst_96 {dimension_numbers = #tpu.dot_dimension_numbers<[1], [0], [0], [1], [0, 0, 1, 1], [], []>} : vector<55x8xf32>, vector<8x8xf32>, vector<55x8xf32> -> vector<55x8xf32>
    %82 = arith.addf %76, %81 : vector<55x8xf32>
    %c0_97 = arith.constant 0 : index
    %c2_98 = arith.constant 2 : index
    %c9_99 = arith.constant 9 : index
    %c0_100 = arith.constant 0 : index
    %83 = vector.load %arg1[%c0_97, %c2_98, %c9_99, %c0_100] : memref<1x4x64x8xf32, #tpu.memory_space<vmem>>, vector<1x1x55x8xf32>
    %84 = vector.shape_cast %83 : vector<1x1x55x8xf32> to vector<55x8xf32>
    %c14 = arith.constant 14 : index
    %c0_101 = arith.constant 0 : index
    %c0_102 = arith.constant 0 : index
    %85 = vector.load %arg2[%c14, %c0_101, %c0_102] : memref<16x8x8xf32, #tpu.memory_space<vmem>>, vector<1x8x8xf32>
    %86 = vector.shape_cast %85 : vector<1x8x8xf32> to vector<8x8xf32>
    %cst_103 = arith.constant dense<0.000000e+00> : vector<55x8xf32>
    %87 = tpu.matmul %84, %86, %cst_103 {dimension_numbers = #tpu.dot_dimension_numbers<[1], [0], [0], [1], [0, 0, 1, 1], [], []>} : vector<55x8xf32>, vector<8x8xf32>, vector<55x8xf32> -> vector<55x8xf32>
    %88 = arith.addf %82, %87 : vector<55x8xf32>
    %c0_104 = arith.constant 0 : index
    %c3_105 = arith.constant 3 : index
    %c9_106 = arith.constant 9 : index
    %c0_107 = arith.constant 0 : index
    %89 = vector.load %arg1[%c0_104, %c3_105, %c9_106, %c0_107] : memref<1x4x64x8xf32, #tpu.memory_space<vmem>>, vector<1x1x55x8xf32>
    %90 = vector.shape_cast %89 : vector<1x1x55x8xf32> to vector<55x8xf32>
    %c15 = arith.constant 15 : index
    %c0_108 = arith.constant 0 : index
    %c0_109 = arith.constant 0 : index
    %91 = vector.load %arg2[%c15, %c0_108, %c0_109] : memref<16x8x8xf32, #tpu.memory_space<vmem>>, vector<1x8x8xf32>
    %92 = vector.shape_cast %91 : vector<1x8x8xf32> to vector<8x8xf32>
    %cst_110 = arith.constant dense<0.000000e+00> : vector<55x8xf32>
    %93 = tpu.matmul %90, %92, %cst_110 {dimension_numbers = #tpu.dot_dimension_numbers<[1], [0], [0], [1], [0, 0, 1, 1], [], []>} : vector<55x8xf32>, vector<8x8xf32>, vector<55x8xf32> -> vector<55x8xf32>
    %94 = arith.addf %88, %93 : vector<55x8xf32>
    %c0_111 = arith.constant 0 : index
    %c0_112 = arith.constant 0 : index
    %95 = vector.load %arg3[%c0_111, %c0_112] : memref<1x8xf32, #tpu.memory_space<vmem>>, vector<1x8xf32>
    %96 = vector.broadcast %95 : vector<1x8xf32> to vector<55x8xf32>
    %97 = arith.addf %94, %96 : vector<55x8xf32>
    %c0_113 = arith.constant 0 : index
    %c0_114 = arith.constant 0 : index
    %98 = vector.load %arg15[%c0_113, %c0_114] : memref<55x8xf32, #tpu.memory_space<vmem>>, vector<55x8xf32>
    tpu.vector_store %arg15[%c0_113, %c0_114], %97 {strides = array<i32>} : memref<55x8xf32, #tpu.memory_space<vmem>>, vector<55x8xf32>,
    %c0_115 = arith.constant 0 : index
    %c0_116 = arith.constant 0 : index
    %99 = vector.load %arg15[%c0_115, %c0_116] : memref<55x8xf32, #tpu.memory_space<vmem>>, vector<37x8xf32>
    %c0_117 = arith.constant 0 : index
    %c0_118 = arith.constant 0 : index
    %c0_119 = arith.constant 0 : index
    %100 = vector.load %arg4[%c0_117, %c0_118, %c0_119] : memref<9x8x16xf32, #tpu.memory_space<vmem>>, vector<1x8x16xf32>
    %101 = vector.shape_cast %100 : vector<1x8x16xf32> to vector<8x16xf32>
    %cst_120 = arith.constant dense<0.000000e+00> : vector<37x16xf32>
    %102 = tpu.matmul %99, %101, %cst_120 {dimension_numbers = #tpu.dot_dimension_numbers<[1], [0], [0], [1], [0, 0, 1, 1], [], []>} : vector<37x8xf32>, vector<8x16xf32>, vector<37x16xf32> -> vector<37x16xf32>
    %c1_121 = arith.constant 1 : index
    %c0_122 = arith.constant 0 : index
    %103 = vector.load %arg15[%c1_121, %c0_122] : memref<55x8xf32, #tpu.memory_space<vmem>>, vector<37x8xf32>
    %c1_123 = arith.constant 1 : index
    %c0_124 = arith.constant 0 : index
    %c0_125 = arith.constant 0 : index
    %104 = vector.load %arg4[%c1_123, %c0_124, %c0_125] : memref<9x8x16xf32, #tpu.memory_space<vmem>>, vector<1x8x16xf32>
    %105 = vector.shape_cast %104 : vector<1x8x16xf32> to vector<8x16xf32>
    %cst_126 = arith.constant dense<0.000000e+00> : vector<37x16xf32>
    %106 = tpu.matmul %103, %105, %cst_126 {dimension_numbers = #tpu.dot_dimension_numbers<[1], [0], [0], [1], [0, 0, 1, 1], [], []>} : vector<37x8xf32>, vector<8x16xf32>, vector<37x16xf32> -> vector<37x16xf32>
    %107 = arith.addf %102, %106 : vector<37x16xf32>
    %c2_127 = arith.constant 2 : index
    %c0_128 = arith.constant 0 : index
    %108 = vector.load %arg15[%c2_127, %c0_128] : memref<55x8xf32, #tpu.memory_space<vmem>>, vector<37x8xf32>
    %c2_129 = arith.constant 2 : index
    %c0_130 = arith.constant 0 : index
    %c0_131 = arith.constant 0 : index
    %109 = vector.load %arg4[%c2_129, %c0_130, %c0_131] : memref<9x8x16xf32, #tpu.memory_space<vmem>>, vector<1x8x16xf32>
    %110 = vector.shape_cast %109 : vector<1x8x16xf32> to vector<8x16xf32>
    %cst_132 = arith.constant dense<0.000000e+00> : vector<37x16xf32>
    %111 = tpu.matmul %108, %110, %cst_132 {dimension_numbers = #tpu.dot_dimension_numbers<[1], [0], [0], [1], [0, 0, 1, 1], [], []>} : vector<37x8xf32>, vector<8x16xf32>, vector<37x16xf32> -> vector<37x16xf32>
    %112 = arith.addf %107, %111 : vector<37x16xf32>
    %c8_133 = arith.constant 8 : index
    %c0_134 = arith.constant 0 : index
    %113 = vector.load %arg15[%c8_133, %c0_134] : memref<55x8xf32, #tpu.memory_space<vmem>>, vector<37x8xf32>
    %c3_135 = arith.constant 3 : index
    %c0_136 = arith.constant 0 : index
    %c0_137 = arith.constant 0 : index
    %114 = vector.load %arg4[%c3_135, %c0_136, %c0_137] : memref<9x8x16xf32, #tpu.memory_space<vmem>>, vector<1x8x16xf32>
    %115 = vector.shape_cast %114 : vector<1x8x16xf32> to vector<8x16xf32>
    %cst_138 = arith.constant dense<0.000000e+00> : vector<37x16xf32>
    %116 = tpu.matmul %113, %115, %cst_138 {dimension_numbers = #tpu.dot_dimension_numbers<[1], [0], [0], [1], [0, 0, 1, 1], [], []>} : vector<37x8xf32>, vector<8x16xf32>, vector<37x16xf32> -> vector<37x16xf32>
    %117 = arith.addf %112, %116 : vector<37x16xf32>
    %c9_139 = arith.constant 9 : index
    %c0_140 = arith.constant 0 : index
    %118 = vector.load %arg15[%c9_139, %c0_140] : memref<55x8xf32, #tpu.memory_space<vmem>>, vector<37x8xf32>
    %c4_141 = arith.constant 4 : index
    %c0_142 = arith.constant 0 : index
    %c0_143 = arith.constant 0 : index
    %119 = vector.load %arg4[%c4_141, %c0_142, %c0_143] : memref<9x8x16xf32, #tpu.memory_space<vmem>>, vector<1x8x16xf32>
    %120 = vector.shape_cast %119 : vector<1x8x16xf32> to vector<8x16xf32>
    %cst_144 = arith.constant dense<0.000000e+00> : vector<37x16xf32>
    %121 = tpu.matmul %118, %120, %cst_144 {dimension_numbers = #tpu.dot_dimension_numbers<[1], [0], [0], [1], [0, 0, 1, 1], [], []>} : vector<37x8xf32>, vector<8x16xf32>, vector<37x16xf32> -> vector<37x16xf32>
    %122 = arith.addf %117, %121 : vector<37x16xf32>
    %c10_145 = arith.constant 10 : index
    %c0_146 = arith.constant 0 : index
    %123 = vector.load %arg15[%c10_145, %c0_146] : memref<55x8xf32, #tpu.memory_space<vmem>>, vector<37x8xf32>
    %c5_147 = arith.constant 5 : index
    %c0_148 = arith.constant 0 : index
    %c0_149 = arith.constant 0 : index
    %124 = vector.load %arg4[%c5_147, %c0_148, %c0_149] : memref<9x8x16xf32, #tpu.memory_space<vmem>>, vector<1x8x16xf32>
    %125 = vector.shape_cast %124 : vector<1x8x16xf32> to vector<8x16xf32>
    %cst_150 = arith.constant dense<0.000000e+00> : vector<37x16xf32>
    %126 = tpu.matmul %123, %125, %cst_150 {dimension_numbers = #tpu.dot_dimension_numbers<[1], [0], [0], [1], [0, 0, 1, 1], [], []>} : vector<37x8xf32>, vector<8x16xf32>, vector<37x16xf32> -> vector<37x16xf32>
    %127 = arith.addf %122, %126 : vector<37x16xf32>
    %c16 = arith.constant 16 : index
    %c0_151 = arith.constant 0 : index
    %128 = vector.load %arg15[%c16, %c0_151] : memref<55x8xf32, #tpu.memory_space<vmem>>, vector<37x8xf32>
    %c6_152 = arith.constant 6 : index
    %c0_153 = arith.constant 0 : index
    %c0_154 = arith.constant 0 : index
    %129 = vector.load %arg4[%c6_152, %c0_153, %c0_154] : memref<9x8x16xf32, #tpu.memory_space<vmem>>, vector<1x8x16xf32>
    %130 = vector.shape_cast %129 : vector<1x8x16xf32> to vector<8x16xf32>
    %cst_155 = arith.constant dense<0.000000e+00> : vector<37x16xf32>
    %131 = tpu.matmul %128, %130, %cst_155 {dimension_numbers = #tpu.dot_dimension_numbers<[1], [0], [0], [1], [0, 0, 1, 1], [], []>} : vector<37x8xf32>, vector<8x16xf32>, vector<37x16xf32> -> vector<37x16xf32>
    %132 = arith.addf %127, %131 : vector<37x16xf32>
    %c17 = arith.constant 17 : index
    %c0_156 = arith.constant 0 : index
    %133 = vector.load %arg15[%c17, %c0_156] : memref<55x8xf32, #tpu.memory_space<vmem>>, vector<37x8xf32>
    %c7_157 = arith.constant 7 : index
    %c0_158 = arith.constant 0 : index
    %c0_159 = arith.constant 0 : index
    %134 = vector.load %arg4[%c7_157, %c0_158, %c0_159] : memref<9x8x16xf32, #tpu.memory_space<vmem>>, vector<1x8x16xf32>
    %135 = vector.shape_cast %134 : vector<1x8x16xf32> to vector<8x16xf32>
    %cst_160 = arith.constant dense<0.000000e+00> : vector<37x16xf32>
    %136 = tpu.matmul %133, %135, %cst_160 {dimension_numbers = #tpu.dot_dimension_numbers<[1], [0], [0], [1], [0, 0, 1, 1], [], []>} : vector<37x8xf32>, vector<8x16xf32>, vector<37x16xf32> -> vector<37x16xf32>
    %137 = arith.addf %132, %136 : vector<37x16xf32>
    %c18 = arith.constant 18 : index
    %c0_161 = arith.constant 0 : index
    %138 = vector.load %arg15[%c18, %c0_161] : memref<55x8xf32, #tpu.memory_space<vmem>>, vector<37x8xf32>
    %c8_162 = arith.constant 8 : index
    %c0_163 = arith.constant 0 : index
    %c0_164 = arith.constant 0 : index
    %139 = vector.load %arg4[%c8_162, %c0_163, %c0_164] : memref<9x8x16xf32, #tpu.memory_space<vmem>>, vector<1x8x16xf32>
    %140 = vector.shape_cast %139 : vector<1x8x16xf32> to vector<8x16xf32>
    %cst_165 = arith.constant dense<0.000000e+00> : vector<37x16xf32>
    %141 = tpu.matmul %138, %140, %cst_165 {dimension_numbers = #tpu.dot_dimension_numbers<[1], [0], [0], [1], [0, 0, 1, 1], [], []>} : vector<37x8xf32>, vector<8x16xf32>, vector<37x16xf32> -> vector<37x16xf32>
    %142 = arith.addf %137, %141 : vector<37x16xf32>
    %c0_166 = arith.constant 0 : index
    %c0_167 = arith.constant 0 : index
    %143 = vector.load %arg5[%c0_166, %c0_167] : memref<1x16xf32, #tpu.memory_space<vmem>>, vector<1x16xf32>
    %144 = vector.broadcast %143 : vector<1x16xf32> to vector<37x16xf32>
    %145 = arith.addf %142, %144 : vector<37x16xf32>
    %c0_168 = arith.constant 0 : index
    %c0_169 = arith.constant 0 : index
    %146 = vector.load %arg16[%c0_168, %c0_169] : memref<37x16xf32, #tpu.memory_space<vmem>>, vector<37x16xf32>
    tpu.vector_store %arg16[%c0_168, %c0_169], %145 {strides = array<i32>} : memref<37x16xf32, #tpu.memory_space<vmem>>, vector<37x16xf32>,
    %c0_170 = arith.constant 0 : index
    %c0_171 = arith.constant 0 : index
    %147 = vector.load %arg16[%c0_170, %c0_171] : memref<37x16xf32, #tpu.memory_space<vmem>>, vector<1x16xf32>
    %c0_172 = arith.constant 0 : index
    %c0_173 = arith.constant 0 : index
    %c0_174 = arith.constant 0 : index
    %148 = vector.load %arg6[%c0_172, %c0_173, %c0_174] : memref<25x16x32xf32, #tpu.memory_space<vmem>>, vector<1x16x32xf32>
    %149 = vector.shape_cast %148 : vector<1x16x32xf32> to vector<16x32xf32>
    %cst_175 = arith.constant dense<0.000000e+00> : vector<1x32xf32>
    %150 = tpu.matmul %147, %149, %cst_175 {dimension_numbers = #tpu.dot_dimension_numbers<[1], [0], [0], [1], [0, 0, 1, 1], [], []>} : vector<1x16xf32>, vector<16x32xf32>, vector<1x32xf32> -> vector<1x32xf32>
    %c1_176 = arith.constant 1 : index
    %c0_177 = arith.constant 0 : index
    %151 = vector.load %arg16[%c1_176, %c0_177] : memref<37x16xf32, #tpu.memory_space<vmem>>, vector<1x16xf32>
    %c1_178 = arith.constant 1 : index
    %c0_179 = arith.constant 0 : index
    %c0_180 = arith.constant 0 : index
    %152 = vector.load %arg6[%c1_178, %c0_179, %c0_180] : memref<25x16x32xf32, #tpu.memory_space<vmem>>, vector<1x16x32xf32>
    %153 = vector.shape_cast %152 : vector<1x16x32xf32> to vector<16x32xf32>
    %cst_181 = arith.constant dense<0.000000e+00> : vector<1x32xf32>
    %154 = tpu.matmul %151, %153, %cst_181 {dimension_numbers = #tpu.dot_dimension_numbers<[1], [0], [0], [1], [0, 0, 1, 1], [], []>} : vector<1x16xf32>, vector<16x32xf32>, vector<1x32xf32> -> vector<1x32xf32>
    %155 = arith.addf %150, %154 : vector<1x32xf32>
    %c2_182 = arith.constant 2 : index
    %c0_183 = arith.constant 0 : index
    %156 = vector.load %arg16[%c2_182, %c0_183] : memref<37x16xf32, #tpu.memory_space<vmem>>, vector<1x16xf32>
    %c2_184 = arith.constant 2 : index
    %c0_185 = arith.constant 0 : index
    %c0_186 = arith.constant 0 : index
    %157 = vector.load %arg6[%c2_184, %c0_185, %c0_186] : memref<25x16x32xf32, #tpu.memory_space<vmem>>, vector<1x16x32xf32>
    %158 = vector.shape_cast %157 : vector<1x16x32xf32> to vector<16x32xf32>
    %cst_187 = arith.constant dense<0.000000e+00> : vector<1x32xf32>
    %159 = tpu.matmul %156, %158, %cst_187 {dimension_numbers = #tpu.dot_dimension_numbers<[1], [0], [0], [1], [0, 0, 1, 1], [], []>} : vector<1x16xf32>, vector<16x32xf32>, vector<1x32xf32> -> vector<1x32xf32>
    %160 = arith.addf %155, %159 : vector<1x32xf32>
    %c3_188 = arith.constant 3 : index
    %c0_189 = arith.constant 0 : index
    %161 = vector.load %arg16[%c3_188, %c0_189] : memref<37x16xf32, #tpu.memory_space<vmem>>, vector<1x16xf32>
    %c3_190 = arith.constant 3 : index
    %c0_191 = arith.constant 0 : index
    %c0_192 = arith.constant 0 : index
    %162 = vector.load %arg6[%c3_190, %c0_191, %c0_192] : memref<25x16x32xf32, #tpu.memory_space<vmem>>, vector<1x16x32xf32>
    %163 = vector.shape_cast %162 : vector<1x16x32xf32> to vector<16x32xf32>
    %cst_193 = arith.constant dense<0.000000e+00> : vector<1x32xf32>
    %164 = tpu.matmul %161, %163, %cst_193 {dimension_numbers = #tpu.dot_dimension_numbers<[1], [0], [0], [1], [0, 0, 1, 1], [], []>} : vector<1x16xf32>, vector<16x32xf32>, vector<1x32xf32> -> vector<1x32xf32>
    %165 = arith.addf %160, %164 : vector<1x32xf32>
    %c4_194 = arith.constant 4 : index
    %c0_195 = arith.constant 0 : index
    %166 = vector.load %arg16[%c4_194, %c0_195] : memref<37x16xf32, #tpu.memory_space<vmem>>, vector<1x16xf32>
    %c4_196 = arith.constant 4 : index
    %c0_197 = arith.constant 0 : index
    %c0_198 = arith.constant 0 : index
    %167 = vector.load %arg6[%c4_196, %c0_197, %c0_198] : memref<25x16x32xf32, #tpu.memory_space<vmem>>, vector<1x16x32xf32>
    %168 = vector.shape_cast %167 : vector<1x16x32xf32> to vector<16x32xf32>
    %cst_199 = arith.constant dense<0.000000e+00> : vector<1x32xf32>
    %169 = tpu.matmul %166, %168, %cst_199 {dimension_numbers = #tpu.dot_dimension_numbers<[1], [0], [0], [1], [0, 0, 1, 1], [], []>} : vector<1x16xf32>, vector<16x32xf32>, vector<1x32xf32> -> vector<1x32xf32>
    %170 = arith.addf %165, %169 : vector<1x32xf32>
    %c8_200 = arith.constant 8 : index
    %c0_201 = arith.constant 0 : index
    %171 = vector.load %arg16[%c8_200, %c0_201] : memref<37x16xf32, #tpu.memory_space<vmem>>, vector<1x16xf32>
    %c5_202 = arith.constant 5 : index
    %c0_203 = arith.constant 0 : index
    %c0_204 = arith.constant 0 : index
    %172 = vector.load %arg6[%c5_202, %c0_203, %c0_204] : memref<25x16x32xf32, #tpu.memory_space<vmem>>, vector<1x16x32xf32>
    %173 = vector.shape_cast %172 : vector<1x16x32xf32> to vector<16x32xf32>
    %cst_205 = arith.constant dense<0.000000e+00> : vector<1x32xf32>
    %174 = tpu.matmul %171, %173, %cst_205 {dimension_numbers = #tpu.dot_dimension_numbers<[1], [0], [0], [1], [0, 0, 1, 1], [], []>} : vector<1x16xf32>, vector<16x32xf32>, vector<1x32xf32> -> vector<1x32xf32>
    %175 = arith.addf %170, %174 : vector<1x32xf32>
    %c9_206 = arith.constant 9 : index
    %c0_207 = arith.constant 0 : index
    %176 = vector.load %arg16[%c9_206, %c0_207] : memref<37x16xf32, #tpu.memory_space<vmem>>, vector<1x16xf32>
    %c6_208 = arith.constant 6 : index
    %c0_209 = arith.constant 0 : index
    %c0_210 = arith.constant 0 : index
    %177 = vector.load %arg6[%c6_208, %c0_209, %c0_210] : memref<25x16x32xf32, #tpu.memory_space<vmem>>, vector<1x16x32xf32>
    %178 = vector.shape_cast %177 : vector<1x16x32xf32> to vector<16x32xf32>
    %cst_211 = arith.constant dense<0.000000e+00> : vector<1x32xf32>
    %179 = tpu.matmul %176, %178, %cst_211 {dimension_numbers = #tpu.dot_dimension_numbers<[1], [0], [0], [1], [0, 0, 1, 1], [], []>} : vector<1x16xf32>, vector<16x32xf32>, vector<1x32xf32> -> vector<1x32xf32>
    %180 = arith.addf %175, %179 : vector<1x32xf32>
    %c10_212 = arith.constant 10 : index
    %c0_213 = arith.constant 0 : index
    %181 = vector.load %arg16[%c10_212, %c0_213] : memref<37x16xf32, #tpu.memory_space<vmem>>, vector<1x16xf32>
    %c7_214 = arith.constant 7 : index
    %c0_215 = arith.constant 0 : index
    %c0_216 = arith.constant 0 : index
    %182 = vector.load %arg6[%c7_214, %c0_215, %c0_216] : memref<25x16x32xf32, #tpu.memory_space<vmem>>, vector<1x16x32xf32>
    %183 = vector.shape_cast %182 : vector<1x16x32xf32> to vector<16x32xf32>
    %cst_217 = arith.constant dense<0.000000e+00> : vector<1x32xf32>
    %184 = tpu.matmul %181, %183, %cst_217 {dimension_numbers = #tpu.dot_dimension_numbers<[1], [0], [0], [1], [0, 0, 1, 1], [], []>} : vector<1x16xf32>, vector<16x32xf32>, vector<1x32xf32> -> vector<1x32xf32>
    %185 = arith.addf %180, %184 : vector<1x32xf32>
    %c11_218 = arith.constant 11 : index
    %c0_219 = arith.constant 0 : index
    %186 = vector.load %arg16[%c11_218, %c0_219] : memref<37x16xf32, #tpu.memory_space<vmem>>, vector<1x16xf32>
    %c8_220 = arith.constant 8 : index
    %c0_221 = arith.constant 0 : index
    %c0_222 = arith.constant 0 : index
    %187 = vector.load %arg6[%c8_220, %c0_221, %c0_222] : memref<25x16x32xf32, #tpu.memory_space<vmem>>, vector<1x16x32xf32>
    %188 = vector.shape_cast %187 : vector<1x16x32xf32> to vector<16x32xf32>
    %cst_223 = arith.constant dense<0.000000e+00> : vector<1x32xf32>
    %189 = tpu.matmul %186, %188, %cst_223 {dimension_numbers = #tpu.dot_dimension_numbers<[1], [0], [0], [1], [0, 0, 1, 1], [], []>} : vector<1x16xf32>, vector<16x32xf32>, vector<1x32xf32> -> vector<1x32xf32>
    %190 = arith.addf %185, %189 : vector<1x32xf32>
    %c12_224 = arith.constant 12 : index
    %c0_225 = arith.constant 0 : index
    %191 = vector.load %arg16[%c12_224, %c0_225] : memref<37x16xf32, #tpu.memory_space<vmem>>, vector<1x16xf32>
    %c9_226 = arith.constant 9 : index
    %c0_227 = arith.constant 0 : index
    %c0_228 = arith.constant 0 : index
    %192 = vector.load %arg6[%c9_226, %c0_227, %c0_228] : memref<25x16x32xf32, #tpu.memory_space<vmem>>, vector<1x16x32xf32>
    %193 = vector.shape_cast %192 : vector<1x16x32xf32> to vector<16x32xf32>
    %cst_229 = arith.constant dense<0.000000e+00> : vector<1x32xf32>
    %194 = tpu.matmul %191, %193, %cst_229 {dimension_numbers = #tpu.dot_dimension_numbers<[1], [0], [0], [1], [0, 0, 1, 1], [], []>} : vector<1x16xf32>, vector<16x32xf32>, vector<1x32xf32> -> vector<1x32xf32>
    %195 = arith.addf %190, %194 : vector<1x32xf32>
    %c16_230 = arith.constant 16 : index
    %c0_231 = arith.constant 0 : index
    %196 = vector.load %arg16[%c16_230, %c0_231] : memref<37x16xf32, #tpu.memory_space<vmem>>, vector<1x16xf32>
    %c10_232 = arith.constant 10 : index
    %c0_233 = arith.constant 0 : index
    %c0_234 = arith.constant 0 : index
    %197 = vector.load %arg6[%c10_232, %c0_233, %c0_234] : memref<25x16x32xf32, #tpu.memory_space<vmem>>, vector<1x16x32xf32>
    %198 = vector.shape_cast %197 : vector<1x16x32xf32> to vector<16x32xf32>
    %cst_235 = arith.constant dense<0.000000e+00> : vector<1x32xf32>
    %199 = tpu.matmul %196, %198, %cst_235 {dimension_numbers = #tpu.dot_dimension_numbers<[1], [0], [0], [1], [0, 0, 1, 1], [], []>} : vector<1x16xf32>, vector<16x32xf32>, vector<1x32xf32> -> vector<1x32xf32>
    %200 = arith.addf %195, %199 : vector<1x32xf32>
    %c17_236 = arith.constant 17 : index
    %c0_237 = arith.constant 0 : index
    %201 = vector.load %arg16[%c17_236, %c0_237] : memref<37x16xf32, #tpu.memory_space<vmem>>, vector<1x16xf32>
    %c11_238 = arith.constant 11 : index
    %c0_239 = arith.constant 0 : index
    %c0_240 = arith.constant 0 : index
    %202 = vector.load %arg6[%c11_238, %c0_239, %c0_240] : memref<25x16x32xf32, #tpu.memory_space<vmem>>, vector<1x16x32xf32>
    %203 = vector.shape_cast %202 : vector<1x16x32xf32> to vector<16x32xf32>
    %cst_241 = arith.constant dense<0.000000e+00> : vector<1x32xf32>
    %204 = tpu.matmul %201, %203, %cst_241 {dimension_numbers = #tpu.dot_dimension_numbers<[1], [0], [0], [1], [0, 0, 1, 1], [], []>} : vector<1x16xf32>, vector<16x32xf32>, vector<1x32xf32> -> vector<1x32xf32>
    %205 = arith.addf %200, %204 : vector<1x32xf32>
    %c18_242 = arith.constant 18 : index
    %c0_243 = arith.constant 0 : index
    %206 = vector.load %arg16[%c18_242, %c0_243] : memref<37x16xf32, #tpu.memory_space<vmem>>, vector<1x16xf32>
    %c12_244 = arith.constant 12 : index
    %c0_245 = arith.constant 0 : index
    %c0_246 = arith.constant 0 : index
    %207 = vector.load %arg6[%c12_244, %c0_245, %c0_246] : memref<25x16x32xf32, #tpu.memory_space<vmem>>, vector<1x16x32xf32>
    %208 = vector.shape_cast %207 : vector<1x16x32xf32> to vector<16x32xf32>
    %cst_247 = arith.constant dense<0.000000e+00> : vector<1x32xf32>
    %209 = tpu.matmul %206, %208, %cst_247 {dimension_numbers = #tpu.dot_dimension_numbers<[1], [0], [0], [1], [0, 0, 1, 1], [], []>} : vector<1x16xf32>, vector<16x32xf32>, vector<1x32xf32> -> vector<1x32xf32>
    %210 = arith.addf %205, %209 : vector<1x32xf32>
    %c19 = arith.constant 19 : index
    %c0_248 = arith.constant 0 : index
    %211 = vector.load %arg16[%c19, %c0_248] : memref<37x16xf32, #tpu.memory_space<vmem>>, vector<1x16xf32>
    %c13_249 = arith.constant 13 : index
    %c0_250 = arith.constant 0 : index
    %c0_251 = arith.constant 0 : index
    %212 = vector.load %arg6[%c13_249, %c0_250, %c0_251] : memref<25x16x32xf32, #tpu.memory_space<vmem>>, vector<1x16x32xf32>
    %213 = vector.shape_cast %212 : vector<1x16x32xf32> to vector<16x32xf32>
    %cst_252 = arith.constant dense<0.000000e+00> : vector<1x32xf32>
    %214 = tpu.matmul %211, %213, %cst_252 {dimension_numbers = #tpu.dot_dimension_numbers<[1], [0], [0], [1], [0, 0, 1, 1], [], []>} : vector<1x16xf32>, vector<16x32xf32>, vector<1x32xf32> -> vector<1x32xf32>
    %215 = arith.addf %210, %214 : vector<1x32xf32>
    %c20 = arith.constant 20 : index
    %c0_253 = arith.constant 0 : index
    %216 = vector.load %arg16[%c20, %c0_253] : memref<37x16xf32, #tpu.memory_space<vmem>>, vector<1x16xf32>
    %c14_254 = arith.constant 14 : index
    %c0_255 = arith.constant 0 : index
    %c0_256 = arith.constant 0 : index
    %217 = vector.load %arg6[%c14_254, %c0_255, %c0_256] : memref<25x16x32xf32, #tpu.memory_space<vmem>>, vector<1x16x32xf32>
    %218 = vector.shape_cast %217 : vector<1x16x32xf32> to vector<16x32xf32>
    %cst_257 = arith.constant dense<0.000000e+00> : vector<1x32xf32>
    %219 = tpu.matmul %216, %218, %cst_257 {dimension_numbers = #tpu.dot_dimension_numbers<[1], [0], [0], [1], [0, 0, 1, 1], [], []>} : vector<1x16xf32>, vector<16x32xf32>, vector<1x32xf32> -> vector<1x32xf32>
    %220 = arith.addf %215, %219 : vector<1x32xf32>
    %c24 = arith.constant 24 : index
    %c0_258 = arith.constant 0 : index
    %221 = vector.load %arg16[%c24, %c0_258] : memref<37x16xf32, #tpu.memory_space<vmem>>, vector<1x16xf32>
    %c15_259 = arith.constant 15 : index
    %c0_260 = arith.constant 0 : index
    %c0_261 = arith.constant 0 : index
    %222 = vector.load %arg6[%c15_259, %c0_260, %c0_261] : memref<25x16x32xf32, #tpu.memory_space<vmem>>, vector<1x16x32xf32>
    %223 = vector.shape_cast %222 : vector<1x16x32xf32> to vector<16x32xf32>
    %cst_262 = arith.constant dense<0.000000e+00> : vector<1x32xf32>
    %224 = tpu.matmul %221, %223, %cst_262 {dimension_numbers = #tpu.dot_dimension_numbers<[1], [0], [0], [1], [0, 0, 1, 1], [], []>} : vector<1x16xf32>, vector<16x32xf32>, vector<1x32xf32> -> vector<1x32xf32>
    %225 = arith.addf %220, %224 : vector<1x32xf32>
    %c25 = arith.constant 25 : index
    %c0_263 = arith.constant 0 : index
    %226 = vector.load %arg16[%c25, %c0_263] : memref<37x16xf32, #tpu.memory_space<vmem>>, vector<1x16xf32>
    %c16_264 = arith.constant 16 : index
    %c0_265 = arith.constant 0 : index
    %c0_266 = arith.constant 0 : index
    %227 = vector.load %arg6[%c16_264, %c0_265, %c0_266] : memref<25x16x32xf32, #tpu.memory_space<vmem>>, vector<1x16x32xf32>
    %228 = vector.shape_cast %227 : vector<1x16x32xf32> to vector<16x32xf32>
    %cst_267 = arith.constant dense<0.000000e+00> : vector<1x32xf32>
    %229 = tpu.matmul %226, %228, %cst_267 {dimension_numbers = #tpu.dot_dimension_numbers<[1], [0], [0], [1], [0, 0, 1, 1], [], []>} : vector<1x16xf32>, vector<16x32xf32>, vector<1x32xf32> -> vector<1x32xf32>
    %230 = arith.addf %225, %229 : vector<1x32xf32>
    %c26 = arith.constant 26 : index
    %c0_268 = arith.constant 0 : index
    %231 = vector.load %arg16[%c26, %c0_268] : memref<37x16xf32, #tpu.memory_space<vmem>>, vector<1x16xf32>
    %c17_269 = arith.constant 17 : index
    %c0_270 = arith.constant 0 : index
    %c0_271 = arith.constant 0 : index
    %232 = vector.load %arg6[%c17_269, %c0_270, %c0_271] : memref<25x16x32xf32, #tpu.memory_space<vmem>>, vector<1x16x32xf32>
    %233 = vector.shape_cast %232 : vector<1x16x32xf32> to vector<16x32xf32>
    %cst_272 = arith.constant dense<0.000000e+00> : vector<1x32xf32>
    %234 = tpu.matmul %231, %233, %cst_272 {dimension_numbers = #tpu.dot_dimension_numbers<[1], [0], [0], [1], [0, 0, 1, 1], [], []>} : vector<1x16xf32>, vector<16x32xf32>, vector<1x32xf32> -> vector<1x32xf32>
    %235 = arith.addf %230, %234 : vector<1x32xf32>
    %c27 = arith.constant 27 : index
    %c0_273 = arith.constant 0 : index
    %236 = vector.load %arg16[%c27, %c0_273] : memref<37x16xf32, #tpu.memory_space<vmem>>, vector<1x16xf32>
    %c18_274 = arith.constant 18 : index
    %c0_275 = arith.constant 0 : index
    %c0_276 = arith.constant 0 : index
    %237 = vector.load %arg6[%c18_274, %c0_275, %c0_276] : memref<25x16x32xf32, #tpu.memory_space<vmem>>, vector<1x16x32xf32>
    %238 = vector.shape_cast %237 : vector<1x16x32xf32> to vector<16x32xf32>
    %cst_277 = arith.constant dense<0.000000e+00> : vector<1x32xf32>
    %239 = tpu.matmul %236, %238, %cst_277 {dimension_numbers = #tpu.dot_dimension_numbers<[1], [0], [0], [1], [0, 0, 1, 1], [], []>} : vector<1x16xf32>, vector<16x32xf32>, vector<1x32xf32> -> vector<1x32xf32>
    %240 = arith.addf %235, %239 : vector<1x32xf32>
    %c28 = arith.constant 28 : index
    %c0_278 = arith.constant 0 : index
    %241 = vector.load %arg16[%c28, %c0_278] : memref<37x16xf32, #tpu.memory_space<vmem>>, vector<1x16xf32>
    %c19_279 = arith.constant 19 : index
    %c0_280 = arith.constant 0 : index
    %c0_281 = arith.constant 0 : index
    %242 = vector.load %arg6[%c19_279, %c0_280, %c0_281] : memref<25x16x32xf32, #tpu.memory_space<vmem>>, vector<1x16x32xf32>
    %243 = vector.shape_cast %242 : vector<1x16x32xf32> to vector<16x32xf32>
    %cst_282 = arith.constant dense<0.000000e+00> : vector<1x32xf32>
    %244 = tpu.matmul %241, %243, %cst_282 {dimension_numbers = #tpu.dot_dimension_numbers<[1], [0], [0], [1], [0, 0, 1, 1], [], []>} : vector<1x16xf32>, vector<16x32xf32>, vector<1x32xf32> -> vector<1x32xf32>
    %245 = arith.addf %240, %244 : vector<1x32xf32>
    %c32 = arith.constant 32 : index
    %c0_283 = arith.constant 0 : index
    %246 = vector.load %arg16[%c32, %c0_283] : memref<37x16xf32, #tpu.memory_space<vmem>>, vector<1x16xf32>
    %c20_284 = arith.constant 20 : index
    %c0_285 = arith.constant 0 : index
    %c0_286 = arith.constant 0 : index
    %247 = vector.load %arg6[%c20_284, %c0_285, %c0_286] : memref<25x16x32xf32, #tpu.memory_space<vmem>>, vector<1x16x32xf32>
    %248 = vector.shape_cast %247 : vector<1x16x32xf32> to vector<16x32xf32>
    %cst_287 = arith.constant dense<0.000000e+00> : vector<1x32xf32>
    %249 = tpu.matmul %246, %248, %cst_287 {dimension_numbers = #tpu.dot_dimension_numbers<[1], [0], [0], [1], [0, 0, 1, 1], [], []>} : vector<1x16xf32>, vector<16x32xf32>, vector<1x32xf32> -> vector<1x32xf32>
    %250 = arith.addf %245, %249 : vector<1x32xf32>
    %c33 = arith.constant 33 : index
    %c0_288 = arith.constant 0 : index
    %251 = vector.load %arg16[%c33, %c0_288] : memref<37x16xf32, #tpu.memory_space<vmem>>, vector<1x16xf32>
    %c21 = arith.constant 21 : index
    %c0_289 = arith.constant 0 : index
    %c0_290 = arith.constant 0 : index
    %252 = vector.load %arg6[%c21, %c0_289, %c0_290] : memref<25x16x32xf32, #tpu.memory_space<vmem>>, vector<1x16x32xf32>
    %253 = vector.shape_cast %252 : vector<1x16x32xf32> to vector<16x32xf32>
    %cst_291 = arith.constant dense<0.000000e+00> : vector<1x32xf32>
    %254 = tpu.matmul %251, %253, %cst_291 {dimension_numbers = #tpu.dot_dimension_numbers<[1], [0], [0], [1], [0, 0, 1, 1], [], []>} : vector<1x16xf32>, vector<16x32xf32>, vector<1x32xf32> -> vector<1x32xf32>
    %255 = arith.addf %250, %254 : vector<1x32xf32>
    %c34 = arith.constant 34 : index
    %c0_292 = arith.constant 0 : index
    %256 = vector.load %arg16[%c34, %c0_292] : memref<37x16xf32, #tpu.memory_space<vmem>>, vector<1x16xf32>
    %c22 = arith.constant 22 : index
    %c0_293 = arith.constant 0 : index
    %c0_294 = arith.constant 0 : index
    %257 = vector.load %arg6[%c22, %c0_293, %c0_294] : memref<25x16x32xf32, #tpu.memory_space<vmem>>, vector<1x16x32xf32>
    %258 = vector.shape_cast %257 : vector<1x16x32xf32> to vector<16x32xf32>
    %cst_295 = arith.constant dense<0.000000e+00> : vector<1x32xf32>
    %259 = tpu.matmul %256, %258, %cst_295 {dimension_numbers = #tpu.dot_dimension_numbers<[1], [0], [0], [1], [0, 0, 1, 1], [], []>} : vector<1x16xf32>, vector<16x32xf32>, vector<1x32xf32> -> vector<1x32xf32>
    %260 = arith.addf %255, %259 : vector<1x32xf32>
    %c35 = arith.constant 35 : index
    %c0_296 = arith.constant 0 : index
    %261 = vector.load %arg16[%c35, %c0_296] : memref<37x16xf32, #tpu.memory_space<vmem>>, vector<1x16xf32>
    %c23 = arith.constant 23 : index
    %c0_297 = arith.constant 0 : index
    %c0_298 = arith.constant 0 : index
    %262 = vector.load %arg6[%c23, %c0_297, %c0_298] : memref<25x16x32xf32, #tpu.memory_space<vmem>>, vector<1x16x32xf32>
    %263 = vector.shape_cast %262 : vector<1x16x32xf32> to vector<16x32xf32>
    %cst_299 = arith.constant dense<0.000000e+00> : vector<1x32xf32>
    %264 = tpu.matmul %261, %263, %cst_299 {dimension_numbers = #tpu.dot_dimension_numbers<[1], [0], [0], [1], [0, 0, 1, 1], [], []>} : vector<1x16xf32>, vector<16x32xf32>, vector<1x32xf32> -> vector<1x32xf32>
    %265 = arith.addf %260, %264 : vector<1x32xf32>
    %c36 = arith.constant 36 : index
    %c0_300 = arith.constant 0 : index
    %266 = vector.load %arg16[%c36, %c0_300] : memref<37x16xf32, #tpu.memory_space<vmem>>, vector<1x16xf32>
    %c24_301 = arith.constant 24 : index
    %c0_302 = arith.constant 0 : index
    %c0_303 = arith.constant 0 : index
    %267 = vector.load %arg6[%c24_301, %c0_302, %c0_303] : memref<25x16x32xf32, #tpu.memory_space<vmem>>, vector<1x16x32xf32>
    %268 = vector.shape_cast %267 : vector<1x16x32xf32> to vector<16x32xf32>
    %cst_304 = arith.constant dense<0.000000e+00> : vector<1x32xf32>
    %269 = tpu.matmul %266, %268, %cst_304 {dimension_numbers = #tpu.dot_dimension_numbers<[1], [0], [0], [1], [0, 0, 1, 1], [], []>} : vector<1x16xf32>, vector<16x32xf32>, vector<1x32xf32> -> vector<1x32xf32>
    %270 = arith.addf %265, %269 : vector<1x32xf32>
    %c0_305 = arith.constant 0 : index
    %c0_306 = arith.constant 0 : index
    %271 = vector.load %arg7[%c0_305, %c0_306] : memref<1x32xf32, #tpu.memory_space<vmem>>, vector<1x32xf32>
    %272 = arith.addf %270, %271 : vector<1x32xf32>
    %c0_307 = arith.constant 0 : index
    %c0_308 = arith.constant 0 : index
    %273 = vector.load %arg8[%c0_307, %c0_308] : memref<32x32xf32, #tpu.memory_space<vmem>>, vector<32x32xf32>
    %cst_309 = arith.constant dense<0.000000e+00> : vector<1x32xf32>
    %274 = tpu.matmul %272, %273, %cst_309 {dimension_numbers = #tpu.dot_dimension_numbers<[1], [0], [0], [1], [0, 0, 1, 1], [], []>} : vector<1x32xf32>, vector<32x32xf32>, vector<1x32xf32> -> vector<1x32xf32>
    %c0_310 = arith.constant 0 : index
    %c0_311 = arith.constant 0 : index
    %275 = vector.load %arg9[%c0_310, %c0_311] : memref<1x32xf32, #tpu.memory_space<vmem>>, vector<1x32xf32>
    %276 = arith.addf %274, %275 : vector<1x32xf32>
    %c0_312 = arith.constant 0 : index
    %c0_313 = arith.constant 0 : index
    %277 = vector.load %arg10[%c0_312, %c0_313] : memref<32x4xf32, #tpu.memory_space<vmem>>, vector<32x4xf32>
    %cst_314 = arith.constant dense<0.000000e+00> : vector<1x4xf32>
    %278 = tpu.matmul %276, %277, %cst_314 {dimension_numbers = #tpu.dot_dimension_numbers<[1], [0], [0], [1], [0, 0, 1, 1], [], []>} : vector<1x32xf32>, vector<32x4xf32>, vector<1x4xf32> -> vector<1x4xf32>
    %c0_315 = arith.constant 0 : index
    %c0_316 = arith.constant 0 : index
    %279 = vector.load %arg11[%c0_315, %c0_316] : memref<1x4xf32, #tpu.memory_space<vmem>>, vector<1x4xf32>
    %280 = arith.addf %278, %279 : vector<1x4xf32>
    %281 = arith.negf %280 : vector<1x4xf32>
    %282 = math.exp %281 : vector<1x4xf32>
    %cst_317 = arith.constant 1.000000e+00 : f32
    %283 = vector.broadcast %cst_317 : f32 to vector<1x4xf32>
    %284 = arith.addf %283, %282 : vector<1x4xf32>
    %285 = arith.divf %283, %284 : vector<1x4xf32>
    %c0_318 = arith.constant 0 : index
    %c0_319 = arith.constant 0 : index
    %286 = vector.load %arg12[%c0_318, %c0_319] : memref<1x4xf32, #tpu.memory_space<vmem>>, vector<1x4xf32>
    %287 = arith.mulf %285, %286 : vector<1x4xf32>
    %c0_320 = arith.constant 0 : index
    %c0_321 = arith.constant 0 : index
    %288 = vector.load %arg13[%c0_320, %c0_321] : memref<1x4xf32, #tpu.memory_space<vmem>>, vector<1x4xf32>
    %289 = arith.addf %287, %288 : vector<1x4xf32>
    %c0_322 = arith.constant 0 : index
    %c0_323 = arith.constant 0 : index
    %c0_324 = arith.constant 0 : index
    %290 = vector.load %arg14[%c0_322, %c0_323, %c0_324] : memref<1x1x4xf32, #tpu.memory_space<vmem>>, vector<1x1x4xf32>
    %291 = vector.shape_cast %290 : vector<1x1x4xf32> to vector<1x4xf32>
    %292 = vector.shape_cast %289 : vector<1x4xf32> to vector<1x1x4xf32>
    tpu.vector_store %arg14[%c0_322, %c0_323, %c0_324], %292 {strides = array<i32>} : memref<1x1x4xf32, #tpu.memory_space<vmem>>, vector<1x1x4xf32>,
    return
  }
  func.func @transform_0(%arg0: i32) -> (i32, i32, i32, i32) {
    %c0_i32 = arith.constant 0 : i32
    %c0_i32_0 = arith.constant 0 : i32
    %c0_i32_1 = arith.constant 0 : i32
    %c0_i32_2 = arith.constant 0 : i32
    return %arg0, %c0_i32, %c0_i32_0, %c0_i32_1 : i32, i32, i32, i32
  }
  func.func @transform_1(%arg0: i32) -> (i32, i32, i32) {
    %c0_i32 = arith.constant 0 : i32
    %c0_i32_0 = arith.constant 0 : i32
    %c0_i32_1 = arith.constant 0 : i32
    %c0_i32_2 = arith.constant 0 : i32
    return %c0_i32, %c0_i32_0, %c0_i32_1 : i32, i32, i32
  }
  func.func @transform_2(%arg0: i32) -> (i32, i32) {
    %c0_i32 = arith.constant 0 : i32
    %c0_i32_0 = arith.constant 0 : i32
    %c0_i32_1 = arith.constant 0 : i32
    return %c0_i32, %c0_i32_0 : i32, i32
  }
  func.func @transform_3(%arg0: i32) -> (i32, i32, i32) {
    %c0_i32 = arith.constant 0 : i32
    %c0_i32_0 = arith.constant 0 : i32
    %c0_i32_1 = arith.constant 0 : i32
    %c0_i32_2 = arith.constant 0 : i32
    return %c0_i32, %c0_i32_0, %c0_i32_1 : i32, i32, i32
  }
  func.func @transform_4(%arg0: i32) -> (i32, i32) {
    %c0_i32 = arith.constant 0 : i32
    %c0_i32_0 = arith.constant 0 : i32
    %c0_i32_1 = arith.constant 0 : i32
    return %c0_i32, %c0_i32_0 : i32, i32
  }
  func.func @transform_5(%arg0: i32) -> (i32, i32, i32) {
    %c0_i32 = arith.constant 0 : i32
    %c0_i32_0 = arith.constant 0 : i32
    %c0_i32_1 = arith.constant 0 : i32
    %c0_i32_2 = arith.constant 0 : i32
    return %c0_i32, %c0_i32_0, %c0_i32_1 : i32, i32, i32
  }
  func.func @transform_6(%arg0: i32) -> (i32, i32) {
    %c0_i32 = arith.constant 0 : i32
    %c0_i32_0 = arith.constant 0 : i32
    %c0_i32_1 = arith.constant 0 : i32
    return %c0_i32, %c0_i32_0 : i32, i32
  }
  func.func @transform_7(%arg0: i32) -> (i32, i32) {
    %c0_i32 = arith.constant 0 : i32
    %c0_i32_0 = arith.constant 0 : i32
    %c0_i32_1 = arith.constant 0 : i32
    return %c0_i32, %c0_i32_0 : i32, i32
  }
  func.func @transform_8(%arg0: i32) -> (i32, i32) {
    %c0_i32 = arith.constant 0 : i32
    %c0_i32_0 = arith.constant 0 : i32
    %c0_i32_1 = arith.constant 0 : i32
    return %c0_i32, %c0_i32_0 : i32, i32
  }
  func.func @transform_9(%arg0: i32) -> (i32, i32) {
    %c0_i32 = arith.constant 0 : i32
    %c0_i32_0 = arith.constant 0 : i32
    %c0_i32_1 = arith.constant 0 : i32
    return %c0_i32, %c0_i32_0 : i32, i32
  }
  func.func @transform_10(%arg0: i32) -> (i32, i32) {
    %c0_i32 = arith.constant 0 : i32
    %c0_i32_0 = arith.constant 0 : i32
    %c0_i32_1 = arith.constant 0 : i32
    return %c0_i32, %c0_i32_0 : i32, i32
  }
  func.func @transform_11(%arg0: i32) -> (i32, i32) {
    %c0_i32 = arith.constant 0 : i32
    %c0_i32_0 = arith.constant 0 : i32
    %c0_i32_1 = arith.constant 0 : i32
    return %c0_i32, %c0_i32_0 : i32, i32
  }
  func.func @transform_12(%arg0: i32) -> (i32, i32) {
    %c0_i32 = arith.constant 0 : i32
    %c0_i32_0 = arith.constant 0 : i32
    %c0_i32_1 = arith.constant 0 : i32
    return %c0_i32, %c0_i32_0 : i32, i32
  }
  func.func @transform_13(%arg0: i32) -> (i32, i32, i32) {
    %c0_i32 = arith.constant 0 : i32
    %c0_i32_0 = arith.constant 0 : i32
    %c0_i32_1 = arith.constant 0 : i32
    return %arg0, %c0_i32, %c0_i32_0 : i32, i32, i32
  }
}

</mosaic_0001>

<llo_original>
// kernel: forward.1
$region0: #{forward.1}
  #allocation0 [shape = 'u32[]', space=smem, size = 0x4, offset = 0x4, fixed_abs, tag = 'smem constant byte address 0x4 - core index']
  #allocation1 [shape = 'u32[144,128]{1,0:T(1,128)}', space=vmem, size = 0x12000, scoped, tag = 'internal scratch']
  #allocation2 [shape = 'f32[55,8]{1,0:T(8,128)}', space=vmem, size = 0x7000, scoped, tag = 'scratch operand']
  #allocation3 [shape = 'f32[37,16]{1,0:T(8,128)}', space=vmem, size = 0x5000, scoped, tag = 'scratch operand']
  %s0 = inlined_call_operand.vmem [shape: f32[2,4,64,8], index: 0, kind: input, shape index: {}]
  %s1 = inlined_call_operand.vmem [shape: f32[16,8,8], index: 1, kind: input, shape index: {}]
  %s2 = inlined_call_operand.vmem [shape: f32[1,8], index: 2, kind: input, shape index: {}]
  %s3 = inlined_call_operand.vmem [shape: f32[9,8,16], index: 3, kind: input, shape index: {}]
  %s4 = inlined_call_operand.vmem [shape: f32[1,16], index: 4, kind: input, shape index: {}]
  %s5 = inlined_call_operand.vmem [shape: f32[25,16,32], index: 5, kind: input, shape index: {}]
  %s6 = inlined_call_operand.vmem [shape: f32[1,32], index: 6, kind: input, shape index: {}]
  %s7 = inlined_call_operand.vmem [shape: f32[32,32], index: 7, kind: input, shape index: {}]
  %s8 = inlined_call_operand.vmem [shape: f32[1,32], index: 8, kind: input, shape index: {}]
  %s9 = inlined_call_operand.vmem [shape: f32[32,4], index: 9, kind: input, shape index: {}]
  %s10 = inlined_call_operand.vmem [shape: f32[1,4], index: 10, kind: input, shape index: {}]
  %s11 = inlined_call_operand.vmem [shape: f32[1,4], index: 11, kind: input, shape index: {}]
  %s12 = inlined_call_operand.vmem [shape: f32[1,4], index: 12, kind: input, shape index: {}]
  %s13 = inlined_call_operand.hbm [shape: f32[2,1,4], index: 13, kind: output, shape index: {}]
  %s14 = sld [smem:[#allocation0]]
  $region85: #{forward.1} parent=0
    _
  %s16 = ssub.s32 1, %s14
  %s17 = scalar_select 0, %s16, %s14
  $region1: #{forward.1} parent=0
    #allocation4 [shape = 'u8[1024]{0}', space=vmem, size = 0x400, scoped, tag = 'output window, operand 0']
    #allocation5 [shape = 's32[2]{0}', space=sflag, size = 0x8, scoped, tag = 'scoped memory for forward.1']
    %18 = vsyncpa [#allocation5], 0
    %s19 = scalar_lea.sflag [#allocation5], 1
    %20 = vsyncpa %s19, 0
    loop: start=0, step=1, limit=4
    $region2: #{forward.1} parent=1 // loop_pre_header
      _
    $region3: #{forward.1} parent=1 // loop_header
      %s22 = sphi 0, %s26
      %p23 = scmp.ge.s32.totalorder %s22, 4
      %s32 = sphi 0, %s34
      %s35 = sphi 0, %s32
      %s36 = sphi 0, %s35
      %s52 = sphi 0, %s36
      %s56 = sphi 0, %s56
      %s58 = sphi 0, %s56
      %s59 = sphi 0, %s58
      %s73 = sphi 0, %s59
      %s77 = sphi 0, %s77
      %s79 = sphi 0, %s77
      %s80 = sphi 0, %s79
      %s94 = sphi 0, %s80
      %s98 = sphi 0, %s98
      %s100 = sphi 0, %s98
      %s101 = sphi 0, %s100
      %s115 = sphi 0, %s101
      %s119 = sphi 0, %s119
      %s121 = sphi 0, %s119
      %s122 = sphi 0, %s121
      %s136 = sphi 0, %s122
      %s140 = sphi 0, %s140
      %s142 = sphi 0, %s140
      %s143 = sphi 0, %s142
      %s157 = sphi 0, %s143
      %s161 = sphi 0, %s161
      %s163 = sphi 0, %s161
      %s164 = sphi 0, %s163
      %s178 = sphi 0, %s164
      %s182 = sphi 0, %s182
      %s184 = sphi 0, %s182
      %s185 = sphi 0, %s184
      %s199 = sphi 0, %s185
      %s203 = sphi 0, %s203
      %s205 = sphi 0, %s203
      %s206 = sphi 0, %s205
      %s220 = sphi 0, %s206
      %s224 = sphi 0, %s224
      %s226 = sphi 0, %s224
      %s227 = sphi 0, %s226
      %s241 = sphi 0, %s227
      %s245 = sphi 0, %s245
      %s247 = sphi 0, %s245
      %s248 = sphi 0, %s247
      %s262 = sphi 0, %s248
      %s266 = sphi 0, %s266
      %s268 = sphi 0, %s266
      %s269 = sphi 0, %s268
      %s283 = sphi 0, %s269
      %s287 = sphi 0, %s287
      %s289 = sphi 0, %s287
      %s290 = sphi 0, %s289
      %s304 = sphi 0, %s290
      %s310 = sphi 0, %s312
      %s313 = sphi 0, %s310
      %s314 = sphi 0, %s313
      %s330 = sphi 0, %s314
    $region4: #{forward.1} parent=1 // loop_header_branch
      %25 = sbr.rel (%p23) target = $region8
    $region5: #{forward.1} parent=1 // loop_body
      %s27 = ssub.s32 %s22, 1
      %s28 = ssub.s32 %s22, 2
      %s29 = sadd.s32 %s22, 1
      %s30 = ssub.s32 %s22, %s29
      %p31 = scmp.eq.s32.totalorder %s30, 0
      %s33 = sadd.s32 %s32, 1
      %s34 = scalar_select %p31, %s32, %s33
      %p37 = pneg %p31
      %p38 = scmp.eq.s32.totalorder %s22, 1
      %p39 = por %p37, %p38
      %p40 = scmp.ne.s32.totalorder %s32, %s35
      %p41 = scmp.eq.s32.totalorder %s22, 0
      %p42 = por %p40, %p41
      %p43 = scmp.ne.s32.totalorder %s32, %s35
      %p44 = scmp.eq.s32.totalorder %s27, 1
      %p45 = por %p43, %p44
      %p46 = scmp.ne.s32.totalorder %s35, %s36
      %p47 = scmp.eq.s32.totalorder %s27, 0
      %p48 = por %p46, %p47
      %p49 = scmp.ne.s32.totalorder %s35, %s36
      %p50 = scmp.eq.s32.totalorder %s28, 1
      %p51 = por %p49, %p50
      %p53 = scmp.ne.s32.totalorder %s36, %s52
      %p54 = scmp.eq.s32.totalorder %s28, 0
      %p55 = por %p53, %p54
      %s57 = sadd.s32 %s56, 1
      %p60 = scmp.eq.s32.totalorder %s22, 1
      %p61 = scmp.ne.s32.totalorder %s56, %s58
      %p62 = scmp.eq.s32.totalorder %s22, 0
      %p63 = por %p61, %p62
      %p64 = scmp.ne.s32.totalorder %s56, %s58
      %p65 = scmp.eq.s32.totalorder %s27, 1
      %p66 = por %p64, %p65
      %p67 = scmp.ne.s32.totalorder %s58, %s59
      %p68 = scmp.eq.s32.totalorder %s27, 0
      %p69 = por %p67, %p68
      %p70 = scmp.ne.s32.totalorder %s58, %s59
      %p71 = scmp.eq.s32.totalorder %s28, 1
      %p72 = por %p70, %p71
      %p74 = scmp.ne.s32.totalorder %s59, %s73
      %p75 = scmp.eq.s32.totalorder %s28, 0
      %p76 = por %p74, %p75
      %s78 = sadd.s32 %s77, 1
      %p81 = scmp.eq.s32.totalorder %s22, 1
      %p82 = scmp.ne.s32.totalorder %s77, %s79
      %p83 = scmp.eq.s32.totalorder %s22, 0
      %p84 = por %p82, %p83
      %p85 = scmp.ne.s32.totalorder %s77, %s79
      %p86 = scmp.eq.s32.totalorder %s27, 1
      %p87 = por %p85, %p86
      %p88 = scmp.ne.s32.totalorder %s79, %s80
      %p89 = scmp.eq.s32.totalorder %s27, 0
      %p90 = por %p88, %p89
      %p91 = scmp.ne.s32.totalorder %s79, %s80
      %p92 = scmp.eq.s32.totalorder %s28, 1
      %p93 = por %p91, %p92
      %p95 = scmp.ne.s32.totalorder %s80, %s94
      %p96 = scmp.eq.s32.totalorder %s28, 0
      %p97 = por %p95, %p96
      %s99 = sadd.s32 %s98, 1
      %p102 = scmp.eq.s32.totalorder %s22, 1
      %p103 = scmp.ne.s32.totalorder %s98, %s100
      %p104 = scmp.eq.s32.totalorder %s22, 0
      %p105 = por %p103, %p104
      %p106 = scmp.ne.s32.totalorder %s98, %s100
      %p107 = scmp.eq.s32.totalorder %s27, 1
      %p108 = por %p106, %p107
      %p109 = scmp.ne.s32.totalorder %s100, %s101
      %p110 = scmp.eq.s32.totalorder %s27, 0
      %p111 = por %p109, %p110
      %p112 = scmp.ne.s32.totalorder %s100, %s101
      %p113 = scmp.eq.s32.totalorder %s28, 1
      %p114 = por %p112, %p113
      %p116 = scmp.ne.s32.totalorder %s101, %s115
      %p117 = scmp.eq.s32.totalorder %s28, 0
      %p118 = por %p116, %p117
      %s120 = sadd.s32 %s119, 1
      %p123 = scmp.eq.s32.totalorder %s22, 1
      %p124 = scmp.ne.s32.totalorder %s119, %s121
      %p125 = scmp.eq.s32.totalorder %s22, 0
      %p126 = por %p124, %p125
      %p127 = scmp.ne.s32.totalorder %s119, %s121
      %p128 = scmp.eq.s32.totalorder %s27, 1
      %p129 = por %p127, %p128
      %p130 = scmp.ne.s32.totalorder %s121, %s122
      %p131 = scmp.eq.s32.totalorder %s27, 0
      %p132 = por %p130, %p131
      %p133 = scmp.ne.s32.totalorder %s121, %s122
      %p134 = scmp.eq.s32.totalorder %s28, 1
      %p135 = por %p133, %p134
      %p137 = scmp.ne.s32.totalorder %s122, %s136
      %p138 = scmp.eq.s32.totalorder %s28, 0
      %p139 = por %p137, %p138
      %s141 = sadd.s32 %s140, 1
      %p144 = scmp.eq.s32.totalorder %s22, 1
      %p145 = scmp.ne.s32.totalorder %s140, %s142
      %p146 = scmp.eq.s32.totalorder %s22, 0
      %p147 = por %p145, %p146
      %p148 = scmp.ne.s32.totalorder %s140, %s142
      %p149 = scmp.eq.s32.totalorder %s27, 1
      %p150 = por %p148, %p149
      %p151 = scmp.ne.s32.totalorder %s142, %s143
      %p152 = scmp.eq.s32.totalorder %s27, 0
      %p153 = por %p151, %p152
      %p154 = scmp.ne.s32.totalorder %s142, %s143
      %p155 = scmp.eq.s32.totalorder %s28, 1
      %p156 = por %p154, %p155
      %p158 = scmp.ne.s32.totalorder %s143, %s157
      %p159 = scmp.eq.s32.totalorder %s28, 0
      %p160 = por %p158, %p159
      %s162 = sadd.s32 %s161, 1
      %p165 = scmp.eq.s32.totalorder %s22, 1
      %p166 = scmp.ne.s32.totalorder %s161, %s163
      %p167 = scmp.eq.s32.totalorder %s22, 0
      %p168 = por %p166, %p167
      %p169 = scmp.ne.s32.totalorder %s161, %s163
      %p170 = scmp.eq.s32.totalorder %s27, 1
      %p171 = por %p169, %p170
      %p172 = scmp.ne.s32.totalorder %s163, %s164
      %p173 = scmp.eq.s32.totalorder %s27, 0
      %p174 = por %p172, %p173
      %p175 = scmp.ne.s32.totalorder %s163, %s164
      %p176 = scmp.eq.s32.totalorder %s28, 1
      %p177 = por %p175, %p176
      %p179 = scmp.ne.s32.totalorder %s164, %s178
      %p180 = scmp.eq.s32.totalorder %s28, 0
      %p181 = por %p179, %p180
      %s183 = sadd.s32 %s182, 1
      %p186 = scmp.eq.s32.totalorder %s22, 1
      %p187 = scmp.ne.s32.totalorder %s182, %s184
      %p188 = scmp.eq.s32.totalorder %s22, 0
      %p189 = por %p187, %p188
      %p190 = scmp.ne.s32.totalorder %s182, %s184
      %p191 = scmp.eq.s32.totalorder %s27, 1
      %p192 = por %p190, %p191
      %p193 = scmp.ne.s32.totalorder %s184, %s185
      %p194 = scmp.eq.s32.totalorder %s27, 0
      %p195 = por %p193, %p194
      %p196 = scmp.ne.s32.totalorder %s184, %s185
      %p197 = scmp.eq.s32.totalorder %s28, 1
      %p198 = por %p196, %p197
      %p200 = scmp.ne.s32.totalorder %s185, %s199
      %p201 = scmp.eq.s32.totalorder %s28, 0
      %p202 = por %p200, %p201
      %s204 = sadd.s32 %s203, 1
      %p207 = scmp.eq.s32.totalorder %s22, 1
      %p208 = scmp.ne.s32.totalorder %s203, %s205
      %p209 = scmp.eq.s32.totalorder %s22, 0
      %p210 = por %p208, %p209
      %p211 = scmp.ne.s32.totalorder %s203, %s205
      %p212 = scmp.eq.s32.totalorder %s27, 1
      %p213 = por %p211, %p212
      %p214 = scmp.ne.s32.totalorder %s205, %s206
      %p215 = scmp.eq.s32.totalorder %s27, 0
      %p216 = por %p214, %p215
      %p217 = scmp.ne.s32.totalorder %s205, %s206
      %p218 = scmp.eq.s32.totalorder %s28, 1
      %p219 = por %p217, %p218
      %p221 = scmp.ne.s32.totalorder %s206, %s220
      %p222 = scmp.eq.s32.totalorder %s28, 0
      %p223 = por %p221, %p222
      %s225 = sadd.s32 %s224, 1
      %p228 = scmp.eq.s32.totalorder %s22, 1
      %p229 = scmp.ne.s32.totalorder %s224, %s226
      %p230 = scmp.eq.s32.totalorder %s22, 0
      %p231 = por %p229, %p230
      %p232 = scmp.ne.s32.totalorder %s224, %s226
      %p233 = scmp.eq.s32.totalorder %s27, 1
      %p234 = por %p232, %p233
      %p235 = scmp.ne.s32.totalorder %s226, %s227
      %p236 = scmp.eq.s32.totalorder %s27, 0
      %p237 = por %p235, %p236
      %p238 = scmp.ne.s32.totalorder %s226, %s227
      %p239 = scmp.eq.s32.totalorder %s28, 1
      %p240 = por %p238, %p239
      %p242 = scmp.ne.s32.totalorder %s227, %s241
      %p243 = scmp.eq.s32.totalorder %s28, 0
      %p244 = por %p242, %p243
      %s246 = sadd.s32 %s245, 1
      %p249 = scmp.eq.s32.totalorder %s22, 1
      %p250 = scmp.ne.s32.totalorder %s245, %s247
      %p251 = scmp.eq.s32.totalorder %s22, 0
      %p252 = por %p250, %p251
      %p253 = scmp.ne.s32.totalorder %s245, %s247
      %p254 = scmp.eq.s32.totalorder %s27, 1
      %p255 = por %p253, %p254
      %p256 = scmp.ne.s32.totalorder %s247, %s248
      %p257 = scmp.eq.s32.totalorder %s27, 0
      %p258 = por %p256, %p257
      %p259 = scmp.ne.s32.totalorder %s247, %s248
      %p260 = scmp.eq.s32.totalorder %s28, 1
      %p261 = por %p259, %p260
      %p263 = scmp.ne.s32.totalorder %s248, %s262
      %p264 = scmp.eq.s32.totalorder %s28, 0
      %p265 = por %p263, %p264
      %s267 = sadd.s32 %s266, 1
      %p270 = scmp.eq.s32.totalorder %s22, 1
      %p271 = scmp.ne.s32.totalorder %s266, %s268
      %p272 = scmp.eq.s32.totalorder %s22, 0
      %p273 = por %p271, %p272
      %p274 = scmp.ne.s32.totalorder %s266, %s268
      %p275 = scmp.eq.s32.totalorder %s27, 1
      %p276 = por %p274, %p275
      %p277 = scmp.ne.s32.totalorder %s268, %s269
      %p278 = scmp.eq.s32.totalorder %s27, 0
      %p279 = por %p277, %p278
      %p280 = scmp.ne.s32.totalorder %s268, %s269
      %p281 = scmp.eq.s32.totalorder %s28, 1
      %p282 = por %p280, %p281
      %p284 = scmp.ne.s32.totalorder %s269, %s283
      %p285 = scmp.eq.s32.totalorder %s28, 0
      %p286 = por %p284, %p285
      %s288 = sadd.s32 %s287, 1
      %p291 = scmp.eq.s32.totalorder %s22, 1
      %p292 = scmp.ne.s32.totalorder %s287, %s289
      %p293 = scmp.eq.s32.totalorder %s22, 0
      %p294 = por %p292, %p293
      %p295 = scmp.ne.s32.totalorder %s287, %s289
      %p296 = scmp.eq.s32.totalorder %s27, 1
      %p297 = por %p295, %p296
      %p298 = scmp.ne.s32.totalorder %s289, %s290
      %p299 = scmp.eq.s32.totalorder %s27, 0
      %p300 = por %p298, %p299
      %p301 = scmp.ne.s32.totalorder %s289, %s290
      %p302 = scmp.eq.s32.totalorder %s28, 1
      %p303 = por %p301, %p302
      %p305 = scmp.ne.s32.totalorder %s290, %s304
      %p306 = scmp.eq.s32.totalorder %s28, 0
      %p307 = por %p305, %p306
      %s308 = ssub.s32 %s22, %s29
      %p309 = scmp.eq.s32.totalorder %s308, 0
      %s311 = sadd.s32 %s310, 1
      %s312 = scalar_select %p309, %s310, %s311
      %p315 = pneg %p309
      %p316 = scmp.eq.s32.totalorder %s22, 1
      %p317 = por %p315, %p316
      %p318 = scmp.ne.s32.totalorder %s310, %s313
      %p319 = scmp.eq.s32.totalorder %s22, 0
      %p320 = por %p318, %p319
      %p321 = scmp.ne.s32.totalorder %s310, %s313
      %p322 = scmp.eq.s32.totalorder %s27, 1
      %p323 = por %p321, %p322
      %p324 = scmp.ne.s32.totalorder %s313, %s314
      %p325 = scmp.eq.s32.totalorder %s27, 0
      %p326 = por %p324, %p325
      %p327 = scmp.ne.s32.totalorder %s313, %s314
      %p328 = scmp.eq.s32.totalorder %s28, 1
      %p329 = por %p327, %p328
      %p331 = scmp.ne.s32.totalorder %s314, %s330
      %p332 = scmp.eq.s32.totalorder %s28, 0
      %p333 = por %p331, %p332
      %p334 = scmp.le.s32.totalorder 1, %s22
      %p335 = scmp.lt.s32.totalorder %s22, 3
      %p336 = pnand %p334, %p335
      %p337 = pneg %p336
      // Predicated region
      $region9: #{forward.1} parent=5 // pred_check
        _
      $region10: #{forward.1} parent=5 // pred_check_branch
        %339 = sbr.rel (%p336) target = $region12
      $region11: #{forward.1} parent=5 // pred_region
        %s340 = ssub.s32 %s22, 1
        // Predicated region
        $region13: #{forward.1} parent=11 // pred_check
          %p341 = pneg %p69
        $region14: #{forward.1} parent=11 // pred_check_branch
          %343 = sbr.rel (%p341) target = $region16
        $region15: #{forward.1} parent=11 // pred_region
          _
        $region16: #{forward.1} parent=11 // pred_fallthru
          _
        // Predicated region
        $region17: #{forward.1} parent=11 // pred_check
          %p344 = pneg %p90
        $region18: #{forward.1} parent=11 // pred_check_branch
          %346 = sbr.rel (%p344) target = $region20
        $region19: #{forward.1} parent=11 // pred_region
          _
        $region20: #{forward.1} parent=11 // pred_fallthru
          _
        // Predicated region
        $region21: #{forward.1} parent=11 // pred_check
          %p347 = pneg %p111
        $region22: #{forward.1} parent=11 // pred_check_branch
          %349 = sbr.rel (%p347) target = $region24
        $region23: #{forward.1} parent=11 // pred_region
          _
        $region24: #{forward.1} parent=11 // pred_fallthru
          _
        // Predicated region
        $region25: #{forward.1} parent=11 // pred_check
          %p350 = pneg %p132
        $region26: #{forward.1} parent=11 // pred_check_branch
          %352 = sbr.rel (%p350) target = $region28
        $region27: #{forward.1} parent=11 // pred_region
          _
        $region28: #{forward.1} parent=11 // pred_fallthru
          _
        // Predicated region
        $region29: #{forward.1} parent=11 // pred_check
          %p353 = pneg %p153
        $region30: #{forward.1} parent=11 // pred_check_branch
          %355 = sbr.rel (%p353) target = $region32
        $region31: #{forward.1} parent=11 // pred_region
          _
        $region32: #{forward.1} parent=11 // pred_fallthru
          _
        // Predicated region
        $region33: #{forward.1} parent=11 // pred_check
          %p356 = pneg %p174
        $region34: #{forward.1} parent=11 // pred_check_branch
          %358 = sbr.rel (%p356) target = $region36
        $region35: #{forward.1} parent=11 // pred_region
          _
        $region36: #{forward.1} parent=11 // pred_fallthru
          _
        // Predicated region
        $region37: #{forward.1} parent=11 // pred_check
          %p359 = pneg %p195
        $region38: #{forward.1} parent=11 // pred_check_branch
          %361 = sbr.rel (%p359) target = $region40
        $region39: #{forward.1} parent=11 // pred_region
          _
        $region40: #{forward.1} parent=11 // pred_fallthru
          _
        // Predicated region
        $region41: #{forward.1} parent=11 // pred_check
          %p362 = pneg %p216
        $region42: #{forward.1} parent=11 // pred_check_branch
          %364 = sbr.rel (%p362) target = $region44
        $region43: #{forward.1} parent=11 // pred_region
          _
        $region44: #{forward.1} parent=11 // pred_fallthru
          _
        // Predicated region
        $region45: #{forward.1} parent=11 // pred_check
          %p365 = pneg %p237
        $region46: #{forward.1} parent=11 // pred_check_branch
          %367 = sbr.rel (%p365) target = $region48
        $region47: #{forward.1} parent=11 // pred_region
          _
        $region48: #{forward.1} parent=11 // pred_fallthru
          _
        // Predicated region
        $region49: #{forward.1} parent=11 // pred_check
          %p368 = pneg %p258
        $region50: #{forward.1} parent=11 // pred_check_branch
          %370 = sbr.rel (%p368) target = $region52
        $region51: #{forward.1} parent=11 // pred_region
          _
        $region52: #{forward.1} parent=11 // pred_fallthru
          _
        // Predicated region
        $region53: #{forward.1} parent=11 // pred_check
          %p371 = pneg %p279
        $region54: #{forward.1} parent=11 // pred_check_branch
          %373 = sbr.rel (%p371) target = $region56
        $region55: #{forward.1} parent=11 // pred_region
          _
        $region56: #{forward.1} parent=11 // pred_fallthru
          _
        // Predicated region
        $region57: #{forward.1} parent=11 // pred_check
          %p374 = pneg %p300
        $region58: #{forward.1} parent=11 // pred_check_branch
          %376 = sbr.rel (%p374) target = $region60
        $region59: #{forward.1} parent=11 // pred_region
          _
        $region60: #{forward.1} parent=11 // pred_fallthru
          _
      $region12: #{forward.1} parent=5 // pred_fallthru
        _
      %p377 = scmp.lt.s32.totalorder %s22, 2
      // Predicated region
      $region61: #{forward.1} parent=5 // pred_check
        %p378 = pneg %p377
      $region62: #{forward.1} parent=5 // pred_check_branch
        %380 = sbr.rel (%p378) target = $region64
      $region63: #{forward.1} parent=5 // pred_region
        // Predicated region
        $region65: #{forward.1} parent=63 // pred_check
          %p381 = pneg %p42
        $region66: #{forward.1} parent=63 // pred_check_branch
          %383 = sbr.rel (%p381) target = $region68
        $region67: #{forward.1} parent=63 // pred_region
          %p384 = scmp.lt.s32.totalorder %s22, 1
          %s385 = scalar_select %p384, %s22, 1
          %s386 = smul.addr %s385, 32
          %s387 = smul.addr %s386, 8
          %s388 = scalar_lea.vmem %s0, %s387
        $region68: #{forward.1} parent=63 // pred_fallthru
          _
      $region64: #{forward.1} parent=5 // pred_fallthru
        _
      %p389 = scmp.le.s32.totalorder 1, %s22
      %p390 = scmp.lt.s32.totalorder %s22, 3
      %p391 = pnand %p389, %p390
      %p392 = pneg %p391
      // Predicated region
      $region69: #{forward.1} parent=5 // pred_check
        _
      $region70: #{forward.1} parent=5 // pred_check_branch
        %394 = sbr.rel (%p391) target = $region72
      $region71: #{forward.1} parent=5 // pred_region
        %s395 = ssub.s32 %s22, 1
        %p396 = scmp.lt.s32.totalorder %s27, 1
        %s397 = scalar_select %p396, %s27, 1
        %s398 = smul.addr %s397, 32
        %s399 = smul.addr %s398, 8
        %s400 = scalar_lea.vmem %s0, %s399
        %p401 = pneg %p48
        %p402 = pneg %p45
        %p403 = pneg %p69
        %p404 = pneg %p66
        %p405 = pneg %p90
        %p406 = pneg %p87
        %p407 = pneg %p111
        %p408 = pneg %p108
        %p409 = pneg %p132
        %p410 = pneg %p129
        %p411 = pneg %p153
        %p412 = pneg %p150
        %p413 = pneg %p174
        %p414 = pneg %p171
        %p415 = pneg %p195
        %p416 = pneg %p192
        %p417 = pneg %p216
        %p418 = pneg %p213
        %p419 = pneg %p237
        %p420 = pneg %p234
        %p421 = pneg %p258
        %p422 = pneg %p255
        %p423 = pneg %p279
        %p424 = pneg %p276
        %p425 = pneg %p300
        %p426 = pneg %p297
        %p427 = pneg %p326
        %p428 = pneg %p323
        %s429 = sand.u32 %s313, 1
        %s430 = scalar_lea.sflag [#allocation5], %s429
        %s431 = sand.u32 %s313, 1
        %s432 = scalar_lea.vmem [#allocation4], %s431
        %p433 = scmp.lt.s32.totalorder %s27, 1
        %s434 = scalar_select %p433, %s27, 1
        %s435 = smul.addr %s434, 32
        %s436 = smul.addr %s435, 8
        %s437 = scalar_lea.vmem %s0, %s436
        %v438 = vld [vmem:[%s437] sm:$0xff]
        %v439 = vld [vmem:[%s437 + $0x8] sm:$0xff]
        %v440 = vld [vmem:[%s437 + $0x10] sm:$0xff]
        %v441 = vld [vmem:[%s437 + $0x18] sm:$0xff]
        %v442 = vld [vmem:[%s437 + $0x20] sm:$0xff]
        %v443 = vld [vmem:[%s437 + $0x28] sm:$0xff]
        %v444 = vld [vmem:[%s437 + $0x30] sm:$0x7f]
        %v445 = vld [vmem:[%s1] sm:$0xff]
        %s446 = scalar_lea.vmem %s437, 64
        %v447 = vld [vmem:[%s446] sm:$0xff]
        %v448 = vld [vmem:[%s446 + $0x8] sm:$0xff]
        %v449 = vld [vmem:[%s446 + $0x10] sm:$0xff]
        %v450 = vld [vmem:[%s446 + $0x18] sm:$0xff]
        %v451 = vld [vmem:[%s446 + $0x20] sm:$0xff]
        %v452 = vld [vmem:[%s446 + $0x28] sm:$0xff]
        %v453 = vld [vmem:[%s446 + $0x30] sm:$0x7f]
        %s454 = scalar_lea.vmem %s1, 8
        %v455 = vld [vmem:[%s454] sm:$0xff]
        %vm456 = vcmask 64512
        %v458 = vsel %vm456, %v447, 0
        %v461 = vsel %vm456, %v448, 0
        %v464 = vsel %vm456, %v449, 0
        %v467 = vsel %vm456, %v450, 0
        %v470 = vsel %vm456, %v451, 0
        %v473 = vsel %vm456, %v452, 0
        %v476 = vsel %vm456, %v453, 0
        %478 = vmatprep.subr.mxu0 0.0
        %479 = vmatpush1.msra.mxu0 0.0
        %480 = vmatprep.subr.mxu0 0.0
        %481 = vmatpush1.msra.mxu0 0.0
        %482 = vmatprep.subr.mxu0 0.0
        %483 = vmatpush1.msra.mxu0 0.0
        %484 = vmatprep.subr.mxu0 0.0
        %485 = vmatpush1.msra.mxu0 0.0
        %486 = vmatprep.subr.mxu0 0.0
        %487 = vmatpush1.msra.mxu0 0.0
        %488 = vmatprep.subr.mxu0 0.0
        %489 = vmatpush1.msra.mxu0 0.0
        %490 = vmatprep.subr.mxu0 0.0
        %491 = vmatpush1.msra.mxu0 0.0
        %492 = vmatprep.subr.mxu0 0.0
        %493 = vmatpush1.msra.mxu0 0.0
        %494 = vmatprep.subr.mxu0 0.0
        %495 = vmatpush1.msra.mxu0 0.0
        %496 = vmatprep.subr.mxu0 0.0
        %497 = vmatpush1.msra.mxu0 0.0
        %498 = vmatprep.subr.mxu0 0.0
        %499 = vmatpush1.msra.mxu0 0.0
        %500 = vmatprep.subr.mxu0 0.0
        %501 = vmatpush1.msra.mxu0 0.0
        %502 = vmatprep.subr.mxu0 0.0
        %503 = vmatpush1.msra.mxu0 0.0
        %504 = vmatprep.subr.mxu0 0.0
        %505 = vmatpush1.msra.mxu0 0.0
        %506 = vmatprep.subr.mxu0 0.0
        %507 = vmatpush1.msra.mxu0 0.0
        %508 = vmatprep.subr.mxu0 0.0
        %509 = vmatpush1.msra.mxu0 %v455
        %510 = vmatprep.subr.mxu0 0.0
        %511 = vmatpush2.msra.mxu0 0.0
        %512 = vmatprep.subr.mxu0 0.0
        %513 = vmatpush2.msra.mxu0 0.0
        %514 = vmatprep.subr.mxu0 0.0
        %515 = vmatpush2.msra.mxu0 0.0
        %516 = vmatprep.subr.mxu0 0.0
        %517 = vmatpush2.msra.mxu0 0.0
        %518 = vmatprep.subr.mxu0 0.0
        %519 = vmatpush2.msra.mxu0 0.0
        %520 = vmatprep.subr.mxu0 0.0
        %521 = vmatpush2.msra.mxu0 0.0
        %522 = vmatprep.subr.mxu0 0.0
        %523 = vmatpush2.msra.mxu0 0.0
        %524 = vmatprep.subr.mxu0 0.0
        %525 = vmatpush2.msra.mxu0 0.0
        %526 = vmatprep.subr.mxu0 0.0
        %527 = vmatpush2.msra.mxu0 0.0
        %528 = vmatprep.subr.mxu0 0.0
        %529 = vmatpush2.msra.mxu0 0.0
        %530 = vmatprep.subr.mxu0 0.0
        %531 = vmatpush2.msra.mxu0 0.0
        %532 = vmatprep.subr.mxu0 0.0
        %533 = vmatpush2.msra.mxu0 0.0
        %534 = vmatprep.subr.mxu0 0.0
        %535 = vmatpush2.msra.mxu0 0.0
        %536 = vmatprep.subr.mxu0 0.0
        %537 = vmatpush2.msra.mxu0 0.0
        %538 = vmatprep.subr.mxu0 0.0
        %539 = vmatpush2.msra.mxu0 0.0
        %540 = vmatprep.subr.mxu0 0.0
        %541 = vmatpush2.msra.mxu0 0.0
        %542 = vmatprep.mubr.f32.mxu0 0.0
        %543 = vmatmul.mubr.f32.gmra.mxu0 %v458
        %v544 = vpop.f32.mrf.mxu0
        %v545 = vadd.f32 0.0, %v544
        %v546 = vpop.f32.mrf.mxu0
        %547 = vmatprep.mubr.f32.mxu0 0.0
        %548 = vmatmul.mubr.f32.gmra.mxu0 %v461
        %v549 = vpop.f32.mrf.mxu0
        %v550 = vadd.f32 0.0, %v549
        %v551 = vpop.f32.mrf.mxu0
        %552 = vmatprep.mubr.f32.mxu0 0.0
        %553 = vmatmul.mubr.f32.gmra.mxu0 %v464
        %v554 = vpop.f32.mrf.mxu0
        %v555 = vadd.f32 0.0, %v554
        %v556 = vpop.f32.mrf.mxu0
        %557 = vmatprep.mubr.f32.mxu0 0.0
        %558 = vmatmul.mubr.f32.gmra.mxu0 %v467
        %v559 = vpop.f32.mrf.mxu0
        %v560 = vadd.f32 0.0, %v559
        %v561 = vpop.f32.mrf.mxu0
        %562 = vmatprep.mubr.f32.mxu0 0.0
        %563 = vmatmul.mubr.f32.gmra.mxu0 %v470
        %v564 = vpop.f32.mrf.mxu0
        %v565 = vadd.f32 0.0, %v564
        %v566 = vpop.f32.mrf.mxu0
        %567 = vmatprep.mubr.f32.mxu0 0.0
        %568 = vmatmul.mubr.f32.gmra.mxu0 %v473
        %v569 = vpop.f32.mrf.mxu0
        %v570 = vadd.f32 0.0, %v569
        %v571 = vpop.f32.mrf.mxu0
        %572 = vmatprep.mubr.f32.mxu0 0.0
        %573 = vmatmul.mubr.f32.gmra.mxu0 %v476
        %v574 = vpop.f32.mrf.mxu0
        %v575 = vadd.f32 0.0, %v574
        %v576 = vpop.f32.mrf.mxu0
        %577 = vdwg.mxu0
        %v579 = vsel %vm456, %v438, 0
        %v582 = vsel %vm456, %v439, 0
        %v585 = vsel %vm456, %v440, 0
        %v588 = vsel %vm456, %v441, 0
        %v591 = vsel %vm456, %v442, 0
        %v594 = vsel %vm456, %v443, 0
        %v597 = vsel %vm456, %v444, 0
        %599 = vmatprep.subr.mxu0 0.0
        %600 = vmatpush1.msra.mxu0 0.0
        %601 = vmatprep.subr.mxu0 0.0
        %602 = vmatpush1.msra.mxu0 0.0
        %603 = vmatprep.subr.mxu0 0.0
        %604 = vmatpush1.msra.mxu0 0.0
        %605 = vmatprep.subr.mxu0 0.0
        %606 = vmatpush1.msra.mxu0 0.0
        %607 = vmatprep.subr.mxu0 0.0
        %608 = vmatpush1.msra.mxu0 0.0
        %609 = vmatprep.subr.mxu0 0.0
        %610 = vmatpush1.msra.mxu0 0.0
        %611 = vmatprep.subr.mxu0 0.0
        %612 = vmatpush1.msra.mxu0 0.0
        %613 = vmatprep.subr.mxu0 0.0
        %614 = vmatpush1.msra.mxu0 0.0
        %615 = vmatprep.subr.mxu0 0.0
        %616 = vmatpush1.msra.mxu0 0.0
        %617 = vmatprep.subr.mxu0 0.0
        %618 = vmatpush1.msra.mxu0 0.0
        %619 = vmatprep.subr.mxu0 0.0
        %620 = vmatpush1.msra.mxu0 0.0
        %621 = vmatprep.subr.mxu0 0.0
        %622 = vmatpush1.msra.mxu0 0.0
        %623 = vmatprep.subr.mxu0 0.0
        %624 = vmatpush1.msra.mxu0 0.0
        %625 = vmatprep.subr.mxu0 0.0
        %626 = vmatpush1.msra.mxu0 0.0
        %627 = vmatprep.subr.mxu0 0.0
        %628 = vmatpush1.msra.mxu0 0.0
        %629 = vmatprep.subr.mxu0 0.0
        %630 = vmatpush1.msra.mxu0 %v445
        %631 = vmatprep.subr.mxu0 0.0
        %632 = vmatpush2.msra.mxu0 0.0
        %633 = vmatprep.subr.mxu0 0.0
        %634 = vmatpush2.msra.mxu0 0.0
        %635 = vmatprep.subr.mxu0 0.0
        %636 = vmatpush2.msra.mxu0 0.0
        %637 = vmatprep.subr.mxu0 0.0
        %638 = vmatpush2.msra.mxu0 0.0
        %639 = vmatprep.subr.mxu0 0.0
        %640 = vmatpush2.msra.mxu0 0.0
        %641 = vmatprep.subr.mxu0 0.0
        %642 = vmatpush2.msra.mxu0 0.0
        %643 = vmatprep.subr.mxu0 0.0
        %644 = vmatpush2.msra.mxu0 0.0
        %645 = vmatprep.subr.mxu0 0.0
        %646 = vmatpush2.msra.mxu0 0.0
        %647 = vmatprep.subr.mxu0 0.0
        %648 = vmatpush2.msra.mxu0 0.0
        %649 = vmatprep.subr.mxu0 0.0
        %650 = vmatpush2.msra.mxu0 0.0
        %651 = vmatprep.subr.mxu0 0.0
        %652 = vmatpush2.msra.mxu0 0.0
        %653 = vmatprep.subr.mxu0 0.0
        %654 = vmatpush2.msra.mxu0 0.0
        %655 = vmatprep.subr.mxu0 0.0
        %656 = vmatpush2.msra.mxu0 0.0
        %657 = vmatprep.subr.mxu0 0.0
        %658 = vmatpush2.msra.mxu0 0.0
        %659 = vmatprep.subr.mxu0 0.0
        %660 = vmatpush2.msra.mxu0 0.0
        %661 = vmatprep.subr.mxu0 0.0
        %662 = vmatpush2.msra.mxu0 0.0
        %663 = vmatprep.mubr.f32.mxu0 0.0
        %664 = vmatmul.mubr.f32.gmra.mxu0 %v579
        %v665 = vpop.f32.mrf.mxu0
        %v666 = vadd.f32 %v545, %v665
        %v667 = vpop.f32.mrf.mxu0
        %668 = vmatprep.mubr.f32.mxu0 0.0
        %669 = vmatmul.mubr.f32.gmra.mxu0 %v582
        %v670 = vpop.f32.mrf.mxu0
        %v671 = vadd.f32 %v550, %v670
        %v672 = vpop.f32.mrf.mxu0
        %673 = vmatprep.mubr.f32.mxu0 0.0
        %674 = vmatmul.mubr.f32.gmra.mxu0 %v585
        %v675 = vpop.f32.mrf.mxu0
        %v676 = vadd.f32 %v555, %v675
        %v677 = vpop.f32.mrf.mxu0
        %678 = vmatprep.mubr.f32.mxu0 0.0
        %679 = vmatmul.mubr.f32.gmra.mxu0 %v588
        %v680 = vpop.f32.mrf.mxu0
        %v681 = vadd.f32 %v560, %v680
        %v682 = vpop.f32.mrf.mxu0
        %683 = vmatprep.mubr.f32.mxu0 0.0
        %684 = vmatmul.mubr.f32.gmra.mxu0 %v591
        %v685 = vpop.f32.mrf.mxu0
        %v686 = vadd.f32 %v565, %v685
        %v687 = vpop.f32.mrf.mxu0
        %688 = vmatprep.mubr.f32.mxu0 0.0
        %689 = vmatmul.mubr.f32.gmra.mxu0 %v594
        %v690 = vpop.f32.mrf.mxu0
        %v691 = vadd.f32 %v570, %v690
        %v692 = vpop.f32.mrf.mxu0
        %693 = vmatprep.mubr.f32.mxu0 0.0
        %694 = vmatmul.mubr.f32.gmra.mxu0 %v597
        %v695 = vpop.f32.mrf.mxu0
        %v696 = vadd.f32 %v575, %v695
        %v697 = vpop.f32.mrf.mxu0
        %698 = vdwg.mxu0
        %v699 = vld [vmem:[%s437 + $0x1] sm:$0xff]
        %v700 = vld [vmem:[%s437 + $0x9] sm:$0xff]
        %v701 = vld [vmem:[%s437 + $0x11] sm:$0xff]
        %v702 = vld [vmem:[%s437 + $0x19] sm:$0xff]
        %v703 = vld [vmem:[%s437 + $0x21] sm:$0xff]
        %v704 = vld [vmem:[%s437 + $0x29] sm:$0xff]
        %v705 = vld [vmem:[%s437 + $0x31] sm:$0x7f]
        %s706 = scalar_lea.vmem %s1, 16
        %v707 = vld [vmem:[%s706] sm:$0xff]
        %v709 = vsel %vm456, %v699, 0
        %v712 = vsel %vm456, %v700, 0
        %v715 = vsel %vm456, %v701, 0
        %v718 = vsel %vm456, %v702, 0
        %v721 = vsel %vm456, %v703, 0
        %v724 = vsel %vm456, %v704, 0
        %v727 = vsel %vm456, %v705, 0
        %729 = vmatprep.subr.mxu0 0.0
        %730 = vmatpush1.msra.mxu0 0.0
        %731 = vmatprep.subr.mxu0 0.0
        %732 = vmatpush1.msra.mxu0 0.0
        %733 = vmatprep.subr.mxu0 0.0
        %734 = vmatpush1.msra.mxu0 0.0
        %735 = vmatprep.subr.mxu0 0.0
        %736 = vmatpush1.msra.mxu0 0.0
        %737 = vmatprep.subr.mxu0 0.0
        %738 = vmatpush1.msra.mxu0 0.0
        %739 = vmatprep.subr.mxu0 0.0
        %740 = vmatpush1.msra.mxu0 0.0
        %741 = vmatprep.subr.mxu0 0.0
        %742 = vmatpush1.msra.mxu0 0.0
        %743 = vmatprep.subr.mxu0 0.0
        %744 = vmatpush1.msra.mxu0 0.0
        %745 = vmatprep.subr.mxu0 0.0
        %746 = vmatpush1.msra.mxu0 0.0
        %747 = vmatprep.subr.mxu0 0.0
        %748 = vmatpush1.msra.mxu0 0.0
        %749 = vmatprep.subr.mxu0 0.0
        %750 = vmatpush1.msra.mxu0 0.0
        %751 = vmatprep.subr.mxu0 0.0
        %752 = vmatpush1.msra.mxu0 0.0
        %753 = vmatprep.subr.mxu0 0.0
        %754 = vmatpush1.msra.mxu0 0.0
        %755 = vmatprep.subr.mxu0 0.0
        %756 = vmatpush1.msra.mxu0 0.0
        %757 = vmatprep.subr.mxu0 0.0
        %758 = vmatpush1.msra.mxu0 0.0
        %759 = vmatprep.subr.mxu0 0.0
        %760 = vmatpush1.msra.mxu0 %v707
        %761 = vmatprep.subr.mxu0 0.0
        %762 = vmatpush2.msra.mxu0 0.0
        %763 = vmatprep.subr.mxu0 0.0
        %764 = vmatpush2.msra.mxu0 0.0
        %765 = vmatprep.subr.mxu0 0.0
        %766 = vmatpush2.msra.mxu0 0.0
        %767 = vmatprep.subr.mxu0 0.0
        %768 = vmatpush2.msra.mxu0 0.0
        %769 = vmatprep.subr.mxu0 0.0
        %770 = vmatpush2.msra.mxu0 0.0
        %771 = vmatprep.subr.mxu0 0.0
        %772 = vmatpush2.msra.mxu0 0.0
        %773 = vmatprep.subr.mxu0 0.0
        %774 = vmatpush2.msra.mxu0 0.0
        %775 = vmatprep.subr.mxu0 0.0
        %776 = vmatpush2.msra.mxu0 0.0
        %777 = vmatprep.subr.mxu0 0.0
        %778 = vmatpush2.msra.mxu0 0.0
        %779 = vmatprep.subr.mxu0 0.0
        %780 = vmatpush2.msra.mxu0 0.0
        %781 = vmatprep.subr.mxu0 0.0
        %782 = vmatpush2.msra.mxu0 0.0
        %783 = vmatprep.subr.mxu0 0.0
        %784 = vmatpush2.msra.mxu0 0.0
        %785 = vmatprep.subr.mxu0 0.0
        %786 = vmatpush2.msra.mxu0 0.0
        %787 = vmatprep.subr.mxu0 0.0
        %788 = vmatpush2.msra.mxu0 0.0
        %789 = vmatprep.subr.mxu0 0.0
        %790 = vmatpush2.msra.mxu0 0.0
        %791 = vmatprep.subr.mxu0 0.0
        %792 = vmatpush2.msra.mxu0 0.0
        %793 = vmatprep.mubr.f32.mxu0 0.0
        %794 = vmatmul.mubr.f32.gmra.mxu0 %v709
        %v795 = vpop.f32.mrf.mxu0
        %v796 = vadd.f32 0.0, %v795
        %v797 = vpop.f32.mrf.mxu0
        %798 = vmatprep.mubr.f32.mxu0 0.0
        %799 = vmatmul.mubr.f32.gmra.mxu0 %v712
        %v800 = vpop.f32.mrf.mxu0
        %v801 = vadd.f32 0.0, %v800
        %v802 = vpop.f32.mrf.mxu0
        %803 = vmatprep.mubr.f32.mxu0 0.0
        %804 = vmatmul.mubr.f32.gmra.mxu0 %v715
        %v805 = vpop.f32.mrf.mxu0
        %v806 = vadd.f32 0.0, %v805
        %v807 = vpop.f32.mrf.mxu0
        %808 = vmatprep.mubr.f32.mxu0 0.0
        %809 = vmatmul.mubr.f32.gmra.mxu0 %v718
        %v810 = vpop.f32.mrf.mxu0
        %v811 = vadd.f32 0.0, %v810
        %v812 = vpop.f32.mrf.mxu0
        %813 = vmatprep.mubr.f32.mxu0 0.0
        %814 = vmatmul.mubr.f32.gmra.mxu0 %v721
        %v815 = vpop.f32.mrf.mxu0
        %v816 = vadd.f32 0.0, %v815
        %v817 = vpop.f32.mrf.mxu0
        %818 = vmatprep.mubr.f32.mxu0 0.0
        %819 = vmatmul.mubr.f32.gmra.mxu0 %v724
        %v820 = vpop.f32.mrf.mxu0
        %v821 = vadd.f32 0.0, %v820
        %v822 = vpop.f32.mrf.mxu0
        %823 = vmatprep.mubr.f32.mxu0 0.0
        %824 = vmatmul.mubr.f32.gmra.mxu0 %v727
        %v825 = vpop.f32.mrf.mxu0
        %v826 = vadd.f32 0.0, %v825
        %v827 = vpop.f32.mrf.mxu0
        %828 = vdwg.mxu0
        %v829 = vadd.f32 %v666, %v796
        %v830 = vadd.f32 %v671, %v801
        %v831 = vadd.f32 %v676, %v806
        %v832 = vadd.f32 %v681, %v811
        %v833 = vadd.f32 %v686, %v816
        %v834 = vadd.f32 %v691, %v821
        %v835 = vadd.f32 %v696, %v826
        %v836 = vld [vmem:[%s446 + $0x1] sm:$0xff]
        %v837 = vld [vmem:[%s446 + $0x9] sm:$0xff]
        %v838 = vld [vmem:[%s446 + $0x11] sm:$0xff]
        %v839 = vld [vmem:[%s446 + $0x19] sm:$0xff]
        %v840 = vld [vmem:[%s446 + $0x21] sm:$0xff]
        %v841 = vld [vmem:[%s446 + $0x29] sm:$0xff]
        %v842 = vld [vmem:[%s446 + $0x31] sm:$0x7f]
        %s843 = scalar_lea.vmem %s1, 24
        %v844 = vld [vmem:[%s843] sm:$0xff]
        %v846 = vsel %vm456, %v836, 0
        %v849 = vsel %vm456, %v837, 0
        %v852 = vsel %vm456, %v838, 0
        %v855 = vsel %vm456, %v839, 0
        %v858 = vsel %vm456, %v840, 0
        %v861 = vsel %vm456, %v841, 0
        %v864 = vsel %vm456, %v842, 0
        %866 = vmatprep.subr.mxu0 0.0
        %867 = vmatpush1.msra.mxu0 0.0
        %868 = vmatprep.subr.mxu0 0.0
        %869 = vmatpush1.msra.mxu0 0.0
        %870 = vmatprep.subr.mxu0 0.0
        %871 = vmatpush1.msra.mxu0 0.0
        %872 = vmatprep.subr.mxu0 0.0
        %873 = vmatpush1.msra.mxu0 0.0
        %874 = vmatprep.subr.mxu0 0.0
        %875 = vmatpush1.msra.mxu0 0.0
        %876 = vmatprep.subr.mxu0 0.0
        %877 = vmatpush1.msra.mxu0 0.0
        %878 = vmatprep.subr.mxu0 0.0
        %879 = vmatpush1.msra.mxu0 0.0
        %880 = vmatprep.subr.mxu0 0.0
        %881 = vmatpush1.msra.mxu0 0.0
        %882 = vmatprep.subr.mxu0 0.0
        %883 = vmatpush1.msra.mxu0 0.0
        %884 = vmatprep.subr.mxu0 0.0
        %885 = vmatpush1.msra.mxu0 0.0
        %886 = vmatprep.subr.mxu0 0.0
        %887 = vmatpush1.msra.mxu0 0.0
        %888 = vmatprep.subr.mxu0 0.0
        %889 = vmatpush1.msra.mxu0 0.0
        %890 = vmatprep.subr.mxu0 0.0
        %891 = vmatpush1.msra.mxu0 0.0
        %892 = vmatprep.subr.mxu0 0.0
        %893 = vmatpush1.msra.mxu0 0.0
        %894 = vmatprep.subr.mxu0 0.0
        %895 = vmatpush1.msra.mxu0 0.0
        %896 = vmatprep.subr.mxu0 0.0
        %897 = vmatpush1.msra.mxu0 %v844
        %898 = vmatprep.subr.mxu0 0.0
        %899 = vmatpush2.msra.mxu0 0.0
        %900 = vmatprep.subr.mxu0 0.0
        %901 = vmatpush2.msra.mxu0 0.0
        %902 = vmatprep.subr.mxu0 0.0
        %903 = vmatpush2.msra.mxu0 0.0
        %904 = vmatprep.subr.mxu0 0.0
        %905 = vmatpush2.msra.mxu0 0.0
        %906 = vmatprep.subr.mxu0 0.0
        %907 = vmatpush2.msra.mxu0 0.0
        %908 = vmatprep.subr.mxu0 0.0
        %909 = vmatpush2.msra.mxu0 0.0
        %910 = vmatprep.subr.mxu0 0.0
        %911 = vmatpush2.msra.mxu0 0.0
        %912 = vmatprep.subr.mxu0 0.0
        %913 = vmatpush2.msra.mxu0 0.0
        %914 = vmatprep.subr.mxu0 0.0
        %915 = vmatpush2.msra.mxu0 0.0
        %916 = vmatprep.subr.mxu0 0.0
        %917 = vmatpush2.msra.mxu0 0.0
        %918 = vmatprep.subr.mxu0 0.0
        %919 = vmatpush2.msra.mxu0 0.0
        %920 = vmatprep.subr.mxu0 0.0
        %921 = vmatpush2.msra.mxu0 0.0
        %922 = vmatprep.subr.mxu0 0.0
        %923 = vmatpush2.msra.mxu0 0.0
        %924 = vmatprep.subr.mxu0 0.0
        %925 = vmatpush2.msra.mxu0 0.0
        %926 = vmatprep.subr.mxu0 0.0
        %927 = vmatpush2.msra.mxu0 0.0
        %928 = vmatprep.subr.mxu0 0.0
        %929 = vmatpush2.msra.mxu0 0.0
        %930 = vmatprep.mubr.f32.mxu0 0.0
        %931 = vmatmul.mubr.f32.gmra.mxu0 %v846
        %v932 = vpop.f32.mrf.mxu0
        %v933 = vadd.f32 0.0, %v932
        %v934 = vpop.f32.mrf.mxu0
        %935 = vmatprep.mubr.f32.mxu0 0.0
        %936 = vmatmul.mubr.f32.gmra.mxu0 %v849
        %v937 = vpop.f32.mrf.mxu0
        %v938 = vadd.f32 0.0, %v937
        %v939 = vpop.f32.mrf.mxu0
        %940 = vmatprep.mubr.f32.mxu0 0.0
        %941 = vmatmul.mubr.f32.gmra.mxu0 %v852
        %v942 = vpop.f32.mrf.mxu0
        %v943 = vadd.f32 0.0, %v942
        %v944 = vpop.f32.mrf.mxu0
        %945 = vmatprep.mubr.f32.mxu0 0.0
        %946 = vmatmul.mubr.f32.gmra.mxu0 %v855
        %v947 = vpop.f32.mrf.mxu0
        %v948 = vadd.f32 0.0, %v947
        %v949 = vpop.f32.mrf.mxu0
        %950 = vmatprep.mubr.f32.mxu0 0.0
        %951 = vmatmul.mubr.f32.gmra.mxu0 %v858
        %v952 = vpop.f32.mrf.mxu0
        %v953 = vadd.f32 0.0, %v952
        %v954 = vpop.f32.mrf.mxu0
        %955 = vmatprep.mubr.f32.mxu0 0.0
        %956 = vmatmul.mubr.f32.gmra.mxu0 %v861
        %v957 = vpop.f32.mrf.mxu0
        %v958 = vadd.f32 0.0, %v957
        %v959 = vpop.f32.mrf.mxu0
        %960 = vmatprep.mubr.f32.mxu0 0.0
        %961 = vmatmul.mubr.f32.gmra.mxu0 %v864
        %v962 = vpop.f32.mrf.mxu0
        %v963 = vadd.f32 0.0, %v962
        %v964 = vpop.f32.mrf.mxu0
        %965 = vdwg.mxu0
        %v966 = vadd.f32 %v829, %v933
        %v967 = vadd.f32 %v830, %v938
        %v968 = vadd.f32 %v831, %v943
        %v969 = vadd.f32 %v832, %v948
        %v970 = vadd.f32 %v833, %v953
        %v971 = vadd.f32 %v834, %v958
        %v972 = vadd.f32 %v835, %v963
        %s973 = scalar_lea.vmem %s437, 128
        %v974 = vld [vmem:[%s973] sm:$0xff]
        %v975 = vld [vmem:[%s973 + $0x8] sm:$0xff]
        %v976 = vld [vmem:[%s973 + $0x10] sm:$0xff]
        %v977 = vld [vmem:[%s973 + $0x18] sm:$0xff]
        %v978 = vld [vmem:[%s973 + $0x20] sm:$0xff]
        %v979 = vld [vmem:[%s973 + $0x28] sm:$0xff]
        %v980 = vld [vmem:[%s973 + $0x30] sm:$0x7f]
        %s981 = scalar_lea.vmem %s1, 32
        %v982 = vld [vmem:[%s981] sm:$0xff]
        %v984 = vsel %vm456, %v974, 0
        %v987 = vsel %vm456, %v975, 0
        %v990 = vsel %vm456, %v976, 0
        %v993 = vsel %vm456, %v977, 0
        %v996 = vsel %vm456, %v978, 0
        %v999 = vsel %vm456, %v979, 0
        %v1002 = vsel %vm456, %v980, 0
        %1004 = vmatprep.subr.mxu0 0.0
        %1005 = vmatpush1.msra.mxu0 0.0
        %1006 = vmatprep.subr.mxu0 0.0
        %1007 = vmatpush1.msra.mxu0 0.0
        %1008 = vmatprep.subr.mxu0 0.0
        %1009 = vmatpush1.msra.mxu0 0.0
        %1010 = vmatprep.subr.mxu0 0.0
        %1011 = vmatpush1.msra.mxu0 0.0
        %1012 = vmatprep.subr.mxu0 0.0
        %1013 = vmatpush1.msra.mxu0 0.0
        %1014 = vmatprep.subr.mxu0 0.0
        %1015 = vmatpush1.msra.mxu0 0.0
        %1016 = vmatprep.subr.mxu0 0.0
        %1017 = vmatpush1.msra.mxu0 0.0
        %1018 = vmatprep.subr.mxu0 0.0
        %1019 = vmatpush1.msra.mxu0 0.0
        %1020 = vmatprep.subr.mxu0 0.0
        %1021 = vmatpush1.msra.mxu0 0.0
        %1022 = vmatprep.subr.mxu0 0.0
        %1023 = vmatpush1.msra.mxu0 0.0
        %1024 = vmatprep.subr.mxu0 0.0
        %1025 = vmatpush1.msra.mxu0 0.0
        %1026 = vmatprep.subr.mxu0 0.0
        %1027 = vmatpush1.msra.mxu0 0.0
        %1028 = vmatprep.subr.mxu0 0.0
        %1029 = vmatpush1.msra.mxu0 0.0
        %1030 = vmatprep.subr.mxu0 0.0
        %1031 = vmatpush1.msra.mxu0 0.0
        %1032 = vmatprep.subr.mxu0 0.0
        %1033 = vmatpush1.msra.mxu0 0.0
        %1034 = vmatprep.subr.mxu0 0.0
        %1035 = vmatpush1.msra.mxu0 %v982
        %1036 = vmatprep.subr.mxu0 0.0
        %1037 = vmatpush2.msra.mxu0 0.0
        %1038 = vmatprep.subr.mxu0 0.0
        %1039 = vmatpush2.msra.mxu0 0.0
        %1040 = vmatprep.subr.mxu0 0.0
        %1041 = vmatpush2.msra.mxu0 0.0
        %1042 = vmatprep.subr.mxu0 0.0
        %1043 = vmatpush2.msra.mxu0 0.0
        %1044 = vmatprep.subr.mxu0 0.0
        %1045 = vmatpush2.msra.mxu0 0.0
        %1046 = vmatprep.subr.mxu0 0.0
        %1047 = vmatpush2.msra.mxu0 0.0
        %1048 = vmatprep.subr.mxu0 0.0
        %1049 = vmatpush2.msra.mxu0 0.0
        %1050 = vmatprep.subr.mxu0 0.0
        %1051 = vmatpush2.msra.mxu0 0.0
        %1052 = vmatprep.subr.mxu0 0.0
        %1053 = vmatpush2.msra.mxu0 0.0
        %1054 = vmatprep.subr.mxu0 0.0
        %1055 = vmatpush2.msra.mxu0 0.0
        %1056 = vmatprep.subr.mxu0 0.0
        %1057 = vmatpush2.msra.mxu0 0.0
        %1058 = vmatprep.subr.mxu0 0.0
        %1059 = vmatpush2.msra.mxu0 0.0
        %1060 = vmatprep.subr.mxu0 0.0
        %1061 = vmatpush2.msra.mxu0 0.0
        %1062 = vmatprep.subr.mxu0 0.0
        %1063 = vmatpush2.msra.mxu0 0.0
        %1064 = vmatprep.subr.mxu0 0.0
        %1065 = vmatpush2.msra.mxu0 0.0
        %1066 = vmatprep.subr.mxu0 0.0
        %1067 = vmatpush2.msra.mxu0 0.0
        %1068 = vmatprep.mubr.f32.mxu0 0.0
        %1069 = vmatmul.mubr.f32.gmra.mxu0 %v984
        %v1070 = vpop.f32.mrf.mxu0
        %v1071 = vadd.f32 0.0, %v1070
        %v1072 = vpop.f32.mrf.mxu0
        %1073 = vmatprep.mubr.f32.mxu0 0.0
        %1074 = vmatmul.mubr.f32.gmra.mxu0 %v987
        %v1075 = vpop.f32.mrf.mxu0
        %v1076 = vadd.f32 0.0, %v1075
        %v1077 = vpop.f32.mrf.mxu0
        %1078 = vmatprep.mubr.f32.mxu0 0.0
        %1079 = vmatmul.mubr.f32.gmra.mxu0 %v990
        %v1080 = vpop.f32.mrf.mxu0
        %v1081 = vadd.f32 0.0, %v1080
        %v1082 = vpop.f32.mrf.mxu0
        %1083 = vmatprep.mubr.f32.mxu0 0.0
        %1084 = vmatmul.mubr.f32.gmra.mxu0 %v993
        %v1085 = vpop.f32.mrf.mxu0
        %v1086 = vadd.f32 0.0, %v1085
        %v1087 = vpop.f32.mrf.mxu0
        %1088 = vmatprep.mubr.f32.mxu0 0.0
        %1089 = vmatmul.mubr.f32.gmra.mxu0 %v996
        %v1090 = vpop.f32.mrf.mxu0
        %v1091 = vadd.f32 0.0, %v1090
        %v1092 = vpop.f32.mrf.mxu0
        %1093 = vmatprep.mubr.f32.mxu0 0.0
        %1094 = vmatmul.mubr.f32.gmra.mxu0 %v999
        %v1095 = vpop.f32.mrf.mxu0
        %v1096 = vadd.f32 0.0, %v1095
        %v1097 = vpop.f32.mrf.mxu0
        %1098 = vmatprep.mubr.f32.mxu0 0.0
        %1099 = vmatmul.mubr.f32.gmra.mxu0 %v1002
        %v1100 = vpop.f32.mrf.mxu0
        %v1101 = vadd.f32 0.0, %v1100
        %v1102 = vpop.f32.mrf.mxu0
        %1103 = vdwg.mxu0
        %v1104 = vadd.f32 %v966, %v1071
        %v1105 = vadd.f32 %v967, %v1076
        %v1106 = vadd.f32 %v968, %v1081
        %v1107 = vadd.f32 %v969, %v1086
        %v1108 = vadd.f32 %v970, %v1091
        %v1109 = vadd.f32 %v971, %v1096
        %v1110 = vadd.f32 %v972, %v1101
        %s1111 = scalar_lea.vmem %s437, 192
        %v1112 = vld [vmem:[%s1111] sm:$0xff]
        %v1113 = vld [vmem:[%s1111 + $0x8] sm:$0xff]
        %v1114 = vld [vmem:[%s1111 + $0x10] sm:$0xff]
        %v1115 = vld [vmem:[%s1111 + $0x18] sm:$0xff]
        %v1116 = vld [vmem:[%s1111 + $0x20] sm:$0xff]
        %v1117 = vld [vmem:[%s1111 + $0x28] sm:$0xff]
        %v1118 = vld [vmem:[%s1111 + $0x30] sm:$0x7f]
        %s1119 = scalar_lea.vmem %s1, 40
        %v1120 = vld [vmem:[%s1119] sm:$0xff]
        %v1122 = vsel %vm456, %v1112, 0
        %v1125 = vsel %vm456, %v1113, 0
        %v1128 = vsel %vm456, %v1114, 0
        %v1131 = vsel %vm456, %v1115, 0
        %v1134 = vsel %vm456, %v1116, 0
        %v1137 = vsel %vm456, %v1117, 0
        %v1140 = vsel %vm456, %v1118, 0
        %1142 = vmatprep.subr.mxu0 0.0
        %1143 = vmatpush1.msra.mxu0 0.0
        %1144 = vmatprep.subr.mxu0 0.0
        %1145 = vmatpush1.msra.mxu0 0.0
        %1146 = vmatprep.subr.mxu0 0.0
        %1147 = vmatpush1.msra.mxu0 0.0
        %1148 = vmatprep.subr.mxu0 0.0
        %1149 = vmatpush1.msra.mxu0 0.0
        %1150 = vmatprep.subr.mxu0 0.0
        %1151 = vmatpush1.msra.mxu0 0.0
        %1152 = vmatprep.subr.mxu0 0.0
        %1153 = vmatpush1.msra.mxu0 0.0
        %1154 = vmatprep.subr.mxu0 0.0
        %1155 = vmatpush1.msra.mxu0 0.0
        %1156 = vmatprep.subr.mxu0 0.0
        %1157 = vmatpush1.msra.mxu0 0.0
        %1158 = vmatprep.subr.mxu0 0.0
        %1159 = vmatpush1.msra.mxu0 0.0
        %1160 = vmatprep.subr.mxu0 0.0
        %1161 = vmatpush1.msra.mxu0 0.0
        %1162 = vmatprep.subr.mxu0 0.0
        %1163 = vmatpush1.msra.mxu0 0.0
        %1164 = vmatprep.subr.mxu0 0.0
        %1165 = vmatpush1.msra.mxu0 0.0
        %1166 = vmatprep.subr.mxu0 0.0
        %1167 = vmatpush1.msra.mxu0 0.0
        %1168 = vmatprep.subr.mxu0 0.0
        %1169 = vmatpush1.msra.mxu0 0.0
        %1170 = vmatprep.subr.mxu0 0.0
        %1171 = vmatpush1.msra.mxu0 0.0
        %1172 = vmatprep.subr.mxu0 0.0
        %1173 = vmatpush1.msra.mxu0 %v1120
        %1174 = vmatprep.subr.mxu0 0.0
        %1175 = vmatpush2.msra.mxu0 0.0
        %1176 = vmatprep.subr.mxu0 0.0
        %1177 = vmatpush2.msra.mxu0 0.0
        %1178 = vmatprep.subr.mxu0 0.0
        %1179 = vmatpush2.msra.mxu0 0.0
        %1180 = vmatprep.subr.mxu0 0.0
        %1181 = vmatpush2.msra.mxu0 0.0
        %1182 = vmatprep.subr.mxu0 0.0
        %1183 = vmatpush2.msra.mxu0 0.0
        %1184 = vmatprep.subr.mxu0 0.0
        %1185 = vmatpush2.msra.mxu0 0.0
        %1186 = vmatprep.subr.mxu0 0.0
        %1187 = vmatpush2.msra.mxu0 0.0
        %1188 = vmatprep.subr.mxu0 0.0
        %1189 = vmatpush2.msra.mxu0 0.0
        %1190 = vmatprep.subr.mxu0 0.0
        %1191 = vmatpush2.msra.mxu0 0.0
        %1192 = vmatprep.subr.mxu0 0.0
        %1193 = vmatpush2.msra.mxu0 0.0
        %1194 = vmatprep.subr.mxu0 0.0
        %1195 = vmatpush2.msra.mxu0 0.0
        %1196 = vmatprep.subr.mxu0 0.0
        %1197 = vmatpush2.msra.mxu0 0.0
        %1198 = vmatprep.subr.mxu0 0.0
        %1199 = vmatpush2.msra.mxu0 0.0
        %1200 = vmatprep.subr.mxu0 0.0
        %1201 = vmatpush2.msra.mxu0 0.0
        %1202 = vmatprep.subr.mxu0 0.0
        %1203 = vmatpush2.msra.mxu0 0.0
        %1204 = vmatprep.subr.mxu0 0.0
        %1205 = vmatpush2.msra.mxu0 0.0
        %1206 = vmatprep.mubr.f32.mxu0 0.0
        %1207 = vmatmul.mubr.f32.gmra.mxu0 %v1122
        %v1208 = vpop.f32.mrf.mxu0
        %v1209 = vadd.f32 0.0, %v1208
        %v1210 = vpop.f32.mrf.mxu0
        %1211 = vmatprep.mubr.f32.mxu0 0.0
        %1212 = vmatmul.mubr.f32.gmra.mxu0 %v1125
        %v1213 = vpop.f32.mrf.mxu0
        %v1214 = vadd.f32 0.0, %v1213
        %v1215 = vpop.f32.mrf.mxu0
        %1216 = vmatprep.mubr.f32.mxu0 0.0
        %1217 = vmatmul.mubr.f32.gmra.mxu0 %v1128
        %v1218 = vpop.f32.mrf.mxu0
        %v1219 = vadd.f32 0.0, %v1218
        %v1220 = vpop.f32.mrf.mxu0
        %1221 = vmatprep.mubr.f32.mxu0 0.0
        %1222 = vmatmul.mubr.f32.gmra.mxu0 %v1131
        %v1223 = vpop.f32.mrf.mxu0
        %v1224 = vadd.f32 0.0, %v1223
        %v1225 = vpop.f32.mrf.mxu0
        %1226 = vmatprep.mubr.f32.mxu0 0.0
        %1227 = vmatmul.mubr.f32.gmra.mxu0 %v1134
        %v1228 = vpop.f32.mrf.mxu0
        %v1229 = vadd.f32 0.0, %v1228
        %v1230 = vpop.f32.mrf.mxu0
        %1231 = vmatprep.mubr.f32.mxu0 0.0
        %1232 = vmatmul.mubr.f32.gmra.mxu0 %v1137
        %v1233 = vpop.f32.mrf.mxu0
        %v1234 = vadd.f32 0.0, %v1233
        %v1235 = vpop.f32.mrf.mxu0
        %1236 = vmatprep.mubr.f32.mxu0 0.0
        %1237 = vmatmul.mubr.f32.gmra.mxu0 %v1140
        %v1238 = vpop.f32.mrf.mxu0
        %v1239 = vadd.f32 0.0, %v1238
        %v1240 = vpop.f32.mrf.mxu0
        %1241 = vdwg.mxu0
        %v1242 = vadd.f32 %v1104, %v1209
        %v1243 = vadd.f32 %v1105, %v1214
        %v1244 = vadd.f32 %v1106, %v1219
        %v1245 = vadd.f32 %v1107, %v1224
        %v1246 = vadd.f32 %v1108, %v1229
        %v1247 = vadd.f32 %v1109, %v1234
        %v1248 = vadd.f32 %v1110, %v1239
        %v1249 = vld [vmem:[%s973 + $0x1] sm:$0xff]
        %v1250 = vld [vmem:[%s973 + $0x9] sm:$0xff]
        %v1251 = vld [vmem:[%s973 + $0x11] sm:$0xff]
        %v1252 = vld [vmem:[%s973 + $0x19] sm:$0xff]
        %v1253 = vld [vmem:[%s973 + $0x21] sm:$0xff]
        %v1254 = vld [vmem:[%s973 + $0x29] sm:$0xff]
        %v1255 = vld [vmem:[%s973 + $0x31] sm:$0x7f]
        %s1256 = scalar_lea.vmem %s1, 48
        %v1257 = vld [vmem:[%s1256] sm:$0xff]
        %v1259 = vsel %vm456, %v1249, 0
        %v1262 = vsel %vm456, %v1250, 0
        %v1265 = vsel %vm456, %v1251, 0
        %v1268 = vsel %vm456, %v1252, 0
        %v1271 = vsel %vm456, %v1253, 0
        %v1274 = vsel %vm456, %v1254, 0
        %v1277 = vsel %vm456, %v1255, 0
        %1279 = vmatprep.subr.mxu0 0.0
        %1280 = vmatpush1.msra.mxu0 0.0
        %1281 = vmatprep.subr.mxu0 0.0
        %1282 = vmatpush1.msra.mxu0 0.0
        %1283 = vmatprep.subr.mxu0 0.0
        %1284 = vmatpush1.msra.mxu0 0.0
        %1285 = vmatprep.subr.mxu0 0.0
        %1286 = vmatpush1.msra.mxu0 0.0
        %1287 = vmatprep.subr.mxu0 0.0
        %1288 = vmatpush1.msra.mxu0 0.0
        %1289 = vmatprep.subr.mxu0 0.0
        %1290 = vmatpush1.msra.mxu0 0.0
        %1291 = vmatprep.subr.mxu0 0.0
        %1292 = vmatpush1.msra.mxu0 0.0
        %1293 = vmatprep.subr.mxu0 0.0
        %1294 = vmatpush1.msra.mxu0 0.0
        %1295 = vmatprep.subr.mxu0 0.0
        %1296 = vmatpush1.msra.mxu0 0.0
        %1297 = vmatprep.subr.mxu0 0.0
        %1298 = vmatpush1.msra.mxu0 0.0
        %1299 = vmatprep.subr.mxu0 0.0
        %1300 = vmatpush1.msra.mxu0 0.0
        %1301 = vmatprep.subr.mxu0 0.0
        %1302 = vmatpush1.msra.mxu0 0.0
        %1303 = vmatprep.subr.mxu0 0.0
        %1304 = vmatpush1.msra.mxu0 0.0
        %1305 = vmatprep.subr.mxu0 0.0
        %1306 = vmatpush1.msra.mxu0 0.0
        %1307 = vmatprep.subr.mxu0 0.0
        %1308 = vmatpush1.msra.mxu0 0.0
        %1309 = vmatprep.subr.mxu0 0.0
        %1310 = vmatpush1.msra.mxu0 %v1257
        %1311 = vmatprep.subr.mxu0 0.0
        %1312 = vmatpush2.msra.mxu0 0.0
        %1313 = vmatprep.subr.mxu0 0.0
        %1314 = vmatpush2.msra.mxu0 0.0
        %1315 = vmatprep.subr.mxu0 0.0
        %1316 = vmatpush2.msra.mxu0 0.0
        %1317 = vmatprep.subr.mxu0 0.0
        %1318 = vmatpush2.msra.mxu0 0.0
        %1319 = vmatprep.subr.mxu0 0.0
        %1320 = vmatpush2.msra.mxu0 0.0
        %1321 = vmatprep.subr.mxu0 0.0
        %1322 = vmatpush2.msra.mxu0 0.0
        %1323 = vmatprep.subr.mxu0 0.0
        %1324 = vmatpush2.msra.mxu0 0.0
        %1325 = vmatprep.subr.mxu0 0.0
        %1326 = vmatpush2.msra.mxu0 0.0
        %1327 = vmatprep.subr.mxu0 0.0
        %1328 = vmatpush2.msra.mxu0 0.0
        %1329 = vmatprep.subr.mxu0 0.0
        %1330 = vmatpush2.msra.mxu0 0.0
        %1331 = vmatprep.subr.mxu0 0.0
        %1332 = vmatpush2.msra.mxu0 0.0
        %1333 = vmatprep.subr.mxu0 0.0
        %1334 = vmatpush2.msra.mxu0 0.0
        %1335 = vmatprep.subr.mxu0 0.0
        %1336 = vmatpush2.msra.mxu0 0.0
        %1337 = vmatprep.subr.mxu0 0.0
        %1338 = vmatpush2.msra.mxu0 0.0
        %1339 = vmatprep.subr.mxu0 0.0
        %1340 = vmatpush2.msra.mxu0 0.0
        %1341 = vmatprep.subr.mxu0 0.0
        %1342 = vmatpush2.msra.mxu0 0.0
        %1343 = vmatprep.mubr.f32.mxu0 0.0
        %1344 = vmatmul.mubr.f32.gmra.mxu0 %v1259
        %v1345 = vpop.f32.mrf.mxu0
        %v1346 = vadd.f32 0.0, %v1345
        %v1347 = vpop.f32.mrf.mxu0
        %1348 = vmatprep.mubr.f32.mxu0 0.0
        %1349 = vmatmul.mubr.f32.gmra.mxu0 %v1262
        %v1350 = vpop.f32.mrf.mxu0
        %v1351 = vadd.f32 0.0, %v1350
        %v1352 = vpop.f32.mrf.mxu0
        %1353 = vmatprep.mubr.f32.mxu0 0.0
        %1354 = vmatmul.mubr.f32.gmra.mxu0 %v1265
        %v1355 = vpop.f32.mrf.mxu0
        %v1356 = vadd.f32 0.0, %v1355
        %v1357 = vpop.f32.mrf.mxu0
        %1358 = vmatprep.mubr.f32.mxu0 0.0
        %1359 = vmatmul.mubr.f32.gmra.mxu0 %v1268
        %v1360 = vpop.f32.mrf.mxu0
        %v1361 = vadd.f32 0.0, %v1360
        %v1362 = vpop.f32.mrf.mxu0
        %1363 = vmatprep.mubr.f32.mxu0 0.0
        %1364 = vmatmul.mubr.f32.gmra.mxu0 %v1271
        %v1365 = vpop.f32.mrf.mxu0
        %v1366 = vadd.f32 0.0, %v1365
        %v1367 = vpop.f32.mrf.mxu0
        %1368 = vmatprep.mubr.f32.mxu0 0.0
        %1369 = vmatmul.mubr.f32.gmra.mxu0 %v1274
        %v1370 = vpop.f32.mrf.mxu0
        %v1371 = vadd.f32 0.0, %v1370
        %v1372 = vpop.f32.mrf.mxu0
        %1373 = vmatprep.mubr.f32.mxu0 0.0
        %1374 = vmatmul.mubr.f32.gmra.mxu0 %v1277
        %v1375 = vpop.f32.mrf.mxu0
        %v1376 = vadd.f32 0.0, %v1375
        %v1377 = vpop.f32.mrf.mxu0
        %1378 = vdwg.mxu0
        %v1379 = vadd.f32 %v1242, %v1346
        %v1380 = vadd.f32 %v1243, %v1351
        %v1381 = vadd.f32 %v1244, %v1356
        %v1382 = vadd.f32 %v1245, %v1361
        %v1383 = vadd.f32 %v1246, %v1366
        %v1384 = vadd.f32 %v1247, %v1371
        %v1385 = vadd.f32 %v1248, %v1376
        %v1386 = vld [vmem:[%s1111 + $0x1] sm:$0xff]
        %v1387 = vld [vmem:[%s1111 + $0x9] sm:$0xff]
        %v1388 = vld [vmem:[%s1111 + $0x11] sm:$0xff]
        %v1389 = vld [vmem:[%s1111 + $0x19] sm:$0xff]
        %v1390 = vld [vmem:[%s1111 + $0x21] sm:$0xff]
        %v1391 = vld [vmem:[%s1111 + $0x29] sm:$0xff]
        %v1392 = vld [vmem:[%s1111 + $0x31] sm:$0x7f]
        %s1393 = scalar_lea.vmem %s1, 56
        %v1394 = vld [vmem:[%s1393] sm:$0xff]
        %v1396 = vsel %vm456, %v1386, 0
        %v1399 = vsel %vm456, %v1387, 0
        %v1402 = vsel %vm456, %v1388, 0
        %v1405 = vsel %vm456, %v1389, 0
        %v1408 = vsel %vm456, %v1390, 0
        %v1411 = vsel %vm456, %v1391, 0
        %v1414 = vsel %vm456, %v1392, 0
        %1416 = vmatprep.subr.mxu0 0.0
        %1417 = vmatpush1.msra.mxu0 0.0
        %1418 = vmatprep.subr.mxu0 0.0
        %1419 = vmatpush1.msra.mxu0 0.0
        %1420 = vmatprep.subr.mxu0 0.0
        %1421 = vmatpush1.msra.mxu0 0.0
        %1422 = vmatprep.subr.mxu0 0.0
        %1423 = vmatpush1.msra.mxu0 0.0
        %1424 = vmatprep.subr.mxu0 0.0
        %1425 = vmatpush1.msra.mxu0 0.0
        %1426 = vmatprep.subr.mxu0 0.0
        %1427 = vmatpush1.msra.mxu0 0.0
        %1428 = vmatprep.subr.mxu0 0.0
        %1429 = vmatpush1.msra.mxu0 0.0
        %1430 = vmatprep.subr.mxu0 0.0
        %1431 = vmatpush1.msra.mxu0 0.0
        %1432 = vmatprep.subr.mxu0 0.0
        %1433 = vmatpush1.msra.mxu0 0.0
        %1434 = vmatprep.subr.mxu0 0.0
        %1435 = vmatpush1.msra.mxu0 0.0
        %1436 = vmatprep.subr.mxu0 0.0
        %1437 = vmatpush1.msra.mxu0 0.0
        %1438 = vmatprep.subr.mxu0 0.0
        %1439 = vmatpush1.msra.mxu0 0.0
        %1440 = vmatprep.subr.mxu0 0.0
        %1441 = vmatpush1.msra.mxu0 0.0
        %1442 = vmatprep.subr.mxu0 0.0
        %1443 = vmatpush1.msra.mxu0 0.0
        %1444 = vmatprep.subr.mxu0 0.0
        %1445 = vmatpush1.msra.mxu0 0.0
        %1446 = vmatprep.subr.mxu0 0.0
        %1447 = vmatpush1.msra.mxu0 %v1394
        %1448 = vmatprep.subr.mxu0 0.0
        %1449 = vmatpush2.msra.mxu0 0.0
        %1450 = vmatprep.subr.mxu0 0.0
        %1451 = vmatpush2.msra.mxu0 0.0
        %1452 = vmatprep.subr.mxu0 0.0
        %1453 = vmatpush2.msra.mxu0 0.0
        %1454 = vmatprep.subr.mxu0 0.0
        %1455 = vmatpush2.msra.mxu0 0.0
        %1456 = vmatprep.subr.mxu0 0.0
        %1457 = vmatpush2.msra.mxu0 0.0
        %1458 = vmatprep.subr.mxu0 0.0
        %1459 = vmatpush2.msra.mxu0 0.0
        %1460 = vmatprep.subr.mxu0 0.0
        %1461 = vmatpush2.msra.mxu0 0.0
        %1462 = vmatprep.subr.mxu0 0.0
        %1463 = vmatpush2.msra.mxu0 0.0
        %1464 = vmatprep.subr.mxu0 0.0
        %1465 = vmatpush2.msra.mxu0 0.0
        %1466 = vmatprep.subr.mxu0 0.0
        %1467 = vmatpush2.msra.mxu0 0.0
        %1468 = vmatprep.subr.mxu0 0.0
        %1469 = vmatpush2.msra.mxu0 0.0
        %1470 = vmatprep.subr.mxu0 0.0
        %1471 = vmatpush2.msra.mxu0 0.0
        %1472 = vmatprep.subr.mxu0 0.0
        %1473 = vmatpush2.msra.mxu0 0.0
        %1474 = vmatprep.subr.mxu0 0.0
        %1475 = vmatpush2.msra.mxu0 0.0
        %1476 = vmatprep.subr.mxu0 0.0
        %1477 = vmatpush2.msra.mxu0 0.0
        %1478 = vmatprep.subr.mxu0 0.0
        %1479 = vmatpush2.msra.mxu0 0.0
        %1480 = vmatprep.mubr.f32.mxu0 0.0
        %1481 = vmatmul.mubr.f32.gmra.mxu0 %v1396
        %v1482 = vpop.f32.mrf.mxu0
        %v1483 = vadd.f32 0.0, %v1482
        %v1484 = vpop.f32.mrf.mxu0
        %1485 = vmatprep.mubr.f32.mxu0 0.0
        %1486 = vmatmul.mubr.f32.gmra.mxu0 %v1399
        %v1487 = vpop.f32.mrf.mxu0
        %v1488 = vadd.f32 0.0, %v1487
        %v1489 = vpop.f32.mrf.mxu0
        %1490 = vmatprep.mubr.f32.mxu0 0.0
        %1491 = vmatmul.mubr.f32.gmra.mxu0 %v1402
        %v1492 = vpop.f32.mrf.mxu0
        %v1493 = vadd.f32 0.0, %v1492
        %v1494 = vpop.f32.mrf.mxu0
        %1495 = vmatprep.mubr.f32.mxu0 0.0
        %1496 = vmatmul.mubr.f32.gmra.mxu0 %v1405
        %v1497 = vpop.f32.mrf.mxu0
        %v1498 = vadd.f32 0.0, %v1497
        %v1499 = vpop.f32.mrf.mxu0
        %1500 = vmatprep.mubr.f32.mxu0 0.0
        %1501 = vmatmul.mubr.f32.gmra.mxu0 %v1408
        %v1502 = vpop.f32.mrf.mxu0
        %v1503 = vadd.f32 0.0, %v1502
        %v1504 = vpop.f32.mrf.mxu0
        %1505 = vmatprep.mubr.f32.mxu0 0.0
        %1506 = vmatmul.mubr.f32.gmra.mxu0 %v1411
        %v1507 = vpop.f32.mrf.mxu0
        %v1508 = vadd.f32 0.0, %v1507
        %v1509 = vpop.f32.mrf.mxu0
        %1510 = vmatprep.mubr.f32.mxu0 0.0
        %1511 = vmatmul.mubr.f32.gmra.mxu0 %v1414
        %v1512 = vpop.f32.mrf.mxu0
        %v1513 = vadd.f32 0.0, %v1512
        %v1514 = vpop.f32.mrf.mxu0
        %1515 = vdwg.mxu0
        %v1516 = vadd.f32 %v1379, %v1483
        %v1517 = vadd.f32 %v1380, %v1488
        %v1518 = vadd.f32 %v1381, %v1493
        %v1519 = vadd.f32 %v1382, %v1498
        %v1520 = vadd.f32 %v1383, %v1503
        %v1521 = vadd.f32 %v1384, %v1508
        %v1522 = vadd.f32 %v1385, %v1513
        %v1523 = vld [vmem:[%s437 + $0x8] sm:$0xff]
        %v1524 = vld [vmem:[%s437 + $0x10] sm:$0xff]
        %v1525 = vld [vmem:[%s437 + $0x18] sm:$0xff]
        %v1526 = vld [vmem:[%s437 + $0x20] sm:$0xff]
        %v1527 = vld [vmem:[%s437 + $0x28] sm:$0xff]
        %v1528 = vld [vmem:[%s437 + $0x30] sm:$0xff]
        %v1529 = vld [vmem:[%s437 + $0x38] sm:$0x7f]
        %s1530 = scalar_lea.vmem %s1, 64
        %v1531 = vld [vmem:[%s1530] sm:$0xff]
        %v1533 = vsel %vm456, %v1523, 0
        %v1536 = vsel %vm456, %v1524, 0
        %v1539 = vsel %vm456, %v1525, 0
        %v1542 = vsel %vm456, %v1526, 0
        %v1545 = vsel %vm456, %v1527, 0
        %v1548 = vsel %vm456, %v1528, 0
        %v1551 = vsel %vm456, %v1529, 0
        %1553 = vmatprep.subr.mxu0 0.0
        %1554 = vmatpush1.msra.mxu0 0.0
        %1555 = vmatprep.subr.mxu0 0.0
        %1556 = vmatpush1.msra.mxu0 0.0
        %1557 = vmatprep.subr.mxu0 0.0
        %1558 = vmatpush1.msra.mxu0 0.0
        %1559 = vmatprep.subr.mxu0 0.0
        %1560 = vmatpush1.msra.mxu0 0.0
        %1561 = vmatprep.subr.mxu0 0.0
        %1562 = vmatpush1.msra.mxu0 0.0
        %1563 = vmatprep.subr.mxu0 0.0
        %1564 = vmatpush1.msra.mxu0 0.0
        %1565 = vmatprep.subr.mxu0 0.0
        %1566 = vmatpush1.msra.mxu0 0.0
        %1567 = vmatprep.subr.mxu0 0.0
        %1568 = vmatpush1.msra.mxu0 0.0
        %1569 = vmatprep.subr.mxu0 0.0
        %1570 = vmatpush1.msra.mxu0 0.0
        %1571 = vmatprep.subr.mxu0 0.0
        %1572 = vmatpush1.msra.mxu0 0.0
        %1573 = vmatprep.subr.mxu0 0.0
        %1574 = vmatpush1.msra.mxu0 0.0
        %1575 = vmatprep.subr.mxu0 0.0
        %1576 = vmatpush1.msra.mxu0 0.0
        %1577 = vmatprep.subr.mxu0 0.0
        %1578 = vmatpush1.msra.mxu0 0.0
        %1579 = vmatprep.subr.mxu0 0.0
        %1580 = vmatpush1.msra.mxu0 0.0
        %1581 = vmatprep.subr.mxu0 0.0
        %1582 = vmatpush1.msra.mxu0 0.0
        %1583 = vmatprep.subr.mxu0 0.0
        %1584 = vmatpush1.msra.mxu0 %v1531
        %1585 = vmatprep.subr.mxu0 0.0
        %1586 = vmatpush2.msra.mxu0 0.0
        %1587 = vmatprep.subr.mxu0 0.0
        %1588 = vmatpush2.msra.mxu0 0.0
        %1589 = vmatprep.subr.mxu0 0.0
        %1590 = vmatpush2.msra.mxu0 0.0
        %1591 = vmatprep.subr.mxu0 0.0
        %1592 = vmatpush2.msra.mxu0 0.0
        %1593 = vmatprep.subr.mxu0 0.0
        %1594 = vmatpush2.msra.mxu0 0.0
        %1595 = vmatprep.subr.mxu0 0.0
        %1596 = vmatpush2.msra.mxu0 0.0
        %1597 = vmatprep.subr.mxu0 0.0
        %1598 = vmatpush2.msra.mxu0 0.0
        %1599 = vmatprep.subr.mxu0 0.0
        %1600 = vmatpush2.msra.mxu0 0.0
        %1601 = vmatprep.subr.mxu0 0.0
        %1602 = vmatpush2.msra.mxu0 0.0
        %1603 = vmatprep.subr.mxu0 0.0
        %1604 = vmatpush2.msra.mxu0 0.0
        %1605 = vmatprep.subr.mxu0 0.0
        %1606 = vmatpush2.msra.mxu0 0.0
        %1607 = vmatprep.subr.mxu0 0.0
        %1608 = vmatpush2.msra.mxu0 0.0
        %1609 = vmatprep.subr.mxu0 0.0
        %1610 = vmatpush2.msra.mxu0 0.0
        %1611 = vmatprep.subr.mxu0 0.0
        %1612 = vmatpush2.msra.mxu0 0.0
        %1613 = vmatprep.subr.mxu0 0.0
        %1614 = vmatpush2.msra.mxu0 0.0
        %1615 = vmatprep.subr.mxu0 0.0
        %1616 = vmatpush2.msra.mxu0 0.0
        %1617 = vmatprep.mubr.f32.mxu0 0.0
        %1618 = vmatmul.mubr.f32.gmra.mxu0 %v1533
        %v1619 = vpop.f32.mrf.mxu0
        %v1620 = vadd.f32 0.0, %v1619
        %v1621 = vpop.f32.mrf.mxu0
        %1622 = vmatprep.mubr.f32.mxu0 0.0
        %1623 = vmatmul.mubr.f32.gmra.mxu0 %v1536
        %v1624 = vpop.f32.mrf.mxu0
        %v1625 = vadd.f32 0.0, %v1624
        %v1626 = vpop.f32.mrf.mxu0
        %1627 = vmatprep.mubr.f32.mxu0 0.0
        %1628 = vmatmul.mubr.f32.gmra.mxu0 %v1539
        %v1629 = vpop.f32.mrf.mxu0
        %v1630 = vadd.f32 0.0, %v1629
        %v1631 = vpop.f32.mrf.mxu0
        %1632 = vmatprep.mubr.f32.mxu0 0.0
        %1633 = vmatmul.mubr.f32.gmra.mxu0 %v1542
        %v1634 = vpop.f32.mrf.mxu0
        %v1635 = vadd.f32 0.0, %v1634
        %v1636 = vpop.f32.mrf.mxu0
        %1637 = vmatprep.mubr.f32.mxu0 0.0
        %1638 = vmatmul.mubr.f32.gmra.mxu0 %v1545
        %v1639 = vpop.f32.mrf.mxu0
        %v1640 = vadd.f32 0.0, %v1639
        %v1641 = vpop.f32.mrf.mxu0
        %1642 = vmatprep.mubr.f32.mxu0 0.0
        %1643 = vmatmul.mubr.f32.gmra.mxu0 %v1548
        %v1644 = vpop.f32.mrf.mxu0
        %v1645 = vadd.f32 0.0, %v1644
        %v1646 = vpop.f32.mrf.mxu0
        %1647 = vmatprep.mubr.f32.mxu0 0.0
        %1648 = vmatmul.mubr.f32.gmra.mxu0 %v1551
        %v1649 = vpop.f32.mrf.mxu0
        %v1650 = vadd.f32 0.0, %v1649
        %v1651 = vpop.f32.mrf.mxu0
        %1652 = vdwg.mxu0
        %v1653 = vadd.f32 %v1516, %v1620
        %v1654 = vadd.f32 %v1517, %v1625
        %v1655 = vadd.f32 %v1518, %v1630
        %v1656 = vadd.f32 %v1519, %v1635
        %v1657 = vadd.f32 %v1520, %v1640
        %v1658 = vadd.f32 %v1521, %v1645
        %v1659 = vadd.f32 %v1522, %v1650
        %v1660 = vld [vmem:[%s446 + $0x8] sm:$0xff]
        %v1661 = vld [vmem:[%s446 + $0x10] sm:$0xff]
        %v1662 = vld [vmem:[%s446 + $0x18] sm:$0xff]
        %v1663 = vld [vmem:[%s446 + $0x20] sm:$0xff]
        %v1664 = vld [vmem:[%s446 + $0x28] sm:$0xff]
        %v1665 = vld [vmem:[%s446 + $0x30] sm:$0xff]
        %v1666 = vld [vmem:[%s446 + $0x38] sm:$0x7f]
        %s1667 = scalar_lea.vmem %s1, 72
        %v1668 = vld [vmem:[%s1667] sm:$0xff]
        %v1670 = vsel %vm456, %v1660, 0
        %v1673 = vsel %vm456, %v1661, 0
        %v1676 = vsel %vm456, %v1662, 0
        %v1679 = vsel %vm456, %v1663, 0
        %v1682 = vsel %vm456, %v1664, 0
        %v1685 = vsel %vm456, %v1665, 0
        %v1688 = vsel %vm456, %v1666, 0
        %1690 = vmatprep.subr.mxu0 0.0
        %1691 = vmatpush1.msra.mxu0 0.0
        %1692 = vmatprep.subr.mxu0 0.0
        %1693 = vmatpush1.msra.mxu0 0.0
        %1694 = vmatprep.subr.mxu0 0.0
        %1695 = vmatpush1.msra.mxu0 0.0
        %1696 = vmatprep.subr.mxu0 0.0
        %1697 = vmatpush1.msra.mxu0 0.0
        %1698 = vmatprep.subr.mxu0 0.0
        %1699 = vmatpush1.msra.mxu0 0.0
        %1700 = vmatprep.subr.mxu0 0.0
        %1701 = vmatpush1.msra.mxu0 0.0
        %1702 = vmatprep.subr.mxu0 0.0
        %1703 = vmatpush1.msra.mxu0 0.0
        %1704 = vmatprep.subr.mxu0 0.0
        %1705 = vmatpush1.msra.mxu0 0.0
        %1706 = vmatprep.subr.mxu0 0.0
        %1707 = vmatpush1.msra.mxu0 0.0
        %1708 = vmatprep.subr.mxu0 0.0
        %1709 = vmatpush1.msra.mxu0 0.0
        %1710 = vmatprep.subr.mxu0 0.0
        %1711 = vmatpush1.msra.mxu0 0.0
        %1712 = vmatprep.subr.mxu0 0.0
        %1713 = vmatpush1.msra.mxu0 0.0
        %1714 = vmatprep.subr.mxu0 0.0
        %1715 = vmatpush1.msra.mxu0 0.0
        %1716 = vmatprep.subr.mxu0 0.0
        %1717 = vmatpush1.msra.mxu0 0.0
        %1718 = vmatprep.subr.mxu0 0.0
        %1719 = vmatpush1.msra.mxu0 0.0
        %1720 = vmatprep.subr.mxu0 0.0
        %1721 = vmatpush1.msra.mxu0 %v1668
        %1722 = vmatprep.subr.mxu0 0.0
        %1723 = vmatpush2.msra.mxu0 0.0
        %1724 = vmatprep.subr.mxu0 0.0
        %1725 = vmatpush2.msra.mxu0 0.0
        %1726 = vmatprep.subr.mxu0 0.0
        %1727 = vmatpush2.msra.mxu0 0.0
        %1728 = vmatprep.subr.mxu0 0.0
        %1729 = vmatpush2.msra.mxu0 0.0
        %1730 = vmatprep.subr.mxu0 0.0
        %1731 = vmatpush2.msra.mxu0 0.0
        %1732 = vmatprep.subr.mxu0 0.0
        %1733 = vmatpush2.msra.mxu0 0.0
        %1734 = vmatprep.subr.mxu0 0.0
        %1735 = vmatpush2.msra.mxu0 0.0
        %1736 = vmatprep.subr.mxu0 0.0
        %1737 = vmatpush2.msra.mxu0 0.0
        %1738 = vmatprep.subr.mxu0 0.0
        %1739 = vmatpush2.msra.mxu0 0.0
        %1740 = vmatprep.subr.mxu0 0.0
        %1741 = vmatpush2.msra.mxu0 0.0
        %1742 = vmatprep.subr.mxu0 0.0
        %1743 = vmatpush2.msra.mxu0 0.0
        %1744 = vmatprep.subr.mxu0 0.0
        %1745 = vmatpush2.msra.mxu0 0.0
        %1746 = vmatprep.subr.mxu0 0.0
        %1747 = vmatpush2.msra.mxu0 0.0
        %1748 = vmatprep.subr.mxu0 0.0
        %1749 = vmatpush2.msra.mxu0 0.0
        %1750 = vmatprep.subr.mxu0 0.0
        %1751 = vmatpush2.msra.mxu0 0.0
        %1752 = vmatprep.subr.mxu0 0.0
        %1753 = vmatpush2.msra.mxu0 0.0
        %1754 = vmatprep.mubr.f32.mxu0 0.0
        %1755 = vmatmul.mubr.f32.gmra.mxu0 %v1670
        %v1756 = vpop.f32.mrf.mxu0
        %v1757 = vadd.f32 0.0, %v1756
        %v1758 = vpop.f32.mrf.mxu0
        %1759 = vmatprep.mubr.f32.mxu0 0.0
        %1760 = vmatmul.mubr.f32.gmra.mxu0 %v1673
        %v1761 = vpop.f32.mrf.mxu0
        %v1762 = vadd.f32 0.0, %v1761
        %v1763 = vpop.f32.mrf.mxu0
        %1764 = vmatprep.mubr.f32.mxu0 0.0
        %1765 = vmatmul.mubr.f32.gmra.mxu0 %v1676
        %v1766 = vpop.f32.mrf.mxu0
        %v1767 = vadd.f32 0.0, %v1766
        %v1768 = vpop.f32.mrf.mxu0
        %1769 = vmatprep.mubr.f32.mxu0 0.0
        %1770 = vmatmul.mubr.f32.gmra.mxu0 %v1679
        %v1771 = vpop.f32.mrf.mxu0
        %v1772 = vadd.f32 0.0, %v1771
        %v1773 = vpop.f32.mrf.mxu0
        %1774 = vmatprep.mubr.f32.mxu0 0.0
        %1775 = vmatmul.mubr.f32.gmra.mxu0 %v1682
        %v1776 = vpop.f32.mrf.mxu0
        %v1777 = vadd.f32 0.0, %v1776
        %v1778 = vpop.f32.mrf.mxu0
        %1779 = vmatprep.mubr.f32.mxu0 0.0
        %1780 = vmatmul.mubr.f32.gmra.mxu0 %v1685
        %v1781 = vpop.f32.mrf.mxu0
        %v1782 = vadd.f32 0.0, %v1781
        %v1783 = vpop.f32.mrf.mxu0
        %1784 = vmatprep.mubr.f32.mxu0 0.0
        %1785 = vmatmul.mubr.f32.gmra.mxu0 %v1688
        %v1786 = vpop.f32.mrf.mxu0
        %v1787 = vadd.f32 0.0, %v1786
        %v1788 = vpop.f32.mrf.mxu0
        %1789 = vdwg.mxu0
        %v1790 = vadd.f32 %v1653, %v1757
        %v1791 = vadd.f32 %v1654, %v1762
        %v1792 = vadd.f32 %v1655, %v1767
        %v1793 = vadd.f32 %v1656, %v1772
        %v1794 = vadd.f32 %v1657, %v1777
        %v1795 = vadd.f32 %v1658, %v1782
        %v1796 = vadd.f32 %v1659, %v1787
        %v1797 = vld [vmem:[%s437 + $0x9] sm:$0xff]
        %v1798 = vld [vmem:[%s437 + $0x11] sm:$0xff]
        %v1799 = vld [vmem:[%s437 + $0x19] sm:$0xff]
        %v1800 = vld [vmem:[%s437 + $0x21] sm:$0xff]
        %v1801 = vld [vmem:[%s437 + $0x29] sm:$0xff]
        %v1802 = vld [vmem:[%s437 + $0x31] sm:$0xff]
        %v1803 = vld [vmem:[%s437 + $0x39] sm:$0x7f]
        %s1804 = scalar_lea.vmem %s1, 80
        %v1805 = vld [vmem:[%s1804] sm:$0xff]
        %v1807 = vsel %vm456, %v1797, 0
        %v1810 = vsel %vm456, %v1798, 0
        %v1813 = vsel %vm456, %v1799, 0
        %v1816 = vsel %vm456, %v1800, 0
        %v1819 = vsel %vm456, %v1801, 0
        %v1822 = vsel %vm456, %v1802, 0
        %v1825 = vsel %vm456, %v1803, 0
        %1827 = vmatprep.subr.mxu0 0.0
        %1828 = vmatpush1.msra.mxu0 0.0
        %1829 = vmatprep.subr.mxu0 0.0
        %1830 = vmatpush1.msra.mxu0 0.0
        %1831 = vmatprep.subr.mxu0 0.0
        %1832 = vmatpush1.msra.mxu0 0.0
        %1833 = vmatprep.subr.mxu0 0.0
        %1834 = vmatpush1.msra.mxu0 0.0
        %1835 = vmatprep.subr.mxu0 0.0
        %1836 = vmatpush1.msra.mxu0 0.0
        %1837 = vmatprep.subr.mxu0 0.0
        %1838 = vmatpush1.msra.mxu0 0.0
        %1839 = vmatprep.subr.mxu0 0.0
        %1840 = vmatpush1.msra.mxu0 0.0
        %1841 = vmatprep.subr.mxu0 0.0
        %1842 = vmatpush1.msra.mxu0 0.0
        %1843 = vmatprep.subr.mxu0 0.0
        %1844 = vmatpush1.msra.mxu0 0.0
        %1845 = vmatprep.subr.mxu0 0.0
        %1846 = vmatpush1.msra.mxu0 0.0
        %1847 = vmatprep.subr.mxu0 0.0
        %1848 = vmatpush1.msra.mxu0 0.0
        %1849 = vmatprep.subr.mxu0 0.0
        %1850 = vmatpush1.msra.mxu0 0.0
        %1851 = vmatprep.subr.mxu0 0.0
        %1852 = vmatpush1.msra.mxu0 0.0
        %1853 = vmatprep.subr.mxu0 0.0
        %1854 = vmatpush1.msra.mxu0 0.0
        %1855 = vmatprep.subr.mxu0 0.0
        %1856 = vmatpush1.msra.mxu0 0.0
        %1857 = vmatprep.subr.mxu0 0.0
        %1858 = vmatpush1.msra.mxu0 %v1805
        %1859 = vmatprep.subr.mxu0 0.0
        %1860 = vmatpush2.msra.mxu0 0.0
        %1861 = vmatprep.subr.mxu0 0.0
        %1862 = vmatpush2.msra.mxu0 0.0
        %1863 = vmatprep.subr.mxu0 0.0
        %1864 = vmatpush2.msra.mxu0 0.0
        %1865 = vmatprep.subr.mxu0 0.0
        %1866 = vmatpush2.msra.mxu0 0.0
        %1867 = vmatprep.subr.mxu0 0.0
        %1868 = vmatpush2.msra.mxu0 0.0
        %1869 = vmatprep.subr.mxu0 0.0
        %1870 = vmatpush2.msra.mxu0 0.0
        %1871 = vmatprep.subr.mxu0 0.0
        %1872 = vmatpush2.msra.mxu0 0.0
        %1873 = vmatprep.subr.mxu0 0.0
        %1874 = vmatpush2.msra.mxu0 0.0
        %1875 = vmatprep.subr.mxu0 0.0
        %1876 = vmatpush2.msra.mxu0 0.0
        %1877 = vmatprep.subr.mxu0 0.0
        %1878 = vmatpush2.msra.mxu0 0.0
        %1879 = vmatprep.subr.mxu0 0.0
        %1880 = vmatpush2.msra.mxu0 0.0
        %1881 = vmatprep.subr.mxu0 0.0
        %1882 = vmatpush2.msra.mxu0 0.0
        %1883 = vmatprep.subr.mxu0 0.0
        %1884 = vmatpush2.msra.mxu0 0.0
        %1885 = vmatprep.subr.mxu0 0.0
        %1886 = vmatpush2.msra.mxu0 0.0
        %1887 = vmatprep.subr.mxu0 0.0
        %1888 = vmatpush2.msra.mxu0 0.0
        %1889 = vmatprep.subr.mxu0 0.0
        %1890 = vmatpush2.msra.mxu0 0.0
        %1891 = vmatprep.mubr.f32.mxu0 0.0
        %1892 = vmatmul.mubr.f32.gmra.mxu0 %v1807
        %v1893 = vpop.f32.mrf.mxu0
        %v1894 = vadd.f32 0.0, %v1893
        %v1895 = vpop.f32.mrf.mxu0
        %1896 = vmatprep.mubr.f32.mxu0 0.0
        %1897 = vmatmul.mubr.f32.gmra.mxu0 %v1810
        %v1898 = vpop.f32.mrf.mxu0
        %v1899 = vadd.f32 0.0, %v1898
        %v1900 = vpop.f32.mrf.mxu0
        %1901 = vmatprep.mubr.f32.mxu0 0.0
        %1902 = vmatmul.mubr.f32.gmra.mxu0 %v1813
        %v1903 = vpop.f32.mrf.mxu0
        %v1904 = vadd.f32 0.0, %v1903
        %v1905 = vpop.f32.mrf.mxu0
        %1906 = vmatprep.mubr.f32.mxu0 0.0
        %1907 = vmatmul.mubr.f32.gmra.mxu0 %v1816
        %v1908 = vpop.f32.mrf.mxu0
        %v1909 = vadd.f32 0.0, %v1908
        %v1910 = vpop.f32.mrf.mxu0
        %1911 = vmatprep.mubr.f32.mxu0 0.0
        %1912 = vmatmul.mubr.f32.gmra.mxu0 %v1819
        %v1913 = vpop.f32.mrf.mxu0
        %v1914 = vadd.f32 0.0, %v1913
        %v1915 = vpop.f32.mrf.mxu0
        %1916 = vmatprep.mubr.f32.mxu0 0.0
        %1917 = vmatmul.mubr.f32.gmra.mxu0 %v1822
        %v1918 = vpop.f32.mrf.mxu0
        %v1919 = vadd.f32 0.0, %v1918
        %v1920 = vpop.f32.mrf.mxu0
        %1921 = vmatprep.mubr.f32.mxu0 0.0
        %1922 = vmatmul.mubr.f32.gmra.mxu0 %v1825
        %v1923 = vpop.f32.mrf.mxu0
        %v1924 = vadd.f32 0.0, %v1923
        %v1925 = vpop.f32.mrf.mxu0
        %1926 = vdwg.mxu0
        %v1927 = vadd.f32 %v1790, %v1894
        %v1928 = vadd.f32 %v1791, %v1899
        %v1929 = vadd.f32 %v1792, %v1904
        %v1930 = vadd.f32 %v1793, %v1909
        %v1931 = vadd.f32 %v1794, %v1914
        %v1932 = vadd.f32 %v1795, %v1919
        %v1933 = vadd.f32 %v1796, %v1924
        %v1934 = vld [vmem:[%s446 + $0x9] sm:$0xff]
        %v1935 = vld [vmem:[%s446 + $0x11] sm:$0xff]
        %v1936 = vld [vmem:[%s446 + $0x19] sm:$0xff]
        %v1937 = vld [vmem:[%s446 + $0x21] sm:$0xff]
        %v1938 = vld [vmem:[%s446 + $0x29] sm:$0xff]
        %v1939 = vld [vmem:[%s446 + $0x31] sm:$0xff]
        %v1940 = vld [vmem:[%s446 + $0x39] sm:$0x7f]
        %s1941 = scalar_lea.vmem %s1, 88
        %v1942 = vld [vmem:[%s1941] sm:$0xff]
        %v1944 = vsel %vm456, %v1934, 0
        %v1947 = vsel %vm456, %v1935, 0
        %v1950 = vsel %vm456, %v1936, 0
        %v1953 = vsel %vm456, %v1937, 0
        %v1956 = vsel %vm456, %v1938, 0
        %v1959 = vsel %vm456, %v1939, 0
        %v1962 = vsel %vm456, %v1940, 0
        %1964 = vmatprep.subr.mxu0 0.0
        %1965 = vmatpush1.msra.mxu0 0.0
        %1966 = vmatprep.subr.mxu0 0.0
        %1967 = vmatpush1.msra.mxu0 0.0
        %1968 = vmatprep.subr.mxu0 0.0
        %1969 = vmatpush1.msra.mxu0 0.0
        %1970 = vmatprep.subr.mxu0 0.0
        %1971 = vmatpush1.msra.mxu0 0.0
        %1972 = vmatprep.subr.mxu0 0.0
        %1973 = vmatpush1.msra.mxu0 0.0
        %1974 = vmatprep.subr.mxu0 0.0
        %1975 = vmatpush1.msra.mxu0 0.0
        %1976 = vmatprep.subr.mxu0 0.0
        %1977 = vmatpush1.msra.mxu0 0.0
        %1978 = vmatprep.subr.mxu0 0.0
        %1979 = vmatpush1.msra.mxu0 0.0
        %1980 = vmatprep.subr.mxu0 0.0
        %1981 = vmatpush1.msra.mxu0 0.0
        %1982 = vmatprep.subr.mxu0 0.0
        %1983 = vmatpush1.msra.mxu0 0.0
        %1984 = vmatprep.subr.mxu0 0.0
        %1985 = vmatpush1.msra.mxu0 0.0
        %1986 = vmatprep.subr.mxu0 0.0
        %1987 = vmatpush1.msra.mxu0 0.0
        %1988 = vmatprep.subr.mxu0 0.0
        %1989 = vmatpush1.msra.mxu0 0.0
        %1990 = vmatprep.subr.mxu0 0.0
        %1991 = vmatpush1.msra.mxu0 0.0
        %1992 = vmatprep.subr.mxu0 0.0
        %1993 = vmatpush1.msra.mxu0 0.0
        %1994 = vmatprep.subr.mxu0 0.0
        %1995 = vmatpush1.msra.mxu0 %v1942
        %1996 = vmatprep.subr.mxu0 0.0
        %1997 = vmatpush2.msra.mxu0 0.0
        %1998 = vmatprep.subr.mxu0 0.0
        %1999 = vmatpush2.msra.mxu0 0.0
        %2000 = vmatprep.subr.mxu0 0.0
        %2001 = vmatpush2.msra.mxu0 0.0
        %2002 = vmatprep.subr.mxu0 0.0
        %2003 = vmatpush2.msra.mxu0 0.0
        %2004 = vmatprep.subr.mxu0 0.0
        %2005 = vmatpush2.msra.mxu0 0.0
        %2006 = vmatprep.subr.mxu0 0.0
        %2007 = vmatpush2.msra.mxu0 0.0
        %2008 = vmatprep.subr.mxu0 0.0
        %2009 = vmatpush2.msra.mxu0 0.0
        %2010 = vmatprep.subr.mxu0 0.0
        %2011 = vmatpush2.msra.mxu0 0.0
        %2012 = vmatprep.subr.mxu0 0.0
        %2013 = vmatpush2.msra.mxu0 0.0
        %2014 = vmatprep.subr.mxu0 0.0
        %2015 = vmatpush2.msra.mxu0 0.0
        %2016 = vmatprep.subr.mxu0 0.0
        %2017 = vmatpush2.msra.mxu0 0.0
        %2018 = vmatprep.subr.mxu0 0.0
        %2019 = vmatpush2.msra.mxu0 0.0
        %2020 = vmatprep.subr.mxu0 0.0
        %2021 = vmatpush2.msra.mxu0 0.0
        %2022 = vmatprep.subr.mxu0 0.0
        %2023 = vmatpush2.msra.mxu0 0.0
        %2024 = vmatprep.subr.mxu0 0.0
        %2025 = vmatpush2.msra.mxu0 0.0
        %2026 = vmatprep.subr.mxu0 0.0
        %2027 = vmatpush2.msra.mxu0 0.0
        %2028 = vmatprep.mubr.f32.mxu0 0.0
        %2029 = vmatmul.mubr.f32.gmra.mxu0 %v1944
        %v2030 = vpop.f32.mrf.mxu0
        %v2031 = vadd.f32 0.0, %v2030
        %v2032 = vpop.f32.mrf.mxu0
        %2033 = vmatprep.mubr.f32.mxu0 0.0
        %2034 = vmatmul.mubr.f32.gmra.mxu0 %v1947
        %v2035 = vpop.f32.mrf.mxu0
        %v2036 = vadd.f32 0.0, %v2035
        %v2037 = vpop.f32.mrf.mxu0
        %2038 = vmatprep.mubr.f32.mxu0 0.0
        %2039 = vmatmul.mubr.f32.gmra.mxu0 %v1950
        %v2040 = vpop.f32.mrf.mxu0
        %v2041 = vadd.f32 0.0, %v2040
        %v2042 = vpop.f32.mrf.mxu0
        %2043 = vmatprep.mubr.f32.mxu0 0.0
        %2044 = vmatmul.mubr.f32.gmra.mxu0 %v1953
        %v2045 = vpop.f32.mrf.mxu0
        %v2046 = vadd.f32 0.0, %v2045
        %v2047 = vpop.f32.mrf.mxu0
        %2048 = vmatprep.mubr.f32.mxu0 0.0
        %2049 = vmatmul.mubr.f32.gmra.mxu0 %v1956
        %v2050 = vpop.f32.mrf.mxu0
        %v2051 = vadd.f32 0.0, %v2050
        %v2052 = vpop.f32.mrf.mxu0
        %2053 = vmatprep.mubr.f32.mxu0 0.0
        %2054 = vmatmul.mubr.f32.gmra.mxu0 %v1959
        %v2055 = vpop.f32.mrf.mxu0
        %v2056 = vadd.f32 0.0, %v2055
        %v2057 = vpop.f32.mrf.mxu0
        %2058 = vmatprep.mubr.f32.mxu0 0.0
        %2059 = vmatmul.mubr.f32.gmra.mxu0 %v1962
        %v2060 = vpop.f32.mrf.mxu0
        %v2061 = vadd.f32 0.0, %v2060
        %v2062 = vpop.f32.mrf.mxu0
        %2063 = vdwg.mxu0
        %v2064 = vadd.f32 %v1927, %v2031
        %v2065 = vadd.f32 %v1928, %v2036
        %v2066 = vadd.f32 %v1929, %v2041
        %v2067 = vadd.f32 %v1930, %v2046
        %v2068 = vadd.f32 %v1931, %v2051
        %v2069 = vadd.f32 %v1932, %v2056
        %v2070 = vadd.f32 %v1933, %v2061
        %v2071 = vld [vmem:[%s973 + $0x8] sm:$0xff]
        %v2072 = vld [vmem:[%s973 + $0x10] sm:$0xff]
        %v2073 = vld [vmem:[%s973 + $0x18] sm:$0xff]
        %v2074 = vld [vmem:[%s973 + $0x20] sm:$0xff]
        %v2075 = vld [vmem:[%s973 + $0x28] sm:$0xff]
        %v2076 = vld [vmem:[%s973 + $0x30] sm:$0xff]
        %v2077 = vld [vmem:[%s973 + $0x38] sm:$0x7f]
        %s2078 = scalar_lea.vmem %s1, 96
        %v2079 = vld [vmem:[%s2078] sm:$0xff]
        %v2081 = vsel %vm456, %v2071, 0
        %v2084 = vsel %vm456, %v2072, 0
        %v2087 = vsel %vm456, %v2073, 0
        %v2090 = vsel %vm456, %v2074, 0
        %v2093 = vsel %vm456, %v2075, 0
        %v2096 = vsel %vm456, %v2076, 0
        %v2099 = vsel %vm456, %v2077, 0
        %2101 = vmatprep.subr.mxu0 0.0
        %2102 = vmatpush1.msra.mxu0 0.0
        %2103 = vmatprep.subr.mxu0 0.0
        %2104 = vmatpush1.msra.mxu0 0.0
        %2105 = vmatprep.subr.mxu0 0.0
        %2106 = vmatpush1.msra.mxu0 0.0
        %2107 = vmatprep.subr.mxu0 0.0
        %2108 = vmatpush1.msra.mxu0 0.0
        %2109 = vmatprep.subr.mxu0 0.0
        %2110 = vmatpush1.msra.mxu0 0.0
        %2111 = vmatprep.subr.mxu0 0.0
        %2112 = vmatpush1.msra.mxu0 0.0
        %2113 = vmatprep.subr.mxu0 0.0
        %2114 = vmatpush1.msra.mxu0 0.0
        %2115 = vmatprep.subr.mxu0 0.0
        %2116 = vmatpush1.msra.mxu0 0.0
        %2117 = vmatprep.subr.mxu0 0.0
        %2118 = vmatpush1.msra.mxu0 0.0
        %2119 = vmatprep.subr.mxu0 0.0
        %2120 = vmatpush1.msra.mxu0 0.0
        %2121 = vmatprep.subr.mxu0 0.0
        %2122 = vmatpush1.msra.mxu0 0.0
        %2123 = vmatprep.subr.mxu0 0.0
        %2124 = vmatpush1.msra.mxu0 0.0
        %2125 = vmatprep.subr.mxu0 0.0
        %2126 = vmatpush1.msra.mxu0 0.0
        %2127 = vmatprep.subr.mxu0 0.0
        %2128 = vmatpush1.msra.mxu0 0.0
        %2129 = vmatprep.subr.mxu0 0.0
        %2130 = vmatpush1.msra.mxu0 0.0
        %2131 = vmatprep.subr.mxu0 0.0
        %2132 = vmatpush1.msra.mxu0 %v2079
        %2133 = vmatprep.subr.mxu0 0.0
        %2134 = vmatpush2.msra.mxu0 0.0
        %2135 = vmatprep.subr.mxu0 0.0
        %2136 = vmatpush2.msra.mxu0 0.0
        %2137 = vmatprep.subr.mxu0 0.0
        %2138 = vmatpush2.msra.mxu0 0.0
        %2139 = vmatprep.subr.mxu0 0.0
        %2140 = vmatpush2.msra.mxu0 0.0
        %2141 = vmatprep.subr.mxu0 0.0
        %2142 = vmatpush2.msra.mxu0 0.0
        %2143 = vmatprep.subr.mxu0 0.0
        %2144 = vmatpush2.msra.mxu0 0.0
        %2145 = vmatprep.subr.mxu0 0.0
        %2146 = vmatpush2.msra.mxu0 0.0
        %2147 = vmatprep.subr.mxu0 0.0
        %2148 = vmatpush2.msra.mxu0 0.0
        %2149 = vmatprep.subr.mxu0 0.0
        %2150 = vmatpush2.msra.mxu0 0.0
        %2151 = vmatprep.subr.mxu0 0.0
        %2152 = vmatpush2.msra.mxu0 0.0
        %2153 = vmatprep.subr.mxu0 0.0
        %2154 = vmatpush2.msra.mxu0 0.0
        %2155 = vmatprep.subr.mxu0 0.0
        %2156 = vmatpush2.msra.mxu0 0.0
        %2157 = vmatprep.subr.mxu0 0.0
        %2158 = vmatpush2.msra.mxu0 0.0
        %2159 = vmatprep.subr.mxu0 0.0
        %2160 = vmatpush2.msra.mxu0 0.0
        %2161 = vmatprep.subr.mxu0 0.0
        %2162 = vmatpush2.msra.mxu0 0.0
        %2163 = vmatprep.subr.mxu0 0.0
        %2164 = vmatpush2.msra.mxu0 0.0
        %2165 = vmatprep.mubr.f32.mxu0 0.0
        %2166 = vmatmul.mubr.f32.gmra.mxu0 %v2081
        %v2167 = vpop.f32.mrf.mxu0
        %v2168 = vadd.f32 0.0, %v2167
        %v2169 = vpop.f32.mrf.mxu0
        %2170 = vmatprep.mubr.f32.mxu0 0.0
        %2171 = vmatmul.mubr.f32.gmra.mxu0 %v2084
        %v2172 = vpop.f32.mrf.mxu0
        %v2173 = vadd.f32 0.0, %v2172
        %v2174 = vpop.f32.mrf.mxu0
        %2175 = vmatprep.mubr.f32.mxu0 0.0
        %2176 = vmatmul.mubr.f32.gmra.mxu0 %v2087
        %v2177 = vpop.f32.mrf.mxu0
        %v2178 = vadd.f32 0.0, %v2177
        %v2179 = vpop.f32.mrf.mxu0
        %2180 = vmatprep.mubr.f32.mxu0 0.0
        %2181 = vmatmul.mubr.f32.gmra.mxu0 %v2090
        %v2182 = vpop.f32.mrf.mxu0
        %v2183 = vadd.f32 0.0, %v2182
        %v2184 = vpop.f32.mrf.mxu0
        %2185 = vmatprep.mubr.f32.mxu0 0.0
        %2186 = vmatmul.mubr.f32.gmra.mxu0 %v2093
        %v2187 = vpop.f32.mrf.mxu0
        %v2188 = vadd.f32 0.0, %v2187
        %v2189 = vpop.f32.mrf.mxu0
        %2190 = vmatprep.mubr.f32.mxu0 0.0
        %2191 = vmatmul.mubr.f32.gmra.mxu0 %v2096
        %v2192 = vpop.f32.mrf.mxu0
        %v2193 = vadd.f32 0.0, %v2192
        %v2194 = vpop.f32.mrf.mxu0
        %2195 = vmatprep.mubr.f32.mxu0 0.0
        %2196 = vmatmul.mubr.f32.gmra.mxu0 %v2099
        %v2197 = vpop.f32.mrf.mxu0
        %v2198 = vadd.f32 0.0, %v2197
        %v2199 = vpop.f32.mrf.mxu0
        %2200 = vdwg.mxu0
        %v2201 = vadd.f32 %v2064, %v2168
        %v2202 = vadd.f32 %v2065, %v2173
        %v2203 = vadd.f32 %v2066, %v2178
        %v2204 = vadd.f32 %v2067, %v2183
        %v2205 = vadd.f32 %v2068, %v2188
        %v2206 = vadd.f32 %v2069, %v2193
        %v2207 = vadd.f32 %v2070, %v2198
        %v2208 = vld [vmem:[%s1111 + $0x8] sm:$0xff]
        %v2209 = vld [vmem:[%s1111 + $0x10] sm:$0xff]
        %v2210 = vld [vmem:[%s1111 + $0x18] sm:$0xff]
        %v2211 = vld [vmem:[%s1111 + $0x20] sm:$0xff]
        %v2212 = vld [vmem:[%s1111 + $0x28] sm:$0xff]
        %v2213 = vld [vmem:[%s1111 + $0x30] sm:$0xff]
        %v2214 = vld [vmem:[%s1111 + $0x38] sm:$0x7f]
        %s2215 = scalar_lea.vmem %s1, 104
        %v2216 = vld [vmem:[%s2215] sm:$0xff]
        %v2218 = vsel %vm456, %v2208, 0
        %v2221 = vsel %vm456, %v2209, 0
        %v2224 = vsel %vm456, %v2210, 0
        %v2227 = vsel %vm456, %v2211, 0
        %v2230 = vsel %vm456, %v2212, 0
        %v2233 = vsel %vm456, %v2213, 0
        %v2236 = vsel %vm456, %v2214, 0
        %2238 = vmatprep.subr.mxu0 0.0
        %2239 = vmatpush1.msra.mxu0 0.0
        %2240 = vmatprep.subr.mxu0 0.0
        %2241 = vmatpush1.msra.mxu0 0.0
        %2242 = vmatprep.subr.mxu0 0.0
        %2243 = vmatpush1.msra.mxu0 0.0
        %2244 = vmatprep.subr.mxu0 0.0
        %2245 = vmatpush1.msra.mxu0 0.0
        %2246 = vmatprep.subr.mxu0 0.0
        %2247 = vmatpush1.msra.mxu0 0.0
        %2248 = vmatprep.subr.mxu0 0.0
        %2249 = vmatpush1.msra.mxu0 0.0
        %2250 = vmatprep.subr.mxu0 0.0
        %2251 = vmatpush1.msra.mxu0 0.0
        %2252 = vmatprep.subr.mxu0 0.0
        %2253 = vmatpush1.msra.mxu0 0.0
        %2254 = vmatprep.subr.mxu0 0.0
        %2255 = vmatpush1.msra.mxu0 0.0
        %2256 = vmatprep.subr.mxu0 0.0
        %2257 = vmatpush1.msra.mxu0 0.0
        %2258 = vmatprep.subr.mxu0 0.0
        %2259 = vmatpush1.msra.mxu0 0.0
        %2260 = vmatprep.subr.mxu0 0.0
        %2261 = vmatpush1.msra.mxu0 0.0
        %2262 = vmatprep.subr.mxu0 0.0
        %2263 = vmatpush1.msra.mxu0 0.0
        %2264 = vmatprep.subr.mxu0 0.0
        %2265 = vmatpush1.msra.mxu0 0.0
        %2266 = vmatprep.subr.mxu0 0.0
        %2267 = vmatpush1.msra.mxu0 0.0
        %2268 = vmatprep.subr.mxu0 0.0
        %2269 = vmatpush1.msra.mxu0 %v2216
        %2270 = vmatprep.subr.mxu0 0.0
        %2271 = vmatpush2.msra.mxu0 0.0
        %2272 = vmatprep.subr.mxu0 0.0
        %2273 = vmatpush2.msra.mxu0 0.0
        %2274 = vmatprep.subr.mxu0 0.0
        %2275 = vmatpush2.msra.mxu0 0.0
        %2276 = vmatprep.subr.mxu0 0.0
        %2277 = vmatpush2.msra.mxu0 0.0
        %2278 = vmatprep.subr.mxu0 0.0
        %2279 = vmatpush2.msra.mxu0 0.0
        %2280 = vmatprep.subr.mxu0 0.0
        %2281 = vmatpush2.msra.mxu0 0.0
        %2282 = vmatprep.subr.mxu0 0.0
        %2283 = vmatpush2.msra.mxu0 0.0
        %2284 = vmatprep.subr.mxu0 0.0
        %2285 = vmatpush2.msra.mxu0 0.0
        %2286 = vmatprep.subr.mxu0 0.0
        %2287 = vmatpush2.msra.mxu0 0.0
        %2288 = vmatprep.subr.mxu0 0.0
        %2289 = vmatpush2.msra.mxu0 0.0
        %2290 = vmatprep.subr.mxu0 0.0
        %2291 = vmatpush2.msra.mxu0 0.0
        %2292 = vmatprep.subr.mxu0 0.0
        %2293 = vmatpush2.msra.mxu0 0.0
        %2294 = vmatprep.subr.mxu0 0.0
        %2295 = vmatpush2.msra.mxu0 0.0
        %2296 = vmatprep.subr.mxu0 0.0
        %2297 = vmatpush2.msra.mxu0 0.0
        %2298 = vmatprep.subr.mxu0 0.0
        %2299 = vmatpush2.msra.mxu0 0.0
        %2300 = vmatprep.subr.mxu0 0.0
        %2301 = vmatpush2.msra.mxu0 0.0
        %2302 = vmatprep.mubr.f32.mxu0 0.0
        %2303 = vmatmul.mubr.f32.gmra.mxu0 %v2218
        %v2304 = vpop.f32.mrf.mxu0
        %v2305 = vadd.f32 0.0, %v2304
        %v2306 = vpop.f32.mrf.mxu0
        %2307 = vmatprep.mubr.f32.mxu0 0.0
        %2308 = vmatmul.mubr.f32.gmra.mxu0 %v2221
        %v2309 = vpop.f32.mrf.mxu0
        %v2310 = vadd.f32 0.0, %v2309
        %v2311 = vpop.f32.mrf.mxu0
        %2312 = vmatprep.mubr.f32.mxu0 0.0
        %2313 = vmatmul.mubr.f32.gmra.mxu0 %v2224
        %v2314 = vpop.f32.mrf.mxu0
        %v2315 = vadd.f32 0.0, %v2314
        %v2316 = vpop.f32.mrf.mxu0
        %2317 = vmatprep.mubr.f32.mxu0 0.0
        %2318 = vmatmul.mubr.f32.gmra.mxu0 %v2227
        %v2319 = vpop.f32.mrf.mxu0
        %v2320 = vadd.f32 0.0, %v2319
        %v2321 = vpop.f32.mrf.mxu0
        %2322 = vmatprep.mubr.f32.mxu0 0.0
        %2323 = vmatmul.mubr.f32.gmra.mxu0 %v2230
        %v2324 = vpop.f32.mrf.mxu0
        %v2325 = vadd.f32 0.0, %v2324
        %v2326 = vpop.f32.mrf.mxu0
        %2327 = vmatprep.mubr.f32.mxu0 0.0
        %2328 = vmatmul.mubr.f32.gmra.mxu0 %v2233
        %v2329 = vpop.f32.mrf.mxu0
        %v2330 = vadd.f32 0.0, %v2329
        %v2331 = vpop.f32.mrf.mxu0
        %2332 = vmatprep.mubr.f32.mxu0 0.0
        %2333 = vmatmul.mubr.f32.gmra.mxu0 %v2236
        %v2334 = vpop.f32.mrf.mxu0
        %v2335 = vadd.f32 0.0, %v2334
        %v2336 = vpop.f32.mrf.mxu0
        %2337 = vdwg.mxu0
        %v2338 = vadd.f32 %v2201, %v2305
        %v2339 = vadd.f32 %v2202, %v2310
        %v2340 = vadd.f32 %v2203, %v2315
        %v2341 = vadd.f32 %v2204, %v2320
        %v2342 = vadd.f32 %v2205, %v2325
        %v2343 = vadd.f32 %v2206, %v2330
        %v2344 = vadd.f32 %v2207, %v2335
        %v2345 = vld [vmem:[%s973 + $0x9] sm:$0xff]
        %v2346 = vld [vmem:[%s973 + $0x11] sm:$0xff]
        %v2347 = vld [vmem:[%s973 + $0x19] sm:$0xff]
        %v2348 = vld [vmem:[%s973 + $0x21] sm:$0xff]
        %v2349 = vld [vmem:[%s973 + $0x29] sm:$0xff]
        %v2350 = vld [vmem:[%s973 + $0x31] sm:$0xff]
        %v2351 = vld [vmem:[%s973 + $0x39] sm:$0x7f]
        %s2352 = scalar_lea.vmem %s1, 112
        %v2353 = vld [vmem:[%s2352] sm:$0xff]
        %v2355 = vsel %vm456, %v2345, 0
        %v2358 = vsel %vm456, %v2346, 0
        %v2361 = vsel %vm456, %v2347, 0
        %v2364 = vsel %vm456, %v2348, 0
        %v2367 = vsel %vm456, %v2349, 0
        %v2370 = vsel %vm456, %v2350, 0
        %v2373 = vsel %vm456, %v2351, 0
        %2375 = vmatprep.subr.mxu0 0.0
        %2376 = vmatpush1.msra.mxu0 0.0
        %2377 = vmatprep.subr.mxu0 0.0
        %2378 = vmatpush1.msra.mxu0 0.0
        %2379 = vmatprep.subr.mxu0 0.0
        %2380 = vmatpush1.msra.mxu0 0.0
        %2381 = vmatprep.subr.mxu0 0.0
        %2382 = vmatpush1.msra.mxu0 0.0
        %2383 = vmatprep.subr.mxu0 0.0
        %2384 = vmatpush1.msra.mxu0 0.0
        %2385 = vmatprep.subr.mxu0 0.0
        %2386 = vmatpush1.msra.mxu0 0.0
        %2387 = vmatprep.subr.mxu0 0.0
        %2388 = vmatpush1.msra.mxu0 0.0
        %2389 = vmatprep.subr.mxu0 0.0
        %2390 = vmatpush1.msra.mxu0 0.0
        %2391 = vmatprep.subr.mxu0 0.0
        %2392 = vmatpush1.msra.mxu0 0.0
        %2393 = vmatprep.subr.mxu0 0.0
        %2394 = vmatpush1.msra.mxu0 0.0
        %2395 = vmatprep.subr.mxu0 0.0
        %2396 = vmatpush1.msra.mxu0 0.0
        %2397 = vmatprep.subr.mxu0 0.0
        %2398 = vmatpush1.msra.mxu0 0.0
        %2399 = vmatprep.subr.mxu0 0.0
        %2400 = vmatpush1.msra.mxu0 0.0
        %2401 = vmatprep.subr.mxu0 0.0
        %2402 = vmatpush1.msra.mxu0 0.0
        %2403 = vmatprep.subr.mxu0 0.0
        %2404 = vmatpush1.msra.mxu0 0.0
        %2405 = vmatprep.subr.mxu0 0.0
        %2406 = vmatpush1.msra.mxu0 %v2353
        %2407 = vmatprep.subr.mxu0 0.0
        %2408 = vmatpush2.msra.mxu0 0.0
        %2409 = vmatprep.subr.mxu0 0.0
        %2410 = vmatpush2.msra.mxu0 0.0
        %2411 = vmatprep.subr.mxu0 0.0
        %2412 = vmatpush2.msra.mxu0 0.0
        %2413 = vmatprep.subr.mxu0 0.0
        %2414 = vmatpush2.msra.mxu0 0.0
        %2415 = vmatprep.subr.mxu0 0.0
        %2416 = vmatpush2.msra.mxu0 0.0
        %2417 = vmatprep.subr.mxu0 0.0
        %2418 = vmatpush2.msra.mxu0 0.0
        %2419 = vmatprep.subr.mxu0 0.0
        %2420 = vmatpush2.msra.mxu0 0.0
        %2421 = vmatprep.subr.mxu0 0.0
        %2422 = vmatpush2.msra.mxu0 0.0
        %2423 = vmatprep.subr.mxu0 0.0
        %2424 = vmatpush2.msra.mxu0 0.0
        %2425 = vmatprep.subr.mxu0 0.0
        %2426 = vmatpush2.msra.mxu0 0.0
        %2427 = vmatprep.subr.mxu0 0.0
        %2428 = vmatpush2.msra.mxu0 0.0
        %2429 = vmatprep.subr.mxu0 0.0
        %2430 = vmatpush2.msra.mxu0 0.0
        %2431 = vmatprep.subr.mxu0 0.0
        %2432 = vmatpush2.msra.mxu0 0.0
        %2433 = vmatprep.subr.mxu0 0.0
        %2434 = vmatpush2.msra.mxu0 0.0
        %2435 = vmatprep.subr.mxu0 0.0
        %2436 = vmatpush2.msra.mxu0 0.0
        %2437 = vmatprep.subr.mxu0 0.0
        %2438 = vmatpush2.msra.mxu0 0.0
        %2439 = vmatprep.mubr.f32.mxu0 0.0
        %2440 = vmatmul.mubr.f32.gmra.mxu0 %v2355
        %v2441 = vpop.f32.mrf.mxu0
        %v2442 = vadd.f32 0.0, %v2441
        %v2443 = vpop.f32.mrf.mxu0
        %2444 = vmatprep.mubr.f32.mxu0 0.0
        %2445 = vmatmul.mubr.f32.gmra.mxu0 %v2358
        %v2446 = vpop.f32.mrf.mxu0
        %v2447 = vadd.f32 0.0, %v2446
        %v2448 = vpop.f32.mrf.mxu0
        %2449 = vmatprep.mubr.f32.mxu0 0.0
        %2450 = vmatmul.mubr.f32.gmra.mxu0 %v2361
        %v2451 = vpop.f32.mrf.mxu0
        %v2452 = vadd.f32 0.0, %v2451
        %v2453 = vpop.f32.mrf.mxu0
        %2454 = vmatprep.mubr.f32.mxu0 0.0
        %2455 = vmatmul.mubr.f32.gmra.mxu0 %v2364
        %v2456 = vpop.f32.mrf.mxu0
        %v2457 = vadd.f32 0.0, %v2456
        %v2458 = vpop.f32.mrf.mxu0
        %2459 = vmatprep.mubr.f32.mxu0 0.0
        %2460 = vmatmul.mubr.f32.gmra.mxu0 %v2367
        %v2461 = vpop.f32.mrf.mxu0
        %v2462 = vadd.f32 0.0, %v2461
        %v2463 = vpop.f32.mrf.mxu0
        %2464 = vmatprep.mubr.f32.mxu0 0.0
        %2465 = vmatmul.mubr.f32.gmra.mxu0 %v2370
        %v2466 = vpop.f32.mrf.mxu0
        %v2467 = vadd.f32 0.0, %v2466
        %v2468 = vpop.f32.mrf.mxu0
        %2469 = vmatprep.mubr.f32.mxu0 0.0
        %2470 = vmatmul.mubr.f32.gmra.mxu0 %v2373
        %v2471 = vpop.f32.mrf.mxu0
        %v2472 = vadd.f32 0.0, %v2471
        %v2473 = vpop.f32.mrf.mxu0
        %2474 = vdwg.mxu0
        %v2475 = vadd.f32 %v2338, %v2442
        %v2476 = vadd.f32 %v2339, %v2447
        %v2477 = vadd.f32 %v2340, %v2452
        %v2478 = vadd.f32 %v2341, %v2457
        %v2479 = vadd.f32 %v2342, %v2462
        %v2480 = vadd.f32 %v2343, %v2467
        %v2481 = vadd.f32 %v2344, %v2472
        %v2482 = vld [vmem:[%s1111 + $0x9] sm:$0xff]
        %v2483 = vld [vmem:[%s1111 + $0x11] sm:$0xff]
        %v2484 = vld [vmem:[%s1111 + $0x19] sm:$0xff]
        %v2485 = vld [vmem:[%s1111 + $0x21] sm:$0xff]
        %v2486 = vld [vmem:[%s1111 + $0x29] sm:$0xff]
        %v2487 = vld [vmem:[%s1111 + $0x31] sm:$0xff]
        %v2488 = vld [vmem:[%s1111 + $0x39] sm:$0x7f]
        %s2489 = scalar_lea.vmem %s1, 120
        %v2490 = vld [vmem:[%s2489] sm:$0xff]
        %v2492 = vsel %vm456, %v2482, 0
        %v2495 = vsel %vm456, %v2483, 0
        %v2498 = vsel %vm456, %v2484, 0
        %v2501 = vsel %vm456, %v2485, 0
        %v2504 = vsel %vm456, %v2486, 0
        %v2507 = vsel %vm456, %v2487, 0
        %v2510 = vsel %vm456, %v2488, 0
        %2512 = vmatprep.subr.mxu0 0.0
        %2513 = vmatpush1.msra.mxu0 0.0
        %2514 = vmatprep.subr.mxu0 0.0
        %2515 = vmatpush1.msra.mxu0 0.0
        %2516 = vmatprep.subr.mxu0 0.0
        %2517 = vmatpush1.msra.mxu0 0.0
        %2518 = vmatprep.subr.mxu0 0.0
        %2519 = vmatpush1.msra.mxu0 0.0
        %2520 = vmatprep.subr.mxu0 0.0
        %2521 = vmatpush1.msra.mxu0 0.0
        %2522 = vmatprep.subr.mxu0 0.0
        %2523 = vmatpush1.msra.mxu0 0.0
        %2524 = vmatprep.subr.mxu0 0.0
        %2525 = vmatpush1.msra.mxu0 0.0
        %2526 = vmatprep.subr.mxu0 0.0
        %2527 = vmatpush1.msra.mxu0 0.0
        %2528 = vmatprep.subr.mxu0 0.0
        %2529 = vmatpush1.msra.mxu0 0.0
        %2530 = vmatprep.subr.mxu0 0.0
        %2531 = vmatpush1.msra.mxu0 0.0
        %2532 = vmatprep.subr.mxu0 0.0
        %2533 = vmatpush1.msra.mxu0 0.0
        %2534 = vmatprep.subr.mxu0 0.0
        %2535 = vmatpush1.msra.mxu0 0.0
        %2536 = vmatprep.subr.mxu0 0.0
        %2537 = vmatpush1.msra.mxu0 0.0
        %2538 = vmatprep.subr.mxu0 0.0
        %2539 = vmatpush1.msra.mxu0 0.0
        %2540 = vmatprep.subr.mxu0 0.0
        %2541 = vmatpush1.msra.mxu0 0.0
        %2542 = vmatprep.subr.mxu0 0.0
        %2543 = vmatpush1.msra.mxu0 %v2490
        %2544 = vmatprep.subr.mxu0 0.0
        %2545 = vmatpush2.msra.mxu0 0.0
        %2546 = vmatprep.subr.mxu0 0.0
        %2547 = vmatpush2.msra.mxu0 0.0
        %2548 = vmatprep.subr.mxu0 0.0
        %2549 = vmatpush2.msra.mxu0 0.0
        %2550 = vmatprep.subr.mxu0 0.0
        %2551 = vmatpush2.msra.mxu0 0.0
        %2552 = vmatprep.subr.mxu0 0.0
        %2553 = vmatpush2.msra.mxu0 0.0
        %2554 = vmatprep.subr.mxu0 0.0
        %2555 = vmatpush2.msra.mxu0 0.0
        %2556 = vmatprep.subr.mxu0 0.0
        %2557 = vmatpush2.msra.mxu0 0.0
        %2558 = vmatprep.subr.mxu0 0.0
        %2559 = vmatpush2.msra.mxu0 0.0
        %2560 = vmatprep.subr.mxu0 0.0
        %2561 = vmatpush2.msra.mxu0 0.0
        %2562 = vmatprep.subr.mxu0 0.0
        %2563 = vmatpush2.msra.mxu0 0.0
        %2564 = vmatprep.subr.mxu0 0.0
        %2565 = vmatpush2.msra.mxu0 0.0
        %2566 = vmatprep.subr.mxu0 0.0
        %2567 = vmatpush2.msra.mxu0 0.0
        %2568 = vmatprep.subr.mxu0 0.0
        %2569 = vmatpush2.msra.mxu0 0.0
        %2570 = vmatprep.subr.mxu0 0.0
        %2571 = vmatpush2.msra.mxu0 0.0
        %2572 = vmatprep.subr.mxu0 0.0
        %2573 = vmatpush2.msra.mxu0 0.0
        %2574 = vmatprep.subr.mxu0 0.0
        %2575 = vmatpush2.msra.mxu0 0.0
        %2576 = vmatprep.mubr.f32.mxu0 0.0
        %2577 = vmatmul.mubr.f32.gmra.mxu0 %v2492
        %v2578 = vpop.f32.mrf.mxu0
        %v2579 = vadd.f32 0.0, %v2578
        %v2580 = vpop.f32.mrf.mxu0
        %2581 = vmatprep.mubr.f32.mxu0 0.0
        %2582 = vmatmul.mubr.f32.gmra.mxu0 %v2495
        %v2583 = vpop.f32.mrf.mxu0
        %v2584 = vadd.f32 0.0, %v2583
        %v2585 = vpop.f32.mrf.mxu0
        %2586 = vmatprep.mubr.f32.mxu0 0.0
        %2587 = vmatmul.mubr.f32.gmra.mxu0 %v2498
        %v2588 = vpop.f32.mrf.mxu0
        %v2589 = vadd.f32 0.0, %v2588
        %v2590 = vpop.f32.mrf.mxu0
        %2591 = vmatprep.mubr.f32.mxu0 0.0
        %2592 = vmatmul.mubr.f32.gmra.mxu0 %v2501
        %v2593 = vpop.f32.mrf.mxu0
        %v2594 = vadd.f32 0.0, %v2593
        %v2595 = vpop.f32.mrf.mxu0
        %2596 = vmatprep.mubr.f32.mxu0 0.0
        %2597 = vmatmul.mubr.f32.gmra.mxu0 %v2504
        %v2598 = vpop.f32.mrf.mxu0
        %v2599 = vadd.f32 0.0, %v2598
        %v2600 = vpop.f32.mrf.mxu0
        %2601 = vmatprep.mubr.f32.mxu0 0.0
        %2602 = vmatmul.mubr.f32.gmra.mxu0 %v2507
        %v2603 = vpop.f32.mrf.mxu0
        %v2604 = vadd.f32 0.0, %v2603
        %v2605 = vpop.f32.mrf.mxu0
        %2606 = vmatprep.mubr.f32.mxu0 0.0
        %2607 = vmatmul.mubr.f32.gmra.mxu0 %v2510
        %v2608 = vpop.f32.mrf.mxu0
        %v2609 = vadd.f32 0.0, %v2608
        %v2610 = vpop.f32.mrf.mxu0
        %2611 = vdwg.mxu0
        %v2612 = vadd.f32 %v2475, %v2579
        %v2613 = vadd.f32 %v2476, %v2584
        %v2614 = vadd.f32 %v2477, %v2589
        %v2615 = vadd.f32 %v2478, %v2594
        %v2616 = vadd.f32 %v2479, %v2599
        %v2617 = vadd.f32 %v2480, %v2604
        %v2618 = vadd.f32 %v2481, %v2609
        %v2619 = vld [vmem:[%s2] sm:$0x1]
        %v2621 = vlaneseq
        %v2622 = vshrl.u32 %v2621, 7
        %v2623 = vsub.s32 0, %v2622
        %v2624 = vrot.slane %v2619, %v2623
        %v2626 = vadd.f32 %v2612, %v2624
        %v2627 = vadd.f32 %v2613, %v2624
        %v2628 = vadd.f32 %v2614, %v2624
        %v2629 = vadd.f32 %v2615, %v2624
        %v2630 = vadd.f32 %v2616, %v2624
        %v2631 = vadd.f32 %v2617, %v2624
        %v2632 = vadd.f32 %v2618, %v2624
        %2633 = vst.msk [vmem:[#allocation2] sm:$0xff] %vm456, %v2626
        %2634 = vst.msk [vmem:[#allocation2 + $0x8] sm:$0xff] %vm456, %v2627
        %2635 = vst.msk [vmem:[#allocation2 + $0x10] sm:$0xff] %vm456, %v2628
        %2636 = vst.msk [vmem:[#allocation2 + $0x18] sm:$0xff] %vm456, %v2629
        %2637 = vst.msk [vmem:[#allocation2 + $0x20] sm:$0xff] %vm456, %v2630
        %2638 = vst.msk [vmem:[#allocation2 + $0x28] sm:$0xff] %vm456, %v2631
        %vm2639 = vcmask 63488
        %2640 = vst.msk [vmem:[#allocation2 + $0x30] sm:$0x7f] %vm2639, %v2632
        %v2641 = vld [vmem:[#allocation2] sm:$0xff]
        %v2642 = vld [vmem:[#allocation2 + $0x8] sm:$0xff]
        %v2643 = vld [vmem:[#allocation2 + $0x10] sm:$0xff]
        %v2644 = vld [vmem:[#allocation2 + $0x18] sm:$0xff]
        %v2645 = vld [vmem:[#allocation2 + $0x20] sm:$0x1f]
        %v2646 = vld [vmem:[%s3] sm:$0xff]
        %v2647 = vld [vmem:[#allocation2 + $0x1] sm:$0xff]
        %v2648 = vld [vmem:[#allocation2 + $0x9] sm:$0xff]
        %v2649 = vld [vmem:[#allocation2 + $0x11] sm:$0xff]
        %v2650 = vld [vmem:[#allocation2 + $0x19] sm:$0xff]
        %v2651 = vld [vmem:[#allocation2 + $0x21] sm:$0x1f]
        %s2652 = scalar_lea.vmem %s3, 8
        %v2653 = vld [vmem:[%s2652] sm:$0xff]
        %v2655 = vsel %vm456, %v2647, 0
        %v2658 = vsel %vm456, %v2648, 0
        %v2661 = vsel %vm456, %v2649, 0
        %v2664 = vsel %vm456, %v2650, 0
        %v2667 = vsel %vm456, %v2651, 0
        %2669 = vmatprep.subr.mxu0 0.0
        %2670 = vmatpush1.msra.mxu0 0.0
        %2671 = vmatprep.subr.mxu0 0.0
        %2672 = vmatpush1.msra.mxu0 0.0
        %2673 = vmatprep.subr.mxu0 0.0
        %2674 = vmatpush1.msra.mxu0 0.0
        %2675 = vmatprep.subr.mxu0 0.0
        %2676 = vmatpush1.msra.mxu0 0.0
        %2677 = vmatprep.subr.mxu0 0.0
        %2678 = vmatpush1.msra.mxu0 0.0
        %2679 = vmatprep.subr.mxu0 0.0
        %2680 = vmatpush1.msra.mxu0 0.0
        %2681 = vmatprep.subr.mxu0 0.0
        %2682 = vmatpush1.msra.mxu0 0.0
        %2683 = vmatprep.subr.mxu0 0.0
        %2684 = vmatpush1.msra.mxu0 0.0
        %2685 = vmatprep.subr.mxu0 0.0
        %2686 = vmatpush1.msra.mxu0 0.0
        %2687 = vmatprep.subr.mxu0 0.0
        %2688 = vmatpush1.msra.mxu0 0.0
        %2689 = vmatprep.subr.mxu0 0.0
        %2690 = vmatpush1.msra.mxu0 0.0
        %2691 = vmatprep.subr.mxu0 0.0
        %2692 = vmatpush1.msra.mxu0 0.0
        %2693 = vmatprep.subr.mxu0 0.0
        %2694 = vmatpush1.msra.mxu0 0.0
        %2695 = vmatprep.subr.mxu0 0.0
        %2696 = vmatpush1.msra.mxu0 0.0
        %2697 = vmatprep.subr.mxu0 0.0
        %2698 = vmatpush1.msra.mxu0 0.0
        %2699 = vmatprep.subr.mxu0 0.0
        %2700 = vmatpush1.msra.mxu0 %v2653
        %2701 = vmatprep.subr.mxu0 0.0
        %2702 = vmatpush2.msra.mxu0 0.0
        %2703 = vmatprep.subr.mxu0 0.0
        %2704 = vmatpush2.msra.mxu0 0.0
        %2705 = vmatprep.subr.mxu0 0.0
        %2706 = vmatpush2.msra.mxu0 0.0
        %2707 = vmatprep.subr.mxu0 0.0
        %2708 = vmatpush2.msra.mxu0 0.0
        %2709 = vmatprep.subr.mxu0 0.0
        %2710 = vmatpush2.msra.mxu0 0.0
        %2711 = vmatprep.subr.mxu0 0.0
        %2712 = vmatpush2.msra.mxu0 0.0
        %2713 = vmatprep.subr.mxu0 0.0
        %2714 = vmatpush2.msra.mxu0 0.0
        %2715 = vmatprep.subr.mxu0 0.0
        %2716 = vmatpush2.msra.mxu0 0.0
        %2717 = vmatprep.subr.mxu0 0.0
        %2718 = vmatpush2.msra.mxu0 0.0
        %2719 = vmatprep.subr.mxu0 0.0
        %2720 = vmatpush2.msra.mxu0 0.0
        %2721 = vmatprep.subr.mxu0 0.0
        %2722 = vmatpush2.msra.mxu0 0.0
        %2723 = vmatprep.subr.mxu0 0.0
        %2724 = vmatpush2.msra.mxu0 0.0
        %2725 = vmatprep.subr.mxu0 0.0
        %2726 = vmatpush2.msra.mxu0 0.0
        %2727 = vmatprep.subr.mxu0 0.0
        %2728 = vmatpush2.msra.mxu0 0.0
        %2729 = vmatprep.subr.mxu0 0.0
        %2730 = vmatpush2.msra.mxu0 0.0
        %2731 = vmatprep.subr.mxu0 0.0
        %2732 = vmatpush2.msra.mxu0 0.0
        %2733 = vmatprep.mubr.f32.mxu0 0.0
        %2734 = vmatmul.mubr.f32.gmra.mxu0 %v2655
        %v2735 = vpop.f32.mrf.mxu0
        %v2736 = vadd.f32 0.0, %v2735
        %v2737 = vpop.f32.mrf.mxu0
        %2738 = vmatprep.mubr.f32.mxu0 0.0
        %2739 = vmatmul.mubr.f32.gmra.mxu0 %v2658
        %v2740 = vpop.f32.mrf.mxu0
        %v2741 = vadd.f32 0.0, %v2740
        %v2742 = vpop.f32.mrf.mxu0
        %2743 = vmatprep.mubr.f32.mxu0 0.0
        %2744 = vmatmul.mubr.f32.gmra.mxu0 %v2661
        %v2745 = vpop.f32.mrf.mxu0
        %v2746 = vadd.f32 0.0, %v2745
        %v2747 = vpop.f32.mrf.mxu0
        %2748 = vmatprep.mubr.f32.mxu0 0.0
        %2749 = vmatmul.mubr.f32.gmra.mxu0 %v2664
        %v2750 = vpop.f32.mrf.mxu0
        %v2751 = vadd.f32 0.0, %v2750
        %v2752 = vpop.f32.mrf.mxu0
        %2753 = vmatprep.mubr.f32.mxu0 0.0
        %2754 = vmatmul.mubr.f32.gmra.mxu0 %v2667
        %v2755 = vpop.f32.mrf.mxu0
        %v2756 = vadd.f32 0.0, %v2755
        %v2757 = vpop.f32.mrf.mxu0
        %2758 = vdwg.mxu0
        %v2760 = vsel %vm456, %v2641, 0
        %v2763 = vsel %vm456, %v2642, 0
        %v2766 = vsel %vm456, %v2643, 0
        %v2769 = vsel %vm456, %v2644, 0
        %v2772 = vsel %vm456, %v2645, 0
        %2774 = vmatprep.subr.mxu0 0.0
        %2775 = vmatpush1.msra.mxu0 0.0
        %2776 = vmatprep.subr.mxu0 0.0
        %2777 = vmatpush1.msra.mxu0 0.0
        %2778 = vmatprep.subr.mxu0 0.0
        %2779 = vmatpush1.msra.mxu0 0.0
        %2780 = vmatprep.subr.mxu0 0.0
        %2781 = vmatpush1.msra.mxu0 0.0
        %2782 = vmatprep.subr.mxu0 0.0
        %2783 = vmatpush1.msra.mxu0 0.0
        %2784 = vmatprep.subr.mxu0 0.0
        %2785 = vmatpush1.msra.mxu0 0.0
        %2786 = vmatprep.subr.mxu0 0.0
        %2787 = vmatpush1.msra.mxu0 0.0
        %2788 = vmatprep.subr.mxu0 0.0
        %2789 = vmatpush1.msra.mxu0 0.0
        %2790 = vmatprep.subr.mxu0 0.0
        %2791 = vmatpush1.msra.mxu0 0.0
        %2792 = vmatprep.subr.mxu0 0.0
        %2793 = vmatpush1.msra.mxu0 0.0
        %2794 = vmatprep.subr.mxu0 0.0
        %2795 = vmatpush1.msra.mxu0 0.0
        %2796 = vmatprep.subr.mxu0 0.0
        %2797 = vmatpush1.msra.mxu0 0.0
        %2798 = vmatprep.subr.mxu0 0.0
        %2799 = vmatpush1.msra.mxu0 0.0
        %2800 = vmatprep.subr.mxu0 0.0
        %2801 = vmatpush1.msra.mxu0 0.0
        %2802 = vmatprep.subr.mxu0 0.0
        %2803 = vmatpush1.msra.mxu0 0.0
        %2804 = vmatprep.subr.mxu0 0.0
        %2805 = vmatpush1.msra.mxu0 %v2646
        %2806 = vmatprep.subr.mxu0 0.0
        %2807 = vmatpush2.msra.mxu0 0.0
        %2808 = vmatprep.subr.mxu0 0.0
        %2809 = vmatpush2.msra.mxu0 0.0
        %2810 = vmatprep.subr.mxu0 0.0
        %2811 = vmatpush2.msra.mxu0 0.0
        %2812 = vmatprep.subr.mxu0 0.0
        %2813 = vmatpush2.msra.mxu0 0.0
        %2814 = vmatprep.subr.mxu0 0.0
        %2815 = vmatpush2.msra.mxu0 0.0
        %2816 = vmatprep.subr.mxu0 0.0
        %2817 = vmatpush2.msra.mxu0 0.0
        %2818 = vmatprep.subr.mxu0 0.0
        %2819 = vmatpush2.msra.mxu0 0.0
        %2820 = vmatprep.subr.mxu0 0.0
        %2821 = vmatpush2.msra.mxu0 0.0
        %2822 = vmatprep.subr.mxu0 0.0
        %2823 = vmatpush2.msra.mxu0 0.0
        %2824 = vmatprep.subr.mxu0 0.0
        %2825 = vmatpush2.msra.mxu0 0.0
        %2826 = vmatprep.subr.mxu0 0.0
        %2827 = vmatpush2.msra.mxu0 0.0
        %2828 = vmatprep.subr.mxu0 0.0
        %2829 = vmatpush2.msra.mxu0 0.0
        %2830 = vmatprep.subr.mxu0 0.0
        %2831 = vmatpush2.msra.mxu0 0.0
        %2832 = vmatprep.subr.mxu0 0.0
        %2833 = vmatpush2.msra.mxu0 0.0
        %2834 = vmatprep.subr.mxu0 0.0
        %2835 = vmatpush2.msra.mxu0 0.0
        %2836 = vmatprep.subr.mxu0 0.0
        %2837 = vmatpush2.msra.mxu0 0.0
        %2838 = vmatprep.mubr.f32.mxu0 0.0
        %2839 = vmatmul.mubr.f32.gmra.mxu0 %v2760
        %v2840 = vpop.f32.mrf.mxu0
        %v2841 = vadd.f32 %v2736, %v2840
        %v2842 = vpop.f32.mrf.mxu0
        %2843 = vmatprep.mubr.f32.mxu0 0.0
        %2844 = vmatmul.mubr.f32.gmra.mxu0 %v2763
        %v2845 = vpop.f32.mrf.mxu0
        %v2846 = vadd.f32 %v2741, %v2845
        %v2847 = vpop.f32.mrf.mxu0
        %2848 = vmatprep.mubr.f32.mxu0 0.0
        %2849 = vmatmul.mubr.f32.gmra.mxu0 %v2766
        %v2850 = vpop.f32.mrf.mxu0
        %v2851 = vadd.f32 %v2746, %v2850
        %v2852 = vpop.f32.mrf.mxu0
        %2853 = vmatprep.mubr.f32.mxu0 0.0
        %2854 = vmatmul.mubr.f32.gmra.mxu0 %v2769
        %v2855 = vpop.f32.mrf.mxu0
        %v2856 = vadd.f32 %v2751, %v2855
        %v2857 = vpop.f32.mrf.mxu0
        %2858 = vmatprep.mubr.f32.mxu0 0.0
        %2859 = vmatmul.mubr.f32.gmra.mxu0 %v2772
        %v2860 = vpop.f32.mrf.mxu0
        %v2861 = vadd.f32 %v2756, %v2860
        %v2862 = vpop.f32.mrf.mxu0
        %2863 = vdwg.mxu0
        %v2864 = vld [vmem:[#allocation2 + $0x2] sm:$0xff]
        %v2865 = vld [vmem:[#allocation2 + $0xa] sm:$0xff]
        %v2866 = vld [vmem:[#allocation2 + $0x12] sm:$0xff]
        %v2867 = vld [vmem:[#allocation2 + $0x1a] sm:$0xff]
        %v2868 = vld [vmem:[#allocation2 + $0x22] sm:$0x1f]
        %s2869 = scalar_lea.vmem %s3, 16
        %v2870 = vld [vmem:[%s2869] sm:$0xff]
        %v2872 = vsel %vm456, %v2864, 0
        %v2875 = vsel %vm456, %v2865, 0
        %v2878 = vsel %vm456, %v2866, 0
        %v2881 = vsel %vm456, %v2867, 0
        %v2884 = vsel %vm456, %v2868, 0
        %2886 = vmatprep.subr.mxu0 0.0
        %2887 = vmatpush1.msra.mxu0 0.0
        %2888 = vmatprep.subr.mxu0 0.0
        %2889 = vmatpush1.msra.mxu0 0.0
        %2890 = vmatprep.subr.mxu0 0.0
        %2891 = vmatpush1.msra.mxu0 0.0
        %2892 = vmatprep.subr.mxu0 0.0
        %2893 = vmatpush1.msra.mxu0 0.0
        %2894 = vmatprep.subr.mxu0 0.0
        %2895 = vmatpush1.msra.mxu0 0.0
        %2896 = vmatprep.subr.mxu0 0.0
        %2897 = vmatpush1.msra.mxu0 0.0
        %2898 = vmatprep.subr.mxu0 0.0
        %2899 = vmatpush1.msra.mxu0 0.0
        %2900 = vmatprep.subr.mxu0 0.0
        %2901 = vmatpush1.msra.mxu0 0.0
        %2902 = vmatprep.subr.mxu0 0.0
        %2903 = vmatpush1.msra.mxu0 0.0
        %2904 = vmatprep.subr.mxu0 0.0
        %2905 = vmatpush1.msra.mxu0 0.0
        %2906 = vmatprep.subr.mxu0 0.0
        %2907 = vmatpush1.msra.mxu0 0.0
        %2908 = vmatprep.subr.mxu0 0.0
        %2909 = vmatpush1.msra.mxu0 0.0
        %2910 = vmatprep.subr.mxu0 0.0
        %2911 = vmatpush1.msra.mxu0 0.0
        %2912 = vmatprep.subr.mxu0 0.0
        %2913 = vmatpush1.msra.mxu0 0.0
        %2914 = vmatprep.subr.mxu0 0.0
        %2915 = vmatpush1.msra.mxu0 0.0
        %2916 = vmatprep.subr.mxu0 0.0
        %2917 = vmatpush1.msra.mxu0 %v2870
        %2918 = vmatprep.subr.mxu0 0.0
        %2919 = vmatpush2.msra.mxu0 0.0
        %2920 = vmatprep.subr.mxu0 0.0
        %2921 = vmatpush2.msra.mxu0 0.0
        %2922 = vmatprep.subr.mxu0 0.0
        %2923 = vmatpush2.msra.mxu0 0.0
        %2924 = vmatprep.subr.mxu0 0.0
        %2925 = vmatpush2.msra.mxu0 0.0
        %2926 = vmatprep.subr.mxu0 0.0
        %2927 = vmatpush2.msra.mxu0 0.0
        %2928 = vmatprep.subr.mxu0 0.0
        %2929 = vmatpush2.msra.mxu0 0.0
        %2930 = vmatprep.subr.mxu0 0.0
        %2931 = vmatpush2.msra.mxu0 0.0
        %2932 = vmatprep.subr.mxu0 0.0
        %2933 = vmatpush2.msra.mxu0 0.0
        %2934 = vmatprep.subr.mxu0 0.0
        %2935 = vmatpush2.msra.mxu0 0.0
        %2936 = vmatprep.subr.mxu0 0.0
        %2937 = vmatpush2.msra.mxu0 0.0
        %2938 = vmatprep.subr.mxu0 0.0
        %2939 = vmatpush2.msra.mxu0 0.0
        %2940 = vmatprep.subr.mxu0 0.0
        %2941 = vmatpush2.msra.mxu0 0.0
        %2942 = vmatprep.subr.mxu0 0.0
        %2943 = vmatpush2.msra.mxu0 0.0
        %2944 = vmatprep.subr.mxu0 0.0
        %2945 = vmatpush2.msra.mxu0 0.0
        %2946 = vmatprep.subr.mxu0 0.0
        %2947 = vmatpush2.msra.mxu0 0.0
        %2948 = vmatprep.subr.mxu0 0.0
        %2949 = vmatpush2.msra.mxu0 0.0
        %2950 = vmatprep.mubr.f32.mxu0 0.0
        %2951 = vmatmul.mubr.f32.gmra.mxu0 %v2872
        %v2952 = vpop.f32.mrf.mxu0
        %v2953 = vadd.f32 0.0, %v2952
        %v2954 = vpop.f32.mrf.mxu0
        %2955 = vmatprep.mubr.f32.mxu0 0.0
        %2956 = vmatmul.mubr.f32.gmra.mxu0 %v2875
        %v2957 = vpop.f32.mrf.mxu0
        %v2958 = vadd.f32 0.0, %v2957
        %v2959 = vpop.f32.mrf.mxu0
        %2960 = vmatprep.mubr.f32.mxu0 0.0
        %2961 = vmatmul.mubr.f32.gmra.mxu0 %v2878
        %v2962 = vpop.f32.mrf.mxu0
        %v2963 = vadd.f32 0.0, %v2962
        %v2964 = vpop.f32.mrf.mxu0
        %2965 = vmatprep.mubr.f32.mxu0 0.0
        %2966 = vmatmul.mubr.f32.gmra.mxu0 %v2881
        %v2967 = vpop.f32.mrf.mxu0
        %v2968 = vadd.f32 0.0, %v2967
        %v2969 = vpop.f32.mrf.mxu0
        %2970 = vmatprep.mubr.f32.mxu0 0.0
        %2971 = vmatmul.mubr.f32.gmra.mxu0 %v2884
        %v2972 = vpop.f32.mrf.mxu0
        %v2973 = vadd.f32 0.0, %v2972
        %v2974 = vpop.f32.mrf.mxu0
        %2975 = vdwg.mxu0
        %v2976 = vadd.f32 %v2841, %v2953
        %v2977 = vadd.f32 %v2846, %v2958
        %v2978 = vadd.f32 %v2851, %v2963
        %v2979 = vadd.f32 %v2856, %v2968
        %v2980 = vadd.f32 %v2861, %v2973
        %v2981 = vld [vmem:[#allocation2 + $0x8] sm:$0xff]
        %v2982 = vld [vmem:[#allocation2 + $0x10] sm:$0xff]
        %v2983 = vld [vmem:[#allocation2 + $0x18] sm:$0xff]
        %v2984 = vld [vmem:[#allocation2 + $0x20] sm:$0xff]
        %v2985 = vld [vmem:[#allocation2 + $0x28] sm:$0x1f]
        %s2986 = scalar_lea.vmem %s3, 24
        %v2987 = vld [vmem:[%s2986] sm:$0xff]
        %v2989 = vsel %vm456, %v2981, 0
        %v2992 = vsel %vm456, %v2982, 0
        %v2995 = vsel %vm456, %v2983, 0
        %v2998 = vsel %vm456, %v2984, 0
        %v3001 = vsel %vm456, %v2985, 0
        %3003 = vmatprep.subr.mxu0 0.0
        %3004 = vmatpush1.msra.mxu0 0.0
        %3005 = vmatprep.subr.mxu0 0.0
        %3006 = vmatpush1.msra.mxu0 0.0
        %3007 = vmatprep.subr.mxu0 0.0
        %3008 = vmatpush1.msra.mxu0 0.0
        %3009 = vmatprep.subr.mxu0 0.0
        %3010 = vmatpush1.msra.mxu0 0.0
        %3011 = vmatprep.subr.mxu0 0.0
        %3012 = vmatpush1.msra.mxu0 0.0
        %3013 = vmatprep.subr.mxu0 0.0
        %3014 = vmatpush1.msra.mxu0 0.0
        %3015 = vmatprep.subr.mxu0 0.0
        %3016 = vmatpush1.msra.mxu0 0.0
        %3017 = vmatprep.subr.mxu0 0.0
        %3018 = vmatpush1.msra.mxu0 0.0
        %3019 = vmatprep.subr.mxu0 0.0
        %3020 = vmatpush1.msra.mxu0 0.0
        %3021 = vmatprep.subr.mxu0 0.0
        %3022 = vmatpush1.msra.mxu0 0.0
        %3023 = vmatprep.subr.mxu0 0.0
        %3024 = vmatpush1.msra.mxu0 0.0
        %3025 = vmatprep.subr.mxu0 0.0
        %3026 = vmatpush1.msra.mxu0 0.0
        %3027 = vmatprep.subr.mxu0 0.0
        %3028 = vmatpush1.msra.mxu0 0.0
        %3029 = vmatprep.subr.mxu0 0.0
        %3030 = vmatpush1.msra.mxu0 0.0
        %3031 = vmatprep.subr.mxu0 0.0
        %3032 = vmatpush1.msra.mxu0 0.0
        %3033 = vmatprep.subr.mxu0 0.0
        %3034 = vmatpush1.msra.mxu0 %v2987
        %3035 = vmatprep.subr.mxu0 0.0
        %3036 = vmatpush2.msra.mxu0 0.0
        %3037 = vmatprep.subr.mxu0 0.0
        %3038 = vmatpush2.msra.mxu0 0.0
        %3039 = vmatprep.subr.mxu0 0.0
        %3040 = vmatpush2.msra.mxu0 0.0
        %3041 = vmatprep.subr.mxu0 0.0
        %3042 = vmatpush2.msra.mxu0 0.0
        %3043 = vmatprep.subr.mxu0 0.0
        %3044 = vmatpush2.msra.mxu0 0.0
        %3045 = vmatprep.subr.mxu0 0.0
        %3046 = vmatpush2.msra.mxu0 0.0
        %3047 = vmatprep.subr.mxu0 0.0
        %3048 = vmatpush2.msra.mxu0 0.0
        %3049 = vmatprep.subr.mxu0 0.0
        %3050 = vmatpush2.msra.mxu0 0.0
        %3051 = vmatprep.subr.mxu0 0.0
        %3052 = vmatpush2.msra.mxu0 0.0
        %3053 = vmatprep.subr.mxu0 0.0
        %3054 = vmatpush2.msra.mxu0 0.0
        %3055 = vmatprep.subr.mxu0 0.0
        %3056 = vmatpush2.msra.mxu0 0.0
        %3057 = vmatprep.subr.mxu0 0.0
        %3058 = vmatpush2.msra.mxu0 0.0
        %3059 = vmatprep.subr.mxu0 0.0
        %3060 = vmatpush2.msra.mxu0 0.0
        %3061 = vmatprep.subr.mxu0 0.0
        %3062 = vmatpush2.msra.mxu0 0.0
        %3063 = vmatprep.subr.mxu0 0.0
        %3064 = vmatpush2.msra.mxu0 0.0
        %3065 = vmatprep.subr.mxu0 0.0
        %3066 = vmatpush2.msra.mxu0 0.0
        %3067 = vmatprep.mubr.f32.mxu0 0.0
        %3068 = vmatmul.mubr.f32.gmra.mxu0 %v2989
        %v3069 = vpop.f32.mrf.mxu0
        %v3070 = vadd.f32 0.0, %v3069
        %v3071 = vpop.f32.mrf.mxu0
        %3072 = vmatprep.mubr.f32.mxu0 0.0
        %3073 = vmatmul.mubr.f32.gmra.mxu0 %v2992
        %v3074 = vpop.f32.mrf.mxu0
        %v3075 = vadd.f32 0.0, %v3074
        %v3076 = vpop.f32.mrf.mxu0
        %3077 = vmatprep.mubr.f32.mxu0 0.0
        %3078 = vmatmul.mubr.f32.gmra.mxu0 %v2995
        %v3079 = vpop.f32.mrf.mxu0
        %v3080 = vadd.f32 0.0, %v3079
        %v3081 = vpop.f32.mrf.mxu0
        %3082 = vmatprep.mubr.f32.mxu0 0.0
        %3083 = vmatmul.mubr.f32.gmra.mxu0 %v2998
        %v3084 = vpop.f32.mrf.mxu0
        %v3085 = vadd.f32 0.0, %v3084
        %v3086 = vpop.f32.mrf.mxu0
        %3087 = vmatprep.mubr.f32.mxu0 0.0
        %3088 = vmatmul.mubr.f32.gmra.mxu0 %v3001
        %v3089 = vpop.f32.mrf.mxu0
        %v3090 = vadd.f32 0.0, %v3089
        %v3091 = vpop.f32.mrf.mxu0
        %3092 = vdwg.mxu0
        %v3093 = vadd.f32 %v2976, %v3070
        %v3094 = vadd.f32 %v2977, %v3075
        %v3095 = vadd.f32 %v2978, %v3080
        %v3096 = vadd.f32 %v2979, %v3085
        %v3097 = vadd.f32 %v2980, %v3090
        %v3098 = vld [vmem:[#allocation2 + $0x9] sm:$0xff]
        %v3099 = vld [vmem:[#allocation2 + $0x11] sm:$0xff]
        %v3100 = vld [vmem:[#allocation2 + $0x19] sm:$0xff]
        %v3101 = vld [vmem:[#allocation2 + $0x21] sm:$0xff]
        %v3102 = vld [vmem:[#allocation2 + $0x29] sm:$0x1f]
        %s3103 = scalar_lea.vmem %s3, 32
        %v3104 = vld [vmem:[%s3103] sm:$0xff]
        %v3106 = vsel %vm456, %v3098, 0
        %v3109 = vsel %vm456, %v3099, 0
        %v3112 = vsel %vm456, %v3100, 0
        %v3115 = vsel %vm456, %v3101, 0
        %v3118 = vsel %vm456, %v3102, 0
        %3120 = vmatprep.subr.mxu0 0.0
        %3121 = vmatpush1.msra.mxu0 0.0
        %3122 = vmatprep.subr.mxu0 0.0
        %3123 = vmatpush1.msra.mxu0 0.0
        %3124 = vmatprep.subr.mxu0 0.0
        %3125 = vmatpush1.msra.mxu0 0.0
        %3126 = vmatprep.subr.mxu0 0.0
        %3127 = vmatpush1.msra.mxu0 0.0
        %3128 = vmatprep.subr.mxu0 0.0
        %3129 = vmatpush1.msra.mxu0 0.0
        %3130 = vmatprep.subr.mxu0 0.0
        %3131 = vmatpush1.msra.mxu0 0.0
        %3132 = vmatprep.subr.mxu0 0.0
        %3133 = vmatpush1.msra.mxu0 0.0
        %3134 = vmatprep.subr.mxu0 0.0
        %3135 = vmatpush1.msra.mxu0 0.0
        %3136 = vmatprep.subr.mxu0 0.0
        %3137 = vmatpush1.msra.mxu0 0.0
        %3138 = vmatprep.subr.mxu0 0.0
        %3139 = vmatpush1.msra.mxu0 0.0
        %3140 = vmatprep.subr.mxu0 0.0
        %3141 = vmatpush1.msra.mxu0 0.0
        %3142 = vmatprep.subr.mxu0 0.0
        %3143 = vmatpush1.msra.mxu0 0.0
        %3144 = vmatprep.subr.mxu0 0.0
        %3145 = vmatpush1.msra.mxu0 0.0
        %3146 = vmatprep.subr.mxu0 0.0
        %3147 = vmatpush1.msra.mxu0 0.0
        %3148 = vmatprep.subr.mxu0 0.0
        %3149 = vmatpush1.msra.mxu0 0.0
        %3150 = vmatprep.subr.mxu0 0.0
        %3151 = vmatpush1.msra.mxu0 %v3104
        %3152 = vmatprep.subr.mxu0 0.0
        %3153 = vmatpush2.msra.mxu0 0.0
        %3154 = vmatprep.subr.mxu0 0.0
        %3155 = vmatpush2.msra.mxu0 0.0
        %3156 = vmatprep.subr.mxu0 0.0
        %3157 = vmatpush2.msra.mxu0 0.0
        %3158 = vmatprep.subr.mxu0 0.0
        %3159 = vmatpush2.msra.mxu0 0.0
        %3160 = vmatprep.subr.mxu0 0.0
        %3161 = vmatpush2.msra.mxu0 0.0
        %3162 = vmatprep.subr.mxu0 0.0
        %3163 = vmatpush2.msra.mxu0 0.0
        %3164 = vmatprep.subr.mxu0 0.0
        %3165 = vmatpush2.msra.mxu0 0.0
        %3166 = vmatprep.subr.mxu0 0.0
        %3167 = vmatpush2.msra.mxu0 0.0
        %3168 = vmatprep.subr.mxu0 0.0
        %3169 = vmatpush2.msra.mxu0 0.0
        %3170 = vmatprep.subr.mxu0 0.0
        %3171 = vmatpush2.msra.mxu0 0.0
        %3172 = vmatprep.subr.mxu0 0.0
        %3173 = vmatpush2.msra.mxu0 0.0
        %3174 = vmatprep.subr.mxu0 0.0
        %3175 = vmatpush2.msra.mxu0 0.0
        %3176 = vmatprep.subr.mxu0 0.0
        %3177 = vmatpush2.msra.mxu0 0.0
        %3178 = vmatprep.subr.mxu0 0.0
        %3179 = vmatpush2.msra.mxu0 0.0
        %3180 = vmatprep.subr.mxu0 0.0
        %3181 = vmatpush2.msra.mxu0 0.0
        %3182 = vmatprep.subr.mxu0 0.0
        %3183 = vmatpush2.msra.mxu0 0.0
        %3184 = vmatprep.mubr.f32.mxu0 0.0
        %3185 = vmatmul.mubr.f32.gmra.mxu0 %v3106
        %v3186 = vpop.f32.mrf.mxu0
        %v3187 = vadd.f32 0.0, %v3186
        %v3188 = vpop.f32.mrf.mxu0
        %3189 = vmatprep.mubr.f32.mxu0 0.0
        %3190 = vmatmul.mubr.f32.gmra.mxu0 %v3109
        %v3191 = vpop.f32.mrf.mxu0
        %v3192 = vadd.f32 0.0, %v3191
        %v3193 = vpop.f32.mrf.mxu0
        %3194 = vmatprep.mubr.f32.mxu0 0.0
        %3195 = vmatmul.mubr.f32.gmra.mxu0 %v3112
        %v3196 = vpop.f32.mrf.mxu0
        %v3197 = vadd.f32 0.0, %v3196
        %v3198 = vpop.f32.mrf.mxu0
        %3199 = vmatprep.mubr.f32.mxu0 0.0
        %3200 = vmatmul.mubr.f32.gmra.mxu0 %v3115
        %v3201 = vpop.f32.mrf.mxu0
        %v3202 = vadd.f32 0.0, %v3201
        %v3203 = vpop.f32.mrf.mxu0
        %3204 = vmatprep.mubr.f32.mxu0 0.0
        %3205 = vmatmul.mubr.f32.gmra.mxu0 %v3118
        %v3206 = vpop.f32.mrf.mxu0
        %v3207 = vadd.f32 0.0, %v3206
        %v3208 = vpop.f32.mrf.mxu0
        %3209 = vdwg.mxu0
        %v3210 = vadd.f32 %v3093, %v3187
        %v3211 = vadd.f32 %v3094, %v3192
        %v3212 = vadd.f32 %v3095, %v3197
        %v3213 = vadd.f32 %v3096, %v3202
        %v3214 = vadd.f32 %v3097, %v3207
        %v3215 = vld [vmem:[#allocation2 + $0xa] sm:$0xff]
        %v3216 = vld [vmem:[#allocation2 + $0x12] sm:$0xff]
        %v3217 = vld [vmem:[#allocation2 + $0x1a] sm:$0xff]
        %v3218 = vld [vmem:[#allocation2 + $0x22] sm:$0xff]
        %v3219 = vld [vmem:[#allocation2 + $0x2a] sm:$0x1f]
        %s3220 = scalar_lea.vmem %s3, 40
        %v3221 = vld [vmem:[%s3220] sm:$0xff]
        %v3223 = vsel %vm456, %v3215, 0
        %v3226 = vsel %vm456, %v3216, 0
        %v3229 = vsel %vm456, %v3217, 0
        %v3232 = vsel %vm456, %v3218, 0
        %v3235 = vsel %vm456, %v3219, 0
        %3237 = vmatprep.subr.mxu0 0.0
        %3238 = vmatpush1.msra.mxu0 0.0
        %3239 = vmatprep.subr.mxu0 0.0
        %3240 = vmatpush1.msra.mxu0 0.0
        %3241 = vmatprep.subr.mxu0 0.0
        %3242 = vmatpush1.msra.mxu0 0.0
        %3243 = vmatprep.subr.mxu0 0.0
        %3244 = vmatpush1.msra.mxu0 0.0
        %3245 = vmatprep.subr.mxu0 0.0
        %3246 = vmatpush1.msra.mxu0 0.0
        %3247 = vmatprep.subr.mxu0 0.0
        %3248 = vmatpush1.msra.mxu0 0.0
        %3249 = vmatprep.subr.mxu0 0.0
        %3250 = vmatpush1.msra.mxu0 0.0
        %3251 = vmatprep.subr.mxu0 0.0
        %3252 = vmatpush1.msra.mxu0 0.0
        %3253 = vmatprep.subr.mxu0 0.0
        %3254 = vmatpush1.msra.mxu0 0.0
        %3255 = vmatprep.subr.mxu0 0.0
        %3256 = vmatpush1.msra.mxu0 0.0
        %3257 = vmatprep.subr.mxu0 0.0
        %3258 = vmatpush1.msra.mxu0 0.0
        %3259 = vmatprep.subr.mxu0 0.0
        %3260 = vmatpush1.msra.mxu0 0.0
        %3261 = vmatprep.subr.mxu0 0.0
        %3262 = vmatpush1.msra.mxu0 0.0
        %3263 = vmatprep.subr.mxu0 0.0
        %3264 = vmatpush1.msra.mxu0 0.0
        %3265 = vmatprep.subr.mxu0 0.0
        %3266 = vmatpush1.msra.mxu0 0.0
        %3267 = vmatprep.subr.mxu0 0.0
        %3268 = vmatpush1.msra.mxu0 %v3221
        %3269 = vmatprep.subr.mxu0 0.0
        %3270 = vmatpush2.msra.mxu0 0.0
        %3271 = vmatprep.subr.mxu0 0.0
        %3272 = vmatpush2.msra.mxu0 0.0
        %3273 = vmatprep.subr.mxu0 0.0
        %3274 = vmatpush2.msra.mxu0 0.0
        %3275 = vmatprep.subr.mxu0 0.0
        %3276 = vmatpush2.msra.mxu0 0.0
        %3277 = vmatprep.subr.mxu0 0.0
        %3278 = vmatpush2.msra.mxu0 0.0
        %3279 = vmatprep.subr.mxu0 0.0
        %3280 = vmatpush2.msra.mxu0 0.0
        %3281 = vmatprep.subr.mxu0 0.0
        %3282 = vmatpush2.msra.mxu0 0.0
        %3283 = vmatprep.subr.mxu0 0.0
        %3284 = vmatpush2.msra.mxu0 0.0
        %3285 = vmatprep.subr.mxu0 0.0
        %3286 = vmatpush2.msra.mxu0 0.0
        %3287 = vmatprep.subr.mxu0 0.0
        %3288 = vmatpush2.msra.mxu0 0.0
        %3289 = vmatprep.subr.mxu0 0.0
        %3290 = vmatpush2.msra.mxu0 0.0
        %3291 = vmatprep.subr.mxu0 0.0
        %3292 = vmatpush2.msra.mxu0 0.0
        %3293 = vmatprep.subr.mxu0 0.0
        %3294 = vmatpush2.msra.mxu0 0.0
        %3295 = vmatprep.subr.mxu0 0.0
        %3296 = vmatpush2.msra.mxu0 0.0
        %3297 = vmatprep.subr.mxu0 0.0
        %3298 = vmatpush2.msra.mxu0 0.0
        %3299 = vmatprep.subr.mxu0 0.0
        %3300 = vmatpush2.msra.mxu0 0.0
        %3301 = vmatprep.mubr.f32.mxu0 0.0
        %3302 = vmatmul.mubr.f32.gmra.mxu0 %v3223
        %v3303 = vpop.f32.mrf.mxu0
        %v3304 = vadd.f32 0.0, %v3303
        %v3305 = vpop.f32.mrf.mxu0
        %3306 = vmatprep.mubr.f32.mxu0 0.0
        %3307 = vmatmul.mubr.f32.gmra.mxu0 %v3226
        %v3308 = vpop.f32.mrf.mxu0
        %v3309 = vadd.f32 0.0, %v3308
        %v3310 = vpop.f32.mrf.mxu0
        %3311 = vmatprep.mubr.f32.mxu0 0.0
        %3312 = vmatmul.mubr.f32.gmra.mxu0 %v3229
        %v3313 = vpop.f32.mrf.mxu0
        %v3314 = vadd.f32 0.0, %v3313
        %v3315 = vpop.f32.mrf.mxu0
        %3316 = vmatprep.mubr.f32.mxu0 0.0
        %3317 = vmatmul.mubr.f32.gmra.mxu0 %v3232
        %v3318 = vpop.f32.mrf.mxu0
        %v3319 = vadd.f32 0.0, %v3318
        %v3320 = vpop.f32.mrf.mxu0
        %3321 = vmatprep.mubr.f32.mxu0 0.0
        %3322 = vmatmul.mubr.f32.gmra.mxu0 %v3235
        %v3323 = vpop.f32.mrf.mxu0
        %v3324 = vadd.f32 0.0, %v3323
        %v3325 = vpop.f32.mrf.mxu0
        %3326 = vdwg.mxu0
        %v3327 = vadd.f32 %v3210, %v3304
        %v3328 = vadd.f32 %v3211, %v3309
        %v3329 = vadd.f32 %v3212, %v3314
        %v3330 = vadd.f32 %v3213, %v3319
        %v3331 = vadd.f32 %v3214, %v3324
        %v3332 = vld [vmem:[#allocation2 + $0x10] sm:$0xff]
        %v3333 = vld [vmem:[#allocation2 + $0x18] sm:$0xff]
        %v3334 = vld [vmem:[#allocation2 + $0x20] sm:$0xff]
        %v3335 = vld [vmem:[#allocation2 + $0x28] sm:$0xff]
        %v3336 = vld [vmem:[#allocation2 + $0x30] sm:$0x1f]
        %s3337 = scalar_lea.vmem %s3, 48
        %v3338 = vld [vmem:[%s3337] sm:$0xff]
        %v3340 = vsel %vm456, %v3332, 0
        %v3343 = vsel %vm456, %v3333, 0
        %v3346 = vsel %vm456, %v3334, 0
        %v3349 = vsel %vm456, %v3335, 0
        %v3352 = vsel %vm456, %v3336, 0
        %3354 = vmatprep.subr.mxu0 0.0
        %3355 = vmatpush1.msra.mxu0 0.0
        %3356 = vmatprep.subr.mxu0 0.0
        %3357 = vmatpush1.msra.mxu0 0.0
        %3358 = vmatprep.subr.mxu0 0.0
        %3359 = vmatpush1.msra.mxu0 0.0
        %3360 = vmatprep.subr.mxu0 0.0
        %3361 = vmatpush1.msra.mxu0 0.0
        %3362 = vmatprep.subr.mxu0 0.0
        %3363 = vmatpush1.msra.mxu0 0.0
        %3364 = vmatprep.subr.mxu0 0.0
        %3365 = vmatpush1.msra.mxu0 0.0
        %3366 = vmatprep.subr.mxu0 0.0
        %3367 = vmatpush1.msra.mxu0 0.0
        %3368 = vmatprep.subr.mxu0 0.0
        %3369 = vmatpush1.msra.mxu0 0.0
        %3370 = vmatprep.subr.mxu0 0.0
        %3371 = vmatpush1.msra.mxu0 0.0
        %3372 = vmatprep.subr.mxu0 0.0
        %3373 = vmatpush1.msra.mxu0 0.0
        %3374 = vmatprep.subr.mxu0 0.0
        %3375 = vmatpush1.msra.mxu0 0.0
        %3376 = vmatprep.subr.mxu0 0.0
        %3377 = vmatpush1.msra.mxu0 0.0
        %3378 = vmatprep.subr.mxu0 0.0
        %3379 = vmatpush1.msra.mxu0 0.0
        %3380 = vmatprep.subr.mxu0 0.0
        %3381 = vmatpush1.msra.mxu0 0.0
        %3382 = vmatprep.subr.mxu0 0.0
        %3383 = vmatpush1.msra.mxu0 0.0
        %3384 = vmatprep.subr.mxu0 0.0
        %3385 = vmatpush1.msra.mxu0 %v3338
        %3386 = vmatprep.subr.mxu0 0.0
        %3387 = vmatpush2.msra.mxu0 0.0
        %3388 = vmatprep.subr.mxu0 0.0
        %3389 = vmatpush2.msra.mxu0 0.0
        %3390 = vmatprep.subr.mxu0 0.0
        %3391 = vmatpush2.msra.mxu0 0.0
        %3392 = vmatprep.subr.mxu0 0.0
        %3393 = vmatpush2.msra.mxu0 0.0
        %3394 = vmatprep.subr.mxu0 0.0
        %3395 = vmatpush2.msra.mxu0 0.0
        %3396 = vmatprep.subr.mxu0 0.0
        %3397 = vmatpush2.msra.mxu0 0.0
        %3398 = vmatprep.subr.mxu0 0.0
        %3399 = vmatpush2.msra.mxu0 0.0
        %3400 = vmatprep.subr.mxu0 0.0
        %3401 = vmatpush2.msra.mxu0 0.0
        %3402 = vmatprep.subr.mxu0 0.0
        %3403 = vmatpush2.msra.mxu0 0.0
        %3404 = vmatprep.subr.mxu0 0.0
        %3405 = vmatpush2.msra.mxu0 0.0
        %3406 = vmatprep.subr.mxu0 0.0
        %3407 = vmatpush2.msra.mxu0 0.0
        %3408 = vmatprep.subr.mxu0 0.0
        %3409 = vmatpush2.msra.mxu0 0.0
        %3410 = vmatprep.subr.mxu0 0.0
        %3411 = vmatpush2.msra.mxu0 0.0
        %3412 = vmatprep.subr.mxu0 0.0
        %3413 = vmatpush2.msra.mxu0 0.0
        %3414 = vmatprep.subr.mxu0 0.0
        %3415 = vmatpush2.msra.mxu0 0.0
        %3416 = vmatprep.subr.mxu0 0.0
        %3417 = vmatpush2.msra.mxu0 0.0
        %3418 = vmatprep.mubr.f32.mxu0 0.0
        %3419 = vmatmul.mubr.f32.gmra.mxu0 %v3340
        %v3420 = vpop.f32.mrf.mxu0
        %v3421 = vadd.f32 0.0, %v3420
        %v3422 = vpop.f32.mrf.mxu0
        %3423 = vmatprep.mubr.f32.mxu0 0.0
        %3424 = vmatmul.mubr.f32.gmra.mxu0 %v3343
        %v3425 = vpop.f32.mrf.mxu0
        %v3426 = vadd.f32 0.0, %v3425
        %v3427 = vpop.f32.mrf.mxu0
        %3428 = vmatprep.mubr.f32.mxu0 0.0
        %3429 = vmatmul.mubr.f32.gmra.mxu0 %v3346
        %v3430 = vpop.f32.mrf.mxu0
        %v3431 = vadd.f32 0.0, %v3430
        %v3432 = vpop.f32.mrf.mxu0
        %3433 = vmatprep.mubr.f32.mxu0 0.0
        %3434 = vmatmul.mubr.f32.gmra.mxu0 %v3349
        %v3435 = vpop.f32.mrf.mxu0
        %v3436 = vadd.f32 0.0, %v3435
        %v3437 = vpop.f32.mrf.mxu0
        %3438 = vmatprep.mubr.f32.mxu0 0.0
        %3439 = vmatmul.mubr.f32.gmra.mxu0 %v3352
        %v3440 = vpop.f32.mrf.mxu0
        %v3441 = vadd.f32 0.0, %v3440
        %v3442 = vpop.f32.mrf.mxu0
        %3443 = vdwg.mxu0
        %v3444 = vadd.f32 %v3327, %v3421
        %v3445 = vadd.f32 %v3328, %v3426
        %v3446 = vadd.f32 %v3329, %v3431
        %v3447 = vadd.f32 %v3330, %v3436
        %v3448 = vadd.f32 %v3331, %v3441
        %v3449 = vld [vmem:[#allocation2 + $0x11] sm:$0xff]
        %v3450 = vld [vmem:[#allocation2 + $0x19] sm:$0xff]
        %v3451 = vld [vmem:[#allocation2 + $0x21] sm:$0xff]
        %v3452 = vld [vmem:[#allocation2 + $0x29] sm:$0xff]
        %v3453 = vld [vmem:[#allocation2 + $0x31] sm:$0x1f]
        %s3454 = scalar_lea.vmem %s3, 56
        %v3455 = vld [vmem:[%s3454] sm:$0xff]
        %v3457 = vsel %vm456, %v3449, 0
        %v3460 = vsel %vm456, %v3450, 0
        %v3463 = vsel %vm456, %v3451, 0
        %v3466 = vsel %vm456, %v3452, 0
        %v3469 = vsel %vm456, %v3453, 0
        %3471 = vmatprep.subr.mxu0 0.0
        %3472 = vmatpush1.msra.mxu0 0.0
        %3473 = vmatprep.subr.mxu0 0.0
        %3474 = vmatpush1.msra.mxu0 0.0
        %3475 = vmatprep.subr.mxu0 0.0
        %3476 = vmatpush1.msra.mxu0 0.0
        %3477 = vmatprep.subr.mxu0 0.0
        %3478 = vmatpush1.msra.mxu0 0.0
        %3479 = vmatprep.subr.mxu0 0.0
        %3480 = vmatpush1.msra.mxu0 0.0
        %3481 = vmatprep.subr.mxu0 0.0
        %3482 = vmatpush1.msra.mxu0 0.0
        %3483 = vmatprep.subr.mxu0 0.0
        %3484 = vmatpush1.msra.mxu0 0.0
        %3485 = vmatprep.subr.mxu0 0.0
        %3486 = vmatpush1.msra.mxu0 0.0
        %3487 = vmatprep.subr.mxu0 0.0
        %3488 = vmatpush1.msra.mxu0 0.0
        %3489 = vmatprep.subr.mxu0 0.0
        %3490 = vmatpush1.msra.mxu0 0.0
        %3491 = vmatprep.subr.mxu0 0.0
        %3492 = vmatpush1.msra.mxu0 0.0
        %3493 = vmatprep.subr.mxu0 0.0
        %3494 = vmatpush1.msra.mxu0 0.0
        %3495 = vmatprep.subr.mxu0 0.0
        %3496 = vmatpush1.msra.mxu0 0.0
        %3497 = vmatprep.subr.mxu0 0.0
        %3498 = vmatpush1.msra.mxu0 0.0
        %3499 = vmatprep.subr.mxu0 0.0
        %3500 = vmatpush1.msra.mxu0 0.0
        %3501 = vmatprep.subr.mxu0 0.0
        %3502 = vmatpush1.msra.mxu0 %v3455
        %3503 = vmatprep.subr.mxu0 0.0
        %3504 = vmatpush2.msra.mxu0 0.0
        %3505 = vmatprep.subr.mxu0 0.0
        %3506 = vmatpush2.msra.mxu0 0.0
        %3507 = vmatprep.subr.mxu0 0.0
        %3508 = vmatpush2.msra.mxu0 0.0
        %3509 = vmatprep.subr.mxu0 0.0
        %3510 = vmatpush2.msra.mxu0 0.0
        %3511 = vmatprep.subr.mxu0 0.0
        %3512 = vmatpush2.msra.mxu0 0.0
        %3513 = vmatprep.subr.mxu0 0.0
        %3514 = vmatpush2.msra.mxu0 0.0
        %3515 = vmatprep.subr.mxu0 0.0
        %3516 = vmatpush2.msra.mxu0 0.0
        %3517 = vmatprep.subr.mxu0 0.0
        %3518 = vmatpush2.msra.mxu0 0.0
        %3519 = vmatprep.subr.mxu0 0.0
        %3520 = vmatpush2.msra.mxu0 0.0
        %3521 = vmatprep.subr.mxu0 0.0
        %3522 = vmatpush2.msra.mxu0 0.0
        %3523 = vmatprep.subr.mxu0 0.0
        %3524 = vmatpush2.msra.mxu0 0.0
        %3525 = vmatprep.subr.mxu0 0.0
        %3526 = vmatpush2.msra.mxu0 0.0
        %3527 = vmatprep.subr.mxu0 0.0
        %3528 = vmatpush2.msra.mxu0 0.0
        %3529 = vmatprep.subr.mxu0 0.0
        %3530 = vmatpush2.msra.mxu0 0.0
        %3531 = vmatprep.subr.mxu0 0.0
        %3532 = vmatpush2.msra.mxu0 0.0
        %3533 = vmatprep.subr.mxu0 0.0
        %3534 = vmatpush2.msra.mxu0 0.0
        %3535 = vmatprep.mubr.f32.mxu0 0.0
        %3536 = vmatmul.mubr.f32.gmra.mxu0 %v3457
        %v3537 = vpop.f32.mrf.mxu0
        %v3538 = vadd.f32 0.0, %v3537
        %v3539 = vpop.f32.mrf.mxu0
        %3540 = vmatprep.mubr.f32.mxu0 0.0
        %3541 = vmatmul.mubr.f32.gmra.mxu0 %v3460
        %v3542 = vpop.f32.mrf.mxu0
        %v3543 = vadd.f32 0.0, %v3542
        %v3544 = vpop.f32.mrf.mxu0
        %3545 = vmatprep.mubr.f32.mxu0 0.0
        %3546 = vmatmul.mubr.f32.gmra.mxu0 %v3463
        %v3547 = vpop.f32.mrf.mxu0
        %v3548 = vadd.f32 0.0, %v3547
        %v3549 = vpop.f32.mrf.mxu0
        %3550 = vmatprep.mubr.f32.mxu0 0.0
        %3551 = vmatmul.mubr.f32.gmra.mxu0 %v3466
        %v3552 = vpop.f32.mrf.mxu0
        %v3553 = vadd.f32 0.0, %v3552
        %v3554 = vpop.f32.mrf.mxu0
        %3555 = vmatprep.mubr.f32.mxu0 0.0
        %3556 = vmatmul.mubr.f32.gmra.mxu0 %v3469
        %v3557 = vpop.f32.mrf.mxu0
        %v3558 = vadd.f32 0.0, %v3557
        %v3559 = vpop.f32.mrf.mxu0
        %3560 = vdwg.mxu0
        %v3561 = vadd.f32 %v3444, %v3538
        %v3562 = vadd.f32 %v3445, %v3543
        %v3563 = vadd.f32 %v3446, %v3548
        %v3564 = vadd.f32 %v3447, %v3553
        %v3565 = vadd.f32 %v3448, %v3558
        %v3566 = vld [vmem:[#allocation2 + $0x12] sm:$0xff]
        %v3567 = vld [vmem:[#allocation2 + $0x1a] sm:$0xff]
        %v3568 = vld [vmem:[#allocation2 + $0x22] sm:$0xff]
        %v3569 = vld [vmem:[#allocation2 + $0x2a] sm:$0xff]
        %v3570 = vld [vmem:[#allocation2 + $0x32] sm:$0x1f]
        %s3571 = scalar_lea.vmem %s3, 64
        %v3572 = vld [vmem:[%s3571] sm:$0xff]
        %v3574 = vsel %vm456, %v3566, 0
        %v3577 = vsel %vm456, %v3567, 0
        %v3580 = vsel %vm456, %v3568, 0
        %v3583 = vsel %vm456, %v3569, 0
        %v3586 = vsel %vm456, %v3570, 0
        %3588 = vmatprep.subr.mxu0 0.0
        %3589 = vmatpush1.msra.mxu0 0.0
        %3590 = vmatprep.subr.mxu0 0.0
        %3591 = vmatpush1.msra.mxu0 0.0
        %3592 = vmatprep.subr.mxu0 0.0
        %3593 = vmatpush1.msra.mxu0 0.0
        %3594 = vmatprep.subr.mxu0 0.0
        %3595 = vmatpush1.msra.mxu0 0.0
        %3596 = vmatprep.subr.mxu0 0.0
        %3597 = vmatpush1.msra.mxu0 0.0
        %3598 = vmatprep.subr.mxu0 0.0
        %3599 = vmatpush1.msra.mxu0 0.0
        %3600 = vmatprep.subr.mxu0 0.0
        %3601 = vmatpush1.msra.mxu0 0.0
        %3602 = vmatprep.subr.mxu0 0.0
        %3603 = vmatpush1.msra.mxu0 0.0
        %3604 = vmatprep.subr.mxu0 0.0
        %3605 = vmatpush1.msra.mxu0 0.0
        %3606 = vmatprep.subr.mxu0 0.0
        %3607 = vmatpush1.msra.mxu0 0.0
        %3608 = vmatprep.subr.mxu0 0.0
        %3609 = vmatpush1.msra.mxu0 0.0
        %3610 = vmatprep.subr.mxu0 0.0
        %3611 = vmatpush1.msra.mxu0 0.0
        %3612 = vmatprep.subr.mxu0 0.0
        %3613 = vmatpush1.msra.mxu0 0.0
        %3614 = vmatprep.subr.mxu0 0.0
        %3615 = vmatpush1.msra.mxu0 0.0
        %3616 = vmatprep.subr.mxu0 0.0
        %3617 = vmatpush1.msra.mxu0 0.0
        %3618 = vmatprep.subr.mxu0 0.0
        %3619 = vmatpush1.msra.mxu0 %v3572
        %3620 = vmatprep.subr.mxu0 0.0
        %3621 = vmatpush2.msra.mxu0 0.0
        %3622 = vmatprep.subr.mxu0 0.0
        %3623 = vmatpush2.msra.mxu0 0.0
        %3624 = vmatprep.subr.mxu0 0.0
        %3625 = vmatpush2.msra.mxu0 0.0
        %3626 = vmatprep.subr.mxu0 0.0
        %3627 = vmatpush2.msra.mxu0 0.0
        %3628 = vmatprep.subr.mxu0 0.0
        %3629 = vmatpush2.msra.mxu0 0.0
        %3630 = vmatprep.subr.mxu0 0.0
        %3631 = vmatpush2.msra.mxu0 0.0
        %3632 = vmatprep.subr.mxu0 0.0
        %3633 = vmatpush2.msra.mxu0 0.0
        %3634 = vmatprep.subr.mxu0 0.0
        %3635 = vmatpush2.msra.mxu0 0.0
        %3636 = vmatprep.subr.mxu0 0.0
        %3637 = vmatpush2.msra.mxu0 0.0
        %3638 = vmatprep.subr.mxu0 0.0
        %3639 = vmatpush2.msra.mxu0 0.0
        %3640 = vmatprep.subr.mxu0 0.0
        %3641 = vmatpush2.msra.mxu0 0.0
        %3642 = vmatprep.subr.mxu0 0.0
        %3643 = vmatpush2.msra.mxu0 0.0
        %3644 = vmatprep.subr.mxu0 0.0
        %3645 = vmatpush2.msra.mxu0 0.0
        %3646 = vmatprep.subr.mxu0 0.0
        %3647 = vmatpush2.msra.mxu0 0.0
        %3648 = vmatprep.subr.mxu0 0.0
        %3649 = vmatpush2.msra.mxu0 0.0
        %3650 = vmatprep.subr.mxu0 0.0
        %3651 = vmatpush2.msra.mxu0 0.0
        %3652 = vmatprep.mubr.f32.mxu0 0.0
        %3653 = vmatmul.mubr.f32.gmra.mxu0 %v3574
        %v3654 = vpop.f32.mrf.mxu0
        %v3655 = vadd.f32 0.0, %v3654
        %v3656 = vpop.f32.mrf.mxu0
        %3657 = vmatprep.mubr.f32.mxu0 0.0
        %3658 = vmatmul.mubr.f32.gmra.mxu0 %v3577
        %v3659 = vpop.f32.mrf.mxu0
        %v3660 = vadd.f32 0.0, %v3659
        %v3661 = vpop.f32.mrf.mxu0
        %3662 = vmatprep.mubr.f32.mxu0 0.0
        %3663 = vmatmul.mubr.f32.gmra.mxu0 %v3580
        %v3664 = vpop.f32.mrf.mxu0
        %v3665 = vadd.f32 0.0, %v3664
        %v3666 = vpop.f32.mrf.mxu0
        %3667 = vmatprep.mubr.f32.mxu0 0.0
        %3668 = vmatmul.mubr.f32.gmra.mxu0 %v3583
        %v3669 = vpop.f32.mrf.mxu0
        %v3670 = vadd.f32 0.0, %v3669
        %v3671 = vpop.f32.mrf.mxu0
        %3672 = vmatprep.mubr.f32.mxu0 0.0
        %3673 = vmatmul.mubr.f32.gmra.mxu0 %v3586
        %v3674 = vpop.f32.mrf.mxu0
        %v3675 = vadd.f32 0.0, %v3674
        %v3676 = vpop.f32.mrf.mxu0
        %3677 = vdwg.mxu0
        %v3678 = vadd.f32 %v3561, %v3655
        %v3679 = vadd.f32 %v3562, %v3660
        %v3680 = vadd.f32 %v3563, %v3665
        %v3681 = vadd.f32 %v3564, %v3670
        %v3682 = vadd.f32 %v3565, %v3675
        %v3683 = vld [vmem:[%s4] sm:$0x1]
        %v3685 = vlaneseq
        %v3686 = vshrl.u32 %v3685, 7
        %v3687 = vsub.s32 0, %v3686
        %v3688 = vrot.slane %v3683, %v3687
        %v3690 = vadd.f32 %v3678, %v3688
        %v3691 = vadd.f32 %v3679, %v3688
        %v3692 = vadd.f32 %v3680, %v3688
        %v3693 = vadd.f32 %v3681, %v3688
        %v3694 = vadd.f32 %v3682, %v3688
        %vm3695 = vcmask 130048
        %3696 = vst.msk [vmem:[#allocation3] sm:$0xff] %vm3695, %v3690
        %3697 = vst.msk [vmem:[#allocation3 + $0x8] sm:$0xff] %vm3695, %v3691
        %3698 = vst.msk [vmem:[#allocation3 + $0x10] sm:$0xff] %vm3695, %v3692
        %3699 = vst.msk [vmem:[#allocation3 + $0x18] sm:$0xff] %vm3695, %v3693
        %vm3700 = vcmask 126976
        %3701 = vst.msk [vmem:[#allocation3 + $0x20] sm:$0x1f] %vm3700, %v3694
        %v3702 = vld [vmem:[#allocation3] sm:$0x1]
        %v3703 = vld [vmem:[%s5] sm:$0xff]
        %v3704 = vld [vmem:[%s5 + $0x8] sm:$0xff]
        %v3705 = vld [vmem:[#allocation3 + $0x1] sm:$0x1]
        %s3706 = scalar_lea.vmem %s5, 16
        %v3707 = vld [vmem:[%s3706] sm:$0xff]
        %v3708 = vld [vmem:[%s3706 + $0x8] sm:$0xff]
        %v3710 = vsel %vm3695, %v3705, 0
        %3712 = vmatprep.subr.mxu0 0.0
        %3713 = vmatpush1.msra.mxu0 0.0
        %3714 = vmatprep.subr.mxu0 0.0
        %3715 = vmatpush1.msra.mxu0 0.0
        %3716 = vmatprep.subr.mxu0 0.0
        %3717 = vmatpush1.msra.mxu0 0.0
        %3718 = vmatprep.subr.mxu0 0.0
        %3719 = vmatpush1.msra.mxu0 0.0
        %3720 = vmatprep.subr.mxu0 0.0
        %3721 = vmatpush1.msra.mxu0 0.0
        %3722 = vmatprep.subr.mxu0 0.0
        %3723 = vmatpush1.msra.mxu0 0.0
        %3724 = vmatprep.subr.mxu0 0.0
        %3725 = vmatpush1.msra.mxu0 0.0
        %3726 = vmatprep.subr.mxu0 0.0
        %3727 = vmatpush1.msra.mxu0 0.0
        %3728 = vmatprep.subr.mxu0 0.0
        %3729 = vmatpush1.msra.mxu0 0.0
        %3730 = vmatprep.subr.mxu0 0.0
        %3731 = vmatpush1.msra.mxu0 0.0
        %3732 = vmatprep.subr.mxu0 0.0
        %3733 = vmatpush1.msra.mxu0 0.0
        %3734 = vmatprep.subr.mxu0 0.0
        %3735 = vmatpush1.msra.mxu0 0.0
        %3736 = vmatprep.subr.mxu0 0.0
        %3737 = vmatpush1.msra.mxu0 0.0
        %3738 = vmatprep.subr.mxu0 0.0
        %3739 = vmatpush1.msra.mxu0 0.0
        %3740 = vmatprep.subr.mxu0 0.0
        %3741 = vmatpush1.msra.mxu0 %v3708
        %3742 = vmatprep.subr.mxu0 0.0
        %3743 = vmatpush1.msra.mxu0 %v3707
        %3744 = vmatprep.subr.mxu0 0.0
        %3745 = vmatpush2.msra.mxu0 0.0
        %3746 = vmatprep.subr.mxu0 0.0
        %3747 = vmatpush2.msra.mxu0 0.0
        %3748 = vmatprep.subr.mxu0 0.0
        %3749 = vmatpush2.msra.mxu0 0.0
        %3750 = vmatprep.subr.mxu0 0.0
        %3751 = vmatpush2.msra.mxu0 0.0
        %3752 = vmatprep.subr.mxu0 0.0
        %3753 = vmatpush2.msra.mxu0 0.0
        %3754 = vmatprep.subr.mxu0 0.0
        %3755 = vmatpush2.msra.mxu0 0.0
        %3756 = vmatprep.subr.mxu0 0.0
        %3757 = vmatpush2.msra.mxu0 0.0
        %3758 = vmatprep.subr.mxu0 0.0
        %3759 = vmatpush2.msra.mxu0 0.0
        %3760 = vmatprep.subr.mxu0 0.0
        %3761 = vmatpush2.msra.mxu0 0.0
        %3762 = vmatprep.subr.mxu0 0.0
        %3763 = vmatpush2.msra.mxu0 0.0
        %3764 = vmatprep.subr.mxu0 0.0
        %3765 = vmatpush2.msra.mxu0 0.0
        %3766 = vmatprep.subr.mxu0 0.0
        %3767 = vmatpush2.msra.mxu0 0.0
        %3768 = vmatprep.subr.mxu0 0.0
        %3769 = vmatpush2.msra.mxu0 0.0
        %3770 = vmatprep.subr.mxu0 0.0
        %3771 = vmatpush2.msra.mxu0 0.0
        %3772 = vmatprep.subr.mxu0 0.0
        %3773 = vmatpush2.msra.mxu0 0.0
        %3774 = vmatprep.subr.mxu0 0.0
        %3775 = vmatpush2.msra.mxu0 0.0
        %3776 = vmatprep.mubr.f32.mxu0 0.0
        %3777 = vmatmul.mubr.f32.gmra.mxu0 %v3710
        %v3778 = vpop.f32.mrf.mxu0
        %v3779 = vadd.f32 0.0, %v3778
        %v3780 = vpop.f32.mrf.mxu0
        %3781 = vdwg.mxu0
        %v3783 = vsel %vm3695, %v3702, 0
        %3785 = vmatprep.subr.mxu0 0.0
        %3786 = vmatpush1.msra.mxu0 0.0
        %3787 = vmatprep.subr.mxu0 0.0
        %3788 = vmatpush1.msra.mxu0 0.0
        %3789 = vmatprep.subr.mxu0 0.0
        %3790 = vmatpush1.msra.mxu0 0.0
        %3791 = vmatprep.subr.mxu0 0.0
        %3792 = vmatpush1.msra.mxu0 0.0
        %3793 = vmatprep.subr.mxu0 0.0
        %3794 = vmatpush1.msra.mxu0 0.0
        %3795 = vmatprep.subr.mxu0 0.0
        %3796 = vmatpush1.msra.mxu0 0.0
        %3797 = vmatprep.subr.mxu0 0.0
        %3798 = vmatpush1.msra.mxu0 0.0
        %3799 = vmatprep.subr.mxu0 0.0
        %3800 = vmatpush1.msra.mxu0 0.0
        %3801 = vmatprep.subr.mxu0 0.0
        %3802 = vmatpush1.msra.mxu0 0.0
        %3803 = vmatprep.subr.mxu0 0.0
        %3804 = vmatpush1.msra.mxu0 0.0
        %3805 = vmatprep.subr.mxu0 0.0
        %3806 = vmatpush1.msra.mxu0 0.0
        %3807 = vmatprep.subr.mxu0 0.0
        %3808 = vmatpush1.msra.mxu0 0.0
        %3809 = vmatprep.subr.mxu0 0.0
        %3810 = vmatpush1.msra.mxu0 0.0
        %3811 = vmatprep.subr.mxu0 0.0
        %3812 = vmatpush1.msra.mxu0 0.0
        %3813 = vmatprep.subr.mxu0 0.0
        %3814 = vmatpush1.msra.mxu0 %v3704
        %3815 = vmatprep.subr.mxu0 0.0
        %3816 = vmatpush1.msra.mxu0 %v3703
        %3817 = vmatprep.subr.mxu0 0.0
        %3818 = vmatpush2.msra.mxu0 0.0
        %3819 = vmatprep.subr.mxu0 0.0
        %3820 = vmatpush2.msra.mxu0 0.0
        %3821 = vmatprep.subr.mxu0 0.0
        %3822 = vmatpush2.msra.mxu0 0.0
        %3823 = vmatprep.subr.mxu0 0.0
        %3824 = vmatpush2.msra.mxu0 0.0
        %3825 = vmatprep.subr.mxu0 0.0
        %3826 = vmatpush2.msra.mxu0 0.0
        %3827 = vmatprep.subr.mxu0 0.0
        %3828 = vmatpush2.msra.mxu0 0.0
        %3829 = vmatprep.subr.mxu0 0.0
        %3830 = vmatpush2.msra.mxu0 0.0
        %3831 = vmatprep.subr.mxu0 0.0
        %3832 = vmatpush2.msra.mxu0 0.0
        %3833 = vmatprep.subr.mxu0 0.0
        %3834 = vmatpush2.msra.mxu0 0.0
        %3835 = vmatprep.subr.mxu0 0.0
        %3836 = vmatpush2.msra.mxu0 0.0
        %3837 = vmatprep.subr.mxu0 0.0
        %3838 = vmatpush2.msra.mxu0 0.0
        %3839 = vmatprep.subr.mxu0 0.0
        %3840 = vmatpush2.msra.mxu0 0.0
        %3841 = vmatprep.subr.mxu0 0.0
        %3842 = vmatpush2.msra.mxu0 0.0
        %3843 = vmatprep.subr.mxu0 0.0
        %3844 = vmatpush2.msra.mxu0 0.0
        %3845 = vmatprep.subr.mxu0 0.0
        %3846 = vmatpush2.msra.mxu0 0.0
        %3847 = vmatprep.subr.mxu0 0.0
        %3848 = vmatpush2.msra.mxu0 0.0
        %3849 = vmatprep.mubr.f32.mxu0 0.0
        %3850 = vmatmul.mubr.f32.gmra.mxu0 %v3783
        %v3851 = vpop.f32.mrf.mxu0
        %v3852 = vadd.f32 %v3779, %v3851
        %v3853 = vpop.f32.mrf.mxu0
        %3854 = vdwg.mxu0
        %v3855 = vld [vmem:[#allocation3 + $0x2] sm:$0x1]
        %s3856 = scalar_lea.vmem %s5, 32
        %v3857 = vld [vmem:[%s3856] sm:$0xff]
        %v3858 = vld [vmem:[%s3856 + $0x8] sm:$0xff]
        %v3860 = vsel %vm3695, %v3855, 0
        %3862 = vmatprep.subr.mxu0 0.0
        %3863 = vmatpush1.msra.mxu0 0.0
        %3864 = vmatprep.subr.mxu0 0.0
        %3865 = vmatpush1.msra.mxu0 0.0
        %3866 = vmatprep.subr.mxu0 0.0
        %3867 = vmatpush1.msra.mxu0 0.0
        %3868 = vmatprep.subr.mxu0 0.0
        %3869 = vmatpush1.msra.mxu0 0.0
        %3870 = vmatprep.subr.mxu0 0.0
        %3871 = vmatpush1.msra.mxu0 0.0
        %3872 = vmatprep.subr.mxu0 0.0
        %3873 = vmatpush1.msra.mxu0 0.0
        %3874 = vmatprep.subr.mxu0 0.0
        %3875 = vmatpush1.msra.mxu0 0.0
        %3876 = vmatprep.subr.mxu0 0.0
        %3877 = vmatpush1.msra.mxu0 0.0
        %3878 = vmatprep.subr.mxu0 0.0
        %3879 = vmatpush1.msra.mxu0 0.0
        %3880 = vmatprep.subr.mxu0 0.0
        %3881 = vmatpush1.msra.mxu0 0.0
        %3882 = vmatprep.subr.mxu0 0.0
        %3883 = vmatpush1.msra.mxu0 0.0
        %3884 = vmatprep.subr.mxu0 0.0
        %3885 = vmatpush1.msra.mxu0 0.0
        %3886 = vmatprep.subr.mxu0 0.0
        %3887 = vmatpush1.msra.mxu0 0.0
        %3888 = vmatprep.subr.mxu0 0.0
        %3889 = vmatpush1.msra.mxu0 0.0
        %3890 = vmatprep.subr.mxu0 0.0
        %3891 = vmatpush1.msra.mxu0 %v3858
        %3892 = vmatprep.subr.mxu0 0.0
        %3893 = vmatpush1.msra.mxu0 %v3857
        %3894 = vmatprep.subr.mxu0 0.0
        %3895 = vmatpush2.msra.mxu0 0.0
        %3896 = vmatprep.subr.mxu0 0.0
        %3897 = vmatpush2.msra.mxu0 0.0
        %3898 = vmatprep.subr.mxu0 0.0
        %3899 = vmatpush2.msra.mxu0 0.0
        %3900 = vmatprep.subr.mxu0 0.0
        %3901 = vmatpush2.msra.mxu0 0.0
        %3902 = vmatprep.subr.mxu0 0.0
        %3903 = vmatpush2.msra.mxu0 0.0
        %3904 = vmatprep.subr.mxu0 0.0
        %3905 = vmatpush2.msra.mxu0 0.0
        %3906 = vmatprep.subr.mxu0 0.0
        %3907 = vmatpush2.msra.mxu0 0.0
        %3908 = vmatprep.subr.mxu0 0.0
        %3909 = vmatpush2.msra.mxu0 0.0
        %3910 = vmatprep.subr.mxu0 0.0
        %3911 = vmatpush2.msra.mxu0 0.0
        %3912 = vmatprep.subr.mxu0 0.0
        %3913 = vmatpush2.msra.mxu0 0.0
        %3914 = vmatprep.subr.mxu0 0.0
        %3915 = vmatpush2.msra.mxu0 0.0
        %3916 = vmatprep.subr.mxu0 0.0
        %3917 = vmatpush2.msra.mxu0 0.0
        %3918 = vmatprep.subr.mxu0 0.0
        %3919 = vmatpush2.msra.mxu0 0.0
        %3920 = vmatprep.subr.mxu0 0.0
        %3921 = vmatpush2.msra.mxu0 0.0
        %3922 = vmatprep.subr.mxu0 0.0
        %3923 = vmatpush2.msra.mxu0 0.0
        %3924 = vmatprep.subr.mxu0 0.0
        %3925 = vmatpush2.msra.mxu0 0.0
        %3926 = vmatprep.mubr.f32.mxu0 0.0
        %3927 = vmatmul.mubr.f32.gmra.mxu0 %v3860
        %v3928 = vpop.f32.mrf.mxu0
        %v3929 = vadd.f32 0.0, %v3928
        %v3930 = vpop.f32.mrf.mxu0
        %3931 = vdwg.mxu0
        %v3932 = vadd.f32 %v3852, %v3929
        %v3933 = vld [vmem:[#allocation3 + $0x3] sm:$0x1]
        %s3934 = scalar_lea.vmem %s5, 48
        %v3935 = vld [vmem:[%s3934] sm:$0xff]
        %v3936 = vld [vmem:[%s3934 + $0x8] sm:$0xff]
        %v3938 = vsel %vm3695, %v3933, 0
        %3940 = vmatprep.subr.mxu0 0.0
        %3941 = vmatpush1.msra.mxu0 0.0
        %3942 = vmatprep.subr.mxu0 0.0
        %3943 = vmatpush1.msra.mxu0 0.0
        %3944 = vmatprep.subr.mxu0 0.0
        %3945 = vmatpush1.msra.mxu0 0.0
        %3946 = vmatprep.subr.mxu0 0.0
        %3947 = vmatpush1.msra.mxu0 0.0
        %3948 = vmatprep.subr.mxu0 0.0
        %3949 = vmatpush1.msra.mxu0 0.0
        %3950 = vmatprep.subr.mxu0 0.0
        %3951 = vmatpush1.msra.mxu0 0.0
        %3952 = vmatprep.subr.mxu0 0.0
        %3953 = vmatpush1.msra.mxu0 0.0
        %3954 = vmatprep.subr.mxu0 0.0
        %3955 = vmatpush1.msra.mxu0 0.0
        %3956 = vmatprep.subr.mxu0 0.0
        %3957 = vmatpush1.msra.mxu0 0.0
        %3958 = vmatprep.subr.mxu0 0.0
        %3959 = vmatpush1.msra.mxu0 0.0
        %3960 = vmatprep.subr.mxu0 0.0
        %3961 = vmatpush1.msra.mxu0 0.0
        %3962 = vmatprep.subr.mxu0 0.0
        %3963 = vmatpush1.msra.mxu0 0.0
        %3964 = vmatprep.subr.mxu0 0.0
        %3965 = vmatpush1.msra.mxu0 0.0
        %3966 = vmatprep.subr.mxu0 0.0
        %3967 = vmatpush1.msra.mxu0 0.0
        %3968 = vmatprep.subr.mxu0 0.0
        %3969 = vmatpush1.msra.mxu0 %v3936
        %3970 = vmatprep.subr.mxu0 0.0
        %3971 = vmatpush1.msra.mxu0 %v3935
        %3972 = vmatprep.subr.mxu0 0.0
        %3973 = vmatpush2.msra.mxu0 0.0
        %3974 = vmatprep.subr.mxu0 0.0
        %3975 = vmatpush2.msra.mxu0 0.0
        %3976 = vmatprep.subr.mxu0 0.0
        %3977 = vmatpush2.msra.mxu0 0.0
        %3978 = vmatprep.subr.mxu0 0.0
        %3979 = vmatpush2.msra.mxu0 0.0
        %3980 = vmatprep.subr.mxu0 0.0
        %3981 = vmatpush2.msra.mxu0 0.0
        %3982 = vmatprep.subr.mxu0 0.0
        %3983 = vmatpush2.msra.mxu0 0.0
        %3984 = vmatprep.subr.mxu0 0.0
        %3985 = vmatpush2.msra.mxu0 0.0
        %3986 = vmatprep.subr.mxu0 0.0
        %3987 = vmatpush2.msra.mxu0 0.0
        %3988 = vmatprep.subr.mxu0 0.0
        %3989 = vmatpush2.msra.mxu0 0.0
        %3990 = vmatprep.subr.mxu0 0.0
        %3991 = vmatpush2.msra.mxu0 0.0
        %3992 = vmatprep.subr.mxu0 0.0
        %3993 = vmatpush2.msra.mxu0 0.0
        %3994 = vmatprep.subr.mxu0 0.0
        %3995 = vmatpush2.msra.mxu0 0.0
        %3996 = vmatprep.subr.mxu0 0.0
        %3997 = vmatpush2.msra.mxu0 0.0
        %3998 = vmatprep.subr.mxu0 0.0
        %3999 = vmatpush2.msra.mxu0 0.0
        %4000 = vmatprep.subr.mxu0 0.0
        %4001 = vmatpush2.msra.mxu0 0.0
        %4002 = vmatprep.subr.mxu0 0.0
        %4003 = vmatpush2.msra.mxu0 0.0
        %4004 = vmatprep.mubr.f32.mxu0 0.0
        %4005 = vmatmul.mubr.f32.gmra.mxu0 %v3938
        %v4006 = vpop.f32.mrf.mxu0
        %v4007 = vadd.f32 0.0, %v4006
        %v4008 = vpop.f32.mrf.mxu0
        %4009 = vdwg.mxu0
        %v4010 = vadd.f32 %v3932, %v4007
        %v4011 = vld [vmem:[#allocation3 + $0x4] sm:$0x1]
        %s4012 = scalar_lea.vmem %s5, 64
        %v4013 = vld [vmem:[%s4012] sm:$0xff]
        %v4014 = vld [vmem:[%s4012 + $0x8] sm:$0xff]
        %v4016 = vsel %vm3695, %v4011, 0
        %4018 = vmatprep.subr.mxu0 0.0
        %4019 = vmatpush1.msra.mxu0 0.0
        %4020 = vmatprep.subr.mxu0 0.0
        %4021 = vmatpush1.msra.mxu0 0.0
        %4022 = vmatprep.subr.mxu0 0.0
        %4023 = vmatpush1.msra.mxu0 0.0
        %4024 = vmatprep.subr.mxu0 0.0
        %4025 = vmatpush1.msra.mxu0 0.0
        %4026 = vmatprep.subr.mxu0 0.0
        %4027 = vmatpush1.msra.mxu0 0.0
        %4028 = vmatprep.subr.mxu0 0.0
        %4029 = vmatpush1.msra.mxu0 0.0
        %4030 = vmatprep.subr.mxu0 0.0
        %4031 = vmatpush1.msra.mxu0 0.0
        %4032 = vmatprep.subr.mxu0 0.0
        %4033 = vmatpush1.msra.mxu0 0.0
        %4034 = vmatprep.subr.mxu0 0.0
        %4035 = vmatpush1.msra.mxu0 0.0
        %4036 = vmatprep.subr.mxu0 0.0
        %4037 = vmatpush1.msra.mxu0 0.0
        %4038 = vmatprep.subr.mxu0 0.0
        %4039 = vmatpush1.msra.mxu0 0.0
        %4040 = vmatprep.subr.mxu0 0.0
        %4041 = vmatpush1.msra.mxu0 0.0
        %4042 = vmatprep.subr.mxu0 0.0
        %4043 = vmatpush1.msra.mxu0 0.0
        %4044 = vmatprep.subr.mxu0 0.0
        %4045 = vmatpush1.msra.mxu0 0.0
        %4046 = vmatprep.subr.mxu0 0.0
        %4047 = vmatpush1.msra.mxu0 %v4014
        %4048 = vmatprep.subr.mxu0 0.0
        %4049 = vmatpush1.msra.mxu0 %v4013
        %4050 = vmatprep.subr.mxu0 0.0
        %4051 = vmatpush2.msra.mxu0 0.0
        %4052 = vmatprep.subr.mxu0 0.0
        %4053 = vmatpush2.msra.mxu0 0.0
        %4054 = vmatprep.subr.mxu0 0.0
        %4055 = vmatpush2.msra.mxu0 0.0
        %4056 = vmatprep.subr.mxu0 0.0
        %4057 = vmatpush2.msra.mxu0 0.0
        %4058 = vmatprep.subr.mxu0 0.0
        %4059 = vmatpush2.msra.mxu0 0.0
        %4060 = vmatprep.subr.mxu0 0.0
        %4061 = vmatpush2.msra.mxu0 0.0
        %4062 = vmatprep.subr.mxu0 0.0
        %4063 = vmatpush2.msra.mxu0 0.0
        %4064 = vmatprep.subr.mxu0 0.0
        %4065 = vmatpush2.msra.mxu0 0.0
        %4066 = vmatprep.subr.mxu0 0.0
        %4067 = vmatpush2.msra.mxu0 0.0
        %4068 = vmatprep.subr.mxu0 0.0
        %4069 = vmatpush2.msra.mxu0 0.0
        %4070 = vmatprep.subr.mxu0 0.0
        %4071 = vmatpush2.msra.mxu0 0.0
        %4072 = vmatprep.subr.mxu0 0.0
        %4073 = vmatpush2.msra.mxu0 0.0
        %4074 = vmatprep.subr.mxu0 0.0
        %4075 = vmatpush2.msra.mxu0 0.0
        %4076 = vmatprep.subr.mxu0 0.0
        %4077 = vmatpush2.msra.mxu0 0.0
        %4078 = vmatprep.subr.mxu0 0.0
        %4079 = vmatpush2.msra.mxu0 0.0
        %4080 = vmatprep.subr.mxu0 0.0
        %4081 = vmatpush2.msra.mxu0 0.0
        %4082 = vmatprep.mubr.f32.mxu0 0.0
        %4083 = vmatmul.mubr.f32.gmra.mxu0 %v4016
        %v4084 = vpop.f32.mrf.mxu0
        %v4085 = vadd.f32 0.0, %v4084
        %v4086 = vpop.f32.mrf.mxu0
        %4087 = vdwg.mxu0
        %v4088 = vadd.f32 %v4010, %v4085
        %v4089 = vld [vmem:[#allocation3 + $0x8] sm:$0x1]
        %s4090 = scalar_lea.vmem %s5, 80
        %v4091 = vld [vmem:[%s4090] sm:$0xff]
        %v4092 = vld [vmem:[%s4090 + $0x8] sm:$0xff]
        %v4094 = vsel %vm3695, %v4089, 0
        %4096 = vmatprep.subr.mxu0 0.0
        %4097 = vmatpush1.msra.mxu0 0.0
        %4098 = vmatprep.subr.mxu0 0.0
        %4099 = vmatpush1.msra.mxu0 0.0
        %4100 = vmatprep.subr.mxu0 0.0
        %4101 = vmatpush1.msra.mxu0 0.0
        %4102 = vmatprep.subr.mxu0 0.0
        %4103 = vmatpush1.msra.mxu0 0.0
        %4104 = vmatprep.subr.mxu0 0.0
        %4105 = vmatpush1.msra.mxu0 0.0
        %4106 = vmatprep.subr.mxu0 0.0
        %4107 = vmatpush1.msra.mxu0 0.0
        %4108 = vmatprep.subr.mxu0 0.0
        %4109 = vmatpush1.msra.mxu0 0.0
        %4110 = vmatprep.subr.mxu0 0.0
        %4111 = vmatpush1.msra.mxu0 0.0
        %4112 = vmatprep.subr.mxu0 0.0
        %4113 = vmatpush1.msra.mxu0 0.0
        %4114 = vmatprep.subr.mxu0 0.0
        %4115 = vmatpush1.msra.mxu0 0.0
        %4116 = vmatprep.subr.mxu0 0.0
        %4117 = vmatpush1.msra.mxu0 0.0
        %4118 = vmatprep.subr.mxu0 0.0
        %4119 = vmatpush1.msra.mxu0 0.0
        %4120 = vmatprep.subr.mxu0 0.0
        %4121 = vmatpush1.msra.mxu0 0.0
        %4122 = vmatprep.subr.mxu0 0.0
        %4123 = vmatpush1.msra.mxu0 0.0
        %4124 = vmatprep.subr.mxu0 0.0
        %4125 = vmatpush1.msra.mxu0 %v4092
        %4126 = vmatprep.subr.mxu0 0.0
        %4127 = vmatpush1.msra.mxu0 %v4091
        %4128 = vmatprep.subr.mxu0 0.0
        %4129 = vmatpush2.msra.mxu0 0.0
        %4130 = vmatprep.subr.mxu0 0.0
        %4131 = vmatpush2.msra.mxu0 0.0
        %4132 = vmatprep.subr.mxu0 0.0
        %4133 = vmatpush2.msra.mxu0 0.0
        %4134 = vmatprep.subr.mxu0 0.0
        %4135 = vmatpush2.msra.mxu0 0.0
        %4136 = vmatprep.subr.mxu0 0.0
        %4137 = vmatpush2.msra.mxu0 0.0
        %4138 = vmatprep.subr.mxu0 0.0
        %4139 = vmatpush2.msra.mxu0 0.0
        %4140 = vmatprep.subr.mxu0 0.0
        %4141 = vmatpush2.msra.mxu0 0.0
        %4142 = vmatprep.subr.mxu0 0.0
        %4143 = vmatpush2.msra.mxu0 0.0
        %4144 = vmatprep.subr.mxu0 0.0
        %4145 = vmatpush2.msra.mxu0 0.0
        %4146 = vmatprep.subr.mxu0 0.0
        %4147 = vmatpush2.msra.mxu0 0.0
        %4148 = vmatprep.subr.mxu0 0.0
        %4149 = vmatpush2.msra.mxu0 0.0
        %4150 = vmatprep.subr.mxu0 0.0
        %4151 = vmatpush2.msra.mxu0 0.0
        %4152 = vmatprep.subr.mxu0 0.0
        %4153 = vmatpush2.msra.mxu0 0.0
        %4154 = vmatprep.subr.mxu0 0.0
        %4155 = vmatpush2.msra.mxu0 0.0
        %4156 = vmatprep.subr.mxu0 0.0
        %4157 = vmatpush2.msra.mxu0 0.0
        %4158 = vmatprep.subr.mxu0 0.0
        %4159 = vmatpush2.msra.mxu0 0.0
        %4160 = vmatprep.mubr.f32.mxu0 0.0
        %4161 = vmatmul.mubr.f32.gmra.mxu0 %v4094
        %v4162 = vpop.f32.mrf.mxu0
        %v4163 = vadd.f32 0.0, %v4162
        %v4164 = vpop.f32.mrf.mxu0
        %4165 = vdwg.mxu0
        %v4166 = vadd.f32 %v4088, %v4163
        %v4167 = vld [vmem:[#allocation3 + $0x9] sm:$0x1]
        %s4168 = scalar_lea.vmem %s5, 96
        %v4169 = vld [vmem:[%s4168] sm:$0xff]
        %v4170 = vld [vmem:[%s4168 + $0x8] sm:$0xff]
        %v4172 = vsel %vm3695, %v4167, 0
        %4174 = vmatprep.subr.mxu0 0.0
        %4175 = vmatpush1.msra.mxu0 0.0
        %4176 = vmatprep.subr.mxu0 0.0
        %4177 = vmatpush1.msra.mxu0 0.0
        %4178 = vmatprep.subr.mxu0 0.0
        %4179 = vmatpush1.msra.mxu0 0.0
        %4180 = vmatprep.subr.mxu0 0.0
        %4181 = vmatpush1.msra.mxu0 0.0
        %4182 = vmatprep.subr.mxu0 0.0
        %4183 = vmatpush1.msra.mxu0 0.0
        %4184 = vmatprep.subr.mxu0 0.0
        %4185 = vmatpush1.msra.mxu0 0.0
        %4186 = vmatprep.subr.mxu0 0.0
        %4187 = vmatpush1.msra.mxu0 0.0
        %4188 = vmatprep.subr.mxu0 0.0
        %4189 = vmatpush1.msra.mxu0 0.0
        %4190 = vmatprep.subr.mxu0 0.0
        %4191 = vmatpush1.msra.mxu0 0.0
        %4192 = vmatprep.subr.mxu0 0.0
        %4193 = vmatpush1.msra.mxu0 0.0
        %4194 = vmatprep.subr.mxu0 0.0
        %4195 = vmatpush1.msra.mxu0 0.0
        %4196 = vmatprep.subr.mxu0 0.0
        %4197 = vmatpush1.msra.mxu0 0.0
        %4198 = vmatprep.subr.mxu0 0.0
        %4199 = vmatpush1.msra.mxu0 0.0
        %4200 = vmatprep.subr.mxu0 0.0
        %4201 = vmatpush1.msra.mxu0 0.0
        %4202 = vmatprep.subr.mxu0 0.0
        %4203 = vmatpush1.msra.mxu0 %v4170
        %4204 = vmatprep.subr.mxu0 0.0
        %4205 = vmatpush1.msra.mxu0 %v4169
        %4206 = vmatprep.subr.mxu0 0.0
        %4207 = vmatpush2.msra.mxu0 0.0
        %4208 = vmatprep.subr.mxu0 0.0
        %4209 = vmatpush2.msra.mxu0 0.0
        %4210 = vmatprep.subr.mxu0 0.0
        %4211 = vmatpush2.msra.mxu0 0.0
        %4212 = vmatprep.subr.mxu0 0.0
        %4213 = vmatpush2.msra.mxu0 0.0
        %4214 = vmatprep.subr.mxu0 0.0
        %4215 = vmatpush2.msra.mxu0 0.0
        %4216 = vmatprep.subr.mxu0 0.0
        %4217 = vmatpush2.msra.mxu0 0.0
        %4218 = vmatprep.subr.mxu0 0.0
        %4219 = vmatpush2.msra.mxu0 0.0
        %4220 = vmatprep.subr.mxu0 0.0
        %4221 = vmatpush2.msra.mxu0 0.0
        %4222 = vmatprep.subr.mxu0 0.0
        %4223 = vmatpush2.msra.mxu0 0.0
        %4224 = vmatprep.subr.mxu0 0.0
        %4225 = vmatpush2.msra.mxu0 0.0
        %4226 = vmatprep.subr.mxu0 0.0
        %4227 = vmatpush2.msra.mxu0 0.0
        %4228 = vmatprep.subr.mxu0 0.0
        %4229 = vmatpush2.msra.mxu0 0.0
        %4230 = vmatprep.subr.mxu0 0.0
        %4231 = vmatpush2.msra.mxu0 0.0
        %4232 = vmatprep.subr.mxu0 0.0
        %4233 = vmatpush2.msra.mxu0 0.0
        %4234 = vmatprep.subr.mxu0 0.0
        %4235 = vmatpush2.msra.mxu0 0.0
        %4236 = vmatprep.subr.mxu0 0.0
        %4237 = vmatpush2.msra.mxu0 0.0
        %4238 = vmatprep.mubr.f32.mxu0 0.0
        %4239 = vmatmul.mubr.f32.gmra.mxu0 %v4172
        %v4240 = vpop.f32.mrf.mxu0
        %v4241 = vadd.f32 0.0, %v4240
        %v4242 = vpop.f32.mrf.mxu0
        %4243 = vdwg.mxu0
        %v4244 = vadd.f32 %v4166, %v4241
        %v4245 = vld [vmem:[#allocation3 + $0xa] sm:$0x1]
        %s4246 = scalar_lea.vmem %s5, 112
        %v4247 = vld [vmem:[%s4246] sm:$0xff]
        %v4248 = vld [vmem:[%s4246 + $0x8] sm:$0xff]
        %v4250 = vsel %vm3695, %v4245, 0
        %4252 = vmatprep.subr.mxu0 0.0
        %4253 = vmatpush1.msra.mxu0 0.0
        %4254 = vmatprep.subr.mxu0 0.0
        %4255 = vmatpush1.msra.mxu0 0.0
        %4256 = vmatprep.subr.mxu0 0.0
        %4257 = vmatpush1.msra.mxu0 0.0
        %4258 = vmatprep.subr.mxu0 0.0
        %4259 = vmatpush1.msra.mxu0 0.0
        %4260 = vmatprep.subr.mxu0 0.0
        %4261 = vmatpush1.msra.mxu0 0.0
        %4262 = vmatprep.subr.mxu0 0.0
        %4263 = vmatpush1.msra.mxu0 0.0
        %4264 = vmatprep.subr.mxu0 0.0
        %4265 = vmatpush1.msra.mxu0 0.0
        %4266 = vmatprep.subr.mxu0 0.0
        %4267 = vmatpush1.msra.mxu0 0.0
        %4268 = vmatprep.subr.mxu0 0.0
        %4269 = vmatpush1.msra.mxu0 0.0
        %4270 = vmatprep.subr.mxu0 0.0
        %4271 = vmatpush1.msra.mxu0 0.0
        %4272 = vmatprep.subr.mxu0 0.0
        %4273 = vmatpush1.msra.mxu0 0.0
        %4274 = vmatprep.subr.mxu0 0.0
        %4275 = vmatpush1.msra.mxu0 0.0
        %4276 = vmatprep.subr.mxu0 0.0
        %4277 = vmatpush1.msra.mxu0 0.0
        %4278 = vmatprep.subr.mxu0 0.0
        %4279 = vmatpush1.msra.mxu0 0.0
        %4280 = vmatprep.subr.mxu0 0.0
        %4281 = vmatpush1.msra.mxu0 %v4248
        %4282 = vmatprep.subr.mxu0 0.0
        %4283 = vmatpush1.msra.mxu0 %v4247
        %4284 = vmatprep.subr.mxu0 0.0
        %4285 = vmatpush2.msra.mxu0 0.0
        %4286 = vmatprep.subr.mxu0 0.0
        %4287 = vmatpush2.msra.mxu0 0.0
        %4288 = vmatprep.subr.mxu0 0.0
        %4289 = vmatpush2.msra.mxu0 0.0
        %4290 = vmatprep.subr.mxu0 0.0
        %4291 = vmatpush2.msra.mxu0 0.0
        %4292 = vmatprep.subr.mxu0 0.0
        %4293 = vmatpush2.msra.mxu0 0.0
        %4294 = vmatprep.subr.mxu0 0.0
        %4295 = vmatpush2.msra.mxu0 0.0
        %4296 = vmatprep.subr.mxu0 0.0
        %4297 = vmatpush2.msra.mxu0 0.0
        %4298 = vmatprep.subr.mxu0 0.0
        %4299 = vmatpush2.msra.mxu0 0.0
        %4300 = vmatprep.subr.mxu0 0.0
        %4301 = vmatpush2.msra.mxu0 0.0
        %4302 = vmatprep.subr.mxu0 0.0
        %4303 = vmatpush2.msra.mxu0 0.0
        %4304 = vmatprep.subr.mxu0 0.0
        %4305 = vmatpush2.msra.mxu0 0.0
        %4306 = vmatprep.subr.mxu0 0.0
        %4307 = vmatpush2.msra.mxu0 0.0
        %4308 = vmatprep.subr.mxu0 0.0
        %4309 = vmatpush2.msra.mxu0 0.0
        %4310 = vmatprep.subr.mxu0 0.0
        %4311 = vmatpush2.msra.mxu0 0.0
        %4312 = vmatprep.subr.mxu0 0.0
        %4313 = vmatpush2.msra.mxu0 0.0
        %4314 = vmatprep.subr.mxu0 0.0
        %4315 = vmatpush2.msra.mxu0 0.0
        %4316 = vmatprep.mubr.f32.mxu0 0.0
        %4317 = vmatmul.mubr.f32.gmra.mxu0 %v4250
        %v4318 = vpop.f32.mrf.mxu0
        %v4319 = vadd.f32 0.0, %v4318
        %v4320 = vpop.f32.mrf.mxu0
        %4321 = vdwg.mxu0
        %v4322 = vadd.f32 %v4244, %v4319
        %v4323 = vld [vmem:[#allocation3 + $0xb] sm:$0x1]
        %s4324 = scalar_lea.vmem %s5, 128
        %v4325 = vld [vmem:[%s4324] sm:$0xff]
        %v4326 = vld [vmem:[%s4324 + $0x8] sm:$0xff]
        %v4328 = vsel %vm3695, %v4323, 0
        %4330 = vmatprep.subr.mxu0 0.0
        %4331 = vmatpush1.msra.mxu0 0.0
        %4332 = vmatprep.subr.mxu0 0.0
        %4333 = vmatpush1.msra.mxu0 0.0
        %4334 = vmatprep.subr.mxu0 0.0
        %4335 = vmatpush1.msra.mxu0 0.0
        %4336 = vmatprep.subr.mxu0 0.0
        %4337 = vmatpush1.msra.mxu0 0.0
        %4338 = vmatprep.subr.mxu0 0.0
        %4339 = vmatpush1.msra.mxu0 0.0
        %4340 = vmatprep.subr.mxu0 0.0
        %4341 = vmatpush1.msra.mxu0 0.0
        %4342 = vmatprep.subr.mxu0 0.0
        %4343 = vmatpush1.msra.mxu0 0.0
        %4344 = vmatprep.subr.mxu0 0.0
        %4345 = vmatpush1.msra.mxu0 0.0
        %4346 = vmatprep.subr.mxu0 0.0
        %4347 = vmatpush1.msra.mxu0 0.0
        %4348 = vmatprep.subr.mxu0 0.0
        %4349 = vmatpush1.msra.mxu0 0.0
        %4350 = vmatprep.subr.mxu0 0.0
        %4351 = vmatpush1.msra.mxu0 0.0
        %4352 = vmatprep.subr.mxu0 0.0
        %4353 = vmatpush1.msra.mxu0 0.0
        %4354 = vmatprep.subr.mxu0 0.0
        %4355 = vmatpush1.msra.mxu0 0.0
        %4356 = vmatprep.subr.mxu0 0.0
        %4357 = vmatpush1.msra.mxu0 0.0
        %4358 = vmatprep.subr.mxu0 0.0
        %4359 = vmatpush1.msra.mxu0 %v4326
        %4360 = vmatprep.subr.mxu0 0.0
        %4361 = vmatpush1.msra.mxu0 %v4325
        %4362 = vmatprep.subr.mxu0 0.0
        %4363 = vmatpush2.msra.mxu0 0.0
        %4364 = vmatprep.subr.mxu0 0.0
        %4365 = vmatpush2.msra.mxu0 0.0
        %4366 = vmatprep.subr.mxu0 0.0
        %4367 = vmatpush2.msra.mxu0 0.0
        %4368 = vmatprep.subr.mxu0 0.0
        %4369 = vmatpush2.msra.mxu0 0.0
        %4370 = vmatprep.subr.mxu0 0.0
        %4371 = vmatpush2.msra.mxu0 0.0
        %4372 = vmatprep.subr.mxu0 0.0
        %4373 = vmatpush2.msra.mxu0 0.0
        %4374 = vmatprep.subr.mxu0 0.0
        %4375 = vmatpush2.msra.mxu0 0.0
        %4376 = vmatprep.subr.mxu0 0.0
        %4377 = vmatpush2.msra.mxu0 0.0
        %4378 = vmatprep.subr.mxu0 0.0
        %4379 = vmatpush2.msra.mxu0 0.0
        %4380 = vmatprep.subr.mxu0 0.0
        %4381 = vmatpush2.msra.mxu0 0.0
        %4382 = vmatprep.subr.mxu0 0.0
        %4383 = vmatpush2.msra.mxu0 0.0
        %4384 = vmatprep.subr.mxu0 0.0
        %4385 = vmatpush2.msra.mxu0 0.0
        %4386 = vmatprep.subr.mxu0 0.0
        %4387 = vmatpush2.msra.mxu0 0.0
        %4388 = vmatprep.subr.mxu0 0.0
        %4389 = vmatpush2.msra.mxu0 0.0
        %4390 = vmatprep.subr.mxu0 0.0
        %4391 = vmatpush2.msra.mxu0 0.0
        %4392 = vmatprep.subr.mxu0 0.0
        %4393 = vmatpush2.msra.mxu0 0.0
        %4394 = vmatprep.mubr.f32.mxu0 0.0
        %4395 = vmatmul.mubr.f32.gmra.mxu0 %v4328
        %v4396 = vpop.f32.mrf.mxu0
        %v4397 = vadd.f32 0.0, %v4396
        %v4398 = vpop.f32.mrf.mxu0
        %4399 = vdwg.mxu0
        %v4400 = vadd.f32 %v4322, %v4397
        %v4401 = vld [vmem:[#allocation3 + $0xc] sm:$0x1]
        %s4402 = scalar_lea.vmem %s5, 144
        %v4403 = vld [vmem:[%s4402] sm:$0xff]
        %v4404 = vld [vmem:[%s4402 + $0x8] sm:$0xff]
        %v4406 = vsel %vm3695, %v4401, 0
        %4408 = vmatprep.subr.mxu0 0.0
        %4409 = vmatpush1.msra.mxu0 0.0
        %4410 = vmatprep.subr.mxu0 0.0
        %4411 = vmatpush1.msra.mxu0 0.0
        %4412 = vmatprep.subr.mxu0 0.0
        %4413 = vmatpush1.msra.mxu0 0.0
        %4414 = vmatprep.subr.mxu0 0.0
        %4415 = vmatpush1.msra.mxu0 0.0
        %4416 = vmatprep.subr.mxu0 0.0
        %4417 = vmatpush1.msra.mxu0 0.0
        %4418 = vmatprep.subr.mxu0 0.0
        %4419 = vmatpush1.msra.mxu0 0.0
        %4420 = vmatprep.subr.mxu0 0.0
        %4421 = vmatpush1.msra.mxu0 0.0
        %4422 = vmatprep.subr.mxu0 0.0
        %4423 = vmatpush1.msra.mxu0 0.0
        %4424 = vmatprep.subr.mxu0 0.0
        %4425 = vmatpush1.msra.mxu0 0.0
        %4426 = vmatprep.subr.mxu0 0.0
        %4427 = vmatpush1.msra.mxu0 0.0
        %4428 = vmatprep.subr.mxu0 0.0
        %4429 = vmatpush1.msra.mxu0 0.0
        %4430 = vmatprep.subr.mxu0 0.0
        %4431 = vmatpush1.msra.mxu0 0.0
        %4432 = vmatprep.subr.mxu0 0.0
        %4433 = vmatpush1.msra.mxu0 0.0
        %4434 = vmatprep.subr.mxu0 0.0
        %4435 = vmatpush1.msra.mxu0 0.0
        %4436 = vmatprep.subr.mxu0 0.0
        %4437 = vmatpush1.msra.mxu0 %v4404
        %4438 = vmatprep.subr.mxu0 0.0
        %4439 = vmatpush1.msra.mxu0 %v4403
        %4440 = vmatprep.subr.mxu0 0.0
        %4441 = vmatpush2.msra.mxu0 0.0
        %4442 = vmatprep.subr.mxu0 0.0
        %4443 = vmatpush2.msra.mxu0 0.0
        %4444 = vmatprep.subr.mxu0 0.0
        %4445 = vmatpush2.msra.mxu0 0.0
        %4446 = vmatprep.subr.mxu0 0.0
        %4447 = vmatpush2.msra.mxu0 0.0
        %4448 = vmatprep.subr.mxu0 0.0
        %4449 = vmatpush2.msra.mxu0 0.0
        %4450 = vmatprep.subr.mxu0 0.0
        %4451 = vmatpush2.msra.mxu0 0.0
        %4452 = vmatprep.subr.mxu0 0.0
        %4453 = vmatpush2.msra.mxu0 0.0
        %4454 = vmatprep.subr.mxu0 0.0
        %4455 = vmatpush2.msra.mxu0 0.0
        %4456 = vmatprep.subr.mxu0 0.0
        %4457 = vmatpush2.msra.mxu0 0.0
        %4458 = vmatprep.subr.mxu0 0.0
        %4459 = vmatpush2.msra.mxu0 0.0
        %4460 = vmatprep.subr.mxu0 0.0
        %4461 = vmatpush2.msra.mxu0 0.0
        %4462 = vmatprep.subr.mxu0 0.0
        %4463 = vmatpush2.msra.mxu0 0.0
        %4464 = vmatprep.subr.mxu0 0.0
        %4465 = vmatpush2.msra.mxu0 0.0
        %4466 = vmatprep.subr.mxu0 0.0
        %4467 = vmatpush2.msra.mxu0 0.0
        %4468 = vmatprep.subr.mxu0 0.0
        %4469 = vmatpush2.msra.mxu0 0.0
        %4470 = vmatprep.subr.mxu0 0.0
        %4471 = vmatpush2.msra.mxu0 0.0
        %4472 = vmatprep.mubr.f32.mxu0 0.0
        %4473 = vmatmul.mubr.f32.gmra.mxu0 %v4406
        %v4474 = vpop.f32.mrf.mxu0
        %v4475 = vadd.f32 0.0, %v4474
        %v4476 = vpop.f32.mrf.mxu0
        %4477 = vdwg.mxu0
        %v4478 = vadd.f32 %v4400, %v4475
        %v4479 = vld [vmem:[#allocation3 + $0x10] sm:$0x1]
        %s4480 = scalar_lea.vmem %s5, 160
        %v4481 = vld [vmem:[%s4480] sm:$0xff]
        %v4482 = vld [vmem:[%s4480 + $0x8] sm:$0xff]
        %v4484 = vsel %vm3695, %v4479, 0
        %4486 = vmatprep.subr.mxu0 0.0
        %4487 = vmatpush1.msra.mxu0 0.0
        %4488 = vmatprep.subr.mxu0 0.0
        %4489 = vmatpush1.msra.mxu0 0.0
        %4490 = vmatprep.subr.mxu0 0.0
        %4491 = vmatpush1.msra.mxu0 0.0
        %4492 = vmatprep.subr.mxu0 0.0
        %4493 = vmatpush1.msra.mxu0 0.0
        %4494 = vmatprep.subr.mxu0 0.0
        %4495 = vmatpush1.msra.mxu0 0.0
        %4496 = vmatprep.subr.mxu0 0.0
        %4497 = vmatpush1.msra.mxu0 0.0
        %4498 = vmatprep.subr.mxu0 0.0
        %4499 = vmatpush1.msra.mxu0 0.0
        %4500 = vmatprep.subr.mxu0 0.0
        %4501 = vmatpush1.msra.mxu0 0.0
        %4502 = vmatprep.subr.mxu0 0.0
        %4503 = vmatpush1.msra.mxu0 0.0
        %4504 = vmatprep.subr.mxu0 0.0
        %4505 = vmatpush1.msra.mxu0 0.0
        %4506 = vmatprep.subr.mxu0 0.0
        %4507 = vmatpush1.msra.mxu0 0.0
        %4508 = vmatprep.subr.mxu0 0.0
        %4509 = vmatpush1.msra.mxu0 0.0
        %4510 = vmatprep.subr.mxu0 0.0
        %4511 = vmatpush1.msra.mxu0 0.0
        %4512 = vmatprep.subr.mxu0 0.0
        %4513 = vmatpush1.msra.mxu0 0.0
        %4514 = vmatprep.subr.mxu0 0.0
        %4515 = vmatpush1.msra.mxu0 %v4482
        %4516 = vmatprep.subr.mxu0 0.0
        %4517 = vmatpush1.msra.mxu0 %v4481
        %4518 = vmatprep.subr.mxu0 0.0
        %4519 = vmatpush2.msra.mxu0 0.0
        %4520 = vmatprep.subr.mxu0 0.0
        %4521 = vmatpush2.msra.mxu0 0.0
        %4522 = vmatprep.subr.mxu0 0.0
        %4523 = vmatpush2.msra.mxu0 0.0
        %4524 = vmatprep.subr.mxu0 0.0
        %4525 = vmatpush2.msra.mxu0 0.0
        %4526 = vmatprep.subr.mxu0 0.0
        %4527 = vmatpush2.msra.mxu0 0.0
        %4528 = vmatprep.subr.mxu0 0.0
        %4529 = vmatpush2.msra.mxu0 0.0
        %4530 = vmatprep.subr.mxu0 0.0
        %4531 = vmatpush2.msra.mxu0 0.0
        %4532 = vmatprep.subr.mxu0 0.0
        %4533 = vmatpush2.msra.mxu0 0.0
        %4534 = vmatprep.subr.mxu0 0.0
        %4535 = vmatpush2.msra.mxu0 0.0
        %4536 = vmatprep.subr.mxu0 0.0
        %4537 = vmatpush2.msra.mxu0 0.0
        %4538 = vmatprep.subr.mxu0 0.0
        %4539 = vmatpush2.msra.mxu0 0.0
        %4540 = vmatprep.subr.mxu0 0.0
        %4541 = vmatpush2.msra.mxu0 0.0
        %4542 = vmatprep.subr.mxu0 0.0
        %4543 = vmatpush2.msra.mxu0 0.0
        %4544 = vmatprep.subr.mxu0 0.0
        %4545 = vmatpush2.msra.mxu0 0.0
        %4546 = vmatprep.subr.mxu0 0.0
        %4547 = vmatpush2.msra.mxu0 0.0
        %4548 = vmatprep.subr.mxu0 0.0
        %4549 = vmatpush2.msra.mxu0 0.0
        %4550 = vmatprep.mubr.f32.mxu0 0.0
        %4551 = vmatmul.mubr.f32.gmra.mxu0 %v4484
        %v4552 = vpop.f32.mrf.mxu0
        %v4553 = vadd.f32 0.0, %v4552
        %v4554 = vpop.f32.mrf.mxu0
        %4555 = vdwg.mxu0
        %v4556 = vadd.f32 %v4478, %v4553
        %v4557 = vld [vmem:[#allocation3 + $0x11] sm:$0x1]
        %s4558 = scalar_lea.vmem %s5, 176
        %v4559 = vld [vmem:[%s4558] sm:$0xff]
        %v4560 = vld [vmem:[%s4558 + $0x8] sm:$0xff]
        %v4562 = vsel %vm3695, %v4557, 0
        %4564 = vmatprep.subr.mxu0 0.0
        %4565 = vmatpush1.msra.mxu0 0.0
        %4566 = vmatprep.subr.mxu0 0.0
        %4567 = vmatpush1.msra.mxu0 0.0
        %4568 = vmatprep.subr.mxu0 0.0
        %4569 = vmatpush1.msra.mxu0 0.0
        %4570 = vmatprep.subr.mxu0 0.0
        %4571 = vmatpush1.msra.mxu0 0.0
        %4572 = vmatprep.subr.mxu0 0.0
        %4573 = vmatpush1.msra.mxu0 0.0
        %4574 = vmatprep.subr.mxu0 0.0
        %4575 = vmatpush1.msra.mxu0 0.0
        %4576 = vmatprep.subr.mxu0 0.0
        %4577 = vmatpush1.msra.mxu0 0.0
        %4578 = vmatprep.subr.mxu0 0.0
        %4579 = vmatpush1.msra.mxu0 0.0
        %4580 = vmatprep.subr.mxu0 0.0
        %4581 = vmatpush1.msra.mxu0 0.0
        %4582 = vmatprep.subr.mxu0 0.0
        %4583 = vmatpush1.msra.mxu0 0.0
        %4584 = vmatprep.subr.mxu0 0.0
        %4585 = vmatpush1.msra.mxu0 0.0
        %4586 = vmatprep.subr.mxu0 0.0
        %4587 = vmatpush1.msra.mxu0 0.0
        %4588 = vmatprep.subr.mxu0 0.0
        %4589 = vmatpush1.msra.mxu0 0.0
        %4590 = vmatprep.subr.mxu0 0.0
        %4591 = vmatpush1.msra.mxu0 0.0
        %4592 = vmatprep.subr.mxu0 0.0
        %4593 = vmatpush1.msra.mxu0 %v4560
        %4594 = vmatprep.subr.mxu0 0.0
        %4595 = vmatpush1.msra.mxu0 %v4559
        %4596 = vmatprep.subr.mxu0 0.0
        %4597 = vmatpush2.msra.mxu0 0.0
        %4598 = vmatprep.subr.mxu0 0.0
        %4599 = vmatpush2.msra.mxu0 0.0
        %4600 = vmatprep.subr.mxu0 0.0
        %4601 = vmatpush2.msra.mxu0 0.0
        %4602 = vmatprep.subr.mxu0 0.0
        %4603 = vmatpush2.msra.mxu0 0.0
        %4604 = vmatprep.subr.mxu0 0.0
        %4605 = vmatpush2.msra.mxu0 0.0
        %4606 = vmatprep.subr.mxu0 0.0
        %4607 = vmatpush2.msra.mxu0 0.0
        %4608 = vmatprep.subr.mxu0 0.0
        %4609 = vmatpush2.msra.mxu0 0.0
        %4610 = vmatprep.subr.mxu0 0.0
        %4611 = vmatpush2.msra.mxu0 0.0
        %4612 = vmatprep.subr.mxu0 0.0
        %4613 = vmatpush2.msra.mxu0 0.0
        %4614 = vmatprep.subr.mxu0 0.0
        %4615 = vmatpush2.msra.mxu0 0.0
        %4616 = vmatprep.subr.mxu0 0.0
        %4617 = vmatpush2.msra.mxu0 0.0
        %4618 = vmatprep.subr.mxu0 0.0
        %4619 = vmatpush2.msra.mxu0 0.0
        %4620 = vmatprep.subr.mxu0 0.0
        %4621 = vmatpush2.msra.mxu0 0.0
        %4622 = vmatprep.subr.mxu0 0.0
        %4623 = vmatpush2.msra.mxu0 0.0
        %4624 = vmatprep.subr.mxu0 0.0
        %4625 = vmatpush2.msra.mxu0 0.0
        %4626 = vmatprep.subr.mxu0 0.0
        %4627 = vmatpush2.msra.mxu0 0.0
        %4628 = vmatprep.mubr.f32.mxu0 0.0
        %4629 = vmatmul.mubr.f32.gmra.mxu0 %v4562
        %v4630 = vpop.f32.mrf.mxu0
        %v4631 = vadd.f32 0.0, %v4630
        %v4632 = vpop.f32.mrf.mxu0
        %4633 = vdwg.mxu0
        %v4634 = vadd.f32 %v4556, %v4631
        %v4635 = vld [vmem:[#allocation3 + $0x12] sm:$0x1]
        %s4636 = scalar_lea.vmem %s5, 192
        %v4637 = vld [vmem:[%s4636] sm:$0xff]
        %v4638 = vld [vmem:[%s4636 + $0x8] sm:$0xff]
        %v4640 = vsel %vm3695, %v4635, 0
        %4642 = vmatprep.subr.mxu0 0.0
        %4643 = vmatpush1.msra.mxu0 0.0
        %4644 = vmatprep.subr.mxu0 0.0
        %4645 = vmatpush1.msra.mxu0 0.0
        %4646 = vmatprep.subr.mxu0 0.0
        %4647 = vmatpush1.msra.mxu0 0.0
        %4648 = vmatprep.subr.mxu0 0.0
        %4649 = vmatpush1.msra.mxu0 0.0
        %4650 = vmatprep.subr.mxu0 0.0
        %4651 = vmatpush1.msra.mxu0 0.0
        %4652 = vmatprep.subr.mxu0 0.0
        %4653 = vmatpush1.msra.mxu0 0.0
        %4654 = vmatprep.subr.mxu0 0.0
        %4655 = vmatpush1.msra.mxu0 0.0
        %4656 = vmatprep.subr.mxu0 0.0
        %4657 = vmatpush1.msra.mxu0 0.0
        %4658 = vmatprep.subr.mxu0 0.0
        %4659 = vmatpush1.msra.mxu0 0.0
        %4660 = vmatprep.subr.mxu0 0.0
        %4661 = vmatpush1.msra.mxu0 0.0
        %4662 = vmatprep.subr.mxu0 0.0
        %4663 = vmatpush1.msra.mxu0 0.0
        %4664 = vmatprep.subr.mxu0 0.0
        %4665 = vmatpush1.msra.mxu0 0.0
        %4666 = vmatprep.subr.mxu0 0.0
        %4667 = vmatpush1.msra.mxu0 0.0
        %4668 = vmatprep.subr.mxu0 0.0
        %4669 = vmatpush1.msra.mxu0 0.0
        %4670 = vmatprep.subr.mxu0 0.0
        %4671 = vmatpush1.msra.mxu0 %v4638
        %4672 = vmatprep.subr.mxu0 0.0
        %4673 = vmatpush1.msra.mxu0 %v4637
        %4674 = vmatprep.subr.mxu0 0.0
        %4675 = vmatpush2.msra.mxu0 0.0
        %4676 = vmatprep.subr.mxu0 0.0
        %4677 = vmatpush2.msra.mxu0 0.0
        %4678 = vmatprep.subr.mxu0 0.0
        %4679 = vmatpush2.msra.mxu0 0.0
        %4680 = vmatprep.subr.mxu0 0.0
        %4681 = vmatpush2.msra.mxu0 0.0
        %4682 = vmatprep.subr.mxu0 0.0
        %4683 = vmatpush2.msra.mxu0 0.0
        %4684 = vmatprep.subr.mxu0 0.0
        %4685 = vmatpush2.msra.mxu0 0.0
        %4686 = vmatprep.subr.mxu0 0.0
        %4687 = vmatpush2.msra.mxu0 0.0
        %4688 = vmatprep.subr.mxu0 0.0
        %4689 = vmatpush2.msra.mxu0 0.0
        %4690 = vmatprep.subr.mxu0 0.0
        %4691 = vmatpush2.msra.mxu0 0.0
        %4692 = vmatprep.subr.mxu0 0.0
        %4693 = vmatpush2.msra.mxu0 0.0
        %4694 = vmatprep.subr.mxu0 0.0
        %4695 = vmatpush2.msra.mxu0 0.0
        %4696 = vmatprep.subr.mxu0 0.0
        %4697 = vmatpush2.msra.mxu0 0.0
        %4698 = vmatprep.subr.mxu0 0.0
        %4699 = vmatpush2.msra.mxu0 0.0
        %4700 = vmatprep.subr.mxu0 0.0
        %4701 = vmatpush2.msra.mxu0 0.0
        %4702 = vmatprep.subr.mxu0 0.0
        %4703 = vmatpush2.msra.mxu0 0.0
        %4704 = vmatprep.subr.mxu0 0.0
        %4705 = vmatpush2.msra.mxu0 0.0
        %4706 = vmatprep.mubr.f32.mxu0 0.0
        %4707 = vmatmul.mubr.f32.gmra.mxu0 %v4640
        %v4708 = vpop.f32.mrf.mxu0
        %v4709 = vadd.f32 0.0, %v4708
        %v4710 = vpop.f32.mrf.mxu0
        %4711 = vdwg.mxu0
        %v4712 = vadd.f32 %v4634, %v4709
        %v4713 = vld [vmem:[#allocation3 + $0x13] sm:$0x1]
        %s4714 = scalar_lea.vmem %s5, 208
        %v4715 = vld [vmem:[%s4714] sm:$0xff]
        %v4716 = vld [vmem:[%s4714 + $0x8] sm:$0xff]
        %v4718 = vsel %vm3695, %v4713, 0
        %4720 = vmatprep.subr.mxu0 0.0
        %4721 = vmatpush1.msra.mxu0 0.0
        %4722 = vmatprep.subr.mxu0 0.0
        %4723 = vmatpush1.msra.mxu0 0.0
        %4724 = vmatprep.subr.mxu0 0.0
        %4725 = vmatpush1.msra.mxu0 0.0
        %4726 = vmatprep.subr.mxu0 0.0
        %4727 = vmatpush1.msra.mxu0 0.0
        %4728 = vmatprep.subr.mxu0 0.0
        %4729 = vmatpush1.msra.mxu0 0.0
        %4730 = vmatprep.subr.mxu0 0.0
        %4731 = vmatpush1.msra.mxu0 0.0
        %4732 = vmatprep.subr.mxu0 0.0
        %4733 = vmatpush1.msra.mxu0 0.0
        %4734 = vmatprep.subr.mxu0 0.0
        %4735 = vmatpush1.msra.mxu0 0.0
        %4736 = vmatprep.subr.mxu0 0.0
        %4737 = vmatpush1.msra.mxu0 0.0
        %4738 = vmatprep.subr.mxu0 0.0
        %4739 = vmatpush1.msra.mxu0 0.0
        %4740 = vmatprep.subr.mxu0 0.0
        %4741 = vmatpush1.msra.mxu0 0.0
        %4742 = vmatprep.subr.mxu0 0.0
        %4743 = vmatpush1.msra.mxu0 0.0
        %4744 = vmatprep.subr.mxu0 0.0
        %4745 = vmatpush1.msra.mxu0 0.0
        %4746 = vmatprep.subr.mxu0 0.0
        %4747 = vmatpush1.msra.mxu0 0.0
        %4748 = vmatprep.subr.mxu0 0.0
        %4749 = vmatpush1.msra.mxu0 %v4716
        %4750 = vmatprep.subr.mxu0 0.0
        %4751 = vmatpush1.msra.mxu0 %v4715
        %4752 = vmatprep.subr.mxu0 0.0
        %4753 = vmatpush2.msra.mxu0 0.0
        %4754 = vmatprep.subr.mxu0 0.0
        %4755 = vmatpush2.msra.mxu0 0.0
        %4756 = vmatprep.subr.mxu0 0.0
        %4757 = vmatpush2.msra.mxu0 0.0
        %4758 = vmatprep.subr.mxu0 0.0
        %4759 = vmatpush2.msra.mxu0 0.0
        %4760 = vmatprep.subr.mxu0 0.0
        %4761 = vmatpush2.msra.mxu0 0.0
        %4762 = vmatprep.subr.mxu0 0.0
        %4763 = vmatpush2.msra.mxu0 0.0
        %4764 = vmatprep.subr.mxu0 0.0
        %4765 = vmatpush2.msra.mxu0 0.0
        %4766 = vmatprep.subr.mxu0 0.0
        %4767 = vmatpush2.msra.mxu0 0.0
        %4768 = vmatprep.subr.mxu0 0.0
        %4769 = vmatpush2.msra.mxu0 0.0
        %4770 = vmatprep.subr.mxu0 0.0
        %4771 = vmatpush2.msra.mxu0 0.0
        %4772 = vmatprep.subr.mxu0 0.0
        %4773 = vmatpush2.msra.mxu0 0.0
        %4774 = vmatprep.subr.mxu0 0.0
        %4775 = vmatpush2.msra.mxu0 0.0
        %4776 = vmatprep.subr.mxu0 0.0
        %4777 = vmatpush2.msra.mxu0 0.0
        %4778 = vmatprep.subr.mxu0 0.0
        %4779 = vmatpush2.msra.mxu0 0.0
        %4780 = vmatprep.subr.mxu0 0.0
        %4781 = vmatpush2.msra.mxu0 0.0
        %4782 = vmatprep.subr.mxu0 0.0
        %4783 = vmatpush2.msra.mxu0 0.0
        %4784 = vmatprep.mubr.f32.mxu0 0.0
        %4785 = vmatmul.mubr.f32.gmra.mxu0 %v4718
        %v4786 = vpop.f32.mrf.mxu0
        %v4787 = vadd.f32 0.0, %v4786
        %v4788 = vpop.f32.mrf.mxu0
        %4789 = vdwg.mxu0
        %v4790 = vadd.f32 %v4712, %v4787
        %v4791 = vld [vmem:[#allocation3 + $0x14] sm:$0x1]
        %s4792 = scalar_lea.vmem %s5, 224
        %v4793 = vld [vmem:[%s4792] sm:$0xff]
        %v4794 = vld [vmem:[%s4792 + $0x8] sm:$0xff]
        %v4796 = vsel %vm3695, %v4791, 0
        %4798 = vmatprep.subr.mxu0 0.0
        %4799 = vmatpush1.msra.mxu0 0.0
        %4800 = vmatprep.subr.mxu0 0.0
        %4801 = vmatpush1.msra.mxu0 0.0
        %4802 = vmatprep.subr.mxu0 0.0
        %4803 = vmatpush1.msra.mxu0 0.0
        %4804 = vmatprep.subr.mxu0 0.0
        %4805 = vmatpush1.msra.mxu0 0.0
        %4806 = vmatprep.subr.mxu0 0.0
        %4807 = vmatpush1.msra.mxu0 0.0
        %4808 = vmatprep.subr.mxu0 0.0
        %4809 = vmatpush1.msra.mxu0 0.0
        %4810 = vmatprep.subr.mxu0 0.0
        %4811 = vmatpush1.msra.mxu0 0.0
        %4812 = vmatprep.subr.mxu0 0.0
        %4813 = vmatpush1.msra.mxu0 0.0
        %4814 = vmatprep.subr.mxu0 0.0
        %4815 = vmatpush1.msra.mxu0 0.0
        %4816 = vmatprep.subr.mxu0 0.0
        %4817 = vmatpush1.msra.mxu0 0.0
        %4818 = vmatprep.subr.mxu0 0.0
        %4819 = vmatpush1.msra.mxu0 0.0
        %4820 = vmatprep.subr.mxu0 0.0
        %4821 = vmatpush1.msra.mxu0 0.0
        %4822 = vmatprep.subr.mxu0 0.0
        %4823 = vmatpush1.msra.mxu0 0.0
        %4824 = vmatprep.subr.mxu0 0.0
        %4825 = vmatpush1.msra.mxu0 0.0
        %4826 = vmatprep.subr.mxu0 0.0
        %4827 = vmatpush1.msra.mxu0 %v4794
        %4828 = vmatprep.subr.mxu0 0.0
        %4829 = vmatpush1.msra.mxu0 %v4793
        %4830 = vmatprep.subr.mxu0 0.0
        %4831 = vmatpush2.msra.mxu0 0.0
        %4832 = vmatprep.subr.mxu0 0.0
        %4833 = vmatpush2.msra.mxu0 0.0
        %4834 = vmatprep.subr.mxu0 0.0
        %4835 = vmatpush2.msra.mxu0 0.0
        %4836 = vmatprep.subr.mxu0 0.0
        %4837 = vmatpush2.msra.mxu0 0.0
        %4838 = vmatprep.subr.mxu0 0.0
        %4839 = vmatpush2.msra.mxu0 0.0
        %4840 = vmatprep.subr.mxu0 0.0
        %4841 = vmatpush2.msra.mxu0 0.0
        %4842 = vmatprep.subr.mxu0 0.0
        %4843 = vmatpush2.msra.mxu0 0.0
        %4844 = vmatprep.subr.mxu0 0.0
        %4845 = vmatpush2.msra.mxu0 0.0
        %4846 = vmatprep.subr.mxu0 0.0
        %4847 = vmatpush2.msra.mxu0 0.0
        %4848 = vmatprep.subr.mxu0 0.0
        %4849 = vmatpush2.msra.mxu0 0.0
        %4850 = vmatprep.subr.mxu0 0.0
        %4851 = vmatpush2.msra.mxu0 0.0
        %4852 = vmatprep.subr.mxu0 0.0
        %4853 = vmatpush2.msra.mxu0 0.0
        %4854 = vmatprep.subr.mxu0 0.0
        %4855 = vmatpush2.msra.mxu0 0.0
        %4856 = vmatprep.subr.mxu0 0.0
        %4857 = vmatpush2.msra.mxu0 0.0
        %4858 = vmatprep.subr.mxu0 0.0
        %4859 = vmatpush2.msra.mxu0 0.0
        %4860 = vmatprep.subr.mxu0 0.0
        %4861 = vmatpush2.msra.mxu0 0.0
        %4862 = vmatprep.mubr.f32.mxu0 0.0
        %4863 = vmatmul.mubr.f32.gmra.mxu0 %v4796
        %v4864 = vpop.f32.mrf.mxu0
        %v4865 = vadd.f32 0.0, %v4864
        %v4866 = vpop.f32.mrf.mxu0
        %4867 = vdwg.mxu0
        %v4868 = vadd.f32 %v4790, %v4865
        %v4869 = vld [vmem:[#allocation3 + $0x18] sm:$0x1]
        %s4870 = scalar_lea.vmem %s5, 240
        %v4871 = vld [vmem:[%s4870] sm:$0xff]
        %v4872 = vld [vmem:[%s4870 + $0x8] sm:$0xff]
        %v4874 = vsel %vm3695, %v4869, 0
        %4876 = vmatprep.subr.mxu0 0.0
        %4877 = vmatpush1.msra.mxu0 0.0
        %4878 = vmatprep.subr.mxu0 0.0
        %4879 = vmatpush1.msra.mxu0 0.0
        %4880 = vmatprep.subr.mxu0 0.0
        %4881 = vmatpush1.msra.mxu0 0.0
        %4882 = vmatprep.subr.mxu0 0.0
        %4883 = vmatpush1.msra.mxu0 0.0
        %4884 = vmatprep.subr.mxu0 0.0
        %4885 = vmatpush1.msra.mxu0 0.0
        %4886 = vmatprep.subr.mxu0 0.0
        %4887 = vmatpush1.msra.mxu0 0.0
        %4888 = vmatprep.subr.mxu0 0.0
        %4889 = vmatpush1.msra.mxu0 0.0
        %4890 = vmatprep.subr.mxu0 0.0
        %4891 = vmatpush1.msra.mxu0 0.0
        %4892 = vmatprep.subr.mxu0 0.0
        %4893 = vmatpush1.msra.mxu0 0.0
        %4894 = vmatprep.subr.mxu0 0.0
        %4895 = vmatpush1.msra.mxu0 0.0
        %4896 = vmatprep.subr.mxu0 0.0
        %4897 = vmatpush1.msra.mxu0 0.0
        %4898 = vmatprep.subr.mxu0 0.0
        %4899 = vmatpush1.msra.mxu0 0.0
        %4900 = vmatprep.subr.mxu0 0.0
        %4901 = vmatpush1.msra.mxu0 0.0
        %4902 = vmatprep.subr.mxu0 0.0
        %4903 = vmatpush1.msra.mxu0 0.0
        %4904 = vmatprep.subr.mxu0 0.0
        %4905 = vmatpush1.msra.mxu0 %v4872
        %4906 = vmatprep.subr.mxu0 0.0
        %4907 = vmatpush1.msra.mxu0 %v4871
        %4908 = vmatprep.subr.mxu0 0.0
        %4909 = vmatpush2.msra.mxu0 0.0
        %4910 = vmatprep.subr.mxu0 0.0
        %4911 = vmatpush2.msra.mxu0 0.0
        %4912 = vmatprep.subr.mxu0 0.0
        %4913 = vmatpush2.msra.mxu0 0.0
        %4914 = vmatprep.subr.mxu0 0.0
        %4915 = vmatpush2.msra.mxu0 0.0
        %4916 = vmatprep.subr.mxu0 0.0
        %4917 = vmatpush2.msra.mxu0 0.0
        %4918 = vmatprep.subr.mxu0 0.0
        %4919 = vmatpush2.msra.mxu0 0.0
        %4920 = vmatprep.subr.mxu0 0.0
        %4921 = vmatpush2.msra.mxu0 0.0
        %4922 = vmatprep.subr.mxu0 0.0
        %4923 = vmatpush2.msra.mxu0 0.0
        %4924 = vmatprep.subr.mxu0 0.0
        %4925 = vmatpush2.msra.mxu0 0.0
        %4926 = vmatprep.subr.mxu0 0.0
        %4927 = vmatpush2.msra.mxu0 0.0
        %4928 = vmatprep.subr.mxu0 0.0
        %4929 = vmatpush2.msra.mxu0 0.0
        %4930 = vmatprep.subr.mxu0 0.0
        %4931 = vmatpush2.msra.mxu0 0.0
        %4932 = vmatprep.subr.mxu0 0.0
        %4933 = vmatpush2.msra.mxu0 0.0
        %4934 = vmatprep.subr.mxu0 0.0
        %4935 = vmatpush2.msra.mxu0 0.0
        %4936 = vmatprep.subr.mxu0 0.0
        %4937 = vmatpush2.msra.mxu0 0.0
        %4938 = vmatprep.subr.mxu0 0.0
        %4939 = vmatpush2.msra.mxu0 0.0
        %4940 = vmatprep.mubr.f32.mxu0 0.0
        %4941 = vmatmul.mubr.f32.gmra.mxu0 %v4874
        %v4942 = vpop.f32.mrf.mxu0
        %v4943 = vadd.f32 0.0, %v4942
        %v4944 = vpop.f32.mrf.mxu0
        %4945 = vdwg.mxu0
        %v4946 = vadd.f32 %v4868, %v4943
        %v4947 = vld [vmem:[#allocation3 + $0x19] sm:$0x1]
        %s4948 = scalar_lea.vmem %s5, 256
        %v4949 = vld [vmem:[%s4948] sm:$0xff]
        %v4950 = vld [vmem:[%s4948 + $0x8] sm:$0xff]
        %v4952 = vsel %vm3695, %v4947, 0
        %4954 = vmatprep.subr.mxu0 0.0
        %4955 = vmatpush1.msra.mxu0 0.0
        %4956 = vmatprep.subr.mxu0 0.0
        %4957 = vmatpush1.msra.mxu0 0.0
        %4958 = vmatprep.subr.mxu0 0.0
        %4959 = vmatpush1.msra.mxu0 0.0
        %4960 = vmatprep.subr.mxu0 0.0
        %4961 = vmatpush1.msra.mxu0 0.0
        %4962 = vmatprep.subr.mxu0 0.0
        %4963 = vmatpush1.msra.mxu0 0.0
        %4964 = vmatprep.subr.mxu0 0.0
        %4965 = vmatpush1.msra.mxu0 0.0
        %4966 = vmatprep.subr.mxu0 0.0
        %4967 = vmatpush1.msra.mxu0 0.0
        %4968 = vmatprep.subr.mxu0 0.0
        %4969 = vmatpush1.msra.mxu0 0.0
        %4970 = vmatprep.subr.mxu0 0.0
        %4971 = vmatpush1.msra.mxu0 0.0
        %4972 = vmatprep.subr.mxu0 0.0
        %4973 = vmatpush1.msra.mxu0 0.0
        %4974 = vmatprep.subr.mxu0 0.0
        %4975 = vmatpush1.msra.mxu0 0.0
        %4976 = vmatprep.subr.mxu0 0.0
        %4977 = vmatpush1.msra.mxu0 0.0
        %4978 = vmatprep.subr.mxu0 0.0
        %4979 = vmatpush1.msra.mxu0 0.0
        %4980 = vmatprep.subr.mxu0 0.0
        %4981 = vmatpush1.msra.mxu0 0.0
        %4982 = vmatprep.subr.mxu0 0.0
        %4983 = vmatpush1.msra.mxu0 %v4950
        %4984 = vmatprep.subr.mxu0 0.0
        %4985 = vmatpush1.msra.mxu0 %v4949
        %4986 = vmatprep.subr.mxu0 0.0
        %4987 = vmatpush2.msra.mxu0 0.0
        %4988 = vmatprep.subr.mxu0 0.0
        %4989 = vmatpush2.msra.mxu0 0.0
        %4990 = vmatprep.subr.mxu0 0.0
        %4991 = vmatpush2.msra.mxu0 0.0
        %4992 = vmatprep.subr.mxu0 0.0
        %4993 = vmatpush2.msra.mxu0 0.0
        %4994 = vmatprep.subr.mxu0 0.0
        %4995 = vmatpush2.msra.mxu0 0.0
        %4996 = vmatprep.subr.mxu0 0.0
        %4997 = vmatpush2.msra.mxu0 0.0
        %4998 = vmatprep.subr.mxu0 0.0
        %4999 = vmatpush2.msra.mxu0 0.0
        %5000 = vmatprep.subr.mxu0 0.0
        %5001 = vmatpush2.msra.mxu0 0.0
        %5002 = vmatprep.subr.mxu0 0.0
        %5003 = vmatpush2.msra.mxu0 0.0
        %5004 = vmatprep.subr.mxu0 0.0
        %5005 = vmatpush2.msra.mxu0 0.0
        %5006 = vmatprep.subr.mxu0 0.0
        %5007 = vmatpush2.msra.mxu0 0.0
        %5008 = vmatprep.subr.mxu0 0.0
        %5009 = vmatpush2.msra.mxu0 0.0
        %5010 = vmatprep.subr.mxu0 0.0
        %5011 = vmatpush2.msra.mxu0 0.0
        %5012 = vmatprep.subr.mxu0 0.0
        %5013 = vmatpush2.msra.mxu0 0.0
        %5014 = vmatprep.subr.mxu0 0.0
        %5015 = vmatpush2.msra.mxu0 0.0
        %5016 = vmatprep.subr.mxu0 0.0
        %5017 = vmatpush2.msra.mxu0 0.0
        %5018 = vmatprep.mubr.f32.mxu0 0.0
        %5019 = vmatmul.mubr.f32.gmra.mxu0 %v4952
        %v5020 = vpop.f32.mrf.mxu0
        %v5021 = vadd.f32 0.0, %v5020
        %v5022 = vpop.f32.mrf.mxu0
        %5023 = vdwg.mxu0
        %v5024 = vadd.f32 %v4946, %v5021
        %v5025 = vld [vmem:[#allocation3 + $0x1a] sm:$0x1]
        %s5026 = scalar_lea.vmem %s5, 272
        %v5027 = vld [vmem:[%s5026] sm:$0xff]
        %v5028 = vld [vmem:[%s5026 + $0x8] sm:$0xff]
        %v5030 = vsel %vm3695, %v5025, 0
        %5032 = vmatprep.subr.mxu0 0.0
        %5033 = vmatpush1.msra.mxu0 0.0
        %5034 = vmatprep.subr.mxu0 0.0
        %5035 = vmatpush1.msra.mxu0 0.0
        %5036 = vmatprep.subr.mxu0 0.0
        %5037 = vmatpush1.msra.mxu0 0.0
        %5038 = vmatprep.subr.mxu0 0.0
        %5039 = vmatpush1.msra.mxu0 0.0
        %5040 = vmatprep.subr.mxu0 0.0
        %5041 = vmatpush1.msra.mxu0 0.0
        %5042 = vmatprep.subr.mxu0 0.0
        %5043 = vmatpush1.msra.mxu0 0.0
        %5044 = vmatprep.subr.mxu0 0.0
        %5045 = vmatpush1.msra.mxu0 0.0
        %5046 = vmatprep.subr.mxu0 0.0
        %5047 = vmatpush1.msra.mxu0 0.0
        %5048 = vmatprep.subr.mxu0 0.0
        %5049 = vmatpush1.msra.mxu0 0.0
        %5050 = vmatprep.subr.mxu0 0.0
        %5051 = vmatpush1.msra.mxu0 0.0
        %5052 = vmatprep.subr.mxu0 0.0
        %5053 = vmatpush1.msra.mxu0 0.0
        %5054 = vmatprep.subr.mxu0 0.0
        %5055 = vmatpush1.msra.mxu0 0.0
        %5056 = vmatprep.subr.mxu0 0.0
        %5057 = vmatpush1.msra.mxu0 0.0
        %5058 = vmatprep.subr.mxu0 0.0
        %5059 = vmatpush1.msra.mxu0 0.0
        %5060 = vmatprep.subr.mxu0 0.0
        %5061 = vmatpush1.msra.mxu0 %v5028
        %5062 = vmatprep.subr.mxu0 0.0
        %5063 = vmatpush1.msra.mxu0 %v5027
        %5064 = vmatprep.subr.mxu0 0.0
        %5065 = vmatpush2.msra.mxu0 0.0
        %5066 = vmatprep.subr.mxu0 0.0
        %5067 = vmatpush2.msra.mxu0 0.0
        %5068 = vmatprep.subr.mxu0 0.0
        %5069 = vmatpush2.msra.mxu0 0.0
        %5070 = vmatprep.subr.mxu0 0.0
        %5071 = vmatpush2.msra.mxu0 0.0
        %5072 = vmatprep.subr.mxu0 0.0
        %5073 = vmatpush2.msra.mxu0 0.0
        %5074 = vmatprep.subr.mxu0 0.0
        %5075 = vmatpush2.msra.mxu0 0.0
        %5076 = vmatprep.subr.mxu0 0.0
        %5077 = vmatpush2.msra.mxu0 0.0
        %5078 = vmatprep.subr.mxu0 0.0
        %5079 = vmatpush2.msra.mxu0 0.0
        %5080 = vmatprep.subr.mxu0 0.0
        %5081 = vmatpush2.msra.mxu0 0.0
        %5082 = vmatprep.subr.mxu0 0.0
        %5083 = vmatpush2.msra.mxu0 0.0
        %5084 = vmatprep.subr.mxu0 0.0
        %5085 = vmatpush2.msra.mxu0 0.0
        %5086 = vmatprep.subr.mxu0 0.0
        %5087 = vmatpush2.msra.mxu0 0.0
        %5088 = vmatprep.subr.mxu0 0.0
        %5089 = vmatpush2.msra.mxu0 0.0
        %5090 = vmatprep.subr.mxu0 0.0
        %5091 = vmatpush2.msra.mxu0 0.0
        %5092 = vmatprep.subr.mxu0 0.0
        %5093 = vmatpush2.msra.mxu0 0.0
        %5094 = vmatprep.subr.mxu0 0.0
        %5095 = vmatpush2.msra.mxu0 0.0
        %5096 = vmatprep.mubr.f32.mxu0 0.0
        %5097 = vmatmul.mubr.f32.gmra.mxu0 %v5030
        %v5098 = vpop.f32.mrf.mxu0
        %v5099 = vadd.f32 0.0, %v5098
        %v5100 = vpop.f32.mrf.mxu0
        %5101 = vdwg.mxu0
        %v5102 = vadd.f32 %v5024, %v5099
        %v5103 = vld [vmem:[#allocation3 + $0x1b] sm:$0x1]
        %s5104 = scalar_lea.vmem %s5, 288
        %v5105 = vld [vmem:[%s5104] sm:$0xff]
        %v5106 = vld [vmem:[%s5104 + $0x8] sm:$0xff]
        %v5108 = vsel %vm3695, %v5103, 0
        %5110 = vmatprep.subr.mxu0 0.0
        %5111 = vmatpush1.msra.mxu0 0.0
        %5112 = vmatprep.subr.mxu0 0.0
        %5113 = vmatpush1.msra.mxu0 0.0
        %5114 = vmatprep.subr.mxu0 0.0
        %5115 = vmatpush1.msra.mxu0 0.0
        %5116 = vmatprep.subr.mxu0 0.0
        %5117 = vmatpush1.msra.mxu0 0.0
        %5118 = vmatprep.subr.mxu0 0.0
        %5119 = vmatpush1.msra.mxu0 0.0
        %5120 = vmatprep.subr.mxu0 0.0
        %5121 = vmatpush1.msra.mxu0 0.0
        %5122 = vmatprep.subr.mxu0 0.0
        %5123 = vmatpush1.msra.mxu0 0.0
        %5124 = vmatprep.subr.mxu0 0.0
        %5125 = vmatpush1.msra.mxu0 0.0
        %5126 = vmatprep.subr.mxu0 0.0
        %5127 = vmatpush1.msra.mxu0 0.0
        %5128 = vmatprep.subr.mxu0 0.0
        %5129 = vmatpush1.msra.mxu0 0.0
        %5130 = vmatprep.subr.mxu0 0.0
        %5131 = vmatpush1.msra.mxu0 0.0
        %5132 = vmatprep.subr.mxu0 0.0
        %5133 = vmatpush1.msra.mxu0 0.0
        %5134 = vmatprep.subr.mxu0 0.0
        %5135 = vmatpush1.msra.mxu0 0.0
        %5136 = vmatprep.subr.mxu0 0.0
        %5137 = vmatpush1.msra.mxu0 0.0
        %5138 = vmatprep.subr.mxu0 0.0
        %5139 = vmatpush1.msra.mxu0 %v5106
        %5140 = vmatprep.subr.mxu0 0.0
        %5141 = vmatpush1.msra.mxu0 %v5105
        %5142 = vmatprep.subr.mxu0 0.0
        %5143 = vmatpush2.msra.mxu0 0.0
        %5144 = vmatprep.subr.mxu0 0.0
        %5145 = vmatpush2.msra.mxu0 0.0
        %5146 = vmatprep.subr.mxu0 0.0
        %5147 = vmatpush2.msra.mxu0 0.0
        %5148 = vmatprep.subr.mxu0 0.0
        %5149 = vmatpush2.msra.mxu0 0.0
        %5150 = vmatprep.subr.mxu0 0.0
        %5151 = vmatpush2.msra.mxu0 0.0
        %5152 = vmatprep.subr.mxu0 0.0
        %5153 = vmatpush2.msra.mxu0 0.0
        %5154 = vmatprep.subr.mxu0 0.0
        %5155 = vmatpush2.msra.mxu0 0.0
        %5156 = vmatprep.subr.mxu0 0.0
        %5157 = vmatpush2.msra.mxu0 0.0
        %5158 = vmatprep.subr.mxu0 0.0
        %5159 = vmatpush2.msra.mxu0 0.0
        %5160 = vmatprep.subr.mxu0 0.0
        %5161 = vmatpush2.msra.mxu0 0.0
        %5162 = vmatprep.subr.mxu0 0.0
        %5163 = vmatpush2.msra.mxu0 0.0
        %5164 = vmatprep.subr.mxu0 0.0
        %5165 = vmatpush2.msra.mxu0 0.0
        %5166 = vmatprep.subr.mxu0 0.0
        %5167 = vmatpush2.msra.mxu0 0.0
        %5168 = vmatprep.subr.mxu0 0.0
        %5169 = vmatpush2.msra.mxu0 0.0
        %5170 = vmatprep.subr.mxu0 0.0
        %5171 = vmatpush2.msra.mxu0 0.0
        %5172 = vmatprep.subr.mxu0 0.0
        %5173 = vmatpush2.msra.mxu0 0.0
        %5174 = vmatprep.mubr.f32.mxu0 0.0
        %5175 = vmatmul.mubr.f32.gmra.mxu0 %v5108
        %v5176 = vpop.f32.mrf.mxu0
        %v5177 = vadd.f32 0.0, %v5176
        %v5178 = vpop.f32.mrf.mxu0
        %5179 = vdwg.mxu0
        %v5180 = vadd.f32 %v5102, %v5177
        %v5181 = vld [vmem:[#allocation3 + $0x1c] sm:$0x1]
        %s5182 = scalar_lea.vmem %s5, 304
        %v5183 = vld [vmem:[%s5182] sm:$0xff]
        %v5184 = vld [vmem:[%s5182 + $0x8] sm:$0xff]
        %v5186 = vsel %vm3695, %v5181, 0
        %5188 = vmatprep.subr.mxu0 0.0
        %5189 = vmatpush1.msra.mxu0 0.0
        %5190 = vmatprep.subr.mxu0 0.0
        %5191 = vmatpush1.msra.mxu0 0.0
        %5192 = vmatprep.subr.mxu0 0.0
        %5193 = vmatpush1.msra.mxu0 0.0
        %5194 = vmatprep.subr.mxu0 0.0
        %5195 = vmatpush1.msra.mxu0 0.0
        %5196 = vmatprep.subr.mxu0 0.0
        %5197 = vmatpush1.msra.mxu0 0.0
        %5198 = vmatprep.subr.mxu0 0.0
        %5199 = vmatpush1.msra.mxu0 0.0
        %5200 = vmatprep.subr.mxu0 0.0
        %5201 = vmatpush1.msra.mxu0 0.0
        %5202 = vmatprep.subr.mxu0 0.0
        %5203 = vmatpush1.msra.mxu0 0.0
        %5204 = vmatprep.subr.mxu0 0.0
        %5205 = vmatpush1.msra.mxu0 0.0
        %5206 = vmatprep.subr.mxu0 0.0
        %5207 = vmatpush1.msra.mxu0 0.0
        %5208 = vmatprep.subr.mxu0 0.0
        %5209 = vmatpush1.msra.mxu0 0.0
        %5210 = vmatprep.subr.mxu0 0.0
        %5211 = vmatpush1.msra.mxu0 0.0
        %5212 = vmatprep.subr.mxu0 0.0
        %5213 = vmatpush1.msra.mxu0 0.0
        %5214 = vmatprep.subr.mxu0 0.0
        %5215 = vmatpush1.msra.mxu0 0.0
        %5216 = vmatprep.subr.mxu0 0.0
        %5217 = vmatpush1.msra.mxu0 %v5184
        %5218 = vmatprep.subr.mxu0 0.0
        %5219 = vmatpush1.msra.mxu0 %v5183
        %5220 = vmatprep.subr.mxu0 0.0
        %5221 = vmatpush2.msra.mxu0 0.0
        %5222 = vmatprep.subr.mxu0 0.0
        %5223 = vmatpush2.msra.mxu0 0.0
        %5224 = vmatprep.subr.mxu0 0.0
        %5225 = vmatpush2.msra.mxu0 0.0
        %5226 = vmatprep.subr.mxu0 0.0
        %5227 = vmatpush2.msra.mxu0 0.0
        %5228 = vmatprep.subr.mxu0 0.0
        %5229 = vmatpush2.msra.mxu0 0.0
        %5230 = vmatprep.subr.mxu0 0.0
        %5231 = vmatpush2.msra.mxu0 0.0
        %5232 = vmatprep.subr.mxu0 0.0
        %5233 = vmatpush2.msra.mxu0 0.0
        %5234 = vmatprep.subr.mxu0 0.0
        %5235 = vmatpush2.msra.mxu0 0.0
        %5236 = vmatprep.subr.mxu0 0.0
        %5237 = vmatpush2.msra.mxu0 0.0
        %5238 = vmatprep.subr.mxu0 0.0
        %5239 = vmatpush2.msra.mxu0 0.0
        %5240 = vmatprep.subr.mxu0 0.0
        %5241 = vmatpush2.msra.mxu0 0.0
        %5242 = vmatprep.subr.mxu0 0.0
        %5243 = vmatpush2.msra.mxu0 0.0
        %5244 = vmatprep.subr.mxu0 0.0
        %5245 = vmatpush2.msra.mxu0 0.0
        %5246 = vmatprep.subr.mxu0 0.0
        %5247 = vmatpush2.msra.mxu0 0.0
        %5248 = vmatprep.subr.mxu0 0.0
        %5249 = vmatpush2.msra.mxu0 0.0
        %5250 = vmatprep.subr.mxu0 0.0
        %5251 = vmatpush2.msra.mxu0 0.0
        %5252 = vmatprep.mubr.f32.mxu0 0.0
        %5253 = vmatmul.mubr.f32.gmra.mxu0 %v5186
        %v5254 = vpop.f32.mrf.mxu0
        %v5255 = vadd.f32 0.0, %v5254
        %v5256 = vpop.f32.mrf.mxu0
        %5257 = vdwg.mxu0
        %v5258 = vadd.f32 %v5180, %v5255
        %v5259 = vld [vmem:[#allocation3 + $0x20] sm:$0x1]
        %s5260 = scalar_lea.vmem %s5, 320
        %v5261 = vld [vmem:[%s5260] sm:$0xff]
        %v5262 = vld [vmem:[%s5260 + $0x8] sm:$0xff]
        %v5264 = vsel %vm3695, %v5259, 0
        %5266 = vmatprep.subr.mxu0 0.0
        %5267 = vmatpush1.msra.mxu0 0.0
        %5268 = vmatprep.subr.mxu0 0.0
        %5269 = vmatpush1.msra.mxu0 0.0
        %5270 = vmatprep.subr.mxu0 0.0
        %5271 = vmatpush1.msra.mxu0 0.0
        %5272 = vmatprep.subr.mxu0 0.0
        %5273 = vmatpush1.msra.mxu0 0.0
        %5274 = vmatprep.subr.mxu0 0.0
        %5275 = vmatpush1.msra.mxu0 0.0
        %5276 = vmatprep.subr.mxu0 0.0
        %5277 = vmatpush1.msra.mxu0 0.0
        %5278 = vmatprep.subr.mxu0 0.0
        %5279 = vmatpush1.msra.mxu0 0.0
        %5280 = vmatprep.subr.mxu0 0.0
        %5281 = vmatpush1.msra.mxu0 0.0
        %5282 = vmatprep.subr.mxu0 0.0
        %5283 = vmatpush1.msra.mxu0 0.0
        %5284 = vmatprep.subr.mxu0 0.0
        %5285 = vmatpush1.msra.mxu0 0.0
        %5286 = vmatprep.subr.mxu0 0.0
        %5287 = vmatpush1.msra.mxu0 0.0
        %5288 = vmatprep.subr.mxu0 0.0
        %5289 = vmatpush1.msra.mxu0 0.0
        %5290 = vmatprep.subr.mxu0 0.0
        %5291 = vmatpush1.msra.mxu0 0.0
        %5292 = vmatprep.subr.mxu0 0.0
        %5293 = vmatpush1.msra.mxu0 0.0
        %5294 = vmatprep.subr.mxu0 0.0
        %5295 = vmatpush1.msra.mxu0 %v5262
        %5296 = vmatprep.subr.mxu0 0.0
        %5297 = vmatpush1.msra.mxu0 %v5261
        %5298 = vmatprep.subr.mxu0 0.0
        %5299 = vmatpush2.msra.mxu0 0.0
        %5300 = vmatprep.subr.mxu0 0.0
        %5301 = vmatpush2.msra.mxu0 0.0
        %5302 = vmatprep.subr.mxu0 0.0
        %5303 = vmatpush2.msra.mxu0 0.0
        %5304 = vmatprep.subr.mxu0 0.0
        %5305 = vmatpush2.msra.mxu0 0.0
        %5306 = vmatprep.subr.mxu0 0.0
        %5307 = vmatpush2.msra.mxu0 0.0
        %5308 = vmatprep.subr.mxu0 0.0
        %5309 = vmatpush2.msra.mxu0 0.0
        %5310 = vmatprep.subr.mxu0 0.0
        %5311 = vmatpush2.msra.mxu0 0.0
        %5312 = vmatprep.subr.mxu0 0.0
        %5313 = vmatpush2.msra.mxu0 0.0
        %5314 = vmatprep.subr.mxu0 0.0
        %5315 = vmatpush2.msra.mxu0 0.0
        %5316 = vmatprep.subr.mxu0 0.0
        %5317 = vmatpush2.msra.mxu0 0.0
        %5318 = vmatprep.subr.mxu0 0.0
        %5319 = vmatpush2.msra.mxu0 0.0
        %5320 = vmatprep.subr.mxu0 0.0
        %5321 = vmatpush2.msra.mxu0 0.0
        %5322 = vmatprep.subr.mxu0 0.0
        %5323 = vmatpush2.msra.mxu0 0.0
        %5324 = vmatprep.subr.mxu0 0.0
        %5325 = vmatpush2.msra.mxu0 0.0
        %5326 = vmatprep.subr.mxu0 0.0
        %5327 = vmatpush2.msra.mxu0 0.0
        %5328 = vmatprep.subr.mxu0 0.0
        %5329 = vmatpush2.msra.mxu0 0.0
        %5330 = vmatprep.mubr.f32.mxu0 0.0
        %5331 = vmatmul.mubr.f32.gmra.mxu0 %v5264
        %v5332 = vpop.f32.mrf.mxu0
        %v5333 = vadd.f32 0.0, %v5332
        %v5334 = vpop.f32.mrf.mxu0
        %5335 = vdwg.mxu0
        %v5336 = vadd.f32 %v5258, %v5333
        %v5337 = vld [vmem:[#allocation3 + $0x21] sm:$0x1]
        %s5338 = scalar_lea.vmem %s5, 336
        %v5339 = vld [vmem:[%s5338] sm:$0xff]
        %v5340 = vld [vmem:[%s5338 + $0x8] sm:$0xff]
        %v5342 = vsel %vm3695, %v5337, 0
        %5344 = vmatprep.subr.mxu0 0.0
        %5345 = vmatpush1.msra.mxu0 0.0
        %5346 = vmatprep.subr.mxu0 0.0
        %5347 = vmatpush1.msra.mxu0 0.0
        %5348 = vmatprep.subr.mxu0 0.0
        %5349 = vmatpush1.msra.mxu0 0.0
        %5350 = vmatprep.subr.mxu0 0.0
        %5351 = vmatpush1.msra.mxu0 0.0
        %5352 = vmatprep.subr.mxu0 0.0
        %5353 = vmatpush1.msra.mxu0 0.0
        %5354 = vmatprep.subr.mxu0 0.0
        %5355 = vmatpush1.msra.mxu0 0.0
        %5356 = vmatprep.subr.mxu0 0.0
        %5357 = vmatpush1.msra.mxu0 0.0
        %5358 = vmatprep.subr.mxu0 0.0
        %5359 = vmatpush1.msra.mxu0 0.0
        %5360 = vmatprep.subr.mxu0 0.0
        %5361 = vmatpush1.msra.mxu0 0.0
        %5362 = vmatprep.subr.mxu0 0.0
        %5363 = vmatpush1.msra.mxu0 0.0
        %5364 = vmatprep.subr.mxu0 0.0
        %5365 = vmatpush1.msra.mxu0 0.0
        %5366 = vmatprep.subr.mxu0 0.0
        %5367 = vmatpush1.msra.mxu0 0.0
        %5368 = vmatprep.subr.mxu0 0.0
        %5369 = vmatpush1.msra.mxu0 0.0
        %5370 = vmatprep.subr.mxu0 0.0
        %5371 = vmatpush1.msra.mxu0 0.0
        %5372 = vmatprep.subr.mxu0 0.0
        %5373 = vmatpush1.msra.mxu0 %v5340
        %5374 = vmatprep.subr.mxu0 0.0
        %5375 = vmatpush1.msra.mxu0 %v5339
        %5376 = vmatprep.subr.mxu0 0.0
        %5377 = vmatpush2.msra.mxu0 0.0
        %5378 = vmatprep.subr.mxu0 0.0
        %5379 = vmatpush2.msra.mxu0 0.0
        %5380 = vmatprep.subr.mxu0 0.0
        %5381 = vmatpush2.msra.mxu0 0.0
        %5382 = vmatprep.subr.mxu0 0.0
        %5383 = vmatpush2.msra.mxu0 0.0
        %5384 = vmatprep.subr.mxu0 0.0
        %5385 = vmatpush2.msra.mxu0 0.0
        %5386 = vmatprep.subr.mxu0 0.0
        %5387 = vmatpush2.msra.mxu0 0.0
        %5388 = vmatprep.subr.mxu0 0.0
        %5389 = vmatpush2.msra.mxu0 0.0
        %5390 = vmatprep.subr.mxu0 0.0
        %5391 = vmatpush2.msra.mxu0 0.0
        %5392 = vmatprep.subr.mxu0 0.0
        %5393 = vmatpush2.msra.mxu0 0.0
        %5394 = vmatprep.subr.mxu0 0.0
        %5395 = vmatpush2.msra.mxu0 0.0
        %5396 = vmatprep.subr.mxu0 0.0
        %5397 = vmatpush2.msra.mxu0 0.0
        %5398 = vmatprep.subr.mxu0 0.0
        %5399 = vmatpush2.msra.mxu0 0.0
        %5400 = vmatprep.subr.mxu0 0.0
        %5401 = vmatpush2.msra.mxu0 0.0
        %5402 = vmatprep.subr.mxu0 0.0
        %5403 = vmatpush2.msra.mxu0 0.0
        %5404 = vmatprep.subr.mxu0 0.0
        %5405 = vmatpush2.msra.mxu0 0.0
        %5406 = vmatprep.subr.mxu0 0.0
        %5407 = vmatpush2.msra.mxu0 0.0
        %5408 = vmatprep.mubr.f32.mxu0 0.0
        %5409 = vmatmul.mubr.f32.gmra.mxu0 %v5342
        %v5410 = vpop.f32.mrf.mxu0
        %v5411 = vadd.f32 0.0, %v5410
        %v5412 = vpop.f32.mrf.mxu0
        %5413 = vdwg.mxu0
        %v5414 = vadd.f32 %v5336, %v5411
        %v5415 = vld [vmem:[#allocation3 + $0x22] sm:$0x1]
        %s5416 = scalar_lea.vmem %s5, 352
        %v5417 = vld [vmem:[%s5416] sm:$0xff]
        %v5418 = vld [vmem:[%s5416 + $0x8] sm:$0xff]
        %v5420 = vsel %vm3695, %v5415, 0
        %5422 = vmatprep.subr.mxu0 0.0
        %5423 = vmatpush1.msra.mxu0 0.0
        %5424 = vmatprep.subr.mxu0 0.0
        %5425 = vmatpush1.msra.mxu0 0.0
        %5426 = vmatprep.subr.mxu0 0.0
        %5427 = vmatpush1.msra.mxu0 0.0
        %5428 = vmatprep.subr.mxu0 0.0
        %5429 = vmatpush1.msra.mxu0 0.0
        %5430 = vmatprep.subr.mxu0 0.0
        %5431 = vmatpush1.msra.mxu0 0.0
        %5432 = vmatprep.subr.mxu0 0.0
        %5433 = vmatpush1.msra.mxu0 0.0
        %5434 = vmatprep.subr.mxu0 0.0
        %5435 = vmatpush1.msra.mxu0 0.0
        %5436 = vmatprep.subr.mxu0 0.0
        %5437 = vmatpush1.msra.mxu0 0.0
        %5438 = vmatprep.subr.mxu0 0.0
        %5439 = vmatpush1.msra.mxu0 0.0
        %5440 = vmatprep.subr.mxu0 0.0
        %5441 = vmatpush1.msra.mxu0 0.0
        %5442 = vmatprep.subr.mxu0 0.0
        %5443 = vmatpush1.msra.mxu0 0.0
        %5444 = vmatprep.subr.mxu0 0.0
        %5445 = vmatpush1.msra.mxu0 0.0
        %5446 = vmatprep.subr.mxu0 0.0
        %5447 = vmatpush1.msra.mxu0 0.0
        %5448 = vmatprep.subr.mxu0 0.0
        %5449 = vmatpush1.msra.mxu0 0.0
        %5450 = vmatprep.subr.mxu0 0.0
        %5451 = vmatpush1.msra.mxu0 %v5418
        %5452 = vmatprep.subr.mxu0 0.0
        %5453 = vmatpush1.msra.mxu0 %v5417
        %5454 = vmatprep.subr.mxu0 0.0
        %5455 = vmatpush2.msra.mxu0 0.0
        %5456 = vmatprep.subr.mxu0 0.0
        %5457 = vmatpush2.msra.mxu0 0.0
        %5458 = vmatprep.subr.mxu0 0.0
        %5459 = vmatpush2.msra.mxu0 0.0
        %5460 = vmatprep.subr.mxu0 0.0
        %5461 = vmatpush2.msra.mxu0 0.0
        %5462 = vmatprep.subr.mxu0 0.0
        %5463 = vmatpush2.msra.mxu0 0.0
        %5464 = vmatprep.subr.mxu0 0.0
        %5465 = vmatpush2.msra.mxu0 0.0
        %5466 = vmatprep.subr.mxu0 0.0
        %5467 = vmatpush2.msra.mxu0 0.0
        %5468 = vmatprep.subr.mxu0 0.0
        %5469 = vmatpush2.msra.mxu0 0.0
        %5470 = vmatprep.subr.mxu0 0.0
        %5471 = vmatpush2.msra.mxu0 0.0
        %5472 = vmatprep.subr.mxu0 0.0
        %5473 = vmatpush2.msra.mxu0 0.0
        %5474 = vmatprep.subr.mxu0 0.0
        %5475 = vmatpush2.msra.mxu0 0.0
        %5476 = vmatprep.subr.mxu0 0.0
        %5477 = vmatpush2.msra.mxu0 0.0
        %5478 = vmatprep.subr.mxu0 0.0
        %5479 = vmatpush2.msra.mxu0 0.0
        %5480 = vmatprep.subr.mxu0 0.0
        %5481 = vmatpush2.msra.mxu0 0.0
        %5482 = vmatprep.subr.mxu0 0.0
        %5483 = vmatpush2.msra.mxu0 0.0
        %5484 = vmatprep.subr.mxu0 0.0
        %5485 = vmatpush2.msra.mxu0 0.0
        %5486 = vmatprep.mubr.f32.mxu0 0.0
        %5487 = vmatmul.mubr.f32.gmra.mxu0 %v5420
        %v5488 = vpop.f32.mrf.mxu0
        %v5489 = vadd.f32 0.0, %v5488
        %v5490 = vpop.f32.mrf.mxu0
        %5491 = vdwg.mxu0
        %v5492 = vadd.f32 %v5414, %v5489
        %v5493 = vld [vmem:[#allocation3 + $0x23] sm:$0x1]
        %s5494 = scalar_lea.vmem %s5, 368
        %v5495 = vld [vmem:[%s5494] sm:$0xff]
        %v5496 = vld [vmem:[%s5494 + $0x8] sm:$0xff]
        %v5498 = vsel %vm3695, %v5493, 0
        %5500 = vmatprep.subr.mxu0 0.0
        %5501 = vmatpush1.msra.mxu0 0.0
        %5502 = vmatprep.subr.mxu0 0.0
        %5503 = vmatpush1.msra.mxu0 0.0
        %5504 = vmatprep.subr.mxu0 0.0
        %5505 = vmatpush1.msra.mxu0 0.0
        %5506 = vmatprep.subr.mxu0 0.0
        %5507 = vmatpush1.msra.mxu0 0.0
        %5508 = vmatprep.subr.mxu0 0.0
        %5509 = vmatpush1.msra.mxu0 0.0
        %5510 = vmatprep.subr.mxu0 0.0
        %5511 = vmatpush1.msra.mxu0 0.0
        %5512 = vmatprep.subr.mxu0 0.0
        %5513 = vmatpush1.msra.mxu0 0.0
        %5514 = vmatprep.subr.mxu0 0.0
        %5515 = vmatpush1.msra.mxu0 0.0
        %5516 = vmatprep.subr.mxu0 0.0
        %5517 = vmatpush1.msra.mxu0 0.0
        %5518 = vmatprep.subr.mxu0 0.0
        %5519 = vmatpush1.msra.mxu0 0.0
        %5520 = vmatprep.subr.mxu0 0.0
        %5521 = vmatpush1.msra.mxu0 0.0
        %5522 = vmatprep.subr.mxu0 0.0
        %5523 = vmatpush1.msra.mxu0 0.0
        %5524 = vmatprep.subr.mxu0 0.0
        %5525 = vmatpush1.msra.mxu0 0.0
        %5526 = vmatprep.subr.mxu0 0.0
        %5527 = vmatpush1.msra.mxu0 0.0
        %5528 = vmatprep.subr.mxu0 0.0
        %5529 = vmatpush1.msra.mxu0 %v5496
        %5530 = vmatprep.subr.mxu0 0.0
        %5531 = vmatpush1.msra.mxu0 %v5495
        %5532 = vmatprep.subr.mxu0 0.0
        %5533 = vmatpush2.msra.mxu0 0.0
        %5534 = vmatprep.subr.mxu0 0.0
        %5535 = vmatpush2.msra.mxu0 0.0
        %5536 = vmatprep.subr.mxu0 0.0
        %5537 = vmatpush2.msra.mxu0 0.0
        %5538 = vmatprep.subr.mxu0 0.0
        %5539 = vmatpush2.msra.mxu0 0.0
        %5540 = vmatprep.subr.mxu0 0.0
        %5541 = vmatpush2.msra.mxu0 0.0
        %5542 = vmatprep.subr.mxu0 0.0
        %5543 = vmatpush2.msra.mxu0 0.0
        %5544 = vmatprep.subr.mxu0 0.0
        %5545 = vmatpush2.msra.mxu0 0.0
        %5546 = vmatprep.subr.mxu0 0.0
        %5547 = vmatpush2.msra.mxu0 0.0
        %5548 = vmatprep.subr.mxu0 0.0
        %5549 = vmatpush2.msra.mxu0 0.0
        %5550 = vmatprep.subr.mxu0 0.0
        %5551 = vmatpush2.msra.mxu0 0.0
        %5552 = vmatprep.subr.mxu0 0.0
        %5553 = vmatpush2.msra.mxu0 0.0
        %5554 = vmatprep.subr.mxu0 0.0
        %5555 = vmatpush2.msra.mxu0 0.0
        %5556 = vmatprep.subr.mxu0 0.0
        %5557 = vmatpush2.msra.mxu0 0.0
        %5558 = vmatprep.subr.mxu0 0.0
        %5559 = vmatpush2.msra.mxu0 0.0
        %5560 = vmatprep.subr.mxu0 0.0
        %5561 = vmatpush2.msra.mxu0 0.0
        %5562 = vmatprep.subr.mxu0 0.0
        %5563 = vmatpush2.msra.mxu0 0.0
        %5564 = vmatprep.mubr.f32.mxu0 0.0
        %5565 = vmatmul.mubr.f32.gmra.mxu0 %v5498
        %v5566 = vpop.f32.mrf.mxu0
        %v5567 = vadd.f32 0.0, %v5566
        %v5568 = vpop.f32.mrf.mxu0
        %5569 = vdwg.mxu0
        %v5570 = vadd.f32 %v5492, %v5567
        %v5571 = vld [vmem:[#allocation3 + $0x24] sm:$0x1]
        %s5572 = scalar_lea.vmem %s5, 384
        %v5573 = vld [vmem:[%s5572] sm:$0xff]
        %v5574 = vld [vmem:[%s5572 + $0x8] sm:$0xff]
        %v5576 = vsel %vm3695, %v5571, 0
        %5578 = vmatprep.subr.mxu0 0.0
        %5579 = vmatpush1.msra.mxu0 0.0
        %5580 = vmatprep.subr.mxu0 0.0
        %5581 = vmatpush1.msra.mxu0 0.0
        %5582 = vmatprep.subr.mxu0 0.0
        %5583 = vmatpush1.msra.mxu0 0.0
        %5584 = vmatprep.subr.mxu0 0.0
        %5585 = vmatpush1.msra.mxu0 0.0
        %5586 = vmatprep.subr.mxu0 0.0
        %5587 = vmatpush1.msra.mxu0 0.0
        %5588 = vmatprep.subr.mxu0 0.0
        %5589 = vmatpush1.msra.mxu0 0.0
        %5590 = vmatprep.subr.mxu0 0.0
        %5591 = vmatpush1.msra.mxu0 0.0
        %5592 = vmatprep.subr.mxu0 0.0
        %5593 = vmatpush1.msra.mxu0 0.0
        %5594 = vmatprep.subr.mxu0 0.0
        %5595 = vmatpush1.msra.mxu0 0.0
        %5596 = vmatprep.subr.mxu0 0.0
        %5597 = vmatpush1.msra.mxu0 0.0
        %5598 = vmatprep.subr.mxu0 0.0
        %5599 = vmatpush1.msra.mxu0 0.0
        %5600 = vmatprep.subr.mxu0 0.0
        %5601 = vmatpush1.msra.mxu0 0.0
        %5602 = vmatprep.subr.mxu0 0.0
        %5603 = vmatpush1.msra.mxu0 0.0
        %5604 = vmatprep.subr.mxu0 0.0
        %5605 = vmatpush1.msra.mxu0 0.0
        %5606 = vmatprep.subr.mxu0 0.0
        %5607 = vmatpush1.msra.mxu0 %v5574
        %5608 = vmatprep.subr.mxu0 0.0
        %5609 = vmatpush1.msra.mxu0 %v5573
        %5610 = vmatprep.subr.mxu0 0.0
        %5611 = vmatpush2.msra.mxu0 0.0
        %5612 = vmatprep.subr.mxu0 0.0
        %5613 = vmatpush2.msra.mxu0 0.0
        %5614 = vmatprep.subr.mxu0 0.0
        %5615 = vmatpush2.msra.mxu0 0.0
        %5616 = vmatprep.subr.mxu0 0.0
        %5617 = vmatpush2.msra.mxu0 0.0
        %5618 = vmatprep.subr.mxu0 0.0
        %5619 = vmatpush2.msra.mxu0 0.0
        %5620 = vmatprep.subr.mxu0 0.0
        %5621 = vmatpush2.msra.mxu0 0.0
        %5622 = vmatprep.subr.mxu0 0.0
        %5623 = vmatpush2.msra.mxu0 0.0
        %5624 = vmatprep.subr.mxu0 0.0
        %5625 = vmatpush2.msra.mxu0 0.0
        %5626 = vmatprep.subr.mxu0 0.0
        %5627 = vmatpush2.msra.mxu0 0.0
        %5628 = vmatprep.subr.mxu0 0.0
        %5629 = vmatpush2.msra.mxu0 0.0
        %5630 = vmatprep.subr.mxu0 0.0
        %5631 = vmatpush2.msra.mxu0 0.0
        %5632 = vmatprep.subr.mxu0 0.0
        %5633 = vmatpush2.msra.mxu0 0.0
        %5634 = vmatprep.subr.mxu0 0.0
        %5635 = vmatpush2.msra.mxu0 0.0
        %5636 = vmatprep.subr.mxu0 0.0
        %5637 = vmatpush2.msra.mxu0 0.0
        %5638 = vmatprep.subr.mxu0 0.0
        %5639 = vmatpush2.msra.mxu0 0.0
        %5640 = vmatprep.subr.mxu0 0.0
        %5641 = vmatpush2.msra.mxu0 0.0
        %5642 = vmatprep.mubr.f32.mxu0 0.0
        %5643 = vmatmul.mubr.f32.gmra.mxu0 %v5576
        %v5644 = vpop.f32.mrf.mxu0
        %v5645 = vadd.f32 0.0, %v5644
        %v5646 = vpop.f32.mrf.mxu0
        %5647 = vdwg.mxu0
        %v5648 = vadd.f32 %v5570, %v5645
        %v5649 = vld [vmem:[%s6] sm:$0x1]
        %v5650 = vadd.f32 %v5648, %v5649
        %v5651 = vld [vmem:[%s7] sm:$0xff]
        %v5652 = vld [vmem:[%s7 + $0x8] sm:$0xff]
        %v5653 = vld [vmem:[%s7 + $0x10] sm:$0xff]
        %v5654 = vld [vmem:[%s7 + $0x18] sm:$0xff]
        %v5655 = vld [vmem:[%s8] sm:$0x1]
        %vm5656 = vcmask 261120
        %v5658 = vsel %vm5656, %v5650, 0
        %5660 = vmatprep.subr.mxu0 0.0
        %5661 = vmatpush1.msra.mxu0 0.0
        %5662 = vmatprep.subr.mxu0 0.0
        %5663 = vmatpush1.msra.mxu0 0.0
        %5664 = vmatprep.subr.mxu0 0.0
        %5665 = vmatpush1.msra.mxu0 0.0
        %5666 = vmatprep.subr.mxu0 0.0
        %5667 = vmatpush1.msra.mxu0 0.0
        %5668 = vmatprep.subr.mxu0 0.0
        %5669 = vmatpush1.msra.mxu0 0.0
        %5670 = vmatprep.subr.mxu0 0.0
        %5671 = vmatpush1.msra.mxu0 0.0
        %5672 = vmatprep.subr.mxu0 0.0
        %5673 = vmatpush1.msra.mxu0 0.0
        %5674 = vmatprep.subr.mxu0 0.0
        %5675 = vmatpush1.msra.mxu0 0.0
        %5676 = vmatprep.subr.mxu0 0.0
        %5677 = vmatpush1.msra.mxu0 0.0
        %5678 = vmatprep.subr.mxu0 0.0
        %5679 = vmatpush1.msra.mxu0 0.0
        %5680 = vmatprep.subr.mxu0 0.0
        %5681 = vmatpush1.msra.mxu0 0.0
        %5682 = vmatprep.subr.mxu0 0.0
        %5683 = vmatpush1.msra.mxu0 0.0
        %5684 = vmatprep.subr.mxu0 0.0
        %5685 = vmatpush1.msra.mxu0 %v5654
        %5686 = vmatprep.subr.mxu0 0.0
        %5687 = vmatpush1.msra.mxu0 %v5653
        %5688 = vmatprep.subr.mxu0 0.0
        %5689 = vmatpush1.msra.mxu0 %v5652
        %5690 = vmatprep.subr.mxu0 0.0
        %5691 = vmatpush1.msra.mxu0 %v5651
        %5692 = vmatprep.subr.mxu0 0.0
        %5693 = vmatpush2.msra.mxu0 0.0
        %5694 = vmatprep.subr.mxu0 0.0
        %5695 = vmatpush2.msra.mxu0 0.0
        %5696 = vmatprep.subr.mxu0 0.0
        %5697 = vmatpush2.msra.mxu0 0.0
        %5698 = vmatprep.subr.mxu0 0.0
        %5699 = vmatpush2.msra.mxu0 0.0
        %5700 = vmatprep.subr.mxu0 0.0
        %5701 = vmatpush2.msra.mxu0 0.0
        %5702 = vmatprep.subr.mxu0 0.0
        %5703 = vmatpush2.msra.mxu0 0.0
        %5704 = vmatprep.subr.mxu0 0.0
        %5705 = vmatpush2.msra.mxu0 0.0
        %5706 = vmatprep.subr.mxu0 0.0
        %5707 = vmatpush2.msra.mxu0 0.0
        %5708 = vmatprep.subr.mxu0 0.0
        %5709 = vmatpush2.msra.mxu0 0.0
        %5710 = vmatprep.subr.mxu0 0.0
        %5711 = vmatpush2.msra.mxu0 0.0
        %5712 = vmatprep.subr.mxu0 0.0
        %5713 = vmatpush2.msra.mxu0 0.0
        %5714 = vmatprep.subr.mxu0 0.0
        %5715 = vmatpush2.msra.mxu0 0.0
        %5716 = vmatprep.subr.mxu0 0.0
        %5717 = vmatpush2.msra.mxu0 0.0
        %5718 = vmatprep.subr.mxu0 0.0
        %5719 = vmatpush2.msra.mxu0 0.0
        %5720 = vmatprep.subr.mxu0 0.0
        %5721 = vmatpush2.msra.mxu0 0.0
        %5722 = vmatprep.subr.mxu0 0.0
        %5723 = vmatpush2.msra.mxu0 0.0
        %5724 = vmatprep.mubr.f32.mxu0 0.0
        %5725 = vmatmul.mubr.f32.gmra.mxu0 %v5658
        %v5726 = vpop.f32.mrf.mxu0
        %v5727 = vadd.f32 %v5655, %v5726
        %v5728 = vpop.f32.mrf.mxu0
        %5729 = vdwg.mxu0
        %v5730 = vld [vmem:[%s9] sm:$0xff]
        %v5731 = vld [vmem:[%s9 + $0x8] sm:$0xff]
        %v5732 = vld [vmem:[%s9 + $0x10] sm:$0xff]
        %v5733 = vld [vmem:[%s9 + $0x18] sm:$0xff]
        %v5734 = vld [vmem:[%s10] sm:$0x1]
        %v5736 = vsel %vm5656, %v5727, 0
        %5738 = vmatprep.subr.mxu0 0.0
        %5739 = vmatpush1.msra.mxu0 0.0
        %5740 = vmatprep.subr.mxu0 0.0
        %5741 = vmatpush1.msra.mxu0 0.0
        %5742 = vmatprep.subr.mxu0 0.0
        %5743 = vmatpush1.msra.mxu0 0.0
        %5744 = vmatprep.subr.mxu0 0.0
        %5745 = vmatpush1.msra.mxu0 0.0
        %5746 = vmatprep.subr.mxu0 0.0
        %5747 = vmatpush1.msra.mxu0 0.0
        %5748 = vmatprep.subr.mxu0 0.0
        %5749 = vmatpush1.msra.mxu0 0.0
        %5750 = vmatprep.subr.mxu0 0.0
        %5751 = vmatpush1.msra.mxu0 0.0
        %5752 = vmatprep.subr.mxu0 0.0
        %5753 = vmatpush1.msra.mxu0 0.0
        %5754 = vmatprep.subr.mxu0 0.0
        %5755 = vmatpush1.msra.mxu0 0.0
        %5756 = vmatprep.subr.mxu0 0.0
        %5757 = vmatpush1.msra.mxu0 0.0
        %5758 = vmatprep.subr.mxu0 0.0
        %5759 = vmatpush1.msra.mxu0 0.0
        %5760 = vmatprep.subr.mxu0 0.0
        %5761 = vmatpush1.msra.mxu0 0.0
        %5762 = vmatprep.subr.mxu0 0.0
        %5763 = vmatpush1.msra.mxu0 %v5733
        %5764 = vmatprep.subr.mxu0 0.0
        %5765 = vmatpush1.msra.mxu0 %v5732
        %5766 = vmatprep.subr.mxu0 0.0
        %5767 = vmatpush1.msra.mxu0 %v5731
        %5768 = vmatprep.subr.mxu0 0.0
        %5769 = vmatpush1.msra.mxu0 %v5730
        %5770 = vmatprep.subr.mxu0 0.0
        %5771 = vmatpush2.msra.mxu0 0.0
        %5772 = vmatprep.subr.mxu0 0.0
        %5773 = vmatpush2.msra.mxu0 0.0
        %5774 = vmatprep.subr.mxu0 0.0
        %5775 = vmatpush2.msra.mxu0 0.0
        %5776 = vmatprep.subr.mxu0 0.0
        %5777 = vmatpush2.msra.mxu0 0.0
        %5778 = vmatprep.subr.mxu0 0.0
        %5779 = vmatpush2.msra.mxu0 0.0
        %5780 = vmatprep.subr.mxu0 0.0
        %5781 = vmatpush2.msra.mxu0 0.0
        %5782 = vmatprep.subr.mxu0 0.0
        %5783 = vmatpush2.msra.mxu0 0.0
        %5784 = vmatprep.subr.mxu0 0.0
        %5785 = vmatpush2.msra.mxu0 0.0
        %5786 = vmatprep.subr.mxu0 0.0
        %5787 = vmatpush2.msra.mxu0 0.0
        %5788 = vmatprep.subr.mxu0 0.0
        %5789 = vmatpush2.msra.mxu0 0.0
        %5790 = vmatprep.subr.mxu0 0.0
        %5791 = vmatpush2.msra.mxu0 0.0
        %5792 = vmatprep.subr.mxu0 0.0
        %5793 = vmatpush2.msra.mxu0 0.0
        %5794 = vmatprep.subr.mxu0 0.0
        %5795 = vmatpush2.msra.mxu0 0.0
        %5796 = vmatprep.subr.mxu0 0.0
        %5797 = vmatpush2.msra.mxu0 0.0
        %5798 = vmatprep.subr.mxu0 0.0
        %5799 = vmatpush2.msra.mxu0 0.0
        %5800 = vmatprep.subr.mxu0 0.0
        %5801 = vmatpush2.msra.mxu0 0.0
        %5802 = vmatprep.mubr.f32.mxu0 0.0
        %5803 = vmatmul.mubr.f32.gmra.mxu0 %v5736
        %v5804 = vpop.f32.mrf.mxu0
        %v5805 = vadd.f32 %v5734, %v5804
        %v5806 = vpop.f32.mrf.mxu0
        %5807 = vdwg.mxu0
        %v5808 = vxor.u32 %v5805, 2147483648
        %v5809 = vmul.f32 %v5808, 1.442695
        %v5810 = vpow.pop %v5809
        %v5811 = vadd.f32 %v5810, 1.0
        %v5812 = vrcp.pop %v5811
        %v5813 = vmul.f32 1.0, %v5812
        %v5814 = vld [vmem:[%s11] sm:$0x1]
        %v5815 = vmul.f32 %v5813, %v5814
        %v5816 = vld [vmem:[%s12] sm:$0x1]
        %v5817 = vadd.f32 %v5815, %v5816
        %vm5818 = vcmask 24576
        %5819 = vst.msk [vmem:[%s432] sm:$0x1] %vm5818, %v5817
        %s5820 = sand.u32 %s313, 1
        %s5821 = scalar_lea.sflag [#allocation5], %s5820
        %s5822 = sand.u32 %s313, 1
        %s5823 = scalar_lea.vmem [#allocation4], %s5822
        // Predicated region
        $region73: #{forward.1} parent=71 // pred_check
          %p5824 = pneg %p323
        $region74: #{forward.1} parent=71 // pred_check_branch
          %5826 = sbr.rel (%p5824) target = $region76
        $region75: #{forward.1} parent=71 // pred_region
          %s5828 = ssub.s32 16, 16
          %5829 = vsyncadd %s5821, %s5828
          %s5830 = smul.addr %s27, 16
          %s5831 = scalar_lea.hbm %s13, %s5830
          %s5833 = sshll.u32 %s5823, 4
          %s5834 = int_to_ptr.vmem [resolvable:$true] %s5833
          %5836 = dma.vmem_to_hbm [thread:$0]  %s5834, 16, %s5831, %s5821
        $region76: #{forward.1} parent=71 // pred_fallthru
          _
      $region72: #{forward.1} parent=5 // pred_fallthru
        _
      %p5837 = scmp.le.s32.totalorder 2, %s22
      // Predicated region
      $region77: #{forward.1} parent=5 // pred_check
        %p5838 = pneg %p5837
      $region78: #{forward.1} parent=5 // pred_check_branch
        %5840 = sbr.rel (%p5838) target = $region80
      $region79: #{forward.1} parent=5 // pred_region
        %s5841 = ssub.s32 %s22, 2
        // Predicated region
        $region81: #{forward.1} parent=79 // pred_check
          %p5842 = pneg %p329
        $region82: #{forward.1} parent=79 // pred_check_branch
          %5844 = sbr.rel (%p5842) target = $region84
        $region83: #{forward.1} parent=79 // pred_region
          %s5845 = sand.u32 %s314, 1
          %s5846 = scalar_lea.sflag [#allocation5], %s5845
          %s5847 = sand.u32 %s314, 1
          %s5848 = scalar_lea.vmem [#allocation4], %s5847
          %5849 = dma.done %s5846, 16
        $region84: #{forward.1} parent=79 // pred_fallthru
          _
      $region80: #{forward.1} parent=5 // pred_fallthru
        _
    $region6: #{forward.1} parent=1 // loop_footer
      %s26 = sadd.s32 1, %s22
    $region7: #{forward.1} parent=1 // loop_footer_branch
      %21 = sbr.rel target = $region3
    $region8: #{forward.1} parent=1 // loop_exit
      _
    %5850 = vsyncpa [#allocation5], 1
    %s5851 = scalar_lea.sflag [#allocation5], 1
    %5852 = vsyncpa %s5851, 1

</llo_original>
